<compile_context>
chip_gen: v5e
topology: v5e:2x2
jax: 0.10.0
libtpu: 0.0.40
codegen_flags: <defaults>
</compile_context>

<pallas_src>
import functools

import jax
import jax.numpy as jnp
from jax.experimental import pallas as pl
from jax.experimental.pallas import tpu as pltpu  # noqa: F401  (TPU backend)


def _srcnn_kernel(p1_ref, w1_ref, b1_ref, w2_ref, b2_ref, w3_ref, b3_ref,
                  o_ref, *, N, H, W):
    # p1_ref: (M, 243) bf16   im2col patches of the padded input (conv1)
    # w1_ref: (243, 64) bf16  conv1 weights, HWIO flattened (kh, kw, ci)
    # w2_ref: (64, 32)  bf16  conv2 (1x1) weights
    # w3_ref: (5, 5, 32, 3) bf16  conv3 weights (HWIO)
    # b*_ref: (1, Cout) f32 biases
    # o_ref : (N, 3, H*W) f32  -- lane-dense NCHW output
    M = N * H * W
    KH3, KW3, C2, C3 = w3_ref.shape          # (5, 5, 32, 3)
    PAD3 = 2

    # ---- conv1: one big MXU matmul over the im2col patches (K = 243) ----
    h1 = jnp.dot(p1_ref[...], w1_ref[...], preferred_element_type=jnp.float32)
    h1 = jnp.maximum(h1 + b1_ref[...], 0.0)                       # (M, 64) f32

    # ---- conv2 (1x1): fused epilogue matmul (K = 64) ----
    h2 = jnp.dot(h1.astype(jnp.bfloat16), w2_ref[...],
                 preferred_element_type=jnp.float32)
    h2 = jnp.maximum(h2 + b2_ref[...], 0.0)                       # (M, 32) f32

    # ---- conv3 (5x5, pad 2): accumulate 25 taps fully inside VMEM ----
    # Zero-padded buffer built with alignment-friendly concatenations only:
    #   H: exact +PAD3 rows top/bottom (leading axis -> no tiling constraint)
    #   W: +8 cols left/right (sublane axis, pieces of 8/16/8 -> 8-aligned),
    #      interior at sublane offset 8.
    h2i = h2.astype(jnp.bfloat16).reshape(N, H, W, C2)
    zh = jnp.zeros((N, PAD3, W, C2), jnp.bfloat16)
    t = jnp.concatenate([zh, h2i, zh], axis=1)                    # (N, H+4, W, C2)
    zw = jnp.zeros((N, H + 2 * PAD3, 8, C2), jnp.bfloat16)
    h2p = jnp.concatenate([zw, t, zw], axis=2)                    # (N, H+4, W+16, C2)

    acc = jnp.zeros((M, C3), jnp.float32)
    for kw in range(KW3):
        # one sublane-shifted window per kw, reused for every kh
        off = 8 - PAD3 + kw
        win = h2p[:, :, off:off + W, :]                           # (N, H+4, W, C2)
        for kh in range(KH3):
            blk = win[:, kh:kh + H, :, :].reshape(M, C2)          # cheap leading slice
            acc = acc + jnp.dot(blk, w3_ref[kh, kw],
                                preferred_element_type=jnp.float32)
    acc = acc + b3_ref[...]                                       # (M, 3) f32

    # ---- lane-dense NCHW store: (N, Cout, H*W), last dim = H*W = 256 ----
    o_ref[...] = jnp.transpose(acc.reshape(N, H * W, C3), (0, 2, 1))


def _srcnn_forward_impl(x_nchw, params):
    """NCHW in / NCHW out.  One fused Pallas call, tiny XLA prep for conv1 patches."""
    N, C0, H, W = x_nchw.shape
    assert C0 == 3, C0
    KH1 = KW1 = 9
    P1 = 4

    # Tiny XLA prep (input-only dependence): NCHW->NHWC, zero pad, im2col for
    # conv1, bf16 cast.  ~250 KB, single small fusion feeding the fused kernel.
    x = jnp.transpose(x_nchw, (0, 2, 3, 1)).astype(jnp.bfloat16)          # (N,H,W,3)
    xp = jnp.pad(x, ((0, 0), (P1, P1), (P1, P1), (0, 0)))                 # (N,H+8,W+8,3)
    patches = jnp.concatenate(
        [xp[:, kh:kh + H, kw:kw + W, :]
         for kh in range(KH1) for kw in range(KW1)], axis=-1)             # (N,H,W,243)
    p1 = patches.reshape(N * H * W, KH1 * KW1 * C0)                       # (M, 243)

    w1r = params["w1"].reshape(KH1 * KW1 * C0, -1).astype(jnp.bfloat16)   # (243, 64)
    w2r = params["w2"].reshape(64, 32).astype(jnp.bfloat16)               # (64, 32)
    w3r = params["w3"].astype(jnp.bfloat16)                               # (5,5,32,3)
    b1 = params["b1"].reshape(1, -1).astype(jnp.float32)
    b2 = params["b2"].reshape(1, -1).astype(jnp.float32)
    b3 = params["b3"].reshape(1, -1).astype(jnp.float32)

    kernel = functools.partial(_srcnn_kernel, N=N, H=H, W=W)
    out = pl.pallas_call(
        kernel,
        out_shape=jax.ShapeDtypeStruct((N, 3, H * W), jnp.float32),
    )(p1, w1r, b1, w2r, b2, w3r, b3)

    return out.reshape(N, 3, H, W)     # pure metadata-size reshape to NCHW


srcnn_forward = jax.jit(_srcnn_forward_impl)


def init_srcnn_params(key):
    """Deterministic SRCNN parameters (HWIO weight layout), PyTorch-style init."""
    ks = jax.random.split(key, 6)

    def _w(k, kh, kw, cin, cout):
        bound = 1.0 / jnp.sqrt(jnp.float32(kh * kw * cin))
        return jax.random.uniform(k, (kh, kw, cin, cout), jnp.float32, -bound, bound)

    def _b(k, kh, kw, cin, cout):
        bound = 1.0 / jnp.sqrt(jnp.float32(kh * kw * cin))
        return jax.random.uniform(k, (cout,), jnp.float32, -bound, bound)

    return {
        "w1": _w(ks[0], 9, 9, 3, 64),  "b1": _b(ks[1], 9, 9, 3, 64),
        "w2": _w(ks[2], 1, 1, 64, 32), "b2": _b(ks[3], 1, 1, 64, 32),
        "w3": _w(ks[4], 5, 5, 32, 3),  "b3": _b(ks[5], 5, 5, 32, 3),
    }


def _reference_forward(x_nchw, params, *, bf16):
    """Pure-JAX reference (lax.conv).  bf16=True mirrors the kernel's MXU
    quantization (bf16 operands, f32 accumulation, f32 bias/ReLU)."""
    dt = jnp.bfloat16 if bf16 else jnp.float32

    def conv(x, w, b, pad, relu):
        y = jax.lax.conv_general_dilated(
            x.astype(dt), w.astype(dt), window_strides=(1, 1),
            padding=[(pad, pad), (pad, pad)],
            dimension_numbers=("NHWC", "HWIO", "NHWC"),
            preferred_element_type=jnp.float32)
        y = y + b.reshape(1, 1, 1, -1)
        return jnp.maximum(y, 0.0) if relu else y

    x = jnp.transpose(x_nchw, (0, 2, 3, 1))
    x = conv(x, params["w1"], params["b1"], 4, True)
    x = conv(x, params["w2"], params["b2"], 0, True)
    x = conv(x, params["w3"], params["b3"], 2, False)
    return jnp.transpose(x, (0, 3, 1, 2))


if __name__ == "__main__":
    key = jax.random.PRNGKey(0)
    k_x, k_p = jax.random.split(key)

    # NCHW input, matching nn.Conv2d(3, ...): batch=2, channels=3, 16x16.
    x = jax.random.normal(k_x, (2, 3, 16, 16), jnp.float32)
    params = init_srcnn_params(k_p)

    out = jax.block_until_ready(srcnn_forward(x, params))
    assert out.shape == (2, 3, 16, 16), out.shape

    # Tight check vs. a reference with the same bf16 operand quantization.
    ref_b = jax.block_until_ready(_reference_forward(x, params, bf16=True))
    err_b = float(jnp.max(jnp.abs(out - ref_b)))
    assert jnp.allclose(out, ref_b, atol=5e-3, rtol=5e-3), err_b

    # Looser sanity check vs. the full-f32 reference.
    ref_f = jax.block_until_ready(_reference_forward(x, params, bf16=False))
    err_f = float(jnp.max(jnp.abs(out - ref_f)))
    assert jnp.allclose(out, ref_f, atol=5e-2, rtol=5e-2), err_f

    print("KERNEL_OK")
</pallas_src>

<mosaic_0001>
module attributes {stable_mosaic.version = 11 : i64} {
  func.func @_srcnn_kernel(%arg0: memref<512x243xbf16, #tpu.memory_space<vmem>>, %arg1: memref<243x64xbf16, #tpu.memory_space<vmem>>, %arg2: memref<1x64xf32, #tpu.memory_space<vmem>>, %arg3: memref<64x32xbf16, #tpu.memory_space<vmem>>, %arg4: memref<1x32xf32, #tpu.memory_space<vmem>>, %arg5: memref<5x5x32x3xbf16, #tpu.memory_space<vmem>>, %arg6: memref<1x3xf32, #tpu.memory_space<vmem>>, %arg7: memref<2x3x256xf32, #tpu.memory_space<vmem>>) attributes {dimension_semantics = [], scalar_prefetch = 0 : i64, scratch_operands = 0 : i64, tpu.core_type = #tpu.core_type<tc>} {
    %c0 = arith.constant 0 : index
    %c0_0 = arith.constant 0 : index
    %0 = vector.load %arg0[%c0, %c0_0] : memref<512x243xbf16, #tpu.memory_space<vmem>>, vector<512x243xbf16>
    %c0_1 = arith.constant 0 : index
    %c0_2 = arith.constant 0 : index
    %1 = vector.load %arg1[%c0_1, %c0_2] : memref<243x64xbf16, #tpu.memory_space<vmem>>, vector<243x64xbf16>
    %cst = arith.constant dense<0.000000e+00> : vector<512x64xf32>
    %2 = tpu.matmul %0, %1, %cst {dimension_numbers = #tpu.dot_dimension_numbers<[1], [0], [0], [1], [0, 0, 1, 1], [], []>} : vector<512x243xbf16>, vector<243x64xbf16>, vector<512x64xf32> -> vector<512x64xf32>
    %c0_3 = arith.constant 0 : index
    %c0_4 = arith.constant 0 : index
    %3 = vector.load %arg2[%c0_3, %c0_4] : memref<1x64xf32, #tpu.memory_space<vmem>>, vector<1x64xf32>
    %4 = vector.broadcast %3 : vector<1x64xf32> to vector<512x64xf32>
    %5 = arith.addf %2, %4 : vector<512x64xf32>
    %cst_5 = arith.constant 0.000000e+00 : f32
    %6 = vector.broadcast %cst_5 : f32 to vector<512x64xf32>
    %7 = arith.maximumf %5, %6 : vector<512x64xf32>
    %8 = arith.truncf %7 : vector<512x64xf32> to vector<512x64xbf16>
    %c0_6 = arith.constant 0 : index
    %c0_7 = arith.constant 0 : index
    %9 = vector.load %arg3[%c0_6, %c0_7] : memref<64x32xbf16, #tpu.memory_space<vmem>>, vector<64x32xbf16>
    %cst_8 = arith.constant dense<0.000000e+00> : vector<512x32xf32>
    %10 = tpu.matmul %8, %9, %cst_8 {dimension_numbers = #tpu.dot_dimension_numbers<[1], [0], [0], [1], [0, 0, 1, 1], [], []>} : vector<512x64xbf16>, vector<64x32xbf16>, vector<512x32xf32> -> vector<512x32xf32>
    %c0_9 = arith.constant 0 : index
    %c0_10 = arith.constant 0 : index
    %11 = vector.load %arg4[%c0_9, %c0_10] : memref<1x32xf32, #tpu.memory_space<vmem>>, vector<1x32xf32>
    %12 = vector.broadcast %11 : vector<1x32xf32> to vector<512x32xf32>
    %13 = arith.addf %10, %12 : vector<512x32xf32>
    %cst_11 = arith.constant 0.000000e+00 : f32
    %14 = vector.broadcast %cst_11 : f32 to vector<512x32xf32>
    %15 = arith.maximumf %13, %14 : vector<512x32xf32>
    %16 = arith.truncf %15 : vector<512x32xf32> to vector<512x32xbf16>
    %17 = vector.shape_cast %16 : vector<512x32xbf16> to vector<2x16x16x32xbf16>
    %cst_12 = arith.constant 0.000000e+00 : bf16
    %18 = vector.broadcast %cst_12 : bf16 to vector<2x2x16x32xbf16>
    %19 = tpu.concatenate %18, %17, %18 in 1 : vector<2x2x16x32xbf16>, vector<2x16x16x32xbf16>, vector<2x2x16x32xbf16> -> vector<2x20x16x32xbf16>
    %cst_13 = arith.constant 0.000000e+00 : bf16
    %20 = vector.broadcast %cst_13 : bf16 to vector<2x20x8x32xbf16>
    %21 = tpu.concatenate %20, %19, %20 in 2 : vector<2x20x8x32xbf16>, vector<2x20x16x32xbf16>, vector<2x20x8x32xbf16> -> vector<2x20x32x32xbf16>
    %cst_14 = arith.constant 0.000000e+00 : f32
    %22 = vector.broadcast %cst_14 : f32 to vector<512x3xf32>
    %23 = vector.extract_strided_slice %21 {offsets = [0, 0, 6, 0], sizes = [2, 20, 16, 32], strides = [1, 1, 1, 1]} : vector<2x20x32x32xbf16> to vector<2x20x16x32xbf16>
    %24 = vector.extract_strided_slice %23 {offsets = [0, 0, 0, 0], sizes = [2, 16, 16, 32], strides = [1, 1, 1, 1]} : vector<2x20x16x32xbf16> to vector<2x16x16x32xbf16>
    %25 = vector.shape_cast %24 : vector<2x16x16x32xbf16> to vector<512x32xbf16>
    %c0_15 = arith.constant 0 : index
    %c0_16 = arith.constant 0 : index
    %c0_17 = arith.constant 0 : index
    %c0_18 = arith.constant 0 : index
    %26 = vector.load %arg5[%c0_15, %c0_16, %c0_17, %c0_18] : memref<5x5x32x3xbf16, #tpu.memory_space<vmem>>, vector<1x1x32x3xbf16>
    %27 = vector.shape_cast %26 : vector<1x1x32x3xbf16> to vector<32x3xbf16>
    %cst_19 = arith.constant dense<0.000000e+00> : vector<512x3xf32>
    %28 = tpu.matmul %25, %27, %cst_19 {dimension_numbers = #tpu.dot_dimension_numbers<[1], [0], [0], [1], [0, 0, 1, 1], [], []>} : vector<512x32xbf16>, vector<32x3xbf16>, vector<512x3xf32> -> vector<512x3xf32>
    %29 = arith.addf %22, %28 : vector<512x3xf32>
    %30 = vector.extract_strided_slice %23 {offsets = [0, 1, 0, 0], sizes = [2, 16, 16, 32], strides = [1, 1, 1, 1]} : vector<2x20x16x32xbf16> to vector<2x16x16x32xbf16>
    %31 = vector.shape_cast %30 : vector<2x16x16x32xbf16> to vector<512x32xbf16>
    %c1 = arith.constant 1 : index
    %c0_20 = arith.constant 0 : index
    %c0_21 = arith.constant 0 : index
    %c0_22 = arith.constant 0 : index
    %32 = vector.load %arg5[%c1, %c0_20, %c0_21, %c0_22] : memref<5x5x32x3xbf16, #tpu.memory_space<vmem>>, vector<1x1x32x3xbf16>
    %33 = vector.shape_cast %32 : vector<1x1x32x3xbf16> to vector<32x3xbf16>
    %cst_23 = arith.constant dense<0.000000e+00> : vector<512x3xf32>
    %34 = tpu.matmul %31, %33, %cst_23 {dimension_numbers = #tpu.dot_dimension_numbers<[1], [0], [0], [1], [0, 0, 1, 1], [], []>} : vector<512x32xbf16>, vector<32x3xbf16>, vector<512x3xf32> -> vector<512x3xf32>
    %35 = arith.addf %29, %34 : vector<512x3xf32>
    %36 = vector.extract_strided_slice %23 {offsets = [0, 2, 0, 0], sizes = [2, 16, 16, 32], strides = [1, 1, 1, 1]} : vector<2x20x16x32xbf16> to vector<2x16x16x32xbf16>
    %37 = vector.shape_cast %36 : vector<2x16x16x32xbf16> to vector<512x32xbf16>
    %c2 = arith.constant 2 : index
    %c0_24 = arith.constant 0 : index
    %c0_25 = arith.constant 0 : index
    %c0_26 = arith.constant 0 : index
    %38 = vector.load %arg5[%c2, %c0_24, %c0_25, %c0_26] : memref<5x5x32x3xbf16, #tpu.memory_space<vmem>>, vector<1x1x32x3xbf16>
    %39 = vector.shape_cast %38 : vector<1x1x32x3xbf16> to vector<32x3xbf16>
    %cst_27 = arith.constant dense<0.000000e+00> : vector<512x3xf32>
    %40 = tpu.matmul %37, %39, %cst_27 {dimension_numbers = #tpu.dot_dimension_numbers<[1], [0], [0], [1], [0, 0, 1, 1], [], []>} : vector<512x32xbf16>, vector<32x3xbf16>, vector<512x3xf32> -> vector<512x3xf32>
    %41 = arith.addf %35, %40 : vector<512x3xf32>
    %42 = vector.extract_strided_slice %23 {offsets = [0, 3, 0, 0], sizes = [2, 16, 16, 32], strides = [1, 1, 1, 1]} : vector<2x20x16x32xbf16> to vector<2x16x16x32xbf16>
    %43 = vector.shape_cast %42 : vector<2x16x16x32xbf16> to vector<512x32xbf16>
    %c3 = arith.constant 3 : index
    %c0_28 = arith.constant 0 : index
    %c0_29 = arith.constant 0 : index
    %c0_30 = arith.constant 0 : index
    %44 = vector.load %arg5[%c3, %c0_28, %c0_29, %c0_30] : memref<5x5x32x3xbf16, #tpu.memory_space<vmem>>, vector<1x1x32x3xbf16>
    %45 = vector.shape_cast %44 : vector<1x1x32x3xbf16> to vector<32x3xbf16>
    %cst_31 = arith.constant dense<0.000000e+00> : vector<512x3xf32>
    %46 = tpu.matmul %43, %45, %cst_31 {dimension_numbers = #tpu.dot_dimension_numbers<[1], [0], [0], [1], [0, 0, 1, 1], [], []>} : vector<512x32xbf16>, vector<32x3xbf16>, vector<512x3xf32> -> vector<512x3xf32>
    %47 = arith.addf %41, %46 : vector<512x3xf32>
    %48 = vector.extract_strided_slice %23 {offsets = [0, 4, 0, 0], sizes = [2, 16, 16, 32], strides = [1, 1, 1, 1]} : vector<2x20x16x32xbf16> to vector<2x16x16x32xbf16>
    %49 = vector.shape_cast %48 : vector<2x16x16x32xbf16> to vector<512x32xbf16>
    %c4 = arith.constant 4 : index
    %c0_32 = arith.constant 0 : index
    %c0_33 = arith.constant 0 : index
    %c0_34 = arith.constant 0 : index
    %50 = vector.load %arg5[%c4, %c0_32, %c0_33, %c0_34] : memref<5x5x32x3xbf16, #tpu.memory_space<vmem>>, vector<1x1x32x3xbf16>
    %51 = vector.shape_cast %50 : vector<1x1x32x3xbf16> to vector<32x3xbf16>
    %cst_35 = arith.constant dense<0.000000e+00> : vector<512x3xf32>
    %52 = tpu.matmul %49, %51, %cst_35 {dimension_numbers = #tpu.dot_dimension_numbers<[1], [0], [0], [1], [0, 0, 1, 1], [], []>} : vector<512x32xbf16>, vector<32x3xbf16>, vector<512x3xf32> -> vector<512x3xf32>
    %53 = arith.addf %47, %52 : vector<512x3xf32>
    %54 = vector.extract_strided_slice %21 {offsets = [0, 0, 7, 0], sizes = [2, 20, 16, 32], strides = [1, 1, 1, 1]} : vector<2x20x32x32xbf16> to vector<2x20x16x32xbf16>
    %55 = vector.extract_strided_slice %54 {offsets = [0, 0, 0, 0], sizes = [2, 16, 16, 32], strides = [1, 1, 1, 1]} : vector<2x20x16x32xbf16> to vector<2x16x16x32xbf16>
    %56 = vector.shape_cast %55 : vector<2x16x16x32xbf16> to vector<512x32xbf16>
    %c0_36 = arith.constant 0 : index
    %c1_37 = arith.constant 1 : index
    %c0_38 = arith.constant 0 : index
    %c0_39 = arith.constant 0 : index
    %57 = vector.load %arg5[%c0_36, %c1_37, %c0_38, %c0_39] : memref<5x5x32x3xbf16, #tpu.memory_space<vmem>>, vector<1x1x32x3xbf16>
    %58 = vector.shape_cast %57 : vector<1x1x32x3xbf16> to vector<32x3xbf16>
    %cst_40 = arith.constant dense<0.000000e+00> : vector<512x3xf32>
    %59 = tpu.matmul %56, %58, %cst_40 {dimension_numbers = #tpu.dot_dimension_numbers<[1], [0], [0], [1], [0, 0, 1, 1], [], []>} : vector<512x32xbf16>, vector<32x3xbf16>, vector<512x3xf32> -> vector<512x3xf32>
    %60 = arith.addf %53, %59 : vector<512x3xf32>
    %61 = vector.extract_strided_slice %54 {offsets = [0, 1, 0, 0], sizes = [2, 16, 16, 32], strides = [1, 1, 1, 1]} : vector<2x20x16x32xbf16> to vector<2x16x16x32xbf16>
    %62 = vector.shape_cast %61 : vector<2x16x16x32xbf16> to vector<512x32xbf16>
    %c1_41 = arith.constant 1 : index
    %c1_42 = arith.constant 1 : index
    %c0_43 = arith.constant 0 : index
    %c0_44 = arith.constant 0 : index
    %63 = vector.load %arg5[%c1_41, %c1_42, %c0_43, %c0_44] : memref<5x5x32x3xbf16, #tpu.memory_space<vmem>>, vector<1x1x32x3xbf16>
    %64 = vector.shape_cast %63 : vector<1x1x32x3xbf16> to vector<32x3xbf16>
    %cst_45 = arith.constant dense<0.000000e+00> : vector<512x3xf32>
    %65 = tpu.matmul %62, %64, %cst_45 {dimension_numbers = #tpu.dot_dimension_numbers<[1], [0], [0], [1], [0, 0, 1, 1], [], []>} : vector<512x32xbf16>, vector<32x3xbf16>, vector<512x3xf32> -> vector<512x3xf32>
    %66 = arith.addf %60, %65 : vector<512x3xf32>
    %67 = vector.extract_strided_slice %54 {offsets = [0, 2, 0, 0], sizes = [2, 16, 16, 32], strides = [1, 1, 1, 1]} : vector<2x20x16x32xbf16> to vector<2x16x16x32xbf16>
    %68 = vector.shape_cast %67 : vector<2x16x16x32xbf16> to vector<512x32xbf16>
    %c2_46 = arith.constant 2 : index
    %c1_47 = arith.constant 1 : index
    %c0_48 = arith.constant 0 : index
    %c0_49 = arith.constant 0 : index
    %69 = vector.load %arg5[%c2_46, %c1_47, %c0_48, %c0_49] : memref<5x5x32x3xbf16, #tpu.memory_space<vmem>>, vector<1x1x32x3xbf16>
    %70 = vector.shape_cast %69 : vector<1x1x32x3xbf16> to vector<32x3xbf16>
    %cst_50 = arith.constant dense<0.000000e+00> : vector<512x3xf32>
    %71 = tpu.matmul %68, %70, %cst_50 {dimension_numbers = #tpu.dot_dimension_numbers<[1], [0], [0], [1], [0, 0, 1, 1], [], []>} : vector<512x32xbf16>, vector<32x3xbf16>, vector<512x3xf32> -> vector<512x3xf32>
    %72 = arith.addf %66, %71 : vector<512x3xf32>
    %73 = vector.extract_strided_slice %54 {offsets = [0, 3, 0, 0], sizes = [2, 16, 16, 32], strides = [1, 1, 1, 1]} : vector<2x20x16x32xbf16> to vector<2x16x16x32xbf16>
    %74 = vector.shape_cast %73 : vector<2x16x16x32xbf16> to vector<512x32xbf16>
    %c3_51 = arith.constant 3 : index
    %c1_52 = arith.constant 1 : index
    %c0_53 = arith.constant 0 : index
    %c0_54 = arith.constant 0 : index
    %75 = vector.load %arg5[%c3_51, %c1_52, %c0_53, %c0_54] : memref<5x5x32x3xbf16, #tpu.memory_space<vmem>>, vector<1x1x32x3xbf16>
    %76 = vector.shape_cast %75 : vector<1x1x32x3xbf16> to vector<32x3xbf16>
    %cst_55 = arith.constant dense<0.000000e+00> : vector<512x3xf32>
    %77 = tpu.matmul %74, %76, %cst_55 {dimension_numbers = #tpu.dot_dimension_numbers<[1], [0], [0], [1], [0, 0, 1, 1], [], []>} : vector<512x32xbf16>, vector<32x3xbf16>, vector<512x3xf32> -> vector<512x3xf32>
    %78 = arith.addf %72, %77 : vector<512x3xf32>
    %79 = vector.extract_strided_slice %54 {offsets = [0, 4, 0, 0], sizes = [2, 16, 16, 32], strides = [1, 1, 1, 1]} : vector<2x20x16x32xbf16> to vector<2x16x16x32xbf16>
    %80 = vector.shape_cast %79 : vector<2x16x16x32xbf16> to vector<512x32xbf16>
    %c4_56 = arith.constant 4 : index
    %c1_57 = arith.constant 1 : index
    %c0_58 = arith.constant 0 : index
    %c0_59 = arith.constant 0 : index
    %81 = vector.load %arg5[%c4_56, %c1_57, %c0_58, %c0_59] : memref<5x5x32x3xbf16, #tpu.memory_space<vmem>>, vector<1x1x32x3xbf16>
    %82 = vector.shape_cast %81 : vector<1x1x32x3xbf16> to vector<32x3xbf16>
    %cst_60 = arith.constant dense<0.000000e+00> : vector<512x3xf32>
    %83 = tpu.matmul %80, %82, %cst_60 {dimension_numbers = #tpu.dot_dimension_numbers<[1], [0], [0], [1], [0, 0, 1, 1], [], []>} : vector<512x32xbf16>, vector<32x3xbf16>, vector<512x3xf32> -> vector<512x3xf32>
    %84 = arith.addf %78, %83 : vector<512x3xf32>
    %85 = vector.extract_strided_slice %21 {offsets = [0, 0, 8, 0], sizes = [2, 20, 16, 32], strides = [1, 1, 1, 1]} : vector<2x20x32x32xbf16> to vector<2x20x16x32xbf16>
    %86 = vector.extract_strided_slice %85 {offsets = [0, 0, 0, 0], sizes = [2, 16, 16, 32], strides = [1, 1, 1, 1]} : vector<2x20x16x32xbf16> to vector<2x16x16x32xbf16>
    %87 = vector.shape_cast %86 : vector<2x16x16x32xbf16> to vector<512x32xbf16>
    %c0_61 = arith.constant 0 : index
    %c2_62 = arith.constant 2 : index
    %c0_63 = arith.constant 0 : index
    %c0_64 = arith.constant 0 : index
    %88 = vector.load %arg5[%c0_61, %c2_62, %c0_63, %c0_64] : memref<5x5x32x3xbf16, #tpu.memory_space<vmem>>, vector<1x1x32x3xbf16>
    %89 = vector.shape_cast %88 : vector<1x1x32x3xbf16> to vector<32x3xbf16>
    %cst_65 = arith.constant dense<0.000000e+00> : vector<512x3xf32>
    %90 = tpu.matmul %87, %89, %cst_65 {dimension_numbers = #tpu.dot_dimension_numbers<[1], [0], [0], [1], [0, 0, 1, 1], [], []>} : vector<512x32xbf16>, vector<32x3xbf16>, vector<512x3xf32> -> vector<512x3xf32>
    %91 = arith.addf %84, %90 : vector<512x3xf32>
    %92 = vector.extract_strided_slice %85 {offsets = [0, 1, 0, 0], sizes = [2, 16, 16, 32], strides = [1, 1, 1, 1]} : vector<2x20x16x32xbf16> to vector<2x16x16x32xbf16>
    %93 = vector.shape_cast %92 : vector<2x16x16x32xbf16> to vector<512x32xbf16>
    %c1_66 = arith.constant 1 : index
    %c2_67 = arith.constant 2 : index
    %c0_68 = arith.constant 0 : index
    %c0_69 = arith.constant 0 : index
    %94 = vector.load %arg5[%c1_66, %c2_67, %c0_68, %c0_69] : memref<5x5x32x3xbf16, #tpu.memory_space<vmem>>, vector<1x1x32x3xbf16>
    %95 = vector.shape_cast %94 : vector<1x1x32x3xbf16> to vector<32x3xbf16>
    %cst_70 = arith.constant dense<0.000000e+00> : vector<512x3xf32>
    %96 = tpu.matmul %93, %95, %cst_70 {dimension_numbers = #tpu.dot_dimension_numbers<[1], [0], [0], [1], [0, 0, 1, 1], [], []>} : vector<512x32xbf16>, vector<32x3xbf16>, vector<512x3xf32> -> vector<512x3xf32>
    %97 = arith.addf %91, %96 : vector<512x3xf32>
    %98 = vector.extract_strided_slice %85 {offsets = [0, 2, 0, 0], sizes = [2, 16, 16, 32], strides = [1, 1, 1, 1]} : vector<2x20x16x32xbf16> to vector<2x16x16x32xbf16>
    %99 = vector.shape_cast %98 : vector<2x16x16x32xbf16> to vector<512x32xbf16>
    %c2_71 = arith.constant 2 : index
    %c2_72 = arith.constant 2 : index
    %c0_73 = arith.constant 0 : index
    %c0_74 = arith.constant 0 : index
    %100 = vector.load %arg5[%c2_71, %c2_72, %c0_73, %c0_74] : memref<5x5x32x3xbf16, #tpu.memory_space<vmem>>, vector<1x1x32x3xbf16>
    %101 = vector.shape_cast %100 : vector<1x1x32x3xbf16> to vector<32x3xbf16>
    %cst_75 = arith.constant dense<0.000000e+00> : vector<512x3xf32>
    %102 = tpu.matmul %99, %101, %cst_75 {dimension_numbers = #tpu.dot_dimension_numbers<[1], [0], [0], [1], [0, 0, 1, 1], [], []>} : vector<512x32xbf16>, vector<32x3xbf16>, vector<512x3xf32> -> vector<512x3xf32>
    %103 = arith.addf %97, %102 : vector<512x3xf32>
    %104 = vector.extract_strided_slice %85 {offsets = [0, 3, 0, 0], sizes = [2, 16, 16, 32], strides = [1, 1, 1, 1]} : vector<2x20x16x32xbf16> to vector<2x16x16x32xbf16>
    %105 = vector.shape_cast %104 : vector<2x16x16x32xbf16> to vector<512x32xbf16>
    %c3_76 = arith.constant 3 : index
    %c2_77 = arith.constant 2 : index
    %c0_78 = arith.constant 0 : index
    %c0_79 = arith.constant 0 : index
    %106 = vector.load %arg5[%c3_76, %c2_77, %c0_78, %c0_79] : memref<5x5x32x3xbf16, #tpu.memory_space<vmem>>, vector<1x1x32x3xbf16>
    %107 = vector.shape_cast %106 : vector<1x1x32x3xbf16> to vector<32x3xbf16>
    %cst_80 = arith.constant dense<0.000000e+00> : vector<512x3xf32>
    %108 = tpu.matmul %105, %107, %cst_80 {dimension_numbers = #tpu.dot_dimension_numbers<[1], [0], [0], [1], [0, 0, 1, 1], [], []>} : vector<512x32xbf16>, vector<32x3xbf16>, vector<512x3xf32> -> vector<512x3xf32>
    %109 = arith.addf %103, %108 : vector<512x3xf32>
    %110 = vector.extract_strided_slice %85 {offsets = [0, 4, 0, 0], sizes = [2, 16, 16, 32], strides = [1, 1, 1, 1]} : vector<2x20x16x32xbf16> to vector<2x16x16x32xbf16>
    %111 = vector.shape_cast %110 : vector<2x16x16x32xbf16> to vector<512x32xbf16>
    %c4_81 = arith.constant 4 : index
    %c2_82 = arith.constant 2 : index
    %c0_83 = arith.constant 0 : index
    %c0_84 = arith.constant 0 : index
    %112 = vector.load %arg5[%c4_81, %c2_82, %c0_83, %c0_84] : memref<5x5x32x3xbf16, #tpu.memory_space<vmem>>, vector<1x1x32x3xbf16>
    %113 = vector.shape_cast %112 : vector<1x1x32x3xbf16> to vector<32x3xbf16>
    %cst_85 = arith.constant dense<0.000000e+00> : vector<512x3xf32>
    %114 = tpu.matmul %111, %113, %cst_85 {dimension_numbers = #tpu.dot_dimension_numbers<[1], [0], [0], [1], [0, 0, 1, 1], [], []>} : vector<512x32xbf16>, vector<32x3xbf16>, vector<512x3xf32> -> vector<512x3xf32>
    %115 = arith.addf %109, %114 : vector<512x3xf32>
    %116 = vector.extract_strided_slice %21 {offsets = [0, 0, 9, 0], sizes = [2, 20, 16, 32], strides = [1, 1, 1, 1]} : vector<2x20x32x32xbf16> to vector<2x20x16x32xbf16>
    %117 = vector.extract_strided_slice %116 {offsets = [0, 0, 0, 0], sizes = [2, 16, 16, 32], strides = [1, 1, 1, 1]} : vector<2x20x16x32xbf16> to vector<2x16x16x32xbf16>
    %118 = vector.shape_cast %117 : vector<2x16x16x32xbf16> to vector<512x32xbf16>
    %c0_86 = arith.constant 0 : index
    %c3_87 = arith.constant 3 : index
    %c0_88 = arith.constant 0 : index
    %c0_89 = arith.constant 0 : index
    %119 = vector.load %arg5[%c0_86, %c3_87, %c0_88, %c0_89] : memref<5x5x32x3xbf16, #tpu.memory_space<vmem>>, vector<1x1x32x3xbf16>
    %120 = vector.shape_cast %119 : vector<1x1x32x3xbf16> to vector<32x3xbf16>
    %cst_90 = arith.constant dense<0.000000e+00> : vector<512x3xf32>
    %121 = tpu.matmul %118, %120, %cst_90 {dimension_numbers = #tpu.dot_dimension_numbers<[1], [0], [0], [1], [0, 0, 1, 1], [], []>} : vector<512x32xbf16>, vector<32x3xbf16>, vector<512x3xf32> -> vector<512x3xf32>
    %122 = arith.addf %115, %121 : vector<512x3xf32>
    %123 = vector.extract_strided_slice %116 {offsets = [0, 1, 0, 0], sizes = [2, 16, 16, 32], strides = [1, 1, 1, 1]} : vector<2x20x16x32xbf16> to vector<2x16x16x32xbf16>
    %124 = vector.shape_cast %123 : vector<2x16x16x32xbf16> to vector<512x32xbf16>
    %c1_91 = arith.constant 1 : index
    %c3_92 = arith.constant 3 : index
    %c0_93 = arith.constant 0 : index
    %c0_94 = arith.constant 0 : index
    %125 = vector.load %arg5[%c1_91, %c3_92, %c0_93, %c0_94] : memref<5x5x32x3xbf16, #tpu.memory_space<vmem>>, vector<1x1x32x3xbf16>
    %126 = vector.shape_cast %125 : vector<1x1x32x3xbf16> to vector<32x3xbf16>
    %cst_95 = arith.constant dense<0.000000e+00> : vector<512x3xf32>
    %127 = tpu.matmul %124, %126, %cst_95 {dimension_numbers = #tpu.dot_dimension_numbers<[1], [0], [0], [1], [0, 0, 1, 1], [], []>} : vector<512x32xbf16>, vector<32x3xbf16>, vector<512x3xf32> -> vector<512x3xf32>
    %128 = arith.addf %122, %127 : vector<512x3xf32>
    %129 = vector.extract_strided_slice %116 {offsets = [0, 2, 0, 0], sizes = [2, 16, 16, 32], strides = [1, 1, 1, 1]} : vector<2x20x16x32xbf16> to vector<2x16x16x32xbf16>
    %130 = vector.shape_cast %129 : vector<2x16x16x32xbf16> to vector<512x32xbf16>
    %c2_96 = arith.constant 2 : index
    %c3_97 = arith.constant 3 : index
    %c0_98 = arith.constant 0 : index
    %c0_99 = arith.constant 0 : index
    %131 = vector.load %arg5[%c2_96, %c3_97, %c0_98, %c0_99] : memref<5x5x32x3xbf16, #tpu.memory_space<vmem>>, vector<1x1x32x3xbf16>
    %132 = vector.shape_cast %131 : vector<1x1x32x3xbf16> to vector<32x3xbf16>
    %cst_100 = arith.constant dense<0.000000e+00> : vector<512x3xf32>
    %133 = tpu.matmul %130, %132, %cst_100 {dimension_numbers = #tpu.dot_dimension_numbers<[1], [0], [0], [1], [0, 0, 1, 1], [], []>} : vector<512x32xbf16>, vector<32x3xbf16>, vector<512x3xf32> -> vector<512x3xf32>
    %134 = arith.addf %128, %133 : vector<512x3xf32>
    %135 = vector.extract_strided_slice %116 {offsets = [0, 3, 0, 0], sizes = [2, 16, 16, 32], strides = [1, 1, 1, 1]} : vector<2x20x16x32xbf16> to vector<2x16x16x32xbf16>
    %136 = vector.shape_cast %135 : vector<2x16x16x32xbf16> to vector<512x32xbf16>
    %c3_101 = arith.constant 3 : index
    %c3_102 = arith.constant 3 : index
    %c0_103 = arith.constant 0 : index
    %c0_104 = arith.constant 0 : index
    %137 = vector.load %arg5[%c3_101, %c3_102, %c0_103, %c0_104] : memref<5x5x32x3xbf16, #tpu.memory_space<vmem>>, vector<1x1x32x3xbf16>
    %138 = vector.shape_cast %137 : vector<1x1x32x3xbf16> to vector<32x3xbf16>
    %cst_105 = arith.constant dense<0.000000e+00> : vector<512x3xf32>
    %139 = tpu.matmul %136, %138, %cst_105 {dimension_numbers = #tpu.dot_dimension_numbers<[1], [0], [0], [1], [0, 0, 1, 1], [], []>} : vector<512x32xbf16>, vector<32x3xbf16>, vector<512x3xf32> -> vector<512x3xf32>
    %140 = arith.addf %134, %139 : vector<512x3xf32>
    %141 = vector.extract_strided_slice %116 {offsets = [0, 4, 0, 0], sizes = [2, 16, 16, 32], strides = [1, 1, 1, 1]} : vector<2x20x16x32xbf16> to vector<2x16x16x32xbf16>
    %142 = vector.shape_cast %141 : vector<2x16x16x32xbf16> to vector<512x32xbf16>
    %c4_106 = arith.constant 4 : index
    %c3_107 = arith.constant 3 : index
    %c0_108 = arith.constant 0 : index
    %c0_109 = arith.constant 0 : index
    %143 = vector.load %arg5[%c4_106, %c3_107, %c0_108, %c0_109] : memref<5x5x32x3xbf16, #tpu.memory_space<vmem>>, vector<1x1x32x3xbf16>
    %144 = vector.shape_cast %143 : vector<1x1x32x3xbf16> to vector<32x3xbf16>
    %cst_110 = arith.constant dense<0.000000e+00> : vector<512x3xf32>
    %145 = tpu.matmul %142, %144, %cst_110 {dimension_numbers = #tpu.dot_dimension_numbers<[1], [0], [0], [1], [0, 0, 1, 1], [], []>} : vector<512x32xbf16>, vector<32x3xbf16>, vector<512x3xf32> -> vector<512x3xf32>
    %146 = arith.addf %140, %145 : vector<512x3xf32>
    %147 = vector.extract_strided_slice %21 {offsets = [0, 0, 10, 0], sizes = [2, 20, 16, 32], strides = [1, 1, 1, 1]} : vector<2x20x32x32xbf16> to vector<2x20x16x32xbf16>
    %148 = vector.extract_strided_slice %147 {offsets = [0, 0, 0, 0], sizes = [2, 16, 16, 32], strides = [1, 1, 1, 1]} : vector<2x20x16x32xbf16> to vector<2x16x16x32xbf16>
    %149 = vector.shape_cast %148 : vector<2x16x16x32xbf16> to vector<512x32xbf16>
    %c0_111 = arith.constant 0 : index
    %c4_112 = arith.constant 4 : index
    %c0_113 = arith.constant 0 : index
    %c0_114 = arith.constant 0 : index
    %150 = vector.load %arg5[%c0_111, %c4_112, %c0_113, %c0_114] : memref<5x5x32x3xbf16, #tpu.memory_space<vmem>>, vector<1x1x32x3xbf16>
    %151 = vector.shape_cast %150 : vector<1x1x32x3xbf16> to vector<32x3xbf16>
    %cst_115 = arith.constant dense<0.000000e+00> : vector<512x3xf32>
    %152 = tpu.matmul %149, %151, %cst_115 {dimension_numbers = #tpu.dot_dimension_numbers<[1], [0], [0], [1], [0, 0, 1, 1], [], []>} : vector<512x32xbf16>, vector<32x3xbf16>, vector<512x3xf32> -> vector<512x3xf32>
    %153 = arith.addf %146, %152 : vector<512x3xf32>
    %154 = vector.extract_strided_slice %147 {offsets = [0, 1, 0, 0], sizes = [2, 16, 16, 32], strides = [1, 1, 1, 1]} : vector<2x20x16x32xbf16> to vector<2x16x16x32xbf16>
    %155 = vector.shape_cast %154 : vector<2x16x16x32xbf16> to vector<512x32xbf16>
    %c1_116 = arith.constant 1 : index
    %c4_117 = arith.constant 4 : index
    %c0_118 = arith.constant 0 : index
    %c0_119 = arith.constant 0 : index
    %156 = vector.load %arg5[%c1_116, %c4_117, %c0_118, %c0_119] : memref<5x5x32x3xbf16, #tpu.memory_space<vmem>>, vector<1x1x32x3xbf16>
    %157 = vector.shape_cast %156 : vector<1x1x32x3xbf16> to vector<32x3xbf16>
    %cst_120 = arith.constant dense<0.000000e+00> : vector<512x3xf32>
    %158 = tpu.matmul %155, %157, %cst_120 {dimension_numbers = #tpu.dot_dimension_numbers<[1], [0], [0], [1], [0, 0, 1, 1], [], []>} : vector<512x32xbf16>, vector<32x3xbf16>, vector<512x3xf32> -> vector<512x3xf32>
    %159 = arith.addf %153, %158 : vector<512x3xf32>
    %160 = vector.extract_strided_slice %147 {offsets = [0, 2, 0, 0], sizes = [2, 16, 16, 32], strides = [1, 1, 1, 1]} : vector<2x20x16x32xbf16> to vector<2x16x16x32xbf16>
    %161 = vector.shape_cast %160 : vector<2x16x16x32xbf16> to vector<512x32xbf16>
    %c2_121 = arith.constant 2 : index
    %c4_122 = arith.constant 4 : index
    %c0_123 = arith.constant 0 : index
    %c0_124 = arith.constant 0 : index
    %162 = vector.load %arg5[%c2_121, %c4_122, %c0_123, %c0_124] : memref<5x5x32x3xbf16, #tpu.memory_space<vmem>>, vector<1x1x32x3xbf16>
    %163 = vector.shape_cast %162 : vector<1x1x32x3xbf16> to vector<32x3xbf16>
    %cst_125 = arith.constant dense<0.000000e+00> : vector<512x3xf32>
    %164 = tpu.matmul %161, %163, %cst_125 {dimension_numbers = #tpu.dot_dimension_numbers<[1], [0], [0], [1], [0, 0, 1, 1], [], []>} : vector<512x32xbf16>, vector<32x3xbf16>, vector<512x3xf32> -> vector<512x3xf32>
    %165 = arith.addf %159, %164 : vector<512x3xf32>
    %166 = vector.extract_strided_slice %147 {offsets = [0, 3, 0, 0], sizes = [2, 16, 16, 32], strides = [1, 1, 1, 1]} : vector<2x20x16x32xbf16> to vector<2x16x16x32xbf16>
    %167 = vector.shape_cast %166 : vector<2x16x16x32xbf16> to vector<512x32xbf16>
    %c3_126 = arith.constant 3 : index
    %c4_127 = arith.constant 4 : index
    %c0_128 = arith.constant 0 : index
    %c0_129 = arith.constant 0 : index
    %168 = vector.load %arg5[%c3_126, %c4_127, %c0_128, %c0_129] : memref<5x5x32x3xbf16, #tpu.memory_space<vmem>>, vector<1x1x32x3xbf16>
    %169 = vector.shape_cast %168 : vector<1x1x32x3xbf16> to vector<32x3xbf16>
    %cst_130 = arith.constant dense<0.000000e+00> : vector<512x3xf32>
    %170 = tpu.matmul %167, %169, %cst_130 {dimension_numbers = #tpu.dot_dimension_numbers<[1], [0], [0], [1], [0, 0, 1, 1], [], []>} : vector<512x32xbf16>, vector<32x3xbf16>, vector<512x3xf32> -> vector<512x3xf32>
    %171 = arith.addf %165, %170 : vector<512x3xf32>
    %172 = vector.extract_strided_slice %147 {offsets = [0, 4, 0, 0], sizes = [2, 16, 16, 32], strides = [1, 1, 1, 1]} : vector<2x20x16x32xbf16> to vector<2x16x16x32xbf16>
    %173 = vector.shape_cast %172 : vector<2x16x16x32xbf16> to vector<512x32xbf16>
    %c4_131 = arith.constant 4 : index
    %c4_132 = arith.constant 4 : index
    %c0_133 = arith.constant 0 : index
    %c0_134 = arith.constant 0 : index
    %174 = vector.load %arg5[%c4_131, %c4_132, %c0_133, %c0_134] : memref<5x5x32x3xbf16, #tpu.memory_space<vmem>>, vector<1x1x32x3xbf16>
    %175 = vector.shape_cast %174 : vector<1x1x32x3xbf16> to vector<32x3xbf16>
    %cst_135 = arith.constant dense<0.000000e+00> : vector<512x3xf32>
    %176 = tpu.matmul %173, %175, %cst_135 {dimension_numbers = #tpu.dot_dimension_numbers<[1], [0], [0], [1], [0, 0, 1, 1], [], []>} : vector<512x32xbf16>, vector<32x3xbf16>, vector<512x3xf32> -> vector<512x3xf32>
    %177 = arith.addf %171, %176 : vector<512x3xf32>
    %c0_136 = arith.constant 0 : index
    %c0_137 = arith.constant 0 : index
    %178 = vector.load %arg6[%c0_136, %c0_137] : memref<1x3xf32, #tpu.memory_space<vmem>>, vector<1x3xf32>
    %179 = vector.broadcast %178 : vector<1x3xf32> to vector<512x3xf32>
    %180 = arith.addf %177, %179 : vector<512x3xf32>
    %181 = vector.shape_cast %180 : vector<512x3xf32> to vector<2x256x3xf32>
    %182 = tpu.transpose %181, [0, 2, 1] : vector<2x256x3xf32> -> vector<2x3x256xf32>
    %c0_138 = arith.constant 0 : index
    %c0_139 = arith.constant 0 : index
    %c0_140 = arith.constant 0 : index
    %183 = vector.load %arg7[%c0_138, %c0_139, %c0_140] : memref<2x3x256xf32, #tpu.memory_space<vmem>>, vector<2x3x256xf32>
    tpu.vector_store %arg7[%c0_138, %c0_139, %c0_140], %182 {strides = array<i32>} : memref<2x3x256xf32, #tpu.memory_space<vmem>>, vector<2x3x256xf32>,
    return
  }
}

</mosaic_0001>

<llo_original>
// kernel: _srcnn_forward_impl.1
$region0: #{_srcnn_forward_impl.1}
  #allocation0 [shape = 'u32[]', space=smem, size = 0x4, offset = 0x4, fixed_abs, tag = 'smem constant byte address 0x4 - core index']
  #allocation1 [shape = 'u32[72,128]{1,0:T(1,128)}', space=vmem, size = 0x9000, scoped, tag = 'internal scratch']
  %s0 = inlined_call_operand.vmem [shape: bf16[512,243], index: 0, kind: input, shape index: {}]
  %s1 = inlined_call_operand.vmem [shape: bf16[243,64], index: 1, kind: input, shape index: {}]
  %s2 = inlined_call_operand.vmem [shape: f32[1,64], index: 2, kind: input, shape index: {}]
  %s3 = inlined_call_operand.vmem [shape: bf16[64,32], index: 3, kind: input, shape index: {}]
  %s4 = inlined_call_operand.vmem [shape: f32[1,32], index: 4, kind: input, shape index: {}]
  %s5 = inlined_call_operand.vmem [shape: bf16[5,5,32,3], index: 5, kind: input, shape index: {}]
  %s6 = inlined_call_operand.vmem [shape: f32[1,3], index: 6, kind: input, shape index: {}]
  %s7 = inlined_call_operand.vmem [shape: f32[2,3,256], index: 7, kind: output, shape index: {}]
  %s8 = sld [smem:[#allocation0]]
  $region38: #{_srcnn_forward_impl.1} parent=0
    _
  %s10 = ssub.s32 1, %s8
  %s11 = scalar_select 0, %s10, %s8
  // Predicated region
  $region2: #{_srcnn_forward_impl.1} parent=0 // pred_check
    _
  $region3: #{_srcnn_forward_impl.1} parent=0 // pred_check_branch
    %13 = sbr.rel (0) target = $region5
  $region4: #{_srcnn_forward_impl.1} parent=0 // pred_region
    _
  $region5: #{_srcnn_forward_impl.1} parent=0 // pred_fallthru
    _
  // Predicated region
  $region6: #{_srcnn_forward_impl.1} parent=0 // pred_check
    _
  $region7: #{_srcnn_forward_impl.1} parent=0 // pred_check_branch
    %15 = sbr.rel (0) target = $region9
  $region8: #{_srcnn_forward_impl.1} parent=0 // pred_region
    _
  $region9: #{_srcnn_forward_impl.1} parent=0 // pred_fallthru
    _
  // Predicated region
  $region10: #{_srcnn_forward_impl.1} parent=0 // pred_check
    _
  $region11: #{_srcnn_forward_impl.1} parent=0 // pred_check_branch
    %17 = sbr.rel (0) target = $region13
  $region12: #{_srcnn_forward_impl.1} parent=0 // pred_region
    _
  $region13: #{_srcnn_forward_impl.1} parent=0 // pred_fallthru
    _
  // Predicated region
  $region14: #{_srcnn_forward_impl.1} parent=0 // pred_check
    _
  $region15: #{_srcnn_forward_impl.1} parent=0 // pred_check_branch
    %19 = sbr.rel (0) target = $region17
  $region16: #{_srcnn_forward_impl.1} parent=0 // pred_region
    _
  $region17: #{_srcnn_forward_impl.1} parent=0 // pred_fallthru
    _
  // Predicated region
  $region18: #{_srcnn_forward_impl.1} parent=0 // pred_check
    _
  $region19: #{_srcnn_forward_impl.1} parent=0 // pred_check_branch
    %21 = sbr.rel (0) target = $region21
  $region20: #{_srcnn_forward_impl.1} parent=0 // pred_region
    _
  $region21: #{_srcnn_forward_impl.1} parent=0 // pred_fallthru
    _
  // Predicated region
  $region22: #{_srcnn_forward_impl.1} parent=0 // pred_check
    _
  $region23: #{_srcnn_forward_impl.1} parent=0 // pred_check_branch
    %23 = sbr.rel (0) target = $region25
  $region24: #{_srcnn_forward_impl.1} parent=0 // pred_region
    _
  $region25: #{_srcnn_forward_impl.1} parent=0 // pred_fallthru
    _
  // Predicated region
  $region26: #{_srcnn_forward_impl.1} parent=0 // pred_check
    _
  $region27: #{_srcnn_forward_impl.1} parent=0 // pred_check_branch
    %25 = sbr.rel (0) target = $region29
  $region28: #{_srcnn_forward_impl.1} parent=0 // pred_region
    _
  $region29: #{_srcnn_forward_impl.1} parent=0 // pred_fallthru
    _
  %v27 = vld [vmem:[%s0] sm:$0xff]
  %v28 = vld [vmem:[%s0 + $0x8] sm:$0xff]
  %v29 = vld [vmem:[%s0 + $0x10] sm:$0xff]
  %v30 = vld [vmem:[%s0 + $0x18] sm:$0xff]
  %v31 = vld [vmem:[%s0 + $0x20] sm:$0xff]
  %v32 = vld [vmem:[%s0 + $0x28] sm:$0xff]
  %v33 = vld [vmem:[%s0 + $0x30] sm:$0xff]
  %v34 = vld [vmem:[%s0 + $0x38] sm:$0xff]
  %v35 = vld [vmem:[%s0 + $0x40] sm:$0xff]
  %v36 = vld [vmem:[%s0 + $0x48] sm:$0xff]
  %v37 = vld [vmem:[%s0 + $0x50] sm:$0xff]
  %v38 = vld [vmem:[%s0 + $0x58] sm:$0xff]
  %v39 = vld [vmem:[%s0 + $0x60] sm:$0xff]
  %v40 = vld [vmem:[%s0 + $0x68] sm:$0xff]
  %v41 = vld [vmem:[%s0 + $0x70] sm:$0xff]
  %v42 = vld [vmem:[%s0 + $0x78] sm:$0xff]
  %v43 = vld [vmem:[%s0 + $0x80] sm:$0xff]
  %v44 = vld [vmem:[%s0 + $0x88] sm:$0xff]
  %v45 = vld [vmem:[%s0 + $0x90] sm:$0xff]
  %v46 = vld [vmem:[%s0 + $0x98] sm:$0xff]
  %v47 = vld [vmem:[%s0 + $0xa0] sm:$0xff]
  %v48 = vld [vmem:[%s0 + $0xa8] sm:$0xff]
  %v49 = vld [vmem:[%s0 + $0xb0] sm:$0xff]
  %v50 = vld [vmem:[%s0 + $0xb8] sm:$0xff]
  %v51 = vld [vmem:[%s0 + $0xc0] sm:$0xff]
  %v52 = vld [vmem:[%s0 + $0xc8] sm:$0xff]
  %v53 = vld [vmem:[%s0 + $0xd0] sm:$0xff]
  %v54 = vld [vmem:[%s0 + $0xd8] sm:$0xff]
  %v55 = vld [vmem:[%s0 + $0xe0] sm:$0xff]
  %v56 = vld [vmem:[%s0 + $0xe8] sm:$0xff]
  %v57 = vld [vmem:[%s0 + $0xf0] sm:$0xff]
  %v58 = vld [vmem:[%s0 + $0xf8] sm:$0xff]
  %v59 = vld [vmem:[%s0 + $0x100] sm:$0xff]
  %v60 = vld [vmem:[%s0 + $0x108] sm:$0xff]
  %v61 = vld [vmem:[%s0 + $0x110] sm:$0xff]
  %v62 = vld [vmem:[%s0 + $0x118] sm:$0xff]
  %v63 = vld [vmem:[%s0 + $0x120] sm:$0xff]
  %v64 = vld [vmem:[%s0 + $0x128] sm:$0xff]
  %v65 = vld [vmem:[%s0 + $0x130] sm:$0xff]
  %v66 = vld [vmem:[%s0 + $0x138] sm:$0xff]
  %v67 = vld [vmem:[%s0 + $0x140] sm:$0xff]
  %v68 = vld [vmem:[%s0 + $0x148] sm:$0xff]
  %v69 = vld [vmem:[%s0 + $0x150] sm:$0xff]
  %v70 = vld [vmem:[%s0 + $0x158] sm:$0xff]
  %v71 = vld [vmem:[%s0 + $0x160] sm:$0xff]
  %v72 = vld [vmem:[%s0 + $0x168] sm:$0xff]
  %v73 = vld [vmem:[%s0 + $0x170] sm:$0xff]
  %v74 = vld [vmem:[%s0 + $0x178] sm:$0xff]
  %v75 = vld [vmem:[%s0 + $0x180] sm:$0xff]
  %v76 = vld [vmem:[%s0 + $0x188] sm:$0xff]
  %v77 = vld [vmem:[%s0 + $0x190] sm:$0xff]
  %v78 = vld [vmem:[%s0 + $0x198] sm:$0xff]
  %v79 = vld [vmem:[%s0 + $0x1a0] sm:$0xff]
  %v80 = vld [vmem:[%s0 + $0x1a8] sm:$0xff]
  %v81 = vld [vmem:[%s0 + $0x1b0] sm:$0xff]
  %v82 = vld [vmem:[%s0 + $0x1b8] sm:$0xff]
  %v83 = vld [vmem:[%s0 + $0x1c0] sm:$0xff]
  %v84 = vld [vmem:[%s0 + $0x1c8] sm:$0xff]
  %v85 = vld [vmem:[%s0 + $0x1d0] sm:$0xff]
  %v86 = vld [vmem:[%s0 + $0x1d8] sm:$0xff]
  %v87 = vld [vmem:[%s0 + $0x1e0] sm:$0xff]
  %v88 = vld [vmem:[%s0 + $0x1e8] sm:$0xff]
  %v89 = vld [vmem:[%s0 + $0x1f0] sm:$0xff]
  %v90 = vld [vmem:[%s0 + $0x1f8] sm:$0xff]
  %v91 = vld [vmem:[%s1] sm:$0xf]
  %v92 = vld [vmem:[%s1 + $0x4] sm:$0xf]
  %v93 = vld [vmem:[%s1 + $0x8] sm:$0xf]
  %v94 = vld [vmem:[%s1 + $0xc] sm:$0xf]
  %v95 = vld [vmem:[%s1 + $0x10] sm:$0xf]
  %v96 = vld [vmem:[%s1 + $0x14] sm:$0xf]
  %v97 = vld [vmem:[%s1 + $0x18] sm:$0xf]
  %v98 = vld [vmem:[%s1 + $0x1c] sm:$0xf]
  %v99 = vld [vmem:[%s1 + $0x20] sm:$0xf]
  %v100 = vld [vmem:[%s1 + $0x24] sm:$0xf]
  %v101 = vld [vmem:[%s1 + $0x28] sm:$0xf]
  %v102 = vld [vmem:[%s1 + $0x2c] sm:$0xf]
  %v103 = vld [vmem:[%s1 + $0x30] sm:$0xf]
  %v104 = vld [vmem:[%s1 + $0x34] sm:$0xf]
  %v105 = vld [vmem:[%s1 + $0x38] sm:$0xf]
  %v106 = vld [vmem:[%s1 + $0x3c] sm:$0xf]
  %v107 = vld [vmem:[%s1 + $0x40] sm:$0xf]
  %v108 = vld [vmem:[%s1 + $0x44] sm:$0xf]
  %v109 = vld [vmem:[%s1 + $0x48] sm:$0xf]
  %v110 = vld [vmem:[%s1 + $0x4c] sm:$0xf]
  %v111 = vld [vmem:[%s1 + $0x50] sm:$0xf]
  %v112 = vld [vmem:[%s1 + $0x54] sm:$0xf]
  %v113 = vld [vmem:[%s1 + $0x58] sm:$0xf]
  %v114 = vld [vmem:[%s1 + $0x5c] sm:$0xf]
  %v115 = vld [vmem:[%s1 + $0x60] sm:$0xf]
  %v116 = vld [vmem:[%s1 + $0x64] sm:$0xf]
  %v117 = vld [vmem:[%s1 + $0x68] sm:$0xf]
  %v118 = vld [vmem:[%s1 + $0x6c] sm:$0xf]
  %v119 = vld [vmem:[%s1 + $0x70] sm:$0xf]
  %v120 = vld [vmem:[%s1 + $0x74] sm:$0xf]
  %v121 = vld [vmem:[%s1 + $0x78] sm:$0x3]
  %v122 = vld [vmem:[%s2] sm:$0x1]
  %v124 = vperm.slane %v122, 0
  %v190 = vunpack.c.l.b16 %v27
  %v191 = vunpack.c.h.b16 %v27
  %v192 = vunpack.c.l.b16 %v28
  %v193 = vunpack.c.h.b16 %v28
  %v194 = vunpack.c.l.b16 %v29
  %v195 = vunpack.c.h.b16 %v29
  %v196 = vunpack.c.l.b16 %v30
  %v197 = vunpack.c.h.b16 %v30
  %v198 = vunpack.c.l.b16 %v31
  %v199 = vunpack.c.h.b16 %v31
  %v200 = vunpack.c.l.b16 %v32
  %v201 = vunpack.c.h.b16 %v32
  %v202 = vunpack.c.l.b16 %v33
  %v203 = vunpack.c.h.b16 %v33
  %v204 = vunpack.c.l.b16 %v34
  %v205 = vunpack.c.h.b16 %v34
  %v206 = vunpack.c.l.b16 %v35
  %v207 = vunpack.c.h.b16 %v35
  %v208 = vunpack.c.l.b16 %v36
  %v209 = vunpack.c.h.b16 %v36
  %v210 = vunpack.c.l.b16 %v37
  %v211 = vunpack.c.h.b16 %v37
  %v212 = vunpack.c.l.b16 %v38
  %v213 = vunpack.c.h.b16 %v38
  %v214 = vunpack.c.l.b16 %v39
  %v215 = vunpack.c.h.b16 %v39
  %v216 = vunpack.c.l.b16 %v40
  %v217 = vunpack.c.h.b16 %v40
  %v218 = vunpack.c.l.b16 %v41
  %v219 = vunpack.c.h.b16 %v41
  %v220 = vunpack.c.l.b16 %v42
  %v221 = vunpack.c.h.b16 %v42
  %v222 = vunpack.c.l.b16 %v43
  %v223 = vunpack.c.h.b16 %v43
  %v224 = vunpack.c.l.b16 %v44
  %v225 = vunpack.c.h.b16 %v44
  %v226 = vunpack.c.l.b16 %v45
  %v227 = vunpack.c.h.b16 %v45
  %v228 = vunpack.c.l.b16 %v46
  %v229 = vunpack.c.h.b16 %v46
  %v230 = vunpack.c.l.b16 %v47
  %v231 = vunpack.c.h.b16 %v47
  %v232 = vunpack.c.l.b16 %v48
  %v233 = vunpack.c.h.b16 %v48
  %v234 = vunpack.c.l.b16 %v49
  %v235 = vunpack.c.h.b16 %v49
  %v236 = vunpack.c.l.b16 %v50
  %v237 = vunpack.c.h.b16 %v50
  %v238 = vunpack.c.l.b16 %v51
  %v239 = vunpack.c.h.b16 %v51
  %v240 = vunpack.c.l.b16 %v52
  %v241 = vunpack.c.h.b16 %v52
  %v242 = vunpack.c.l.b16 %v53
  %v243 = vunpack.c.h.b16 %v53
  %v244 = vunpack.c.l.b16 %v54
  %v245 = vunpack.c.h.b16 %v54
  %v246 = vunpack.c.l.b16 %v55
  %v247 = vunpack.c.h.b16 %v55
  %v248 = vunpack.c.l.b16 %v56
  %v249 = vunpack.c.h.b16 %v56
  %v250 = vunpack.c.l.b16 %v57
  %v251 = vunpack.c.h.b16 %v57
  %v252 = vunpack.c.l.b16 %v58
  %v253 = vunpack.c.h.b16 %v58
  %v254 = vunpack.c.l.b16 %v59
  %v255 = vunpack.c.h.b16 %v59
  %v256 = vunpack.c.l.b16 %v60
  %v257 = vunpack.c.h.b16 %v60
  %v258 = vunpack.c.l.b16 %v61
  %v259 = vunpack.c.h.b16 %v61
  %v260 = vunpack.c.l.b16 %v62
  %v261 = vunpack.c.h.b16 %v62
  %v262 = vunpack.c.l.b16 %v63
  %v263 = vunpack.c.h.b16 %v63
  %v264 = vunpack.c.l.b16 %v64
  %v265 = vunpack.c.h.b16 %v64
  %v266 = vunpack.c.l.b16 %v65
  %v267 = vunpack.c.h.b16 %v65
  %v268 = vunpack.c.l.b16 %v66
  %v269 = vunpack.c.h.b16 %v66
  %v270 = vunpack.c.l.b16 %v67
  %v271 = vunpack.c.h.b16 %v67
  %v272 = vunpack.c.l.b16 %v68
  %v273 = vunpack.c.h.b16 %v68
  %v274 = vunpack.c.l.b16 %v69
  %v275 = vunpack.c.h.b16 %v69
  %v276 = vunpack.c.l.b16 %v70
  %v277 = vunpack.c.h.b16 %v70
  %v278 = vunpack.c.l.b16 %v71
  %v279 = vunpack.c.h.b16 %v71
  %v280 = vunpack.c.l.b16 %v72
  %v281 = vunpack.c.h.b16 %v72
  %v282 = vunpack.c.l.b16 %v73
  %v283 = vunpack.c.h.b16 %v73
  %v284 = vunpack.c.l.b16 %v74
  %v285 = vunpack.c.h.b16 %v74
  %v286 = vunpack.c.l.b16 %v75
  %v287 = vunpack.c.h.b16 %v75
  %v288 = vunpack.c.l.b16 %v76
  %v289 = vunpack.c.h.b16 %v76
  %v290 = vunpack.c.l.b16 %v77
  %v291 = vunpack.c.h.b16 %v77
  %v292 = vunpack.c.l.b16 %v78
  %v293 = vunpack.c.h.b16 %v78
  %v294 = vunpack.c.l.b16 %v79
  %v295 = vunpack.c.h.b16 %v79
  %v296 = vunpack.c.l.b16 %v80
  %v297 = vunpack.c.h.b16 %v80
  %v298 = vunpack.c.l.b16 %v81
  %v299 = vunpack.c.h.b16 %v81
  %v300 = vunpack.c.l.b16 %v82
  %v301 = vunpack.c.h.b16 %v82
  %v302 = vunpack.c.l.b16 %v83
  %v303 = vunpack.c.h.b16 %v83
  %v304 = vunpack.c.l.b16 %v84
  %v305 = vunpack.c.h.b16 %v84
  %v306 = vunpack.c.l.b16 %v85
  %v307 = vunpack.c.h.b16 %v85
  %v308 = vunpack.c.l.b16 %v86
  %v309 = vunpack.c.h.b16 %v86
  %v310 = vunpack.c.l.b16 %v87
  %v311 = vunpack.c.h.b16 %v87
  %v312 = vunpack.c.l.b16 %v88
  %v313 = vunpack.c.h.b16 %v88
  %v314 = vunpack.c.l.b16 %v89
  %v315 = vunpack.c.h.b16 %v89
  %v316 = vunpack.c.l.b16 %v90
  %v317 = vunpack.c.h.b16 %v90
  %v318 = vpack.c.b16 %v192, %v190
  %v319 = vpack.c.b16 %v193, %v191
  %v320 = vpack.c.b16 %v196, %v194
  %v321 = vpack.c.b16 %v197, %v195
  %v322 = vpack.c.b16 %v200, %v198
  %v323 = vpack.c.b16 %v201, %v199
  %v324 = vpack.c.b16 %v204, %v202
  %v325 = vpack.c.b16 %v205, %v203
  %v326 = vpack.c.b16 %v208, %v206
  %v327 = vpack.c.b16 %v209, %v207
  %v328 = vpack.c.b16 %v212, %v210
  %v329 = vpack.c.b16 %v213, %v211
  %v330 = vpack.c.b16 %v216, %v214
  %v331 = vpack.c.b16 %v217, %v215
  %v332 = vpack.c.b16 %v220, %v218
  %v333 = vpack.c.b16 %v221, %v219
  %v334 = vpack.c.b16 %v224, %v222
  %v335 = vpack.c.b16 %v225, %v223
  %v336 = vpack.c.b16 %v228, %v226
  %v337 = vpack.c.b16 %v229, %v227
  %v338 = vpack.c.b16 %v232, %v230
  %v339 = vpack.c.b16 %v233, %v231
  %v340 = vpack.c.b16 %v236, %v234
  %v341 = vpack.c.b16 %v237, %v235
  %v342 = vpack.c.b16 %v240, %v238
  %v343 = vpack.c.b16 %v241, %v239
  %v344 = vpack.c.b16 %v244, %v242
  %v345 = vpack.c.b16 %v245, %v243
  %v346 = vpack.c.b16 %v248, %v246
  %v347 = vpack.c.b16 %v249, %v247
  %v348 = vpack.c.b16 %v252, %v250
  %v349 = vpack.c.b16 %v253, %v251
  %v350 = vpack.c.b16 %v256, %v254
  %v351 = vpack.c.b16 %v257, %v255
  %v352 = vpack.c.b16 %v260, %v258
  %v353 = vpack.c.b16 %v261, %v259
  %v354 = vpack.c.b16 %v264, %v262
  %v355 = vpack.c.b16 %v265, %v263
  %v356 = vpack.c.b16 %v268, %v266
  %v357 = vpack.c.b16 %v269, %v267
  %v358 = vpack.c.b16 %v272, %v270
  %v359 = vpack.c.b16 %v273, %v271
  %v360 = vpack.c.b16 %v276, %v274
  %v361 = vpack.c.b16 %v277, %v275
  %v362 = vpack.c.b16 %v280, %v278
  %v363 = vpack.c.b16 %v281, %v279
  %v364 = vpack.c.b16 %v284, %v282
  %v365 = vpack.c.b16 %v285, %v283
  %v366 = vpack.c.b16 %v288, %v286
  %v367 = vpack.c.b16 %v289, %v287
  %v368 = vpack.c.b16 %v292, %v290
  %v369 = vpack.c.b16 %v293, %v291
  %v370 = vpack.c.b16 %v296, %v294
  %v371 = vpack.c.b16 %v297, %v295
  %v372 = vpack.c.b16 %v300, %v298
  %v373 = vpack.c.b16 %v301, %v299
  %v374 = vpack.c.b16 %v304, %v302
  %v375 = vpack.c.b16 %v305, %v303
  %v376 = vpack.c.b16 %v308, %v306
  %v377 = vpack.c.b16 %v309, %v307
  %v378 = vpack.c.b16 %v312, %v310
  %v379 = vpack.c.b16 %v313, %v311
  %v380 = vpack.c.b16 %v316, %v314
  %v381 = vpack.c.b16 %v317, %v315
  %v445 = vunpack.c.l.b16 %v91
  %v446 = vunpack.c.l.b16 %v92
  %v447 = vunpack.c.l.b16 %v93
  %v448 = vunpack.c.l.b16 %v94
  %v449 = vunpack.c.l.b16 %v95
  %v450 = vunpack.c.l.b16 %v96
  %v451 = vunpack.c.l.b16 %v97
  %v452 = vunpack.c.l.b16 %v98
  %v453 = vunpack.c.l.b16 %v99
  %v454 = vunpack.c.l.b16 %v100
  %v455 = vunpack.c.l.b16 %v101
  %v456 = vunpack.c.l.b16 %v102
  %v457 = vunpack.c.l.b16 %v103
  %v458 = vunpack.c.l.b16 %v104
  %v459 = vunpack.c.l.b16 %v105
  %v460 = vunpack.c.l.b16 %v106
  %v461 = vunpack.c.l.b16 %v107
  %v462 = vunpack.c.l.b16 %v108
  %v463 = vunpack.c.l.b16 %v109
  %v464 = vunpack.c.l.b16 %v110
  %v465 = vunpack.c.l.b16 %v111
  %v466 = vunpack.c.l.b16 %v112
  %v467 = vunpack.c.l.b16 %v113
  %v468 = vunpack.c.l.b16 %v114
  %v469 = vunpack.c.l.b16 %v115
  %v470 = vunpack.c.l.b16 %v116
  %v471 = vunpack.c.l.b16 %v117
  %v472 = vunpack.c.l.b16 %v118
  %v473 = vunpack.c.l.b16 %v119
  %v474 = vunpack.c.l.b16 %v120
  %v475 = vunpack.c.l.b16 %v121
  %v476 = vpack.c.b16 %v446, %v445
  %v477 = vpack.c.b16 %v448, %v447
  %v478 = vpack.c.b16 %v450, %v449
  %v479 = vpack.c.b16 %v452, %v451
  %v480 = vpack.c.b16 %v454, %v453
  %v481 = vpack.c.b16 %v456, %v455
  %v482 = vpack.c.b16 %v458, %v457
  %v483 = vpack.c.b16 %v460, %v459
  %v484 = vpack.c.b16 %v462, %v461
  %v485 = vpack.c.b16 %v464, %v463
  %v486 = vpack.c.b16 %v466, %v465
  %v487 = vpack.c.b16 %v468, %v467
  %v488 = vpack.c.b16 %v470, %v469
  %v489 = vpack.c.b16 %v472, %v471
  %v490 = vpack.c.b16 %v474, %v473
  %v491 = vpack.c.b16 %v475, %v475
  %vm507 = vcmask 941056
  %v509 = vsel %vm507, %v319, 0
  %v512 = vsel %vm507, %v321, 0
  %v515 = vsel %vm507, %v323, 0
  %v518 = vsel %vm507, %v325, 0
  %v521 = vsel %vm507, %v327, 0
  %v524 = vsel %vm507, %v329, 0
  %v527 = vsel %vm507, %v331, 0
  %v530 = vsel %vm507, %v333, 0
  %v533 = vsel %vm507, %v335, 0
  %v536 = vsel %vm507, %v337, 0
  %v539 = vsel %vm507, %v339, 0
  %v542 = vsel %vm507, %v341, 0
  %v545 = vsel %vm507, %v343, 0
  %v548 = vsel %vm507, %v345, 0
  %v551 = vsel %vm507, %v347, 0
  %v554 = vsel %vm507, %v349, 0
  %v557 = vsel %vm507, %v351, 0
  %v560 = vsel %vm507, %v353, 0
  %v563 = vsel %vm507, %v355, 0
  %v566 = vsel %vm507, %v357, 0
  %v569 = vsel %vm507, %v359, 0
  %v572 = vsel %vm507, %v361, 0
  %v575 = vsel %vm507, %v363, 0
  %v578 = vsel %vm507, %v365, 0
  %v581 = vsel %vm507, %v367, 0
  %v584 = vsel %vm507, %v369, 0
  %v587 = vsel %vm507, %v371, 0
  %v590 = vsel %vm507, %v373, 0
  %v593 = vsel %vm507, %v375, 0
  %v596 = vsel %vm507, %v377, 0
  %v599 = vsel %vm507, %v379, 0
  %v602 = vsel %vm507, %v381, 0
  %vm604 = vcmask 1040384
  %vm605 = vcmask 1041408
  %v606 = vsel %vm604, 4294967295, 65535
  %v607 = vsel %vm605, %v606, 0
  %v609 = vand.u32 %v491, %v607
  %611 = vmatpush.bf16.msra.mxu0 %v483
  %612 = vmatpush.bf16.msra.mxu0 %v482
  %613 = vmatpush.bf16.msra.mxu0 %v481
  %614 = vmatpush.bf16.msra.mxu0 %v480
  %615 = vmatpush.bf16.msra.mxu0 %v479
  %616 = vmatpush.bf16.msra.mxu0 %v478
  %617 = vmatpush.bf16.msra.mxu0 %v477
  %618 = vmatpush.bf16.msra.mxu0 %v476
  %619 = vmatmul.bf16.gmra.mxu0 %v318
  %v620 = vpop.f32.mrf.mxu0
  %v621 = vadd.f32 %v124, %v620
  %v622 = vpop.f32.mrf.mxu0
  %v623 = vadd.f32 %v124, %v622
  %624 = vmatmul.bf16.gmra.mxu0 %v320
  %v625 = vpop.f32.mrf.mxu0
  %v626 = vadd.f32 %v124, %v625
  %v627 = vpop.f32.mrf.mxu0
  %v628 = vadd.f32 %v124, %v627
  %629 = vmatmul.bf16.gmra.mxu0 %v322
  %v630 = vpop.f32.mrf.mxu0
  %v631 = vadd.f32 %v124, %v630
  %v632 = vpop.f32.mrf.mxu0
  %v633 = vadd.f32 %v124, %v632
  %634 = vmatmul.bf16.gmra.mxu0 %v324
  %v635 = vpop.f32.mrf.mxu0
  %v636 = vadd.f32 %v124, %v635
  %v637 = vpop.f32.mrf.mxu0
  %v638 = vadd.f32 %v124, %v637
  %639 = vmatmul.bf16.gmra.mxu0 %v326
  %v640 = vpop.f32.mrf.mxu0
  %v641 = vadd.f32 %v124, %v640
  %v642 = vpop.f32.mrf.mxu0
  %v643 = vadd.f32 %v124, %v642
  %644 = vmatmul.bf16.gmra.mxu0 %v328
  %v645 = vpop.f32.mrf.mxu0
  %v646 = vadd.f32 %v124, %v645
  %v647 = vpop.f32.mrf.mxu0
  %v648 = vadd.f32 %v124, %v647
  %649 = vmatmul.bf16.gmra.mxu0 %v330
  %v650 = vpop.f32.mrf.mxu0
  %v651 = vadd.f32 %v124, %v650
  %v652 = vpop.f32.mrf.mxu0
  %v653 = vadd.f32 %v124, %v652
  %654 = vmatmul.bf16.gmra.mxu0 %v332
  %v655 = vpop.f32.mrf.mxu0
  %v656 = vadd.f32 %v124, %v655
  %v657 = vpop.f32.mrf.mxu0
  %v658 = vadd.f32 %v124, %v657
  %659 = vmatmul.bf16.gmra.mxu0 %v334
  %v660 = vpop.f32.mrf.mxu0
  %v661 = vadd.f32 %v124, %v660
  %v662 = vpop.f32.mrf.mxu0
  %v663 = vadd.f32 %v124, %v662
  %664 = vmatmul.bf16.gmra.mxu0 %v336
  %v665 = vpop.f32.mrf.mxu0
  %v666 = vadd.f32 %v124, %v665
  %v667 = vpop.f32.mrf.mxu0
  %v668 = vadd.f32 %v124, %v667
  %669 = vmatmul.bf16.gmra.mxu0 %v338
  %v670 = vpop.f32.mrf.mxu0
  %v671 = vadd.f32 %v124, %v670
  %v672 = vpop.f32.mrf.mxu0
  %v673 = vadd.f32 %v124, %v672
  %674 = vmatmul.bf16.gmra.mxu0 %v340
  %v675 = vpop.f32.mrf.mxu0
  %v676 = vadd.f32 %v124, %v675
  %v677 = vpop.f32.mrf.mxu0
  %v678 = vadd.f32 %v124, %v677
  %679 = vmatmul.bf16.gmra.mxu0 %v342
  %v680 = vpop.f32.mrf.mxu0
  %v681 = vadd.f32 %v124, %v680
  %v682 = vpop.f32.mrf.mxu0
  %v683 = vadd.f32 %v124, %v682
  %684 = vmatmul.bf16.gmra.mxu0 %v344
  %v685 = vpop.f32.mrf.mxu0
  %v686 = vadd.f32 %v124, %v685
  %v687 = vpop.f32.mrf.mxu0
  %v688 = vadd.f32 %v124, %v687
  %689 = vmatmul.bf16.gmra.mxu0 %v346
  %v690 = vpop.f32.mrf.mxu0
  %v691 = vadd.f32 %v124, %v690
  %v692 = vpop.f32.mrf.mxu0
  %v693 = vadd.f32 %v124, %v692
  %694 = vmatmul.bf16.gmra.mxu0 %v348
  %v695 = vpop.f32.mrf.mxu0
  %v696 = vadd.f32 %v124, %v695
  %v697 = vpop.f32.mrf.mxu0
  %v698 = vadd.f32 %v124, %v697
  %699 = vmatmul.bf16.gmra.mxu0 %v350
  %v700 = vpop.f32.mrf.mxu0
  %v701 = vadd.f32 %v124, %v700
  %v702 = vpop.f32.mrf.mxu0
  %v703 = vadd.f32 %v124, %v702
  %704 = vmatmul.bf16.gmra.mxu0 %v352
  %v705 = vpop.f32.mrf.mxu0
  %v706 = vadd.f32 %v124, %v705
  %v707 = vpop.f32.mrf.mxu0
  %v708 = vadd.f32 %v124, %v707
  %709 = vmatmul.bf16.gmra.mxu0 %v354
  %v710 = vpop.f32.mrf.mxu0
  %v711 = vadd.f32 %v124, %v710
  %v712 = vpop.f32.mrf.mxu0
  %v713 = vadd.f32 %v124, %v712
  %714 = vmatmul.bf16.gmra.mxu0 %v356
  %v715 = vpop.f32.mrf.mxu0
  %v716 = vadd.f32 %v124, %v715
  %v717 = vpop.f32.mrf.mxu0
  %v718 = vadd.f32 %v124, %v717
  %719 = vmatmul.bf16.gmra.mxu0 %v358
  %v720 = vpop.f32.mrf.mxu0
  %v721 = vadd.f32 %v124, %v720
  %v722 = vpop.f32.mrf.mxu0
  %v723 = vadd.f32 %v124, %v722
  %724 = vmatmul.bf16.gmra.mxu0 %v360
  %v725 = vpop.f32.mrf.mxu0
  %v726 = vadd.f32 %v124, %v725
  %v727 = vpop.f32.mrf.mxu0
  %v728 = vadd.f32 %v124, %v727
  %729 = vmatmul.bf16.gmra.mxu0 %v362
  %v730 = vpop.f32.mrf.mxu0
  %v731 = vadd.f32 %v124, %v730
  %v732 = vpop.f32.mrf.mxu0
  %v733 = vadd.f32 %v124, %v732
  %734 = vmatmul.bf16.gmra.mxu0 %v364
  %v735 = vpop.f32.mrf.mxu0
  %v736 = vadd.f32 %v124, %v735
  %v737 = vpop.f32.mrf.mxu0
  %v738 = vadd.f32 %v124, %v737
  %739 = vmatmul.bf16.gmra.mxu0 %v366
  %v740 = vpop.f32.mrf.mxu0
  %v741 = vadd.f32 %v124, %v740
  %v742 = vpop.f32.mrf.mxu0
  %v743 = vadd.f32 %v124, %v742
  %744 = vmatmul.bf16.gmra.mxu0 %v368
  %v745 = vpop.f32.mrf.mxu0
  %v746 = vadd.f32 %v124, %v745
  %v747 = vpop.f32.mrf.mxu0
  %v748 = vadd.f32 %v124, %v747
  %749 = vmatmul.bf16.gmra.mxu0 %v370
  %v750 = vpop.f32.mrf.mxu0
  %v751 = vadd.f32 %v124, %v750
  %v752 = vpop.f32.mrf.mxu0
  %v753 = vadd.f32 %v124, %v752
  %754 = vmatmul.bf16.gmra.mxu0 %v372
  %v755 = vpop.f32.mrf.mxu0
  %v756 = vadd.f32 %v124, %v755
  %v757 = vpop.f32.mrf.mxu0
  %v758 = vadd.f32 %v124, %v757
  %759 = vmatmul.bf16.gmra.mxu0 %v374
  %v760 = vpop.f32.mrf.mxu0
  %v761 = vadd.f32 %v124, %v760
  %v762 = vpop.f32.mrf.mxu0
  %v763 = vadd.f32 %v124, %v762
  %764 = vmatmul.bf16.gmra.mxu0 %v376
  %v765 = vpop.f32.mrf.mxu0
  %v766 = vadd.f32 %v124, %v765
  %v767 = vpop.f32.mrf.mxu0
  %v768 = vadd.f32 %v124, %v767
  %769 = vmatmul.bf16.gmra.mxu0 %v378
  %v770 = vpop.f32.mrf.mxu0
  %v771 = vadd.f32 %v124, %v770
  %v772 = vpop.f32.mrf.mxu0
  %v773 = vadd.f32 %v124, %v772
  %774 = vmatmul.bf16.gmra.mxu0 %v380
  %v775 = vpop.f32.mrf.mxu0
  %v776 = vadd.f32 %v124, %v775
  %v777 = vpop.f32.mrf.mxu0
  %v778 = vadd.f32 %v124, %v777
  %779 = vdwg.mxu0
  %780 = vmatpush.bf16.msra.mxu0 %v609
  %781 = vmatpush.bf16.msra.mxu0 %v490
  %782 = vmatpush.bf16.msra.mxu0 %v489
  %783 = vmatpush.bf16.msra.mxu0 %v488
  %784 = vmatpush.bf16.msra.mxu0 %v487
  %785 = vmatpush.bf16.msra.mxu0 %v486
  %786 = vmatpush.bf16.msra.mxu0 %v485
  %787 = vmatpush.bf16.msra.mxu0 %v484
  %788 = vmatmul.bf16.gmra.mxu0 %v509
  %v789 = vpop.f32.mrf.mxu0
  %v790 = vadd.f32 %v621, %v789
  %v791 = vpop.f32.mrf.mxu0
  %v792 = vadd.f32 %v623, %v791
  %793 = vmatmul.bf16.gmra.mxu0 %v512
  %v794 = vpop.f32.mrf.mxu0
  %v795 = vadd.f32 %v626, %v794
  %v796 = vpop.f32.mrf.mxu0
  %v797 = vadd.f32 %v628, %v796
  %798 = vmatmul.bf16.gmra.mxu0 %v515
  %v799 = vpop.f32.mrf.mxu0
  %v800 = vadd.f32 %v631, %v799
  %v801 = vpop.f32.mrf.mxu0
  %v802 = vadd.f32 %v633, %v801
  %803 = vmatmul.bf16.gmra.mxu0 %v518
  %v804 = vpop.f32.mrf.mxu0
  %v805 = vadd.f32 %v636, %v804
  %v806 = vpop.f32.mrf.mxu0
  %v807 = vadd.f32 %v638, %v806
  %808 = vmatmul.bf16.gmra.mxu0 %v521
  %v809 = vpop.f32.mrf.mxu0
  %v810 = vadd.f32 %v641, %v809
  %v811 = vpop.f32.mrf.mxu0
  %v812 = vadd.f32 %v643, %v811
  %813 = vmatmul.bf16.gmra.mxu0 %v524
  %v814 = vpop.f32.mrf.mxu0
  %v815 = vadd.f32 %v646, %v814
  %v816 = vpop.f32.mrf.mxu0
  %v817 = vadd.f32 %v648, %v816
  %818 = vmatmul.bf16.gmra.mxu0 %v527
  %v819 = vpop.f32.mrf.mxu0
  %v820 = vadd.f32 %v651, %v819
  %v821 = vpop.f32.mrf.mxu0
  %v822 = vadd.f32 %v653, %v821
  %823 = vmatmul.bf16.gmra.mxu0 %v530
  %v824 = vpop.f32.mrf.mxu0
  %v825 = vadd.f32 %v656, %v824
  %v826 = vpop.f32.mrf.mxu0
  %v827 = vadd.f32 %v658, %v826
  %828 = vmatmul.bf16.gmra.mxu0 %v533
  %v829 = vpop.f32.mrf.mxu0
  %v830 = vadd.f32 %v661, %v829
  %v831 = vpop.f32.mrf.mxu0
  %v832 = vadd.f32 %v663, %v831
  %833 = vmatmul.bf16.gmra.mxu0 %v536
  %v834 = vpop.f32.mrf.mxu0
  %v835 = vadd.f32 %v666, %v834
  %v836 = vpop.f32.mrf.mxu0
  %v837 = vadd.f32 %v668, %v836
  %838 = vmatmul.bf16.gmra.mxu0 %v539
  %v839 = vpop.f32.mrf.mxu0
  %v840 = vadd.f32 %v671, %v839
  %v841 = vpop.f32.mrf.mxu0
  %v842 = vadd.f32 %v673, %v841
  %843 = vmatmul.bf16.gmra.mxu0 %v542
  %v844 = vpop.f32.mrf.mxu0
  %v845 = vadd.f32 %v676, %v844
  %v846 = vpop.f32.mrf.mxu0
  %v847 = vadd.f32 %v678, %v846
  %848 = vmatmul.bf16.gmra.mxu0 %v545
  %v849 = vpop.f32.mrf.mxu0
  %v850 = vadd.f32 %v681, %v849
  %v851 = vpop.f32.mrf.mxu0
  %v852 = vadd.f32 %v683, %v851
  %853 = vmatmul.bf16.gmra.mxu0 %v548
  %v854 = vpop.f32.mrf.mxu0
  %v855 = vadd.f32 %v686, %v854
  %v856 = vpop.f32.mrf.mxu0
  %v857 = vadd.f32 %v688, %v856
  %858 = vmatmul.bf16.gmra.mxu0 %v551
  %v859 = vpop.f32.mrf.mxu0
  %v860 = vadd.f32 %v691, %v859
  %v861 = vpop.f32.mrf.mxu0
  %v862 = vadd.f32 %v693, %v861
  %863 = vmatmul.bf16.gmra.mxu0 %v554
  %v864 = vpop.f32.mrf.mxu0
  %v865 = vadd.f32 %v696, %v864
  %v866 = vpop.f32.mrf.mxu0
  %v867 = vadd.f32 %v698, %v866
  %868 = vmatmul.bf16.gmra.mxu0 %v557
  %v869 = vpop.f32.mrf.mxu0
  %v870 = vadd.f32 %v701, %v869
  %v871 = vpop.f32.mrf.mxu0
  %v872 = vadd.f32 %v703, %v871
  %873 = vmatmul.bf16.gmra.mxu0 %v560
  %v874 = vpop.f32.mrf.mxu0
  %v875 = vadd.f32 %v706, %v874
  %v876 = vpop.f32.mrf.mxu0
  %v877 = vadd.f32 %v708, %v876
  %878 = vmatmul.bf16.gmra.mxu0 %v563
  %v879 = vpop.f32.mrf.mxu0
  %v880 = vadd.f32 %v711, %v879
  %v881 = vpop.f32.mrf.mxu0
  %v882 = vadd.f32 %v713, %v881
  %883 = vmatmul.bf16.gmra.mxu0 %v566
  %v884 = vpop.f32.mrf.mxu0
  %v885 = vadd.f32 %v716, %v884
  %v886 = vpop.f32.mrf.mxu0
  %v887 = vadd.f32 %v718, %v886
  %888 = vmatmul.bf16.gmra.mxu0 %v569
  %v889 = vpop.f32.mrf.mxu0
  %v890 = vadd.f32 %v721, %v889
  %v891 = vpop.f32.mrf.mxu0
  %v892 = vadd.f32 %v723, %v891
  %893 = vmatmul.bf16.gmra.mxu0 %v572
  %v894 = vpop.f32.mrf.mxu0
  %v895 = vadd.f32 %v726, %v894
  %v896 = vpop.f32.mrf.mxu0
  %v897 = vadd.f32 %v728, %v896
  %898 = vmatmul.bf16.gmra.mxu0 %v575
  %v899 = vpop.f32.mrf.mxu0
  %v900 = vadd.f32 %v731, %v899
  %v901 = vpop.f32.mrf.mxu0
  %v902 = vadd.f32 %v733, %v901
  %903 = vmatmul.bf16.gmra.mxu0 %v578
  %v904 = vpop.f32.mrf.mxu0
  %v905 = vadd.f32 %v736, %v904
  %v906 = vpop.f32.mrf.mxu0
  %v907 = vadd.f32 %v738, %v906
  %908 = vmatmul.bf16.gmra.mxu0 %v581
  %v909 = vpop.f32.mrf.mxu0
  %v910 = vadd.f32 %v741, %v909
  %v911 = vpop.f32.mrf.mxu0
  %v912 = vadd.f32 %v743, %v911
  %913 = vmatmul.bf16.gmra.mxu0 %v584
  %v914 = vpop.f32.mrf.mxu0
  %v915 = vadd.f32 %v746, %v914
  %v916 = vpop.f32.mrf.mxu0
  %v917 = vadd.f32 %v748, %v916
  %918 = vmatmul.bf16.gmra.mxu0 %v587
  %v919 = vpop.f32.mrf.mxu0
  %v920 = vadd.f32 %v751, %v919
  %v921 = vpop.f32.mrf.mxu0
  %v922 = vadd.f32 %v753, %v921
  %923 = vmatmul.bf16.gmra.mxu0 %v590
  %v924 = vpop.f32.mrf.mxu0
  %v925 = vadd.f32 %v756, %v924
  %v926 = vpop.f32.mrf.mxu0
  %v927 = vadd.f32 %v758, %v926
  %928 = vmatmul.bf16.gmra.mxu0 %v593
  %v929 = vpop.f32.mrf.mxu0
  %v930 = vadd.f32 %v761, %v929
  %v931 = vpop.f32.mrf.mxu0
  %v932 = vadd.f32 %v763, %v931
  %933 = vmatmul.bf16.gmra.mxu0 %v596
  %v934 = vpop.f32.mrf.mxu0
  %v935 = vadd.f32 %v766, %v934
  %v936 = vpop.f32.mrf.mxu0
  %v937 = vadd.f32 %v768, %v936
  %938 = vmatmul.bf16.gmra.mxu0 %v599
  %v939 = vpop.f32.mrf.mxu0
  %v940 = vadd.f32 %v771, %v939
  %v941 = vpop.f32.mrf.mxu0
  %v942 = vadd.f32 %v773, %v941
  %943 = vmatmul.bf16.gmra.mxu0 %v602
  %v944 = vpop.f32.mrf.mxu0
  %v945 = vadd.f32 %v776, %v944
  %v946 = vpop.f32.mrf.mxu0
  %v947 = vadd.f32 %v778, %v946
  %948 = vdwg.mxu0
  %v949 = vmax.f32 %v790, 0.0
  %v950 = vmax.f32 %v792, 0.0
  %v951 = vmax.f32 %v795, 0.0
  %v952 = vmax.f32 %v797, 0.0
  %v953 = vmax.f32 %v800, 0.0
  %v954 = vmax.f32 %v802, 0.0
  %v955 = vmax.f32 %v805, 0.0
  %v956 = vmax.f32 %v807, 0.0
  %v957 = vmax.f32 %v810, 0.0
  %v958 = vmax.f32 %v812, 0.0
  %v959 = vmax.f32 %v815, 0.0
  %v960 = vmax.f32 %v817, 0.0
  %v961 = vmax.f32 %v820, 0.0
  %v962 = vmax.f32 %v822, 0.0
  %v963 = vmax.f32 %v825, 0.0
  %v964 = vmax.f32 %v827, 0.0
  %v965 = vmax.f32 %v830, 0.0
  %v966 = vmax.f32 %v832, 0.0
  %v967 = vmax.f32 %v835, 0.0
  %v968 = vmax.f32 %v837, 0.0
  %v969 = vmax.f32 %v840, 0.0
  %v970 = vmax.f32 %v842, 0.0
  %v971 = vmax.f32 %v845, 0.0
  %v972 = vmax.f32 %v847, 0.0
  %v973 = vmax.f32 %v850, 0.0
  %v974 = vmax.f32 %v852, 0.0
  %v975 = vmax.f32 %v855, 0.0
  %v976 = vmax.f32 %v857, 0.0
  %v977 = vmax.f32 %v860, 0.0
  %v978 = vmax.f32 %v862, 0.0
  %v979 = vmax.f32 %v865, 0.0
  %v980 = vmax.f32 %v867, 0.0
  %v981 = vmax.f32 %v870, 0.0
  %v982 = vmax.f32 %v872, 0.0
  %v983 = vmax.f32 %v875, 0.0
  %v984 = vmax.f32 %v877, 0.0
  %v985 = vmax.f32 %v880, 0.0
  %v986 = vmax.f32 %v882, 0.0
  %v987 = vmax.f32 %v885, 0.0
  %v988 = vmax.f32 %v887, 0.0
  %v989 = vmax.f32 %v890, 0.0
  %v990 = vmax.f32 %v892, 0.0
  %v991 = vmax.f32 %v895, 0.0
  %v992 = vmax.f32 %v897, 0.0
  %v993 = vmax.f32 %v900, 0.0
  %v994 = vmax.f32 %v902, 0.0
  %v995 = vmax.f32 %v905, 0.0
  %v996 = vmax.f32 %v907, 0.0
  %v997 = vmax.f32 %v910, 0.0
  %v998 = vmax.f32 %v912, 0.0
  %v999 = vmax.f32 %v915, 0.0
  %v1000 = vmax.f32 %v917, 0.0
  %v1001 = vmax.f32 %v920, 0.0
  %v1002 = vmax.f32 %v922, 0.0
  %v1003 = vmax.f32 %v925, 0.0
  %v1004 = vmax.f32 %v927, 0.0
  %v1005 = vmax.f32 %v930, 0.0
  %v1006 = vmax.f32 %v932, 0.0
  %v1007 = vmax.f32 %v935, 0.0
  %v1008 = vmax.f32 %v937, 0.0
  %v1009 = vmax.f32 %v940, 0.0
  %v1010 = vmax.f32 %v942, 0.0
  %v1011 = vmax.f32 %v945, 0.0
  %v1012 = vmax.f32 %v947, 0.0
  %v1013 = vpack.c.bf16 %v950, %v949
  %v1014 = vpack.c.bf16 %v952, %v951
  %v1015 = vpack.c.bf16 %v954, %v953
  %v1016 = vpack.c.bf16 %v956, %v955
  %v1017 = vpack.c.bf16 %v958, %v957
  %v1018 = vpack.c.bf16 %v960, %v959
  %v1019 = vpack.c.bf16 %v962, %v961
  %v1020 = vpack.c.bf16 %v964, %v963
  %v1021 = vpack.c.bf16 %v966, %v965
  %v1022 = vpack.c.bf16 %v968, %v967
  %v1023 = vpack.c.bf16 %v970, %v969
  %v1024 = vpack.c.bf16 %v972, %v971
  %v1025 = vpack.c.bf16 %v974, %v973
  %v1026 = vpack.c.bf16 %v976, %v975
  %v1027 = vpack.c.bf16 %v978, %v977
  %v1028 = vpack.c.bf16 %v980, %v979
  %v1029 = vpack.c.bf16 %v982, %v981
  %v1030 = vpack.c.bf16 %v984, %v983
  %v1031 = vpack.c.bf16 %v986, %v985
  %v1032 = vpack.c.bf16 %v988, %v987
  %v1033 = vpack.c.bf16 %v990, %v989
  %v1034 = vpack.c.bf16 %v992, %v991
  %v1035 = vpack.c.bf16 %v994, %v993
  %v1036 = vpack.c.bf16 %v996, %v995
  %v1037 = vpack.c.bf16 %v998, %v997
  %v1038 = vpack.c.bf16 %v1000, %v999
  %v1039 = vpack.c.bf16 %v1002, %v1001
  %v1040 = vpack.c.bf16 %v1004, %v1003
  %v1041 = vpack.c.bf16 %v1006, %v1005
  %v1042 = vpack.c.bf16 %v1008, %v1007
  %v1043 = vpack.c.bf16 %v1010, %v1009
  %v1044 = vpack.c.bf16 %v1012, %v1011
  %v1045 = vld [vmem:[%s3] sm:$0xf]
  %v1046 = vld [vmem:[%s3 + $0x4] sm:$0xf]
  %v1047 = vld [vmem:[%s3 + $0x8] sm:$0xf]
  %v1048 = vld [vmem:[%s3 + $0xc] sm:$0xf]
  %v1049 = vld [vmem:[%s3 + $0x10] sm:$0xf]
  %v1050 = vld [vmem:[%s3 + $0x14] sm:$0xf]
  %v1051 = vld [vmem:[%s3 + $0x18] sm:$0xf]
  %v1052 = vld [vmem:[%s3 + $0x1c] sm:$0xf]
  %v1053 = vld [vmem:[%s4] sm:$0x1]
  %v1055 = vperm.slane %v1053, 0
  %v1065 = vunpack.c.l.b16 %v1045
  %v1066 = vunpack.c.l.b16 %v1046
  %v1067 = vunpack.c.l.b16 %v1047
  %v1068 = vunpack.c.l.b16 %v1048
  %v1069 = vunpack.c.l.b16 %v1049
  %v1070 = vunpack.c.l.b16 %v1050
  %v1071 = vunpack.c.l.b16 %v1051
  %v1072 = vunpack.c.l.b16 %v1052
  %v1073 = vpack.c.b16 %v1066, %v1065
  %v1074 = vpack.c.b16 %v1068, %v1067
  %v1075 = vpack.c.b16 %v1070, %v1069
  %v1076 = vpack.c.b16 %v1072, %v1071
  %vm1081 = vcmask 523264
  %v1083 = vsel %vm1081, %v1013, 0
  %v1086 = vsel %vm1081, %v1014, 0
  %v1089 = vsel %vm1081, %v1015, 0
  %v1092 = vsel %vm1081, %v1016, 0
  %v1095 = vsel %vm1081, %v1017, 0
  %v1098 = vsel %vm1081, %v1018, 0
  %v1101 = vsel %vm1081, %v1019, 0
  %v1104 = vsel %vm1081, %v1020, 0
  %v1107 = vsel %vm1081, %v1021, 0
  %v1110 = vsel %vm1081, %v1022, 0
  %v1113 = vsel %vm1081, %v1023, 0
  %v1116 = vsel %vm1081, %v1024, 0
  %v1119 = vsel %vm1081, %v1025, 0
  %v1122 = vsel %vm1081, %v1026, 0
  %v1125 = vsel %vm1081, %v1027, 0
  %v1128 = vsel %vm1081, %v1028, 0
  %v1131 = vsel %vm1081, %v1029, 0
  %v1134 = vsel %vm1081, %v1030, 0
  %v1137 = vsel %vm1081, %v1031, 0
  %v1140 = vsel %vm1081, %v1032, 0
  %v1143 = vsel %vm1081, %v1033, 0
  %v1146 = vsel %vm1081, %v1034, 0
  %v1149 = vsel %vm1081, %v1035, 0
  %v1152 = vsel %vm1081, %v1036, 0
  %v1155 = vsel %vm1081, %v1037, 0
  %v1158 = vsel %vm1081, %v1038, 0
  %v1161 = vsel %vm1081, %v1039, 0
  %v1164 = vsel %vm1081, %v1040, 0
  %v1167 = vsel %vm1081, %v1041, 0
  %v1170 = vsel %vm1081, %v1042, 0
  %v1173 = vsel %vm1081, %v1043, 0
  %v1176 = vsel %vm1081, %v1044, 0
  %1178 = vmatpush.bf16.msra.mxu0 0
  %1179 = vmatpush.bf16.msra.mxu0 0
  %1180 = vmatpush.bf16.msra.mxu0 0
  %1181 = vmatpush.bf16.msra.mxu0 0
  %1182 = vmatpush.bf16.msra.mxu0 %v1076
  %1183 = vmatpush.bf16.msra.mxu0 %v1075
  %1184 = vmatpush.bf16.msra.mxu0 %v1074
  %1185 = vmatpush.bf16.msra.mxu0 %v1073
  %1186 = vmatmul.bf16.gmra.mxu0 %v1083
  %v1187 = vpop.f32.mrf.mxu0
  %v1188 = vadd.f32 %v1055, %v1187
  %v1189 = vpop.f32.mrf.mxu0
  %v1190 = vadd.f32 %v1055, %v1189
  %1191 = vmatmul.bf16.gmra.mxu0 %v1086
  %v1192 = vpop.f32.mrf.mxu0
  %v1193 = vadd.f32 %v1055, %v1192
  %v1194 = vpop.f32.mrf.mxu0
  %v1195 = vadd.f32 %v1055, %v1194
  %1196 = vmatmul.bf16.gmra.mxu0 %v1089
  %v1197 = vpop.f32.mrf.mxu0
  %v1198 = vadd.f32 %v1055, %v1197
  %v1199 = vpop.f32.mrf.mxu0
  %v1200 = vadd.f32 %v1055, %v1199
  %1201 = vmatmul.bf16.gmra.mxu0 %v1092
  %v1202 = vpop.f32.mrf.mxu0
  %v1203 = vadd.f32 %v1055, %v1202
  %v1204 = vpop.f32.mrf.mxu0
  %v1205 = vadd.f32 %v1055, %v1204
  %1206 = vmatmul.bf16.gmra.mxu0 %v1095
  %v1207 = vpop.f32.mrf.mxu0
  %v1208 = vadd.f32 %v1055, %v1207
  %v1209 = vpop.f32.mrf.mxu0
  %v1210 = vadd.f32 %v1055, %v1209
  %1211 = vmatmul.bf16.gmra.mxu0 %v1098
  %v1212 = vpop.f32.mrf.mxu0
  %v1213 = vadd.f32 %v1055, %v1212
  %v1214 = vpop.f32.mrf.mxu0
  %v1215 = vadd.f32 %v1055, %v1214
  %1216 = vmatmul.bf16.gmra.mxu0 %v1101
  %v1217 = vpop.f32.mrf.mxu0
  %v1218 = vadd.f32 %v1055, %v1217
  %v1219 = vpop.f32.mrf.mxu0
  %v1220 = vadd.f32 %v1055, %v1219
  %1221 = vmatmul.bf16.gmra.mxu0 %v1104
  %v1222 = vpop.f32.mrf.mxu0
  %v1223 = vadd.f32 %v1055, %v1222
  %v1224 = vpop.f32.mrf.mxu0
  %v1225 = vadd.f32 %v1055, %v1224
  %1226 = vmatmul.bf16.gmra.mxu0 %v1107
  %v1227 = vpop.f32.mrf.mxu0
  %v1228 = vadd.f32 %v1055, %v1227
  %v1229 = vpop.f32.mrf.mxu0
  %v1230 = vadd.f32 %v1055, %v1229
  %1231 = vmatmul.bf16.gmra.mxu0 %v1110
  %v1232 = vpop.f32.mrf.mxu0
  %v1233 = vadd.f32 %v1055, %v1232
  %v1234 = vpop.f32.mrf.mxu0
  %v1235 = vadd.f32 %v1055, %v1234
  %1236 = vmatmul.bf16.gmra.mxu0 %v1113
  %v1237 = vpop.f32.mrf.mxu0
  %v1238 = vadd.f32 %v1055, %v1237
  %v1239 = vpop.f32.mrf.mxu0
  %v1240 = vadd.f32 %v1055, %v1239
  %1241 = vmatmul.bf16.gmra.mxu0 %v1116
  %v1242 = vpop.f32.mrf.mxu0
  %v1243 = vadd.f32 %v1055, %v1242
  %v1244 = vpop.f32.mrf.mxu0
  %v1245 = vadd.f32 %v1055, %v1244
  %1246 = vmatmul.bf16.gmra.mxu0 %v1119
  %v1247 = vpop.f32.mrf.mxu0
  %v1248 = vadd.f32 %v1055, %v1247
  %v1249 = vpop.f32.mrf.mxu0
  %v1250 = vadd.f32 %v1055, %v1249
  %1251 = vmatmul.bf16.gmra.mxu0 %v1122
  %v1252 = vpop.f32.mrf.mxu0
  %v1253 = vadd.f32 %v1055, %v1252
  %v1254 = vpop.f32.mrf.mxu0
  %v1255 = vadd.f32 %v1055, %v1254
  %1256 = vmatmul.bf16.gmra.mxu0 %v1125
  %v1257 = vpop.f32.mrf.mxu0
  %v1258 = vadd.f32 %v1055, %v1257
  %v1259 = vpop.f32.mrf.mxu0
  %v1260 = vadd.f32 %v1055, %v1259
  %1261 = vmatmul.bf16.gmra.mxu0 %v1128
  %v1262 = vpop.f32.mrf.mxu0
  %v1263 = vadd.f32 %v1055, %v1262
  %v1264 = vpop.f32.mrf.mxu0
  %v1265 = vadd.f32 %v1055, %v1264
  %1266 = vmatmul.bf16.gmra.mxu0 %v1131
  %v1267 = vpop.f32.mrf.mxu0
  %v1268 = vadd.f32 %v1055, %v1267
  %v1269 = vpop.f32.mrf.mxu0
  %v1270 = vadd.f32 %v1055, %v1269
  %1271 = vmatmul.bf16.gmra.mxu0 %v1134
  %v1272 = vpop.f32.mrf.mxu0
  %v1273 = vadd.f32 %v1055, %v1272
  %v1274 = vpop.f32.mrf.mxu0
  %v1275 = vadd.f32 %v1055, %v1274
  %1276 = vmatmul.bf16.gmra.mxu0 %v1137
  %v1277 = vpop.f32.mrf.mxu0
  %v1278 = vadd.f32 %v1055, %v1277
  %v1279 = vpop.f32.mrf.mxu0
  %v1280 = vadd.f32 %v1055, %v1279
  %1281 = vmatmul.bf16.gmra.mxu0 %v1140
  %v1282 = vpop.f32.mrf.mxu0
  %v1283 = vadd.f32 %v1055, %v1282
  %v1284 = vpop.f32.mrf.mxu0
  %v1285 = vadd.f32 %v1055, %v1284
  %1286 = vmatmul.bf16.gmra.mxu0 %v1143
  %v1287 = vpop.f32.mrf.mxu0
  %v1288 = vadd.f32 %v1055, %v1287
  %v1289 = vpop.f32.mrf.mxu0
  %v1290 = vadd.f32 %v1055, %v1289
  %1291 = vmatmul.bf16.gmra.mxu0 %v1146
  %v1292 = vpop.f32.mrf.mxu0
  %v1293 = vadd.f32 %v1055, %v1292
  %v1294 = vpop.f32.mrf.mxu0
  %v1295 = vadd.f32 %v1055, %v1294
  %1296 = vmatmul.bf16.gmra.mxu0 %v1149
  %v1297 = vpop.f32.mrf.mxu0
  %v1298 = vadd.f32 %v1055, %v1297
  %v1299 = vpop.f32.mrf.mxu0
  %v1300 = vadd.f32 %v1055, %v1299
  %1301 = vmatmul.bf16.gmra.mxu0 %v1152
  %v1302 = vpop.f32.mrf.mxu0
  %v1303 = vadd.f32 %v1055, %v1302
  %v1304 = vpop.f32.mrf.mxu0
  %v1305 = vadd.f32 %v1055, %v1304
  %1306 = vmatmul.bf16.gmra.mxu0 %v1155
  %v1307 = vpop.f32.mrf.mxu0
  %v1308 = vadd.f32 %v1055, %v1307
  %v1309 = vpop.f32.mrf.mxu0
  %v1310 = vadd.f32 %v1055, %v1309
  %1311 = vmatmul.bf16.gmra.mxu0 %v1158
  %v1312 = vpop.f32.mrf.mxu0
  %v1313 = vadd.f32 %v1055, %v1312
  %v1314 = vpop.f32.mrf.mxu0
  %v1315 = vadd.f32 %v1055, %v1314
  %1316 = vmatmul.bf16.gmra.mxu0 %v1161
  %v1317 = vpop.f32.mrf.mxu0
  %v1318 = vadd.f32 %v1055, %v1317
  %v1319 = vpop.f32.mrf.mxu0
  %v1320 = vadd.f32 %v1055, %v1319
  %1321 = vmatmul.bf16.gmra.mxu0 %v1164
  %v1322 = vpop.f32.mrf.mxu0
  %v1323 = vadd.f32 %v1055, %v1322
  %v1324 = vpop.f32.mrf.mxu0
  %v1325 = vadd.f32 %v1055, %v1324
  %1326 = vmatmul.bf16.gmra.mxu0 %v1167
  %v1327 = vpop.f32.mrf.mxu0
  %v1328 = vadd.f32 %v1055, %v1327
  %v1329 = vpop.f32.mrf.mxu0
  %v1330 = vadd.f32 %v1055, %v1329
  %1331 = vmatmul.bf16.gmra.mxu0 %v1170
  %v1332 = vpop.f32.mrf.mxu0
  %v1333 = vadd.f32 %v1055, %v1332
  %v1334 = vpop.f32.mrf.mxu0
  %v1335 = vadd.f32 %v1055, %v1334
  %1336 = vmatmul.bf16.gmra.mxu0 %v1173
  %v1337 = vpop.f32.mrf.mxu0
  %v1338 = vadd.f32 %v1055, %v1337
  %v1339 = vpop.f32.mrf.mxu0
  %v1340 = vadd.f32 %v1055, %v1339
  %1341 = vmatmul.bf16.gmra.mxu0 %v1176
  %v1342 = vpop.f32.mrf.mxu0
  %v1343 = vadd.f32 %v1055, %v1342
  %v1344 = vpop.f32.mrf.mxu0
  %v1345 = vadd.f32 %v1055, %v1344
  %1346 = vdwg.mxu0
  %v1347 = vmax.f32 %v1188, 0.0
  %v1348 = vmax.f32 %v1190, 0.0
  %v1349 = vmax.f32 %v1193, 0.0
  %v1350 = vmax.f32 %v1195, 0.0
  %v1351 = vmax.f32 %v1198, 0.0
  %v1352 = vmax.f32 %v1200, 0.0
  %v1353 = vmax.f32 %v1203, 0.0
  %v1354 = vmax.f32 %v1205, 0.0
  %v1355 = vmax.f32 %v1208, 0.0
  %v1356 = vmax.f32 %v1210, 0.0
  %v1357 = vmax.f32 %v1213, 0.0
  %v1358 = vmax.f32 %v1215, 0.0
  %v1359 = vmax.f32 %v1218, 0.0
  %v1360 = vmax.f32 %v1220, 0.0
  %v1361 = vmax.f32 %v1223, 0.0
  %v1362 = vmax.f32 %v1225, 0.0
  %v1363 = vmax.f32 %v1228, 0.0
  %v1364 = vmax.f32 %v1230, 0.0
  %v1365 = vmax.f32 %v1233, 0.0
  %v1366 = vmax.f32 %v1235, 0.0
  %v1367 = vmax.f32 %v1238, 0.0
  %v1368 = vmax.f32 %v1240, 0.0
  %v1369 = vmax.f32 %v1243, 0.0
  %v1370 = vmax.f32 %v1245, 0.0
  %v1371 = vmax.f32 %v1248, 0.0
  %v1372 = vmax.f32 %v1250, 0.0
  %v1373 = vmax.f32 %v1253, 0.0
  %v1374 = vmax.f32 %v1255, 0.0
  %v1375 = vmax.f32 %v1258, 0.0
  %v1376 = vmax.f32 %v1260, 0.0
  %v1377 = vmax.f32 %v1263, 0.0
  %v1378 = vmax.f32 %v1265, 0.0
  %v1379 = vmax.f32 %v1268, 0.0
  %v1380 = vmax.f32 %v1270, 0.0
  %v1381 = vmax.f32 %v1273, 0.0
  %v1382 = vmax.f32 %v1275, 0.0
  %v1383 = vmax.f32 %v1278, 0.0
  %v1384 = vmax.f32 %v1280, 0.0
  %v1385 = vmax.f32 %v1283, 0.0
  %v1386 = vmax.f32 %v1285, 0.0
  %v1387 = vmax.f32 %v1288, 0.0
  %v1388 = vmax.f32 %v1290, 0.0
  %v1389 = vmax.f32 %v1293, 0.0
  %v1390 = vmax.f32 %v1295, 0.0
  %v1391 = vmax.f32 %v1298, 0.0
  %v1392 = vmax.f32 %v1300, 0.0
  %v1393 = vmax.f32 %v1303, 0.0
  %v1394 = vmax.f32 %v1305, 0.0
  %v1395 = vmax.f32 %v1308, 0.0
  %v1396 = vmax.f32 %v1310, 0.0
  %v1397 = vmax.f32 %v1313, 0.0
  %v1398 = vmax.f32 %v1315, 0.0
  %v1399 = vmax.f32 %v1318, 0.0
  %v1400 = vmax.f32 %v1320, 0.0
  %v1401 = vmax.f32 %v1323, 0.0
  %v1402 = vmax.f32 %v1325, 0.0
  %v1403 = vmax.f32 %v1328, 0.0
  %v1404 = vmax.f32 %v1330, 0.0
  %v1405 = vmax.f32 %v1333, 0.0
  %v1406 = vmax.f32 %v1335, 0.0
  %v1407 = vmax.f32 %v1338, 0.0
  %v1408 = vmax.f32 %v1340, 0.0
  %v1409 = vmax.f32 %v1343, 0.0
  %v1410 = vmax.f32 %v1345, 0.0
  %v1411 = vpack.c.bf16 %v1347, %v1347
  %v1412 = vpack.c.bf16 %v1348, %v1348
  %v1413 = vpack.c.bf16 %v1349, %v1349
  %v1414 = vpack.c.bf16 %v1350, %v1350
  %v1415 = vpack.c.bf16 %v1351, %v1351
  %v1416 = vpack.c.bf16 %v1352, %v1352
  %v1417 = vpack.c.bf16 %v1353, %v1353
  %v1418 = vpack.c.bf16 %v1354, %v1354
  %v1419 = vpack.c.bf16 %v1355, %v1355
  %v1420 = vpack.c.bf16 %v1356, %v1356
  %v1421 = vpack.c.bf16 %v1357, %v1357
  %v1422 = vpack.c.bf16 %v1358, %v1358
  %v1423 = vpack.c.bf16 %v1359, %v1359
  %v1424 = vpack.c.bf16 %v1360, %v1360
  %v1425 = vpack.c.bf16 %v1361, %v1361
  %v1426 = vpack.c.bf16 %v1362, %v1362
  %v1427 = vpack.c.bf16 %v1363, %v1363
  %v1428 = vpack.c.bf16 %v1364, %v1364
  %v1429 = vpack.c.bf16 %v1365, %v1365
  %v1430 = vpack.c.bf16 %v1366, %v1366
  %v1431 = vpack.c.bf16 %v1367, %v1367
  %v1432 = vpack.c.bf16 %v1368, %v1368
  %v1433 = vpack.c.bf16 %v1369, %v1369
  %v1434 = vpack.c.bf16 %v1370, %v1370
  %v1435 = vpack.c.bf16 %v1371, %v1371
  %v1436 = vpack.c.bf16 %v1372, %v1372
  %v1437 = vpack.c.bf16 %v1373, %v1373
  %v1438 = vpack.c.bf16 %v1374, %v1374
  %v1439 = vpack.c.bf16 %v1375, %v1375
  %v1440 = vpack.c.bf16 %v1376, %v1376
  %v1441 = vpack.c.bf16 %v1377, %v1377
  %v1442 = vpack.c.bf16 %v1378, %v1378
  %v1443 = vpack.c.bf16 %v1379, %v1379
  %v1444 = vpack.c.bf16 %v1380, %v1380
  %v1445 = vpack.c.bf16 %v1381, %v1381
  %v1446 = vpack.c.bf16 %v1382, %v1382
  %v1447 = vpack.c.bf16 %v1383, %v1383
  %v1448 = vpack.c.bf16 %v1384, %v1384
  %v1449 = vpack.c.bf16 %v1385, %v1385
  %v1450 = vpack.c.bf16 %v1386, %v1386
  %v1451 = vpack.c.bf16 %v1387, %v1387
  %v1452 = vpack.c.bf16 %v1388, %v1388
  %v1453 = vpack.c.bf16 %v1389, %v1389
  %v1454 = vpack.c.bf16 %v1390, %v1390
  %v1455 = vpack.c.bf16 %v1391, %v1391
  %v1456 = vpack.c.bf16 %v1392, %v1392
  %v1457 = vpack.c.bf16 %v1393, %v1393
  %v1458 = vpack.c.bf16 %v1394, %v1394
  %v1459 = vpack.c.bf16 %v1395, %v1395
  %v1460 = vpack.c.bf16 %v1396, %v1396
  %v1461 = vpack.c.bf16 %v1397, %v1397
  %v1462 = vpack.c.bf16 %v1398, %v1398
  %v1463 = vpack.c.bf16 %v1399, %v1399
  %v1464 = vpack.c.bf16 %v1400, %v1400
  %v1465 = vpack.c.bf16 %v1401, %v1401
  %v1466 = vpack.c.bf16 %v1402, %v1402
  %v1467 = vpack.c.bf16 %v1403, %v1403
  %v1468 = vpack.c.bf16 %v1404, %v1404
  %v1469 = vpack.c.bf16 %v1405, %v1405
  %v1470 = vpack.c.bf16 %v1406, %v1406
  %v1471 = vpack.c.bf16 %v1407, %v1407
  %v1472 = vpack.c.bf16 %v1408, %v1408
  %v1473 = vpack.c.bf16 %v1409, %v1409
  %v1474 = vpack.c.bf16 %v1410, %v1410
  %v1539 = vunpack.c.l.b16 %v1411
  %v1540 = vunpack.c.l.b16 %v1412
  %v1541 = vunpack.c.l.b16 %v1413
  %v1542 = vunpack.c.l.b16 %v1414
  %v1543 = vunpack.c.l.b16 %v1415
  %v1544 = vunpack.c.l.b16 %v1416
  %v1545 = vunpack.c.l.b16 %v1417
  %v1546 = vunpack.c.l.b16 %v1418
  %v1547 = vunpack.c.l.b16 %v1419
  %v1548 = vunpack.c.l.b16 %v1420
  %v1549 = vunpack.c.l.b16 %v1421
  %v1550 = vunpack.c.l.b16 %v1422
  %v1551 = vunpack.c.l.b16 %v1423
  %v1552 = vunpack.c.l.b16 %v1424
  %v1553 = vunpack.c.l.b16 %v1425
  %v1554 = vunpack.c.l.b16 %v1426
  %v1555 = vunpack.c.l.b16 %v1427
  %v1556 = vunpack.c.l.b16 %v1428
  %v1557 = vunpack.c.l.b16 %v1429
  %v1558 = vunpack.c.l.b16 %v1430
  %v1559 = vunpack.c.l.b16 %v1431
  %v1560 = vunpack.c.l.b16 %v1432
  %v1561 = vunpack.c.l.b16 %v1433
  %v1562 = vunpack.c.l.b16 %v1434
  %v1563 = vunpack.c.l.b16 %v1435
  %v1564 = vunpack.c.l.b16 %v1436
  %v1565 = vunpack.c.l.b16 %v1437
  %v1566 = vunpack.c.l.b16 %v1438
  %v1567 = vunpack.c.l.b16 %v1439
  %v1568 = vunpack.c.l.b16 %v1440
  %v1569 = vunpack.c.l.b16 %v1441
  %v1570 = vunpack.c.l.b16 %v1442
  %v1571 = vunpack.c.l.b16 %v1443
  %v1572 = vunpack.c.l.b16 %v1444
  %v1573 = vunpack.c.l.b16 %v1445
  %v1574 = vunpack.c.l.b16 %v1446
  %v1575 = vunpack.c.l.b16 %v1447
  %v1576 = vunpack.c.l.b16 %v1448
  %v1577 = vunpack.c.l.b16 %v1449
  %v1578 = vunpack.c.l.b16 %v1450
  %v1579 = vunpack.c.l.b16 %v1451
  %v1580 = vunpack.c.l.b16 %v1452
  %v1581 = vunpack.c.l.b16 %v1453
  %v1582 = vunpack.c.l.b16 %v1454
  %v1583 = vunpack.c.l.b16 %v1455
  %v1584 = vunpack.c.l.b16 %v1456
  %v1585 = vunpack.c.l.b16 %v1457
  %v1586 = vunpack.c.l.b16 %v1458
  %v1587 = vunpack.c.l.b16 %v1459
  %v1588 = vunpack.c.l.b16 %v1460
  %v1589 = vunpack.c.l.b16 %v1461
  %v1590 = vunpack.c.l.b16 %v1462
  %v1591 = vunpack.c.l.b16 %v1463
  %v1592 = vunpack.c.l.b16 %v1464
  %v1593 = vunpack.c.l.b16 %v1465
  %v1594 = vunpack.c.l.b16 %v1466
  %v1595 = vunpack.c.l.b16 %v1467
  %v1596 = vunpack.c.l.b16 %v1468
  %v1597 = vunpack.c.l.b16 %v1469
  %v1598 = vunpack.c.l.b16 %v1470
  %v1599 = vunpack.c.l.b16 %v1471
  %v1600 = vunpack.c.l.b16 %v1472
  %v1601 = vunpack.c.l.b16 %v1473
  %v1602 = vunpack.c.l.b16 %v1474
  %v1603 = vpack.c.b16 %v1540, %v1539
  %v1604 = vpack.c.b16 %v1542, %v1541
  %v1605 = vpack.c.b16 %v1544, %v1543
  %v1606 = vpack.c.b16 %v1546, %v1545
  %v1607 = vpack.c.b16 %v1548, %v1547
  %v1608 = vpack.c.b16 %v1550, %v1549
  %v1609 = vpack.c.b16 %v1552, %v1551
  %v1610 = vpack.c.b16 %v1554, %v1553
  %v1611 = vpack.c.b16 %v1556, %v1555
  %v1612 = vpack.c.b16 %v1558, %v1557
  %v1613 = vpack.c.b16 %v1560, %v1559
  %v1614 = vpack.c.b16 %v1562, %v1561
  %v1615 = vpack.c.b16 %v1564, %v1563
  %v1616 = vpack.c.b16 %v1566, %v1565
  %v1617 = vpack.c.b16 %v1568, %v1567
  %v1618 = vpack.c.b16 %v1570, %v1569
  %v1619 = vpack.c.b16 %v1572, %v1571
  %v1620 = vpack.c.b16 %v1574, %v1573
  %v1621 = vpack.c.b16 %v1576, %v1575
  %v1622 = vpack.c.b16 %v1578, %v1577
  %v1623 = vpack.c.b16 %v1580, %v1579
  %v1624 = vpack.c.b16 %v1582, %v1581
  %v1625 = vpack.c.b16 %v1584, %v1583
  %v1626 = vpack.c.b16 %v1586, %v1585
  %v1627 = vpack.c.b16 %v1588, %v1587
  %v1628 = vpack.c.b16 %v1590, %v1589
  %v1629 = vpack.c.b16 %v1592, %v1591
  %v1630 = vpack.c.b16 %v1594, %v1593
  %v1631 = vpack.c.b16 %v1596, %v1595
  %v1632 = vpack.c.b16 %v1598, %v1597
  %v1633 = vpack.c.b16 %v1600, %v1599
  %v1634 = vpack.c.b16 %v1602, %v1601
  %v1636 = vrot.slane 0, 4
  %v1637 = vrot.slane %v1603, 4
  %v1638 = vrot.slane %v1604, 4
  %v1639 = vrot.slane %v1605, 4
  %v1640 = vrot.slane %v1606, 4
  %v1641 = vrot.slane %v1607, 4
  %v1642 = vrot.slane %v1608, 4
  %v1643 = vrot.slane %v1609, 4
  %v1644 = vrot.slane %v1610, 4
  %v1645 = vrot.slane %v1611, 4
  %v1646 = vrot.slane %v1612, 4
  %v1647 = vrot.slane %v1613, 4
  %v1648 = vrot.slane %v1614, 4
  %v1649 = vrot.slane %v1615, 4
  %v1650 = vrot.slane %v1616, 4
  %v1651 = vrot.slane %v1617, 4
  %v1652 = vrot.slane %v1618, 4
  %v1653 = vrot.slane %v1619, 4
  %v1654 = vrot.slane %v1620, 4
  %v1655 = vrot.slane %v1621, 4
  %v1656 = vrot.slane %v1622, 4
  %v1657 = vrot.slane %v1623, 4
  %v1658 = vrot.slane %v1624, 4
  %v1659 = vrot.slane %v1625, 4
  %v1660 = vrot.slane %v1626, 4
  %v1661 = vrot.slane %v1627, 4
  %v1662 = vrot.slane %v1628, 4
  %v1663 = vrot.slane %v1629, 4
  %v1664 = vrot.slane %v1630, 4
  %v1665 = vrot.slane %v1631, 4
  %v1666 = vrot.slane %v1632, 4
  %v1667 = vrot.slane %v1633, 4
  %v1668 = vrot.slane %v1634, 4
  %vm1669 = vcmask 1043456
  %v1672 = vsel %vm1669, 0, %v1636
  %v1674 = vsel %vm1669, 0, %v1637
  %v1676 = vsel %vm1669, 0, %v1638
  %v1678 = vsel %vm1669, 0, %v1639
  %v1680 = vsel %vm1669, 0, %v1640
  %v1682 = vsel %vm1669, 0, %v1641
  %v1684 = vsel %vm1669, 0, %v1642
  %v1686 = vsel %vm1669, 0, %v1643
  %v1688 = vsel %vm1669, 0, %v1644
  %v1690 = vsel %vm1669, 0, %v1645
  %v1692 = vsel %vm1669, 0, %v1646
  %v1694 = vsel %vm1669, 0, %v1647
  %v1696 = vsel %vm1669, 0, %v1648
  %v1698 = vsel %vm1669, 0, %v1649
  %v1700 = vsel %vm1669, 0, %v1650
  %v1702 = vsel %vm1669, 0, %v1651
  %v1704 = vsel %vm1669, 0, %v1652
  %v1706 = vsel %vm1669, 0, %v1653
  %v1708 = vsel %vm1669, 0, %v1654
  %v1710 = vsel %vm1669, 0, %v1655
  %v1712 = vsel %vm1669, 0, %v1656
  %v1714 = vsel %vm1669, 0, %v1657
  %v1716 = vsel %vm1669, 0, %v1658
  %v1718 = vsel %vm1669, 0, %v1659
  %v1720 = vsel %vm1669, 0, %v1660
  %v1722 = vsel %vm1669, 0, %v1661
  %v1724 = vsel %vm1669, 0, %v1662
  %v1726 = vsel %vm1669, 0, %v1663
  %v1728 = vsel %vm1669, 0, %v1664
  %v1730 = vsel %vm1669, 0, %v1665
  %v1732 = vsel %vm1669, 0, %v1666
  %v1734 = vsel %vm1669, 0, %v1667
  %v1736 = vsel %vm1669, 0, %v1668
  %v1737 = vsel %vm1669, %v1636, 0
  %v1738 = vsel %vm1669, %v1637, 0
  %v1739 = vsel %vm1669, %v1638, 0
  %v1740 = vsel %vm1669, %v1639, 0
  %v1741 = vsel %vm1669, %v1640, 0
  %v1742 = vsel %vm1669, %v1641, 0
  %v1743 = vsel %vm1669, %v1642, 0
  %v1744 = vsel %vm1669, %v1643, 0
  %v1745 = vsel %vm1669, %v1644, 0
  %v1746 = vsel %vm1669, %v1645, 0
  %v1747 = vsel %vm1669, %v1646, 0
  %v1748 = vsel %vm1669, %v1647, 0
  %v1749 = vsel %vm1669, %v1648, 0
  %v1750 = vsel %vm1669, %v1649, 0
  %v1751 = vsel %vm1669, %v1650, 0
  %v1752 = vsel %vm1669, %v1651, 0
  %v1753 = vsel %vm1669, %v1652, 0
  %v1754 = vsel %vm1669, %v1653, 0
  %v1755 = vsel %vm1669, %v1654, 0
  %v1756 = vsel %vm1669, %v1655, 0
  %v1757 = vsel %vm1669, %v1656, 0
  %v1758 = vsel %vm1669, %v1657, 0
  %v1759 = vsel %vm1669, %v1658, 0
  %v1760 = vsel %vm1669, %v1659, 0
  %v1761 = vsel %vm1669, %v1660, 0
  %v1762 = vsel %vm1669, %v1661, 0
  %v1763 = vsel %vm1669, %v1662, 0
  %v1764 = vsel %vm1669, %v1663, 0
  %v1765 = vsel %vm1669, %v1664, 0
  %v1766 = vsel %vm1669, %v1665, 0
  %v1767 = vsel %vm1669, %v1666, 0
  %v1768 = vsel %vm1669, %v1667, 0
  %v1769 = vsel %vm1669, %v1668, 0
  %vm1828 = vcmask 1044480
  %v1829 = vrot.slane %v1672, 3
  %v1830 = vrot.slane %v1737, 3
  %v1831 = vsel %vm1828, %v1829, %v1830
  %v1832 = vrot.slane %v1674, 3
  %v1833 = vrot.slane %v1738, 3
  %v1834 = vsel %vm1828, %v1832, %v1833
  %v1835 = vrot.slane %v1676, 3
  %v1836 = vrot.slane %v1739, 3
  %v1837 = vsel %vm1828, %v1835, %v1836
  %v1838 = vrot.slane %v1678, 3
  %v1839 = vrot.slane %v1740, 3
  %v1840 = vsel %vm1828, %v1838, %v1839
  %v1841 = vrot.slane %v1680, 3
  %v1842 = vrot.slane %v1741, 3
  %v1843 = vsel %vm1828, %v1841, %v1842
  %v1844 = vrot.slane %v1682, 3
  %v1845 = vrot.slane %v1742, 3
  %v1846 = vsel %vm1828, %v1844, %v1845
  %v1847 = vrot.slane %v1684, 3
  %v1848 = vrot.slane %v1743, 3
  %v1849 = vsel %vm1828, %v1847, %v1848
  %v1850 = vrot.slane %v1686, 3
  %v1851 = vrot.slane %v1744, 3
  %v1852 = vsel %vm1828, %v1850, %v1851
  %v1853 = vrot.slane %v1688, 3
  %v1854 = vrot.slane %v1745, 3
  %v1855 = vsel %vm1828, %v1853, %v1854
  %v1856 = vrot.slane %v1690, 3
  %v1857 = vrot.slane %v1746, 3
  %v1858 = vsel %vm1828, %v1856, %v1857
  %v1859 = vrot.slane %v1692, 3
  %v1860 = vrot.slane %v1747, 3
  %v1861 = vsel %vm1828, %v1859, %v1860
  %v1862 = vrot.slane %v1694, 3
  %v1863 = vrot.slane %v1748, 3
  %v1864 = vsel %vm1828, %v1862, %v1863
  %v1865 = vrot.slane %v1696, 3
  %v1866 = vrot.slane %v1749, 3
  %v1867 = vsel %vm1828, %v1865, %v1866
  %v1868 = vrot.slane %v1698, 3
  %v1869 = vrot.slane %v1750, 3
  %v1870 = vsel %vm1828, %v1868, %v1869
  %v1871 = vrot.slane %v1700, 3
  %v1872 = vrot.slane %v1751, 3
  %v1873 = vsel %vm1828, %v1871, %v1872
  %v1874 = vrot.slane %v1706, 3
  %v1875 = vrot.slane %v1754, 3
  %v1876 = vsel %vm1828, %v1874, %v1875
  %v1877 = vrot.slane %v1708, 3
  %v1878 = vrot.slane %v1755, 3
  %v1879 = vsel %vm1828, %v1877, %v1878
  %v1880 = vrot.slane %v1710, 3
  %v1881 = vrot.slane %v1756, 3
  %v1882 = vsel %vm1828, %v1880, %v1881
  %v1883 = vrot.slane %v1712, 3
  %v1884 = vrot.slane %v1757, 3
  %v1885 = vsel %vm1828, %v1883, %v1884
  %v1886 = vrot.slane %v1714, 3
  %v1887 = vrot.slane %v1758, 3
  %v1888 = vsel %vm1828, %v1886, %v1887
  %v1889 = vrot.slane %v1716, 3
  %v1890 = vrot.slane %v1759, 3
  %v1891 = vsel %vm1828, %v1889, %v1890
  %v1892 = vrot.slane %v1718, 3
  %v1893 = vrot.slane %v1760, 3
  %v1894 = vsel %vm1828, %v1892, %v1893
  %v1895 = vrot.slane %v1720, 3
  %v1896 = vrot.slane %v1761, 3
  %v1897 = vsel %vm1828, %v1895, %v1896
  %v1898 = vrot.slane %v1722, 3
  %v1899 = vrot.slane %v1762, 3
  %v1900 = vsel %vm1828, %v1898, %v1899
  %v1901 = vrot.slane %v1724, 3
  %v1902 = vrot.slane %v1763, 3
  %v1903 = vsel %vm1828, %v1901, %v1902
  %v1904 = vrot.slane %v1726, 3
  %v1905 = vrot.slane %v1764, 3
  %v1906 = vsel %vm1828, %v1904, %v1905
  %v1907 = vrot.slane %v1728, 3
  %v1908 = vrot.slane %v1765, 3
  %v1909 = vsel %vm1828, %v1907, %v1908
  %v1910 = vrot.slane %v1730, 3
  %v1911 = vrot.slane %v1766, 3
  %v1912 = vsel %vm1828, %v1910, %v1911
  %v1913 = vrot.slane %v1732, 3
  %v1914 = vrot.slane %v1767, 3
  %v1915 = vsel %vm1828, %v1913, %v1914
  %v1916 = vld [vmem:[%s5] sm:$0xf]
  %v1917 = vld [vmem:[%s5 + $0x4] sm:$0xf]
  %v1918 = vld [vmem:[%s5 + $0x8] sm:$0xf]
  %v1919 = vld [vmem:[%s5 + $0xc] sm:$0xf]
  %v1924 = vrot.slane %v1702, 3
  %v1925 = vrot.slane %v1752, 3
  %v1926 = vsel %vm1828, %v1924, %v1925
  %v1927 = vrot.slane %v1734, 3
  %v1928 = vrot.slane %v1768, 3
  %v1929 = vsel %vm1828, %v1927, %v1928
  %s1930 = scalar_lea.vmem %s5, 80
  %v1931 = vld [vmem:[%s1930] sm:$0xf]
  %v1932 = vld [vmem:[%s1930 + $0x4] sm:$0xf]
  %v1933 = vld [vmem:[%s1930 + $0x8] sm:$0xf]
  %v1934 = vld [vmem:[%s1930 + $0xc] sm:$0xf]
  %v1939 = vunpack.c.l.b16 %v1931
  %v1940 = vunpack.c.l.b16 %v1932
  %v1941 = vunpack.c.l.b16 %v1933
  %v1942 = vunpack.c.l.b16 %v1934
  %v1943 = vpack.c.b16 %v1940, %v1939
  %v1944 = vpack.c.b16 %v1942, %v1941
  %vm1947 = vcmask 261120
  %v1949 = vsel %vm1947, %v1831, 0
  %v1952 = vsel %vm1947, %v1834, 0
  %v1955 = vsel %vm1947, %v1837, 0
  %v1958 = vsel %vm1947, %v1840, 0
  %v1961 = vsel %vm1947, %v1843, 0
  %v1964 = vsel %vm1947, %v1846, 0
  %v1967 = vsel %vm1947, %v1849, 0
  %v1970 = vsel %vm1947, %v1852, 0
  %v1973 = vsel %vm1947, %v1855, 0
  %v1976 = vsel %vm1947, %v1858, 0
  %v1979 = vsel %vm1947, %v1861, 0
  %v1982 = vsel %vm1947, %v1864, 0
  %v1985 = vsel %vm1947, %v1867, 0
  %v1988 = vsel %vm1947, %v1870, 0
  %v1991 = vsel %vm1947, %v1873, 0
  %v1994 = vsel %vm1947, %v1926, 0
  %v1997 = vsel %vm1947, %v1876, 0
  %v2000 = vsel %vm1947, %v1879, 0
  %v2003 = vsel %vm1947, %v1882, 0
  %v2006 = vsel %vm1947, %v1885, 0
  %v2009 = vsel %vm1947, %v1888, 0
  %v2012 = vsel %vm1947, %v1891, 0
  %v2015 = vsel %vm1947, %v1894, 0
  %v2018 = vsel %vm1947, %v1897, 0
  %v2021 = vsel %vm1947, %v1900, 0
  %v2024 = vsel %vm1947, %v1903, 0
  %v2027 = vsel %vm1947, %v1906, 0
  %v2030 = vsel %vm1947, %v1909, 0
  %v2033 = vsel %vm1947, %v1912, 0
  %v2036 = vsel %vm1947, %v1915, 0
  %v2039 = vsel %vm1947, %v1929, 0
  %2041 = vmatpush.bf16.msra.mxu0 0
  %2042 = vmatpush.bf16.msra.mxu0 0
  %2043 = vmatpush.bf16.msra.mxu0 0
  %2044 = vmatpush.bf16.msra.mxu0 0
  %2045 = vmatpush.bf16.msra.mxu0 0
  %2046 = vmatpush.bf16.msra.mxu0 0
  %2047 = vmatpush.bf16.msra.mxu0 %v1944
  %2048 = vmatpush.bf16.msra.mxu0 %v1943
  %2049 = vmatmul.bf16.gmra.mxu0 %v1949
  %v2050 = vpop.f32.mrf.mxu0
  %v2051 = vadd.f32 0.0, %v2050
  %v2052 = vpop.f32.mrf.mxu0
  %v2053 = vadd.f32 0.0, %v2052
  %2054 = vmatmul.bf16.gmra.mxu0 %v1952
  %v2055 = vpop.f32.mrf.mxu0
  %v2056 = vadd.f32 0.0, %v2055
  %v2057 = vpop.f32.mrf.mxu0
  %v2058 = vadd.f32 0.0, %v2057
  %2059 = vmatmul.bf16.gmra.mxu0 %v1955
  %v2060 = vpop.f32.mrf.mxu0
  %v2061 = vadd.f32 0.0, %v2060
  %v2062 = vpop.f32.mrf.mxu0
  %v2063 = vadd.f32 0.0, %v2062
  %2064 = vmatmul.bf16.gmra.mxu0 %v1958
  %v2065 = vpop.f32.mrf.mxu0
  %v2066 = vadd.f32 0.0, %v2065
  %v2067 = vpop.f32.mrf.mxu0
  %v2068 = vadd.f32 0.0, %v2067
  %2069 = vmatmul.bf16.gmra.mxu0 %v1961
  %v2070 = vpop.f32.mrf.mxu0
  %v2071 = vadd.f32 0.0, %v2070
  %v2072 = vpop.f32.mrf.mxu0
  %v2073 = vadd.f32 0.0, %v2072
  %2074 = vmatmul.bf16.gmra.mxu0 %v1964
  %v2075 = vpop.f32.mrf.mxu0
  %v2076 = vadd.f32 0.0, %v2075
  %v2077 = vpop.f32.mrf.mxu0
  %v2078 = vadd.f32 0.0, %v2077
  %2079 = vmatmul.bf16.gmra.mxu0 %v1967
  %v2080 = vpop.f32.mrf.mxu0
  %v2081 = vadd.f32 0.0, %v2080
  %v2082 = vpop.f32.mrf.mxu0
  %v2083 = vadd.f32 0.0, %v2082
  %2084 = vmatmul.bf16.gmra.mxu0 %v1970
  %v2085 = vpop.f32.mrf.mxu0
  %v2086 = vadd.f32 0.0, %v2085
  %v2087 = vpop.f32.mrf.mxu0
  %v2088 = vadd.f32 0.0, %v2087
  %2089 = vmatmul.bf16.gmra.mxu0 %v1973
  %v2090 = vpop.f32.mrf.mxu0
  %v2091 = vadd.f32 0.0, %v2090
  %v2092 = vpop.f32.mrf.mxu0
  %v2093 = vadd.f32 0.0, %v2092
  %2094 = vmatmul.bf16.gmra.mxu0 %v1976
  %v2095 = vpop.f32.mrf.mxu0
  %v2096 = vadd.f32 0.0, %v2095
  %v2097 = vpop.f32.mrf.mxu0
  %v2098 = vadd.f32 0.0, %v2097
  %2099 = vmatmul.bf16.gmra.mxu0 %v1979
  %v2100 = vpop.f32.mrf.mxu0
  %v2101 = vadd.f32 0.0, %v2100
  %v2102 = vpop.f32.mrf.mxu0
  %v2103 = vadd.f32 0.0, %v2102
  %2104 = vmatmul.bf16.gmra.mxu0 %v1982
  %v2105 = vpop.f32.mrf.mxu0
  %v2106 = vadd.f32 0.0, %v2105
  %v2107 = vpop.f32.mrf.mxu0
  %v2108 = vadd.f32 0.0, %v2107
  %2109 = vmatmul.bf16.gmra.mxu0 %v1985
  %v2110 = vpop.f32.mrf.mxu0
  %v2111 = vadd.f32 0.0, %v2110
  %v2112 = vpop.f32.mrf.mxu0
  %v2113 = vadd.f32 0.0, %v2112
  %2114 = vmatmul.bf16.gmra.mxu0 %v1988
  %v2115 = vpop.f32.mrf.mxu0
  %v2116 = vadd.f32 0.0, %v2115
  %v2117 = vpop.f32.mrf.mxu0
  %v2118 = vadd.f32 0.0, %v2117
  %2119 = vmatmul.bf16.gmra.mxu0 %v1991
  %v2120 = vpop.f32.mrf.mxu0
  %v2121 = vadd.f32 0.0, %v2120
  %v2122 = vpop.f32.mrf.mxu0
  %v2123 = vadd.f32 0.0, %v2122
  %2124 = vmatmul.bf16.gmra.mxu0 %v1994
  %v2125 = vpop.f32.mrf.mxu0
  %v2126 = vadd.f32 0.0, %v2125
  %v2127 = vpop.f32.mrf.mxu0
  %v2128 = vadd.f32 0.0, %v2127
  %2129 = vmatmul.bf16.gmra.mxu0 %v1949
  %v2130 = vpop.f32.mrf.mxu0
  %v2131 = vadd.f32 0.0, %v2130
  %v2132 = vpop.f32.mrf.mxu0
  %v2133 = vadd.f32 0.0, %v2132
  %2134 = vmatmul.bf16.gmra.mxu0 %v1997
  %v2135 = vpop.f32.mrf.mxu0
  %v2136 = vadd.f32 0.0, %v2135
  %v2137 = vpop.f32.mrf.mxu0
  %v2138 = vadd.f32 0.0, %v2137
  %2139 = vmatmul.bf16.gmra.mxu0 %v2000
  %v2140 = vpop.f32.mrf.mxu0
  %v2141 = vadd.f32 0.0, %v2140
  %v2142 = vpop.f32.mrf.mxu0
  %v2143 = vadd.f32 0.0, %v2142
  %2144 = vmatmul.bf16.gmra.mxu0 %v2003
  %v2145 = vpop.f32.mrf.mxu0
  %v2146 = vadd.f32 0.0, %v2145
  %v2147 = vpop.f32.mrf.mxu0
  %v2148 = vadd.f32 0.0, %v2147
  %2149 = vmatmul.bf16.gmra.mxu0 %v2006
  %v2150 = vpop.f32.mrf.mxu0
  %v2151 = vadd.f32 0.0, %v2150
  %v2152 = vpop.f32.mrf.mxu0
  %v2153 = vadd.f32 0.0, %v2152
  %2154 = vmatmul.bf16.gmra.mxu0 %v2009
  %v2155 = vpop.f32.mrf.mxu0
  %v2156 = vadd.f32 0.0, %v2155
  %v2157 = vpop.f32.mrf.mxu0
  %v2158 = vadd.f32 0.0, %v2157
  %2159 = vmatmul.bf16.gmra.mxu0 %v2012
  %v2160 = vpop.f32.mrf.mxu0
  %v2161 = vadd.f32 0.0, %v2160
  %v2162 = vpop.f32.mrf.mxu0
  %v2163 = vadd.f32 0.0, %v2162
  %2164 = vmatmul.bf16.gmra.mxu0 %v2015
  %v2165 = vpop.f32.mrf.mxu0
  %v2166 = vadd.f32 0.0, %v2165
  %v2167 = vpop.f32.mrf.mxu0
  %v2168 = vadd.f32 0.0, %v2167
  %2169 = vmatmul.bf16.gmra.mxu0 %v2018
  %v2170 = vpop.f32.mrf.mxu0
  %v2171 = vadd.f32 0.0, %v2170
  %v2172 = vpop.f32.mrf.mxu0
  %v2173 = vadd.f32 0.0, %v2172
  %2174 = vmatmul.bf16.gmra.mxu0 %v2021
  %v2175 = vpop.f32.mrf.mxu0
  %v2176 = vadd.f32 0.0, %v2175
  %v2177 = vpop.f32.mrf.mxu0
  %v2178 = vadd.f32 0.0, %v2177
  %2179 = vmatmul.bf16.gmra.mxu0 %v2024
  %v2180 = vpop.f32.mrf.mxu0
  %v2181 = vadd.f32 0.0, %v2180
  %v2182 = vpop.f32.mrf.mxu0
  %v2183 = vadd.f32 0.0, %v2182
  %2184 = vmatmul.bf16.gmra.mxu0 %v2027
  %v2185 = vpop.f32.mrf.mxu0
  %v2186 = vadd.f32 0.0, %v2185
  %v2187 = vpop.f32.mrf.mxu0
  %v2188 = vadd.f32 0.0, %v2187
  %2189 = vmatmul.bf16.gmra.mxu0 %v2030
  %v2190 = vpop.f32.mrf.mxu0
  %v2191 = vadd.f32 0.0, %v2190
  %v2192 = vpop.f32.mrf.mxu0
  %v2193 = vadd.f32 0.0, %v2192
  %2194 = vmatmul.bf16.gmra.mxu0 %v2033
  %v2195 = vpop.f32.mrf.mxu0
  %v2196 = vadd.f32 0.0, %v2195
  %v2197 = vpop.f32.mrf.mxu0
  %v2198 = vadd.f32 0.0, %v2197
  %2199 = vmatmul.bf16.gmra.mxu0 %v2036
  %v2200 = vpop.f32.mrf.mxu0
  %v2201 = vadd.f32 0.0, %v2200
  %v2202 = vpop.f32.mrf.mxu0
  %v2203 = vadd.f32 0.0, %v2202
  %2204 = vmatmul.bf16.gmra.mxu0 %v2039
  %v2205 = vpop.f32.mrf.mxu0
  %v2206 = vadd.f32 0.0, %v2205
  %v2207 = vpop.f32.mrf.mxu0
  %v2208 = vadd.f32 0.0, %v2207
  %2209 = vdwg.mxu0
  %v2214 = vunpack.c.l.b16 %v1916
  %v2215 = vunpack.c.l.b16 %v1917
  %v2216 = vunpack.c.l.b16 %v1918
  %v2217 = vunpack.c.l.b16 %v1919
  %v2218 = vpack.c.b16 %v2215, %v2214
  %v2219 = vpack.c.b16 %v2217, %v2216
  %2222 = vmatpush.bf16.msra.mxu0 0
  %2223 = vmatpush.bf16.msra.mxu0 0
  %2224 = vmatpush.bf16.msra.mxu0 0
  %2225 = vmatpush.bf16.msra.mxu0 0
  %2226 = vmatpush.bf16.msra.mxu0 0
  %2227 = vmatpush.bf16.msra.mxu0 0
  %2228 = vmatpush.bf16.msra.mxu0 %v2219
  %2229 = vmatpush.bf16.msra.mxu0 %v2218
  %2230 = vmatmul.bf16.gmra.mxu0 %v1949
  %v2231 = vpop.f32.mrf.mxu0
  %v2232 = vadd.f32 %v2051, %v2231
  %v2233 = vpop.f32.mrf.mxu0
  %v2234 = vadd.f32 %v2053, %v2233
  %2235 = vmatmul.bf16.gmra.mxu0 %v1949
  %v2236 = vpop.f32.mrf.mxu0
  %v2237 = vadd.f32 %v2056, %v2236
  %v2238 = vpop.f32.mrf.mxu0
  %v2239 = vadd.f32 %v2058, %v2238
  %2240 = vmatmul.bf16.gmra.mxu0 %v1952
  %v2241 = vpop.f32.mrf.mxu0
  %v2242 = vadd.f32 %v2061, %v2241
  %v2243 = vpop.f32.mrf.mxu0
  %v2244 = vadd.f32 %v2063, %v2243
  %2245 = vmatmul.bf16.gmra.mxu0 %v1955
  %v2246 = vpop.f32.mrf.mxu0
  %v2247 = vadd.f32 %v2066, %v2246
  %v2248 = vpop.f32.mrf.mxu0
  %v2249 = vadd.f32 %v2068, %v2248
  %2250 = vmatmul.bf16.gmra.mxu0 %v1958
  %v2251 = vpop.f32.mrf.mxu0
  %v2252 = vadd.f32 %v2071, %v2251
  %v2253 = vpop.f32.mrf.mxu0
  %v2254 = vadd.f32 %v2073, %v2253
  %2255 = vmatmul.bf16.gmra.mxu0 %v1961
  %v2256 = vpop.f32.mrf.mxu0
  %v2257 = vadd.f32 %v2076, %v2256
  %v2258 = vpop.f32.mrf.mxu0
  %v2259 = vadd.f32 %v2078, %v2258
  %2260 = vmatmul.bf16.gmra.mxu0 %v1964
  %v2261 = vpop.f32.mrf.mxu0
  %v2262 = vadd.f32 %v2081, %v2261
  %v2263 = vpop.f32.mrf.mxu0
  %v2264 = vadd.f32 %v2083, %v2263
  %2265 = vmatmul.bf16.gmra.mxu0 %v1967
  %v2266 = vpop.f32.mrf.mxu0
  %v2267 = vadd.f32 %v2086, %v2266
  %v2268 = vpop.f32.mrf.mxu0
  %v2269 = vadd.f32 %v2088, %v2268
  %2270 = vmatmul.bf16.gmra.mxu0 %v1970
  %v2271 = vpop.f32.mrf.mxu0
  %v2272 = vadd.f32 %v2091, %v2271
  %v2273 = vpop.f32.mrf.mxu0
  %v2274 = vadd.f32 %v2093, %v2273
  %2275 = vmatmul.bf16.gmra.mxu0 %v1973
  %v2276 = vpop.f32.mrf.mxu0
  %v2277 = vadd.f32 %v2096, %v2276
  %v2278 = vpop.f32.mrf.mxu0
  %v2279 = vadd.f32 %v2098, %v2278
  %2280 = vmatmul.bf16.gmra.mxu0 %v1976
  %v2281 = vpop.f32.mrf.mxu0
  %v2282 = vadd.f32 %v2101, %v2281
  %v2283 = vpop.f32.mrf.mxu0
  %v2284 = vadd.f32 %v2103, %v2283
  %2285 = vmatmul.bf16.gmra.mxu0 %v1979
  %v2286 = vpop.f32.mrf.mxu0
  %v2287 = vadd.f32 %v2106, %v2286
  %v2288 = vpop.f32.mrf.mxu0
  %v2289 = vadd.f32 %v2108, %v2288
  %2290 = vmatmul.bf16.gmra.mxu0 %v1982
  %v2291 = vpop.f32.mrf.mxu0
  %v2292 = vadd.f32 %v2111, %v2291
  %v2293 = vpop.f32.mrf.mxu0
  %v2294 = vadd.f32 %v2113, %v2293
  %2295 = vmatmul.bf16.gmra.mxu0 %v1985
  %v2296 = vpop.f32.mrf.mxu0
  %v2297 = vadd.f32 %v2116, %v2296
  %v2298 = vpop.f32.mrf.mxu0
  %v2299 = vadd.f32 %v2118, %v2298
  %2300 = vmatmul.bf16.gmra.mxu0 %v1988
  %v2301 = vpop.f32.mrf.mxu0
  %v2302 = vadd.f32 %v2121, %v2301
  %v2303 = vpop.f32.mrf.mxu0
  %v2304 = vadd.f32 %v2123, %v2303
  %2305 = vmatmul.bf16.gmra.mxu0 %v1991
  %v2306 = vpop.f32.mrf.mxu0
  %v2307 = vadd.f32 %v2126, %v2306
  %v2308 = vpop.f32.mrf.mxu0
  %v2309 = vadd.f32 %v2128, %v2308
  %2310 = vmatmul.bf16.gmra.mxu0 %v1949
  %v2311 = vpop.f32.mrf.mxu0
  %v2312 = vadd.f32 %v2131, %v2311
  %v2313 = vpop.f32.mrf.mxu0
  %v2314 = vadd.f32 %v2133, %v2313
  %2315 = vmatmul.bf16.gmra.mxu0 %v1949
  %v2316 = vpop.f32.mrf.mxu0
  %v2317 = vadd.f32 %v2136, %v2316
  %v2318 = vpop.f32.mrf.mxu0
  %v2319 = vadd.f32 %v2138, %v2318
  %2320 = vmatmul.bf16.gmra.mxu0 %v1997
  %v2321 = vpop.f32.mrf.mxu0
  %v2322 = vadd.f32 %v2141, %v2321
  %v2323 = vpop.f32.mrf.mxu0
  %v2324 = vadd.f32 %v2143, %v2323
  %2325 = vmatmul.bf16.gmra.mxu0 %v2000
  %v2326 = vpop.f32.mrf.mxu0
  %v2327 = vadd.f32 %v2146, %v2326
  %v2328 = vpop.f32.mrf.mxu0
  %v2329 = vadd.f32 %v2148, %v2328
  %2330 = vmatmul.bf16.gmra.mxu0 %v2003
  %v2331 = vpop.f32.mrf.mxu0
  %v2332 = vadd.f32 %v2151, %v2331
  %v2333 = vpop.f32.mrf.mxu0
  %v2334 = vadd.f32 %v2153, %v2333
  %2335 = vmatmul.bf16.gmra.mxu0 %v2006
  %v2336 = vpop.f32.mrf.mxu0
  %v2337 = vadd.f32 %v2156, %v2336
  %v2338 = vpop.f32.mrf.mxu0
  %v2339 = vadd.f32 %v2158, %v2338
  %2340 = vmatmul.bf16.gmra.mxu0 %v2009
  %v2341 = vpop.f32.mrf.mxu0
  %v2342 = vadd.f32 %v2161, %v2341
  %v2343 = vpop.f32.mrf.mxu0
  %v2344 = vadd.f32 %v2163, %v2343
  %2345 = vmatmul.bf16.gmra.mxu0 %v2012
  %v2346 = vpop.f32.mrf.mxu0
  %v2347 = vadd.f32 %v2166, %v2346
  %v2348 = vpop.f32.mrf.mxu0
  %v2349 = vadd.f32 %v2168, %v2348
  %2350 = vmatmul.bf16.gmra.mxu0 %v2015
  %v2351 = vpop.f32.mrf.mxu0
  %v2352 = vadd.f32 %v2171, %v2351
  %v2353 = vpop.f32.mrf.mxu0
  %v2354 = vadd.f32 %v2173, %v2353
  %2355 = vmatmul.bf16.gmra.mxu0 %v2018
  %v2356 = vpop.f32.mrf.mxu0
  %v2357 = vadd.f32 %v2176, %v2356
  %v2358 = vpop.f32.mrf.mxu0
  %v2359 = vadd.f32 %v2178, %v2358
  %2360 = vmatmul.bf16.gmra.mxu0 %v2021
  %v2361 = vpop.f32.mrf.mxu0
  %v2362 = vadd.f32 %v2181, %v2361
  %v2363 = vpop.f32.mrf.mxu0
  %v2364 = vadd.f32 %v2183, %v2363
  %2365 = vmatmul.bf16.gmra.mxu0 %v2024
  %v2366 = vpop.f32.mrf.mxu0
  %v2367 = vadd.f32 %v2186, %v2366
  %v2368 = vpop.f32.mrf.mxu0
  %v2369 = vadd.f32 %v2188, %v2368
  %2370 = vmatmul.bf16.gmra.mxu0 %v2027
  %v2371 = vpop.f32.mrf.mxu0
  %v2372 = vadd.f32 %v2191, %v2371
  %v2373 = vpop.f32.mrf.mxu0
  %v2374 = vadd.f32 %v2193, %v2373
  %2375 = vmatmul.bf16.gmra.mxu0 %v2030
  %v2376 = vpop.f32.mrf.mxu0
  %v2377 = vadd.f32 %v2196, %v2376
  %v2378 = vpop.f32.mrf.mxu0
  %v2379 = vadd.f32 %v2198, %v2378
  %2380 = vmatmul.bf16.gmra.mxu0 %v2033
  %v2381 = vpop.f32.mrf.mxu0
  %v2382 = vadd.f32 %v2201, %v2381
  %v2383 = vpop.f32.mrf.mxu0
  %v2384 = vadd.f32 %v2203, %v2383
  %2385 = vmatmul.bf16.gmra.mxu0 %v2036
  %v2386 = vpop.f32.mrf.mxu0
  %v2387 = vadd.f32 %v2206, %v2386
  %v2388 = vpop.f32.mrf.mxu0
  %v2389 = vadd.f32 %v2208, %v2388
  %2390 = vdwg.mxu0
  %v2395 = vrot.slane %v1704, 3
  %v2396 = vrot.slane %v1753, 3
  %v2397 = vsel %vm1828, %v2395, %v2396
  %v2398 = vrot.slane %v1736, 3
  %v2399 = vrot.slane %v1769, 3
  %v2400 = vsel %vm1828, %v2398, %v2399
  %s2401 = scalar_lea.vmem %s5, 160
  %v2402 = vld [vmem:[%s2401] sm:$0xf]
  %v2403 = vld [vmem:[%s2401 + $0x4] sm:$0xf]
  %v2404 = vld [vmem:[%s2401 + $0x8] sm:$0xf]
  %v2405 = vld [vmem:[%s2401 + $0xc] sm:$0xf]
  %v2410 = vunpack.c.l.b16 %v2402
  %v2411 = vunpack.c.l.b16 %v2403
  %v2412 = vunpack.c.l.b16 %v2404
  %v2413 = vunpack.c.l.b16 %v2405
  %v2414 = vpack.c.b16 %v2411, %v2410
  %v2415 = vpack.c.b16 %v2413, %v2412
  %v2419 = vsel %vm1947, %v2397, 0
  %v2422 = vsel %vm1947, %v2400, 0
  %2424 = vmatpush.bf16.msra.mxu0 0
  %2425 = vmatpush.bf16.msra.mxu0 0
  %2426 = vmatpush.bf16.msra.mxu0 0
  %2427 = vmatpush.bf16.msra.mxu0 0
  %2428 = vmatpush.bf16.msra.mxu0 0
  %2429 = vmatpush.bf16.msra.mxu0 0
  %2430 = vmatpush.bf16.msra.mxu0 %v2415
  %2431 = vmatpush.bf16.msra.mxu0 %v2414
  %2432 = vmatmul.bf16.gmra.mxu0 %v1952
  %v2433 = vpop.f32.mrf.mxu0
  %v2434 = vadd.f32 0.0, %v2433
  %v2435 = vpop.f32.mrf.mxu0
  %v2436 = vadd.f32 0.0, %v2435
  %2437 = vmatmul.bf16.gmra.mxu0 %v1955
  %v2438 = vpop.f32.mrf.mxu0
  %v2439 = vadd.f32 0.0, %v2438
  %v2440 = vpop.f32.mrf.mxu0
  %v2441 = vadd.f32 0.0, %v2440
  %2442 = vmatmul.bf16.gmra.mxu0 %v1958
  %v2443 = vpop.f32.mrf.mxu0
  %v2444 = vadd.f32 0.0, %v2443
  %v2445 = vpop.f32.mrf.mxu0
  %v2446 = vadd.f32 0.0, %v2445
  %2447 = vmatmul.bf16.gmra.mxu0 %v1961
  %v2448 = vpop.f32.mrf.mxu0
  %v2449 = vadd.f32 0.0, %v2448
  %v2450 = vpop.f32.mrf.mxu0
  %v2451 = vadd.f32 0.0, %v2450
  %2452 = vmatmul.bf16.gmra.mxu0 %v1964
  %v2453 = vpop.f32.mrf.mxu0
  %v2454 = vadd.f32 0.0, %v2453
  %v2455 = vpop.f32.mrf.mxu0
  %v2456 = vadd.f32 0.0, %v2455
  %2457 = vmatmul.bf16.gmra.mxu0 %v1967
  %v2458 = vpop.f32.mrf.mxu0
  %v2459 = vadd.f32 0.0, %v2458
  %v2460 = vpop.f32.mrf.mxu0
  %v2461 = vadd.f32 0.0, %v2460
  %2462 = vmatmul.bf16.gmra.mxu0 %v1970
  %v2463 = vpop.f32.mrf.mxu0
  %v2464 = vadd.f32 0.0, %v2463
  %v2465 = vpop.f32.mrf.mxu0
  %v2466 = vadd.f32 0.0, %v2465
  %2467 = vmatmul.bf16.gmra.mxu0 %v1973
  %v2468 = vpop.f32.mrf.mxu0
  %v2469 = vadd.f32 0.0, %v2468
  %v2470 = vpop.f32.mrf.mxu0
  %v2471 = vadd.f32 0.0, %v2470
  %2472 = vmatmul.bf16.gmra.mxu0 %v1976
  %v2473 = vpop.f32.mrf.mxu0
  %v2474 = vadd.f32 0.0, %v2473
  %v2475 = vpop.f32.mrf.mxu0
  %v2476 = vadd.f32 0.0, %v2475
  %2477 = vmatmul.bf16.gmra.mxu0 %v1979
  %v2478 = vpop.f32.mrf.mxu0
  %v2479 = vadd.f32 0.0, %v2478
  %v2480 = vpop.f32.mrf.mxu0
  %v2481 = vadd.f32 0.0, %v2480
  %2482 = vmatmul.bf16.gmra.mxu0 %v1982
  %v2483 = vpop.f32.mrf.mxu0
  %v2484 = vadd.f32 0.0, %v2483
  %v2485 = vpop.f32.mrf.mxu0
  %v2486 = vadd.f32 0.0, %v2485
  %2487 = vmatmul.bf16.gmra.mxu0 %v1985
  %v2488 = vpop.f32.mrf.mxu0
  %v2489 = vadd.f32 0.0, %v2488
  %v2490 = vpop.f32.mrf.mxu0
  %v2491 = vadd.f32 0.0, %v2490
  %2492 = vmatmul.bf16.gmra.mxu0 %v1988
  %v2493 = vpop.f32.mrf.mxu0
  %v2494 = vadd.f32 0.0, %v2493
  %v2495 = vpop.f32.mrf.mxu0
  %v2496 = vadd.f32 0.0, %v2495
  %2497 = vmatmul.bf16.gmra.mxu0 %v1991
  %v2498 = vpop.f32.mrf.mxu0
  %v2499 = vadd.f32 0.0, %v2498
  %v2500 = vpop.f32.mrf.mxu0
  %v2501 = vadd.f32 0.0, %v2500
  %2502 = vmatmul.bf16.gmra.mxu0 %v1994
  %v2503 = vpop.f32.mrf.mxu0
  %v2504 = vadd.f32 0.0, %v2503
  %v2505 = vpop.f32.mrf.mxu0
  %v2506 = vadd.f32 0.0, %v2505
  %2507 = vmatmul.bf16.gmra.mxu0 %v2419
  %v2508 = vpop.f32.mrf.mxu0
  %v2509 = vadd.f32 0.0, %v2508
  %v2510 = vpop.f32.mrf.mxu0
  %v2511 = vadd.f32 0.0, %v2510
  %2512 = vmatmul.bf16.gmra.mxu0 %v1997
  %v2513 = vpop.f32.mrf.mxu0
  %v2514 = vadd.f32 0.0, %v2513
  %v2515 = vpop.f32.mrf.mxu0
  %v2516 = vadd.f32 0.0, %v2515
  %2517 = vmatmul.bf16.gmra.mxu0 %v2000
  %v2518 = vpop.f32.mrf.mxu0
  %v2519 = vadd.f32 0.0, %v2518
  %v2520 = vpop.f32.mrf.mxu0
  %v2521 = vadd.f32 0.0, %v2520
  %2522 = vmatmul.bf16.gmra.mxu0 %v2003
  %v2523 = vpop.f32.mrf.mxu0
  %v2524 = vadd.f32 0.0, %v2523
  %v2525 = vpop.f32.mrf.mxu0
  %v2526 = vadd.f32 0.0, %v2525
  %2527 = vmatmul.bf16.gmra.mxu0 %v2006
  %v2528 = vpop.f32.mrf.mxu0
  %v2529 = vadd.f32 0.0, %v2528
  %v2530 = vpop.f32.mrf.mxu0
  %v2531 = vadd.f32 0.0, %v2530
  %2532 = vmatmul.bf16.gmra.mxu0 %v2009
  %v2533 = vpop.f32.mrf.mxu0
  %v2534 = vadd.f32 0.0, %v2533
  %v2535 = vpop.f32.mrf.mxu0
  %v2536 = vadd.f32 0.0, %v2535
  %2537 = vmatmul.bf16.gmra.mxu0 %v2012
  %v2538 = vpop.f32.mrf.mxu0
  %v2539 = vadd.f32 0.0, %v2538
  %v2540 = vpop.f32.mrf.mxu0
  %v2541 = vadd.f32 0.0, %v2540
  %2542 = vmatmul.bf16.gmra.mxu0 %v2015
  %v2543 = vpop.f32.mrf.mxu0
  %v2544 = vadd.f32 0.0, %v2543
  %v2545 = vpop.f32.mrf.mxu0
  %v2546 = vadd.f32 0.0, %v2545
  %2547 = vmatmul.bf16.gmra.mxu0 %v2018
  %v2548 = vpop.f32.mrf.mxu0
  %v2549 = vadd.f32 0.0, %v2548
  %v2550 = vpop.f32.mrf.mxu0
  %v2551 = vadd.f32 0.0, %v2550
  %2552 = vmatmul.bf16.gmra.mxu0 %v2021
  %v2553 = vpop.f32.mrf.mxu0
  %v2554 = vadd.f32 0.0, %v2553
  %v2555 = vpop.f32.mrf.mxu0
  %v2556 = vadd.f32 0.0, %v2555
  %2557 = vmatmul.bf16.gmra.mxu0 %v2024
  %v2558 = vpop.f32.mrf.mxu0
  %v2559 = vadd.f32 0.0, %v2558
  %v2560 = vpop.f32.mrf.mxu0
  %v2561 = vadd.f32 0.0, %v2560
  %2562 = vmatmul.bf16.gmra.mxu0 %v2027
  %v2563 = vpop.f32.mrf.mxu0
  %v2564 = vadd.f32 0.0, %v2563
  %v2565 = vpop.f32.mrf.mxu0
  %v2566 = vadd.f32 0.0, %v2565
  %2567 = vmatmul.bf16.gmra.mxu0 %v2030
  %v2568 = vpop.f32.mrf.mxu0
  %v2569 = vadd.f32 0.0, %v2568
  %v2570 = vpop.f32.mrf.mxu0
  %v2571 = vadd.f32 0.0, %v2570
  %2572 = vmatmul.bf16.gmra.mxu0 %v2033
  %v2573 = vpop.f32.mrf.mxu0
  %v2574 = vadd.f32 0.0, %v2573
  %v2575 = vpop.f32.mrf.mxu0
  %v2576 = vadd.f32 0.0, %v2575
  %2577 = vmatmul.bf16.gmra.mxu0 %v2036
  %v2578 = vpop.f32.mrf.mxu0
  %v2579 = vadd.f32 0.0, %v2578
  %v2580 = vpop.f32.mrf.mxu0
  %v2581 = vadd.f32 0.0, %v2580
  %2582 = vmatmul.bf16.gmra.mxu0 %v2039
  %v2583 = vpop.f32.mrf.mxu0
  %v2584 = vadd.f32 0.0, %v2583
  %v2585 = vpop.f32.mrf.mxu0
  %v2586 = vadd.f32 0.0, %v2585
  %2587 = vmatmul.bf16.gmra.mxu0 %v2422
  %v2588 = vpop.f32.mrf.mxu0
  %v2589 = vadd.f32 0.0, %v2588
  %v2590 = vpop.f32.mrf.mxu0
  %v2591 = vadd.f32 0.0, %v2590
  %2592 = vdwg.mxu0
  %v2593 = vadd.f32 %v2232, %v2434
  %v2594 = vadd.f32 %v2234, %v2436
  %v2595 = vadd.f32 %v2237, %v2439
  %v2596 = vadd.f32 %v2239, %v2441
  %v2597 = vadd.f32 %v2242, %v2444
  %v2598 = vadd.f32 %v2244, %v2446
  %v2599 = vadd.f32 %v2247, %v2449
  %v2600 = vadd.f32 %v2249, %v2451
  %v2601 = vadd.f32 %v2252, %v2454
  %v2602 = vadd.f32 %v2254, %v2456
  %v2603 = vadd.f32 %v2257, %v2459
  %v2604 = vadd.f32 %v2259, %v2461
  %v2605 = vadd.f32 %v2262, %v2464
  %v2606 = vadd.f32 %v2264, %v2466
  %v2607 = vadd.f32 %v2267, %v2469
  %v2608 = vadd.f32 %v2269, %v2471
  %v2609 = vadd.f32 %v2272, %v2474
  %v2610 = vadd.f32 %v2274, %v2476
  %v2611 = vadd.f32 %v2277, %v2479
  %v2612 = vadd.f32 %v2279, %v2481
  %v2613 = vadd.f32 %v2282, %v2484
  %v2614 = vadd.f32 %v2284, %v2486
  %v2615 = vadd.f32 %v2287, %v2489
  %v2616 = vadd.f32 %v2289, %v2491
  %v2617 = vadd.f32 %v2292, %v2494
  %v2618 = vadd.f32 %v2294, %v2496
  %v2619 = vadd.f32 %v2297, %v2499
  %v2620 = vadd.f32 %v2299, %v2501
  %v2621 = vadd.f32 %v2302, %v2504
  %v2622 = vadd.f32 %v2304, %v2506
  %v2623 = vadd.f32 %v2307, %v2509
  %v2624 = vadd.f32 %v2309, %v2511
  %v2625 = vadd.f32 %v2312, %v2514
  %v2626 = vadd.f32 %v2314, %v2516
  %v2627 = vadd.f32 %v2317, %v2519
  %v2628 = vadd.f32 %v2319, %v2521
  %v2629 = vadd.f32 %v2322, %v2524
  %v2630 = vadd.f32 %v2324, %v2526
  %v2631 = vadd.f32 %v2327, %v2529
  %v2632 = vadd.f32 %v2329, %v2531
  %v2633 = vadd.f32 %v2332, %v2534
  %v2634 = vadd.f32 %v2334, %v2536
  %v2635 = vadd.f32 %v2337, %v2539
  %v2636 = vadd.f32 %v2339, %v2541
  %v2637 = vadd.f32 %v2342, %v2544
  %v2638 = vadd.f32 %v2344, %v2546
  %v2639 = vadd.f32 %v2347, %v2549
  %v2640 = vadd.f32 %v2349, %v2551
  %v2641 = vadd.f32 %v2352, %v2554
  %v2642 = vadd.f32 %v2354, %v2556
  %v2643 = vadd.f32 %v2357, %v2559
  %v2644 = vadd.f32 %v2359, %v2561
  %v2645 = vadd.f32 %v2362, %v2564
  %v2646 = vadd.f32 %v2364, %v2566
  %v2647 = vadd.f32 %v2367, %v2569
  %v2648 = vadd.f32 %v2369, %v2571
  %v2649 = vadd.f32 %v2372, %v2574
  %v2650 = vadd.f32 %v2374, %v2576
  %v2651 = vadd.f32 %v2377, %v2579
  %v2652 = vadd.f32 %v2379, %v2581
  %v2653 = vadd.f32 %v2382, %v2584
  %v2654 = vadd.f32 %v2384, %v2586
  %v2655 = vadd.f32 %v2387, %v2589
  %v2656 = vadd.f32 %v2389, %v2591
  %s2657 = scalar_lea.vmem %s5, 240
  %v2658 = vld [vmem:[%s2657] sm:$0xf]
  %v2659 = vld [vmem:[%s2657 + $0x4] sm:$0xf]
  %v2660 = vld [vmem:[%s2657 + $0x8] sm:$0xf]
  %v2661 = vld [vmem:[%s2657 + $0xc] sm:$0xf]
  %v2666 = vunpack.c.l.b16 %v2658
  %v2667 = vunpack.c.l.b16 %v2659
  %v2668 = vunpack.c.l.b16 %v2660
  %v2669 = vunpack.c.l.b16 %v2661
  %v2670 = vpack.c.b16 %v2667, %v2666
  %v2671 = vpack.c.b16 %v2669, %v2668
  %2674 = vmatpush.bf16.msra.mxu0 0
  %2675 = vmatpush.bf16.msra.mxu0 0
  %2676 = vmatpush.bf16.msra.mxu0 0
  %2677 = vmatpush.bf16.msra.mxu0 0
  %2678 = vmatpush.bf16.msra.mxu0 0
  %2679 = vmatpush.bf16.msra.mxu0 0
  %2680 = vmatpush.bf16.msra.mxu0 %v2671
  %2681 = vmatpush.bf16.msra.mxu0 %v2670
  %2682 = vmatmul.bf16.gmra.mxu0 %v1955
  %v2683 = vpop.f32.mrf.mxu0
  %v2684 = vadd.f32 0.0, %v2683
  %v2685 = vpop.f32.mrf.mxu0
  %v2686 = vadd.f32 0.0, %v2685
  %2687 = vmatmul.bf16.gmra.mxu0 %v1958
  %v2688 = vpop.f32.mrf.mxu0
  %v2689 = vadd.f32 0.0, %v2688
  %v2690 = vpop.f32.mrf.mxu0
  %v2691 = vadd.f32 0.0, %v2690
  %2692 = vmatmul.bf16.gmra.mxu0 %v1961
  %v2693 = vpop.f32.mrf.mxu0
  %v2694 = vadd.f32 0.0, %v2693
  %v2695 = vpop.f32.mrf.mxu0
  %v2696 = vadd.f32 0.0, %v2695
  %2697 = vmatmul.bf16.gmra.mxu0 %v1964
  %v2698 = vpop.f32.mrf.mxu0
  %v2699 = vadd.f32 0.0, %v2698
  %v2700 = vpop.f32.mrf.mxu0
  %v2701 = vadd.f32 0.0, %v2700
  %2702 = vmatmul.bf16.gmra.mxu0 %v1967
  %v2703 = vpop.f32.mrf.mxu0
  %v2704 = vadd.f32 0.0, %v2703
  %v2705 = vpop.f32.mrf.mxu0
  %v2706 = vadd.f32 0.0, %v2705
  %2707 = vmatmul.bf16.gmra.mxu0 %v1970
  %v2708 = vpop.f32.mrf.mxu0
  %v2709 = vadd.f32 0.0, %v2708
  %v2710 = vpop.f32.mrf.mxu0
  %v2711 = vadd.f32 0.0, %v2710
  %2712 = vmatmul.bf16.gmra.mxu0 %v1973
  %v2713 = vpop.f32.mrf.mxu0
  %v2714 = vadd.f32 0.0, %v2713
  %v2715 = vpop.f32.mrf.mxu0
  %v2716 = vadd.f32 0.0, %v2715
  %2717 = vmatmul.bf16.gmra.mxu0 %v1976
  %v2718 = vpop.f32.mrf.mxu0
  %v2719 = vadd.f32 0.0, %v2718
  %v2720 = vpop.f32.mrf.mxu0
  %v2721 = vadd.f32 0.0, %v2720
  %2722 = vmatmul.bf16.gmra.mxu0 %v1979
  %v2723 = vpop.f32.mrf.mxu0
  %v2724 = vadd.f32 0.0, %v2723
  %v2725 = vpop.f32.mrf.mxu0
  %v2726 = vadd.f32 0.0, %v2725
  %2727 = vmatmul.bf16.gmra.mxu0 %v1982
  %v2728 = vpop.f32.mrf.mxu0
  %v2729 = vadd.f32 0.0, %v2728
  %v2730 = vpop.f32.mrf.mxu0
  %v2731 = vadd.f32 0.0, %v2730
  %2732 = vmatmul.bf16.gmra.mxu0 %v1985
  %v2733 = vpop.f32.mrf.mxu0
  %v2734 = vadd.f32 0.0, %v2733
  %v2735 = vpop.f32.mrf.mxu0
  %v2736 = vadd.f32 0.0, %v2735
  %2737 = vmatmul.bf16.gmra.mxu0 %v1988
  %v2738 = vpop.f32.mrf.mxu0
  %v2739 = vadd.f32 0.0, %v2738
  %v2740 = vpop.f32.mrf.mxu0
  %v2741 = vadd.f32 0.0, %v2740
  %2742 = vmatmul.bf16.gmra.mxu0 %v1991
  %v2743 = vpop.f32.mrf.mxu0
  %v2744 = vadd.f32 0.0, %v2743
  %v2745 = vpop.f32.mrf.mxu0
  %v2746 = vadd.f32 0.0, %v2745
  %2747 = vmatmul.bf16.gmra.mxu0 %v1994
  %v2748 = vpop.f32.mrf.mxu0
  %v2749 = vadd.f32 0.0, %v2748
  %v2750 = vpop.f32.mrf.mxu0
  %v2751 = vadd.f32 0.0, %v2750
  %2752 = vmatmul.bf16.gmra.mxu0 %v2419
  %v2753 = vpop.f32.mrf.mxu0
  %v2754 = vadd.f32 0.0, %v2753
  %v2755 = vpop.f32.mrf.mxu0
  %v2756 = vadd.f32 0.0, %v2755
  %2757 = vmatmul.bf16.gmra.mxu0 %v1949
  %v2758 = vpop.f32.mrf.mxu0
  %v2759 = vadd.f32 0.0, %v2758
  %v2760 = vpop.f32.mrf.mxu0
  %v2761 = vadd.f32 0.0, %v2760
  %2762 = vmatmul.bf16.gmra.mxu0 %v2000
  %v2763 = vpop.f32.mrf.mxu0
  %v2764 = vadd.f32 0.0, %v2763
  %v2765 = vpop.f32.mrf.mxu0
  %v2766 = vadd.f32 0.0, %v2765
  %2767 = vmatmul.bf16.gmra.mxu0 %v2003
  %v2768 = vpop.f32.mrf.mxu0
  %v2769 = vadd.f32 0.0, %v2768
  %v2770 = vpop.f32.mrf.mxu0
  %v2771 = vadd.f32 0.0, %v2770
  %2772 = vmatmul.bf16.gmra.mxu0 %v2006
  %v2773 = vpop.f32.mrf.mxu0
  %v2774 = vadd.f32 0.0, %v2773
  %v2775 = vpop.f32.mrf.mxu0
  %v2776 = vadd.f32 0.0, %v2775
  %2777 = vmatmul.bf16.gmra.mxu0 %v2009
  %v2778 = vpop.f32.mrf.mxu0
  %v2779 = vadd.f32 0.0, %v2778
  %v2780 = vpop.f32.mrf.mxu0
  %v2781 = vadd.f32 0.0, %v2780
  %2782 = vmatmul.bf16.gmra.mxu0 %v2012
  %v2783 = vpop.f32.mrf.mxu0
  %v2784 = vadd.f32 0.0, %v2783
  %v2785 = vpop.f32.mrf.mxu0
  %v2786 = vadd.f32 0.0, %v2785
  %2787 = vmatmul.bf16.gmra.mxu0 %v2015
  %v2788 = vpop.f32.mrf.mxu0
  %v2789 = vadd.f32 0.0, %v2788
  %v2790 = vpop.f32.mrf.mxu0
  %v2791 = vadd.f32 0.0, %v2790
  %2792 = vmatmul.bf16.gmra.mxu0 %v2018
  %v2793 = vpop.f32.mrf.mxu0
  %v2794 = vadd.f32 0.0, %v2793
  %v2795 = vpop.f32.mrf.mxu0
  %v2796 = vadd.f32 0.0, %v2795
  %2797 = vmatmul.bf16.gmra.mxu0 %v2021
  %v2798 = vpop.f32.mrf.mxu0
  %v2799 = vadd.f32 0.0, %v2798
  %v2800 = vpop.f32.mrf.mxu0
  %v2801 = vadd.f32 0.0, %v2800
  %2802 = vmatmul.bf16.gmra.mxu0 %v2024
  %v2803 = vpop.f32.mrf.mxu0
  %v2804 = vadd.f32 0.0, %v2803
  %v2805 = vpop.f32.mrf.mxu0
  %v2806 = vadd.f32 0.0, %v2805
  %2807 = vmatmul.bf16.gmra.mxu0 %v2027
  %v2808 = vpop.f32.mrf.mxu0
  %v2809 = vadd.f32 0.0, %v2808
  %v2810 = vpop.f32.mrf.mxu0
  %v2811 = vadd.f32 0.0, %v2810
  %2812 = vmatmul.bf16.gmra.mxu0 %v2030
  %v2813 = vpop.f32.mrf.mxu0
  %v2814 = vadd.f32 0.0, %v2813
  %v2815 = vpop.f32.mrf.mxu0
  %v2816 = vadd.f32 0.0, %v2815
  %2817 = vmatmul.bf16.gmra.mxu0 %v2033
  %v2818 = vpop.f32.mrf.mxu0
  %v2819 = vadd.f32 0.0, %v2818
  %v2820 = vpop.f32.mrf.mxu0
  %v2821 = vadd.f32 0.0, %v2820
  %2822 = vmatmul.bf16.gmra.mxu0 %v2036
  %v2823 = vpop.f32.mrf.mxu0
  %v2824 = vadd.f32 0.0, %v2823
  %v2825 = vpop.f32.mrf.mxu0
  %v2826 = vadd.f32 0.0, %v2825
  %2827 = vmatmul.bf16.gmra.mxu0 %v2039
  %v2828 = vpop.f32.mrf.mxu0
  %v2829 = vadd.f32 0.0, %v2828
  %v2830 = vpop.f32.mrf.mxu0
  %v2831 = vadd.f32 0.0, %v2830
  %2832 = vmatmul.bf16.gmra.mxu0 %v2422
  %v2833 = vpop.f32.mrf.mxu0
  %v2834 = vadd.f32 0.0, %v2833
  %v2835 = vpop.f32.mrf.mxu0
  %v2836 = vadd.f32 0.0, %v2835
  %2837 = vmatmul.bf16.gmra.mxu0 %v1949
  %v2838 = vpop.f32.mrf.mxu0
  %v2839 = vadd.f32 0.0, %v2838
  %v2840 = vpop.f32.mrf.mxu0
  %v2841 = vadd.f32 0.0, %v2840
  %2842 = vdwg.mxu0
  %v2843 = vadd.f32 %v2593, %v2684
  %v2844 = vadd.f32 %v2594, %v2686
  %v2845 = vadd.f32 %v2595, %v2689
  %v2846 = vadd.f32 %v2596, %v2691
  %v2847 = vadd.f32 %v2597, %v2694
  %v2848 = vadd.f32 %v2598, %v2696
  %v2849 = vadd.f32 %v2599, %v2699
  %v2850 = vadd.f32 %v2600, %v2701
  %v2851 = vadd.f32 %v2601, %v2704
  %v2852 = vadd.f32 %v2602, %v2706
  %v2853 = vadd.f32 %v2603, %v2709
  %v2854 = vadd.f32 %v2604, %v2711
  %v2855 = vadd.f32 %v2605, %v2714
  %v2856 = vadd.f32 %v2606, %v2716
  %v2857 = vadd.f32 %v2607, %v2719
  %v2858 = vadd.f32 %v2608, %v2721
  %v2859 = vadd.f32 %v2609, %v2724
  %v2860 = vadd.f32 %v2610, %v2726
  %v2861 = vadd.f32 %v2611, %v2729
  %v2862 = vadd.f32 %v2612, %v2731
  %v2863 = vadd.f32 %v2613, %v2734
  %v2864 = vadd.f32 %v2614, %v2736
  %v2865 = vadd.f32 %v2615, %v2739
  %v2866 = vadd.f32 %v2616, %v2741
  %v2867 = vadd.f32 %v2617, %v2744
  %v2868 = vadd.f32 %v2618, %v2746
  %v2869 = vadd.f32 %v2619, %v2749
  %v2870 = vadd.f32 %v2620, %v2751
  %v2871 = vadd.f32 %v2621, %v2754
  %v2872 = vadd.f32 %v2622, %v2756
  %v2873 = vadd.f32 %v2623, %v2759
  %v2874 = vadd.f32 %v2624, %v2761
  %v2875 = vadd.f32 %v2625, %v2764
  %v2876 = vadd.f32 %v2626, %v2766
  %v2877 = vadd.f32 %v2627, %v2769
  %v2878 = vadd.f32 %v2628, %v2771
  %v2879 = vadd.f32 %v2629, %v2774
  %v2880 = vadd.f32 %v2630, %v2776
  %v2881 = vadd.f32 %v2631, %v2779
  %v2882 = vadd.f32 %v2632, %v2781
  %v2883 = vadd.f32 %v2633, %v2784
  %v2884 = vadd.f32 %v2634, %v2786
  %v2885 = vadd.f32 %v2635, %v2789
  %v2886 = vadd.f32 %v2636, %v2791
  %v2887 = vadd.f32 %v2637, %v2794
  %v2888 = vadd.f32 %v2638, %v2796
  %v2889 = vadd.f32 %v2639, %v2799
  %v2890 = vadd.f32 %v2640, %v2801
  %v2891 = vadd.f32 %v2641, %v2804
  %v2892 = vadd.f32 %v2642, %v2806
  %v2893 = vadd.f32 %v2643, %v2809
  %v2894 = vadd.f32 %v2644, %v2811
  %v2895 = vadd.f32 %v2645, %v2814
  %v2896 = vadd.f32 %v2646, %v2816
  %v2897 = vadd.f32 %v2647, %v2819
  %v2898 = vadd.f32 %v2648, %v2821
  %v2899 = vadd.f32 %v2649, %v2824
  %v2900 = vadd.f32 %v2650, %v2826
  %v2901 = vadd.f32 %v2651, %v2829
  %v2902 = vadd.f32 %v2652, %v2831
  %v2903 = vadd.f32 %v2653, %v2834
  %v2904 = vadd.f32 %v2654, %v2836
  %v2905 = vadd.f32 %v2655, %v2839
  %v2906 = vadd.f32 %v2656, %v2841
  %s2907 = scalar_lea.vmem %s5, 320
  %v2908 = vld [vmem:[%s2907] sm:$0xf]
  %v2909 = vld [vmem:[%s2907 + $0x4] sm:$0xf]
  %v2910 = vld [vmem:[%s2907 + $0x8] sm:$0xf]
  %v2911 = vld [vmem:[%s2907 + $0xc] sm:$0xf]
  %v2916 = vunpack.c.l.b16 %v2908
  %v2917 = vunpack.c.l.b16 %v2909
  %v2918 = vunpack.c.l.b16 %v2910
  %v2919 = vunpack.c.l.b16 %v2911
  %v2920 = vpack.c.b16 %v2917, %v2916
  %v2921 = vpack.c.b16 %v2919, %v2918
  %2924 = vmatpush.bf16.msra.mxu0 0
  %2925 = vmatpush.bf16.msra.mxu0 0
  %2926 = vmatpush.bf16.msra.mxu0 0
  %2927 = vmatpush.bf16.msra.mxu0 0
  %2928 = vmatpush.bf16.msra.mxu0 0
  %2929 = vmatpush.bf16.msra.mxu0 0
  %2930 = vmatpush.bf16.msra.mxu0 %v2921
  %2931 = vmatpush.bf16.msra.mxu0 %v2920
  %2932 = vmatmul.bf16.gmra.mxu0 %v1958
  %v2933 = vpop.f32.mrf.mxu0
  %v2934 = vadd.f32 0.0, %v2933
  %v2935 = vpop.f32.mrf.mxu0
  %v2936 = vadd.f32 0.0, %v2935
  %2937 = vmatmul.bf16.gmra.mxu0 %v1961
  %v2938 = vpop.f32.mrf.mxu0
  %v2939 = vadd.f32 0.0, %v2938
  %v2940 = vpop.f32.mrf.mxu0
  %v2941 = vadd.f32 0.0, %v2940
  %2942 = vmatmul.bf16.gmra.mxu0 %v1964
  %v2943 = vpop.f32.mrf.mxu0
  %v2944 = vadd.f32 0.0, %v2943
  %v2945 = vpop.f32.mrf.mxu0
  %v2946 = vadd.f32 0.0, %v2945
  %2947 = vmatmul.bf16.gmra.mxu0 %v1967
  %v2948 = vpop.f32.mrf.mxu0
  %v2949 = vadd.f32 0.0, %v2948
  %v2950 = vpop.f32.mrf.mxu0
  %v2951 = vadd.f32 0.0, %v2950
  %2952 = vmatmul.bf16.gmra.mxu0 %v1970
  %v2953 = vpop.f32.mrf.mxu0
  %v2954 = vadd.f32 0.0, %v2953
  %v2955 = vpop.f32.mrf.mxu0
  %v2956 = vadd.f32 0.0, %v2955
  %2957 = vmatmul.bf16.gmra.mxu0 %v1973
  %v2958 = vpop.f32.mrf.mxu0
  %v2959 = vadd.f32 0.0, %v2958
  %v2960 = vpop.f32.mrf.mxu0
  %v2961 = vadd.f32 0.0, %v2960
  %2962 = vmatmul.bf16.gmra.mxu0 %v1976
  %v2963 = vpop.f32.mrf.mxu0
  %v2964 = vadd.f32 0.0, %v2963
  %v2965 = vpop.f32.mrf.mxu0
  %v2966 = vadd.f32 0.0, %v2965
  %2967 = vmatmul.bf16.gmra.mxu0 %v1979
  %v2968 = vpop.f32.mrf.mxu0
  %v2969 = vadd.f32 0.0, %v2968
  %v2970 = vpop.f32.mrf.mxu0
  %v2971 = vadd.f32 0.0, %v2970
  %2972 = vmatmul.bf16.gmra.mxu0 %v1982
  %v2973 = vpop.f32.mrf.mxu0
  %v2974 = vadd.f32 0.0, %v2973
  %v2975 = vpop.f32.mrf.mxu0
  %v2976 = vadd.f32 0.0, %v2975
  %2977 = vmatmul.bf16.gmra.mxu0 %v1985
  %v2978 = vpop.f32.mrf.mxu0
  %v2979 = vadd.f32 0.0, %v2978
  %v2980 = vpop.f32.mrf.mxu0
  %v2981 = vadd.f32 0.0, %v2980
  %2982 = vmatmul.bf16.gmra.mxu0 %v1988
  %v2983 = vpop.f32.mrf.mxu0
  %v2984 = vadd.f32 0.0, %v2983
  %v2985 = vpop.f32.mrf.mxu0
  %v2986 = vadd.f32 0.0, %v2985
  %2987 = vmatmul.bf16.gmra.mxu0 %v1991
  %v2988 = vpop.f32.mrf.mxu0
  %v2989 = vadd.f32 0.0, %v2988
  %v2990 = vpop.f32.mrf.mxu0
  %v2991 = vadd.f32 0.0, %v2990
  %2992 = vmatmul.bf16.gmra.mxu0 %v1994
  %v2993 = vpop.f32.mrf.mxu0
  %v2994 = vadd.f32 0.0, %v2993
  %v2995 = vpop.f32.mrf.mxu0
  %v2996 = vadd.f32 0.0, %v2995
  %2997 = vmatmul.bf16.gmra.mxu0 %v2419
  %v2998 = vpop.f32.mrf.mxu0
  %v2999 = vadd.f32 0.0, %v2998
  %v3000 = vpop.f32.mrf.mxu0
  %v3001 = vadd.f32 0.0, %v3000
  %3002 = vmatmul.bf16.gmra.mxu0 %v1949
  %v3003 = vpop.f32.mrf.mxu0
  %v3004 = vadd.f32 0.0, %v3003
  %v3005 = vpop.f32.mrf.mxu0
  %v3006 = vadd.f32 0.0, %v3005
  %3007 = vmatmul.bf16.gmra.mxu0 %v1949
  %v3008 = vpop.f32.mrf.mxu0
  %v3009 = vadd.f32 0.0, %v3008
  %v3010 = vpop.f32.mrf.mxu0
  %v3011 = vadd.f32 0.0, %v3010
  %3012 = vmatmul.bf16.gmra.mxu0 %v2003
  %v3013 = vpop.f32.mrf.mxu0
  %v3014 = vadd.f32 0.0, %v3013
  %v3015 = vpop.f32.mrf.mxu0
  %v3016 = vadd.f32 0.0, %v3015
  %3017 = vmatmul.bf16.gmra.mxu0 %v2006
  %v3018 = vpop.f32.mrf.mxu0
  %v3019 = vadd.f32 0.0, %v3018
  %v3020 = vpop.f32.mrf.mxu0
  %v3021 = vadd.f32 0.0, %v3020
  %3022 = vmatmul.bf16.gmra.mxu0 %v2009
  %v3023 = vpop.f32.mrf.mxu0
  %v3024 = vadd.f32 0.0, %v3023
  %v3025 = vpop.f32.mrf.mxu0
  %v3026 = vadd.f32 0.0, %v3025
  %3027 = vmatmul.bf16.gmra.mxu0 %v2012
  %v3028 = vpop.f32.mrf.mxu0
  %v3029 = vadd.f32 0.0, %v3028
  %v3030 = vpop.f32.mrf.mxu0
  %v3031 = vadd.f32 0.0, %v3030
  %3032 = vmatmul.bf16.gmra.mxu0 %v2015
  %v3033 = vpop.f32.mrf.mxu0
  %v3034 = vadd.f32 0.0, %v3033
  %v3035 = vpop.f32.mrf.mxu0
  %v3036 = vadd.f32 0.0, %v3035
  %3037 = vmatmul.bf16.gmra.mxu0 %v2018
  %v3038 = vpop.f32.mrf.mxu0
  %v3039 = vadd.f32 0.0, %v3038
  %v3040 = vpop.f32.mrf.mxu0
  %v3041 = vadd.f32 0.0, %v3040
  %3042 = vmatmul.bf16.gmra.mxu0 %v2021
  %v3043 = vpop.f32.mrf.mxu0
  %v3044 = vadd.f32 0.0, %v3043
  %v3045 = vpop.f32.mrf.mxu0
  %v3046 = vadd.f32 0.0, %v3045
  %3047 = vmatmul.bf16.gmra.mxu0 %v2024
  %v3048 = vpop.f32.mrf.mxu0
  %v3049 = vadd.f32 0.0, %v3048
  %v3050 = vpop.f32.mrf.mxu0
  %v3051 = vadd.f32 0.0, %v3050
  %3052 = vmatmul.bf16.gmra.mxu0 %v2027
  %v3053 = vpop.f32.mrf.mxu0
  %v3054 = vadd.f32 0.0, %v3053
  %v3055 = vpop.f32.mrf.mxu0
  %v3056 = vadd.f32 0.0, %v3055
  %3057 = vmatmul.bf16.gmra.mxu0 %v2030
  %v3058 = vpop.f32.mrf.mxu0
  %v3059 = vadd.f32 0.0, %v3058
  %v3060 = vpop.f32.mrf.mxu0
  %v3061 = vadd.f32 0.0, %v3060
  %3062 = vmatmul.bf16.gmra.mxu0 %v2033
  %v3063 = vpop.f32.mrf.mxu0
  %v3064 = vadd.f32 0.0, %v3063
  %v3065 = vpop.f32.mrf.mxu0
  %v3066 = vadd.f32 0.0, %v3065
  %3067 = vmatmul.bf16.gmra.mxu0 %v2036
  %v3068 = vpop.f32.mrf.mxu0
  %v3069 = vadd.f32 0.0, %v3068
  %v3070 = vpop.f32.mrf.mxu0
  %v3071 = vadd.f32 0.0, %v3070
  %3072 = vmatmul.bf16.gmra.mxu0 %v2039
  %v3073 = vpop.f32.mrf.mxu0
  %v3074 = vadd.f32 0.0, %v3073
  %v3075 = vpop.f32.mrf.mxu0
  %v3076 = vadd.f32 0.0, %v3075
  %3077 = vmatmul.bf16.gmra.mxu0 %v2422
  %v3078 = vpop.f32.mrf.mxu0
  %v3079 = vadd.f32 0.0, %v3078
  %v3080 = vpop.f32.mrf.mxu0
  %v3081 = vadd.f32 0.0, %v3080
  %3082 = vmatmul.bf16.gmra.mxu0 %v1949
  %v3083 = vpop.f32.mrf.mxu0
  %v3084 = vadd.f32 0.0, %v3083
  %v3085 = vpop.f32.mrf.mxu0
  %v3086 = vadd.f32 0.0, %v3085
  %3087 = vmatmul.bf16.gmra.mxu0 %v1949
  %v3088 = vpop.f32.mrf.mxu0
  %v3089 = vadd.f32 0.0, %v3088
  %v3090 = vpop.f32.mrf.mxu0
  %v3091 = vadd.f32 0.0, %v3090
  %3092 = vdwg.mxu0
  %v3093 = vadd.f32 %v2843, %v2934
  %v3094 = vadd.f32 %v2844, %v2936
  %v3095 = vadd.f32 %v2845, %v2939
  %v3096 = vadd.f32 %v2846, %v2941
  %v3097 = vadd.f32 %v2847, %v2944
  %v3098 = vadd.f32 %v2848, %v2946
  %v3099 = vadd.f32 %v2849, %v2949
  %v3100 = vadd.f32 %v2850, %v2951
  %v3101 = vadd.f32 %v2851, %v2954
  %v3102 = vadd.f32 %v2852, %v2956
  %v3103 = vadd.f32 %v2853, %v2959
  %v3104 = vadd.f32 %v2854, %v2961
  %v3105 = vadd.f32 %v2855, %v2964
  %v3106 = vadd.f32 %v2856, %v2966
  %v3107 = vadd.f32 %v2857, %v2969
  %v3108 = vadd.f32 %v2858, %v2971
  %v3109 = vadd.f32 %v2859, %v2974
  %v3110 = vadd.f32 %v2860, %v2976
  %v3111 = vadd.f32 %v2861, %v2979
  %v3112 = vadd.f32 %v2862, %v2981
  %v3113 = vadd.f32 %v2863, %v2984
  %v3114 = vadd.f32 %v2864, %v2986
  %v3115 = vadd.f32 %v2865, %v2989
  %v3116 = vadd.f32 %v2866, %v2991
  %v3117 = vadd.f32 %v2867, %v2994
  %v3118 = vadd.f32 %v2868, %v2996
  %v3119 = vadd.f32 %v2869, %v2999
  %v3120 = vadd.f32 %v2870, %v3001
  %v3121 = vadd.f32 %v2871, %v3004
  %v3122 = vadd.f32 %v2872, %v3006
  %v3123 = vadd.f32 %v2873, %v3009
  %v3124 = vadd.f32 %v2874, %v3011
  %v3125 = vadd.f32 %v2875, %v3014
  %v3126 = vadd.f32 %v2876, %v3016
  %v3127 = vadd.f32 %v2877, %v3019
  %v3128 = vadd.f32 %v2878, %v3021
  %v3129 = vadd.f32 %v2879, %v3024
  %v3130 = vadd.f32 %v2880, %v3026
  %v3131 = vadd.f32 %v2881, %v3029
  %v3132 = vadd.f32 %v2882, %v3031
  %v3133 = vadd.f32 %v2883, %v3034
  %v3134 = vadd.f32 %v2884, %v3036
  %v3135 = vadd.f32 %v2885, %v3039
  %v3136 = vadd.f32 %v2886, %v3041
  %v3137 = vadd.f32 %v2887, %v3044
  %v3138 = vadd.f32 %v2888, %v3046
  %v3139 = vadd.f32 %v2889, %v3049
  %v3140 = vadd.f32 %v2890, %v3051
  %v3141 = vadd.f32 %v2891, %v3054
  %v3142 = vadd.f32 %v2892, %v3056
  %v3143 = vadd.f32 %v2893, %v3059
  %v3144 = vadd.f32 %v2894, %v3061
  %v3145 = vadd.f32 %v2895, %v3064
  %v3146 = vadd.f32 %v2896, %v3066
  %v3147 = vadd.f32 %v2897, %v3069
  %v3148 = vadd.f32 %v2898, %v3071
  %v3149 = vadd.f32 %v2899, %v3074
  %v3150 = vadd.f32 %v2900, %v3076
  %v3151 = vadd.f32 %v2901, %v3079
  %v3152 = vadd.f32 %v2902, %v3081
  %v3153 = vadd.f32 %v2903, %v3084
  %v3154 = vadd.f32 %v2904, %v3086
  %v3155 = vadd.f32 %v2905, %v3089
  %v3156 = vadd.f32 %v2906, %v3091
  %vm3157 = vsmask.f32 4352
  %v3158 = vshrl.u32 %v1672, 16
  %v3160 = vrot.slane %v3158, 3
  %v3161 = vshll.u32 %v1672, 16
  %v3163 = vrot.slane %v3161, 4
  %v3164 = vor.u32 %v3160, %v3163
  %v3165 = vshrl.u32 %v1737, 16
  %v3167 = vrot.slane %v3165, 3
  %v3168 = vshll.u32 %v1737, 16
  %v3170 = vrot.slane %v3168, 4
  %v3171 = vor.u32 %v3167, %v3170
  %v3172 = vsel %vm3157, %v3164, %v3171
  %v3173 = vshrl.u32 %v1674, 16
  %v3175 = vrot.slane %v3173, 3
  %v3176 = vshll.u32 %v1674, 16
  %v3178 = vrot.slane %v3176, 4
  %v3179 = vor.u32 %v3175, %v3178
  %v3180 = vshrl.u32 %v1738, 16
  %v3182 = vrot.slane %v3180, 3
  %v3183 = vshll.u32 %v1738, 16
  %v3185 = vrot.slane %v3183, 4
  %v3186 = vor.u32 %v3182, %v3185
  %v3187 = vsel %vm3157, %v3179, %v3186
  %v3188 = vshrl.u32 %v1676, 16
  %v3190 = vrot.slane %v3188, 3
  %v3191 = vshll.u32 %v1676, 16
  %v3193 = vrot.slane %v3191, 4
  %v3194 = vor.u32 %v3190, %v3193
  %v3195 = vshrl.u32 %v1739, 16
  %v3197 = vrot.slane %v3195, 3
  %v3198 = vshll.u32 %v1739, 16
  %v3200 = vrot.slane %v3198, 4
  %v3201 = vor.u32 %v3197, %v3200
  %v3202 = vsel %vm3157, %v3194, %v3201
  %v3203 = vshrl.u32 %v1678, 16
  %v3205 = vrot.slane %v3203, 3
  %v3206 = vshll.u32 %v1678, 16
  %v3208 = vrot.slane %v3206, 4
  %v3209 = vor.u32 %v3205, %v3208
  %v3210 = vshrl.u32 %v1740, 16
  %v3212 = vrot.slane %v3210, 3
  %v3213 = vshll.u32 %v1740, 16
  %v3215 = vrot.slane %v3213, 4
  %v3216 = vor.u32 %v3212, %v3215
  %v3217 = vsel %vm3157, %v3209, %v3216
  %v3218 = vshrl.u32 %v1680, 16
  %v3220 = vrot.slane %v3218, 3
  %v3221 = vshll.u32 %v1680, 16
  %v3223 = vrot.slane %v3221, 4
  %v3224 = vor.u32 %v3220, %v3223
  %v3225 = vshrl.u32 %v1741, 16
  %v3227 = vrot.slane %v3225, 3
  %v3228 = vshll.u32 %v1741, 16
  %v3230 = vrot.slane %v3228, 4
  %v3231 = vor.u32 %v3227, %v3230
  %v3232 = vsel %vm3157, %v3224, %v3231
  %v3233 = vshrl.u32 %v1682, 16
  %v3235 = vrot.slane %v3233, 3
  %v3236 = vshll.u32 %v1682, 16
  %v3238 = vrot.slane %v3236, 4
  %v3239 = vor.u32 %v3235, %v3238
  %v3240 = vshrl.u32 %v1742, 16
  %v3242 = vrot.slane %v3240, 3
  %v3243 = vshll.u32 %v1742, 16
  %v3245 = vrot.slane %v3243, 4
  %v3246 = vor.u32 %v3242, %v3245
  %v3247 = vsel %vm3157, %v3239, %v3246
  %v3248 = vshrl.u32 %v1684, 16
  %v3250 = vrot.slane %v3248, 3
  %v3251 = vshll.u32 %v1684, 16
  %v3253 = vrot.slane %v3251, 4
  %v3254 = vor.u32 %v3250, %v3253
  %v3255 = vshrl.u32 %v1743, 16
  %v3257 = vrot.slane %v3255, 3
  %v3258 = vshll.u32 %v1743, 16
  %v3260 = vrot.slane %v3258, 4
  %v3261 = vor.u32 %v3257, %v3260
  %v3262 = vsel %vm3157, %v3254, %v3261
  %v3263 = vshrl.u32 %v1686, 16
  %v3265 = vrot.slane %v3263, 3
  %v3266 = vshll.u32 %v1686, 16
  %v3268 = vrot.slane %v3266, 4
  %v3269 = vor.u32 %v3265, %v3268
  %v3270 = vshrl.u32 %v1744, 16
  %v3272 = vrot.slane %v3270, 3
  %v3273 = vshll.u32 %v1744, 16
  %v3275 = vrot.slane %v3273, 4
  %v3276 = vor.u32 %v3272, %v3275
  %v3277 = vsel %vm3157, %v3269, %v3276
  %v3278 = vshrl.u32 %v1688, 16
  %v3280 = vrot.slane %v3278, 3
  %v3281 = vshll.u32 %v1688, 16
  %v3283 = vrot.slane %v3281, 4
  %v3284 = vor.u32 %v3280, %v3283
  %v3285 = vshrl.u32 %v1745, 16
  %v3287 = vrot.slane %v3285, 3
  %v3288 = vshll.u32 %v1745, 16
  %v3290 = vrot.slane %v3288, 4
  %v3291 = vor.u32 %v3287, %v3290
  %v3292 = vsel %vm3157, %v3284, %v3291
  %v3293 = vshrl.u32 %v1690, 16
  %v3295 = vrot.slane %v3293, 3
  %v3296 = vshll.u32 %v1690, 16
  %v3298 = vrot.slane %v3296, 4
  %v3299 = vor.u32 %v3295, %v3298
  %v3300 = vshrl.u32 %v1746, 16
  %v3302 = vrot.slane %v3300, 3
  %v3303 = vshll.u32 %v1746, 16
  %v3305 = vrot.slane %v3303, 4
  %v3306 = vor.u32 %v3302, %v3305
  %v3307 = vsel %vm3157, %v3299, %v3306
  %v3308 = vshrl.u32 %v1692, 16
  %v3310 = vrot.slane %v3308, 3
  %v3311 = vshll.u32 %v1692, 16
  %v3313 = vrot.slane %v3311, 4
  %v3314 = vor.u32 %v3310, %v3313
  %v3315 = vshrl.u32 %v1747, 16
  %v3317 = vrot.slane %v3315, 3
  %v3318 = vshll.u32 %v1747, 16
  %v3320 = vrot.slane %v3318, 4
  %v3321 = vor.u32 %v3317, %v3320
  %v3322 = vsel %vm3157, %v3314, %v3321
  %v3323 = vshrl.u32 %v1694, 16
  %v3325 = vrot.slane %v3323, 3
  %v3326 = vshll.u32 %v1694, 16
  %v3328 = vrot.slane %v3326, 4
  %v3329 = vor.u32 %v3325, %v3328
  %v3330 = vshrl.u32 %v1748, 16
  %v3332 = vrot.slane %v3330, 3
  %v3333 = vshll.u32 %v1748, 16
  %v3335 = vrot.slane %v3333, 4
  %v3336 = vor.u32 %v3332, %v3335
  %v3337 = vsel %vm3157, %v3329, %v3336
  %v3338 = vshrl.u32 %v1696, 16
  %v3340 = vrot.slane %v3338, 3
  %v3341 = vshll.u32 %v1696, 16
  %v3343 = vrot.slane %v3341, 4
  %v3344 = vor.u32 %v3340, %v3343
  %v3345 = vshrl.u32 %v1749, 16
  %v3347 = vrot.slane %v3345, 3
  %v3348 = vshll.u32 %v1749, 16
  %v3350 = vrot.slane %v3348, 4
  %v3351 = vor.u32 %v3347, %v3350
  %v3352 = vsel %vm3157, %v3344, %v3351
  %v3353 = vshrl.u32 %v1698, 16
  %v3355 = vrot.slane %v3353, 3
  %v3356 = vshll.u32 %v1698, 16
  %v3358 = vrot.slane %v3356, 4
  %v3359 = vor.u32 %v3355, %v3358
  %v3360 = vshrl.u32 %v1750, 16
  %v3362 = vrot.slane %v3360, 3
  %v3363 = vshll.u32 %v1750, 16
  %v3365 = vrot.slane %v3363, 4
  %v3366 = vor.u32 %v3362, %v3365
  %v3367 = vsel %vm3157, %v3359, %v3366
  %v3368 = vshrl.u32 %v1700, 16
  %v3370 = vrot.slane %v3368, 3
  %v3371 = vshll.u32 %v1700, 16
  %v3373 = vrot.slane %v3371, 4
  %v3374 = vor.u32 %v3370, %v3373
  %v3375 = vshrl.u32 %v1751, 16
  %v3377 = vrot.slane %v3375, 3
  %v3378 = vshll.u32 %v1751, 16
  %v3380 = vrot.slane %v3378, 4
  %v3381 = vor.u32 %v3377, %v3380
  %v3382 = vsel %vm3157, %v3374, %v3381
  %v3383 = vshrl.u32 %v1706, 16
  %v3385 = vrot.slane %v3383, 3
  %v3386 = vshll.u32 %v1706, 16
  %v3388 = vrot.slane %v3386, 4
  %v3389 = vor.u32 %v3385, %v3388
  %v3390 = vshrl.u32 %v1754, 16
  %v3392 = vrot.slane %v3390, 3
  %v3393 = vshll.u32 %v1754, 16
  %v3395 = vrot.slane %v3393, 4
  %v3396 = vor.u32 %v3392, %v3395
  %v3397 = vsel %vm3157, %v3389, %v3396
  %v3398 = vshrl.u32 %v1708, 16
  %v3400 = vrot.slane %v3398, 3
  %v3401 = vshll.u32 %v1708, 16
  %v3403 = vrot.slane %v3401, 4
  %v3404 = vor.u32 %v3400, %v3403
  %v3405 = vshrl.u32 %v1755, 16
  %v3407 = vrot.slane %v3405, 3
  %v3408 = vshll.u32 %v1755, 16
  %v3410 = vrot.slane %v3408, 4
  %v3411 = vor.u32 %v3407, %v3410
  %v3412 = vsel %vm3157, %v3404, %v3411
  %v3413 = vshrl.u32 %v1710, 16
  %v3415 = vrot.slane %v3413, 3
  %v3416 = vshll.u32 %v1710, 16
  %v3418 = vrot.slane %v3416, 4
  %v3419 = vor.u32 %v3415, %v3418
  %v3420 = vshrl.u32 %v1756, 16
  %v3422 = vrot.slane %v3420, 3
  %v3423 = vshll.u32 %v1756, 16
  %v3425 = vrot.slane %v3423, 4
  %v3426 = vor.u32 %v3422, %v3425
  %v3427 = vsel %vm3157, %v3419, %v3426
  %v3428 = vshrl.u32 %v1712, 16
  %v3430 = vrot.slane %v3428, 3
  %v3431 = vshll.u32 %v1712, 16
  %v3433 = vrot.slane %v3431, 4
  %v3434 = vor.u32 %v3430, %v3433
  %v3435 = vshrl.u32 %v1757, 16
  %v3437 = vrot.slane %v3435, 3
  %v3438 = vshll.u32 %v1757, 16
  %v3440 = vrot.slane %v3438, 4
  %v3441 = vor.u32 %v3437, %v3440
  %v3442 = vsel %vm3157, %v3434, %v3441
  %v3443 = vshrl.u32 %v1714, 16
  %v3445 = vrot.slane %v3443, 3
  %v3446 = vshll.u32 %v1714, 16
  %v3448 = vrot.slane %v3446, 4
  %v3449 = vor.u32 %v3445, %v3448
  %v3450 = vshrl.u32 %v1758, 16
  %v3452 = vrot.slane %v3450, 3
  %v3453 = vshll.u32 %v1758, 16
  %v3455 = vrot.slane %v3453, 4
  %v3456 = vor.u32 %v3452, %v3455
  %v3457 = vsel %vm3157, %v3449, %v3456
  %v3458 = vshrl.u32 %v1716, 16
  %v3460 = vrot.slane %v3458, 3
  %v3461 = vshll.u32 %v1716, 16
  %v3463 = vrot.slane %v3461, 4
  %v3464 = vor.u32 %v3460, %v3463
  %v3465 = vshrl.u32 %v1759, 16
  %v3467 = vrot.slane %v3465, 3
  %v3468 = vshll.u32 %v1759, 16
  %v3470 = vrot.slane %v3468, 4
  %v3471 = vor.u32 %v3467, %v3470
  %v3472 = vsel %vm3157, %v3464, %v3471
  %v3473 = vshrl.u32 %v1718, 16
  %v3475 = vrot.slane %v3473, 3
  %v3476 = vshll.u32 %v1718, 16
  %v3478 = vrot.slane %v3476, 4
  %v3479 = vor.u32 %v3475, %v3478
  %v3480 = vshrl.u32 %v1760, 16
  %v3482 = vrot.slane %v3480, 3
  %v3483 = vshll.u32 %v1760, 16
  %v3485 = vrot.slane %v3483, 4
  %v3486 = vor.u32 %v3482, %v3485
  %v3487 = vsel %vm3157, %v3479, %v3486
  %v3488 = vshrl.u32 %v1720, 16
  %v3490 = vrot.slane %v3488, 3
  %v3491 = vshll.u32 %v1720, 16
  %v3493 = vrot.slane %v3491, 4
  %v3494 = vor.u32 %v3490, %v3493
  %v3495 = vshrl.u32 %v1761, 16
  %v3497 = vrot.slane %v3495, 3
  %v3498 = vshll.u32 %v1761, 16
  %v3500 = vrot.slane %v3498, 4
  %v3501 = vor.u32 %v3497, %v3500
  %v3502 = vsel %vm3157, %v3494, %v3501
  %v3503 = vshrl.u32 %v1722, 16
  %v3505 = vrot.slane %v3503, 3
  %v3506 = vshll.u32 %v1722, 16
  %v3508 = vrot.slane %v3506, 4
  %v3509 = vor.u32 %v3505, %v3508
  %v3510 = vshrl.u32 %v1762, 16
  %v3512 = vrot.slane %v3510, 3
  %v3513 = vshll.u32 %v1762, 16
  %v3515 = vrot.slane %v3513, 4
  %v3516 = vor.u32 %v3512, %v3515
  %v3517 = vsel %vm3157, %v3509, %v3516
  %v3518 = vshrl.u32 %v1724, 16
  %v3520 = vrot.slane %v3518, 3
  %v3521 = vshll.u32 %v1724, 16
  %v3523 = vrot.slane %v3521, 4
  %v3524 = vor.u32 %v3520, %v3523
  %v3525 = vshrl.u32 %v1763, 16
  %v3527 = vrot.slane %v3525, 3
  %v3528 = vshll.u32 %v1763, 16
  %v3530 = vrot.slane %v3528, 4
  %v3531 = vor.u32 %v3527, %v3530
  %v3532 = vsel %vm3157, %v3524, %v3531
  %v3533 = vshrl.u32 %v1726, 16
  %v3535 = vrot.slane %v3533, 3
  %v3536 = vshll.u32 %v1726, 16
  %v3538 = vrot.slane %v3536, 4
  %v3539 = vor.u32 %v3535, %v3538
  %v3540 = vshrl.u32 %v1764, 16
  %v3542 = vrot.slane %v3540, 3
  %v3543 = vshll.u32 %v1764, 16
  %v3545 = vrot.slane %v3543, 4
  %v3546 = vor.u32 %v3542, %v3545
  %v3547 = vsel %vm3157, %v3539, %v3546
  %v3548 = vshrl.u32 %v1728, 16
  %v3550 = vrot.slane %v3548, 3
  %v3551 = vshll.u32 %v1728, 16
  %v3553 = vrot.slane %v3551, 4
  %v3554 = vor.u32 %v3550, %v3553
  %v3555 = vshrl.u32 %v1765, 16
  %v3557 = vrot.slane %v3555, 3
  %v3558 = vshll.u32 %v1765, 16
  %v3560 = vrot.slane %v3558, 4
  %v3561 = vor.u32 %v3557, %v3560
  %v3562 = vsel %vm3157, %v3554, %v3561
  %v3563 = vshrl.u32 %v1730, 16
  %v3565 = vrot.slane %v3563, 3
  %v3566 = vshll.u32 %v1730, 16
  %v3568 = vrot.slane %v3566, 4
  %v3569 = vor.u32 %v3565, %v3568
  %v3570 = vshrl.u32 %v1766, 16
  %v3572 = vrot.slane %v3570, 3
  %v3573 = vshll.u32 %v1766, 16
  %v3575 = vrot.slane %v3573, 4
  %v3576 = vor.u32 %v3572, %v3575
  %v3577 = vsel %vm3157, %v3569, %v3576
  %v3578 = vshrl.u32 %v1732, 16
  %v3580 = vrot.slane %v3578, 3
  %v3581 = vshll.u32 %v1732, 16
  %v3583 = vrot.slane %v3581, 4
  %v3584 = vor.u32 %v3580, %v3583
  %v3585 = vshrl.u32 %v1767, 16
  %v3587 = vrot.slane %v3585, 3
  %v3588 = vshll.u32 %v1767, 16
  %v3590 = vrot.slane %v3588, 4
  %v3591 = vor.u32 %v3587, %v3590
  %v3592 = vsel %vm3157, %v3584, %v3591
  %s3593 = scalar_lea.vmem %s5, 16
  %v3594 = vld [vmem:[%s3593] sm:$0xf]
  %v3595 = vld [vmem:[%s3593 + $0x4] sm:$0xf]
  %v3596 = vld [vmem:[%s3593 + $0x8] sm:$0xf]
  %v3597 = vld [vmem:[%s3593 + $0xc] sm:$0xf]
  %v3602 = vunpack.c.l.b16 %v3594
  %v3603 = vunpack.c.l.b16 %v3595
  %v3604 = vunpack.c.l.b16 %v3596
  %v3605 = vunpack.c.l.b16 %v3597
  %v3606 = vpack.c.b16 %v3603, %v3602
  %v3607 = vpack.c.b16 %v3605, %v3604
  %v3611 = vsel %vm1947, %v3172, 0
  %v3614 = vsel %vm1947, %v3187, 0
  %v3617 = vsel %vm1947, %v3202, 0
  %v3620 = vsel %vm1947, %v3217, 0
  %v3623 = vsel %vm1947, %v3232, 0
  %v3626 = vsel %vm1947, %v3247, 0
  %v3629 = vsel %vm1947, %v3262, 0
  %v3632 = vsel %vm1947, %v3277, 0
  %v3635 = vsel %vm1947, %v3292, 0
  %v3638 = vsel %vm1947, %v3307, 0
  %v3641 = vsel %vm1947, %v3322, 0
  %v3644 = vsel %vm1947, %v3337, 0
  %v3647 = vsel %vm1947, %v3352, 0
  %v3650 = vsel %vm1947, %v3367, 0
  %v3653 = vsel %vm1947, %v3382, 0
  %v3656 = vsel %vm1947, %v3397, 0
  %v3659 = vsel %vm1947, %v3412, 0
  %v3662 = vsel %vm1947, %v3427, 0
  %v3665 = vsel %vm1947, %v3442, 0
  %v3668 = vsel %vm1947, %v3457, 0
  %v3671 = vsel %vm1947, %v3472, 0
  %v3674 = vsel %vm1947, %v3487, 0
  %v3677 = vsel %vm1947, %v3502, 0
  %v3680 = vsel %vm1947, %v3517, 0
  %v3683 = vsel %vm1947, %v3532, 0
  %v3686 = vsel %vm1947, %v3547, 0
  %v3689 = vsel %vm1947, %v3562, 0
  %v3692 = vsel %vm1947, %v3577, 0
  %v3695 = vsel %vm1947, %v3592, 0
  %3697 = vmatpush.bf16.msra.mxu0 0
  %3698 = vmatpush.bf16.msra.mxu0 0
  %3699 = vmatpush.bf16.msra.mxu0 0
  %3700 = vmatpush.bf16.msra.mxu0 0
  %3701 = vmatpush.bf16.msra.mxu0 0
  %3702 = vmatpush.bf16.msra.mxu0 0
  %3703 = vmatpush.bf16.msra.mxu0 %v3607
  %3704 = vmatpush.bf16.msra.mxu0 %v3606
  %3705 = vmatmul.bf16.gmra.mxu0 %v3611
  %v3706 = vpop.f32.mrf.mxu0
  %v3707 = vadd.f32 0.0, %v3706
  %v3708 = vpop.f32.mrf.mxu0
  %v3709 = vadd.f32 0.0, %v3708
  %3710 = vmatmul.bf16.gmra.mxu0 %v3611
  %v3711 = vpop.f32.mrf.mxu0
  %v3712 = vadd.f32 0.0, %v3711
  %v3713 = vpop.f32.mrf.mxu0
  %v3714 = vadd.f32 0.0, %v3713
  %3715 = vmatmul.bf16.gmra.mxu0 %v3614
  %v3716 = vpop.f32.mrf.mxu0
  %v3717 = vadd.f32 0.0, %v3716
  %v3718 = vpop.f32.mrf.mxu0
  %v3719 = vadd.f32 0.0, %v3718
  %3720 = vmatmul.bf16.gmra.mxu0 %v3617
  %v3721 = vpop.f32.mrf.mxu0
  %v3722 = vadd.f32 0.0, %v3721
  %v3723 = vpop.f32.mrf.mxu0
  %v3724 = vadd.f32 0.0, %v3723
  %3725 = vmatmul.bf16.gmra.mxu0 %v3620
  %v3726 = vpop.f32.mrf.mxu0
  %v3727 = vadd.f32 0.0, %v3726
  %v3728 = vpop.f32.mrf.mxu0
  %v3729 = vadd.f32 0.0, %v3728
  %3730 = vmatmul.bf16.gmra.mxu0 %v3623
  %v3731 = vpop.f32.mrf.mxu0
  %v3732 = vadd.f32 0.0, %v3731
  %v3733 = vpop.f32.mrf.mxu0
  %v3734 = vadd.f32 0.0, %v3733
  %3735 = vmatmul.bf16.gmra.mxu0 %v3626
  %v3736 = vpop.f32.mrf.mxu0
  %v3737 = vadd.f32 0.0, %v3736
  %v3738 = vpop.f32.mrf.mxu0
  %v3739 = vadd.f32 0.0, %v3738
  %3740 = vmatmul.bf16.gmra.mxu0 %v3629
  %v3741 = vpop.f32.mrf.mxu0
  %v3742 = vadd.f32 0.0, %v3741
  %v3743 = vpop.f32.mrf.mxu0
  %v3744 = vadd.f32 0.0, %v3743
  %3745 = vmatmul.bf16.gmra.mxu0 %v3632
  %v3746 = vpop.f32.mrf.mxu0
  %v3747 = vadd.f32 0.0, %v3746
  %v3748 = vpop.f32.mrf.mxu0
  %v3749 = vadd.f32 0.0, %v3748
  %3750 = vmatmul.bf16.gmra.mxu0 %v3635
  %v3751 = vpop.f32.mrf.mxu0
  %v3752 = vadd.f32 0.0, %v3751
  %v3753 = vpop.f32.mrf.mxu0
  %v3754 = vadd.f32 0.0, %v3753
  %3755 = vmatmul.bf16.gmra.mxu0 %v3638
  %v3756 = vpop.f32.mrf.mxu0
  %v3757 = vadd.f32 0.0, %v3756
  %v3758 = vpop.f32.mrf.mxu0
  %v3759 = vadd.f32 0.0, %v3758
  %3760 = vmatmul.bf16.gmra.mxu0 %v3641
  %v3761 = vpop.f32.mrf.mxu0
  %v3762 = vadd.f32 0.0, %v3761
  %v3763 = vpop.f32.mrf.mxu0
  %v3764 = vadd.f32 0.0, %v3763
  %3765 = vmatmul.bf16.gmra.mxu0 %v3644
  %v3766 = vpop.f32.mrf.mxu0
  %v3767 = vadd.f32 0.0, %v3766
  %v3768 = vpop.f32.mrf.mxu0
  %v3769 = vadd.f32 0.0, %v3768
  %3770 = vmatmul.bf16.gmra.mxu0 %v3647
  %v3771 = vpop.f32.mrf.mxu0
  %v3772 = vadd.f32 0.0, %v3771
  %v3773 = vpop.f32.mrf.mxu0
  %v3774 = vadd.f32 0.0, %v3773
  %3775 = vmatmul.bf16.gmra.mxu0 %v3650
  %v3776 = vpop.f32.mrf.mxu0
  %v3777 = vadd.f32 0.0, %v3776
  %v3778 = vpop.f32.mrf.mxu0
  %v3779 = vadd.f32 0.0, %v3778
  %3780 = vmatmul.bf16.gmra.mxu0 %v3653
  %v3781 = vpop.f32.mrf.mxu0
  %v3782 = vadd.f32 0.0, %v3781
  %v3783 = vpop.f32.mrf.mxu0
  %v3784 = vadd.f32 0.0, %v3783
  %3785 = vmatmul.bf16.gmra.mxu0 %v3611
  %v3786 = vpop.f32.mrf.mxu0
  %v3787 = vadd.f32 0.0, %v3786
  %v3788 = vpop.f32.mrf.mxu0
  %v3789 = vadd.f32 0.0, %v3788
  %3790 = vmatmul.bf16.gmra.mxu0 %v3611
  %v3791 = vpop.f32.mrf.mxu0
  %v3792 = vadd.f32 0.0, %v3791
  %v3793 = vpop.f32.mrf.mxu0
  %v3794 = vadd.f32 0.0, %v3793
  %3795 = vmatmul.bf16.gmra.mxu0 %v3656
  %v3796 = vpop.f32.mrf.mxu0
  %v3797 = vadd.f32 0.0, %v3796
  %v3798 = vpop.f32.mrf.mxu0
  %v3799 = vadd.f32 0.0, %v3798
  %3800 = vmatmul.bf16.gmra.mxu0 %v3659
  %v3801 = vpop.f32.mrf.mxu0
  %v3802 = vadd.f32 0.0, %v3801
  %v3803 = vpop.f32.mrf.mxu0
  %v3804 = vadd.f32 0.0, %v3803
  %3805 = vmatmul.bf16.gmra.mxu0 %v3662
  %v3806 = vpop.f32.mrf.mxu0
  %v3807 = vadd.f32 0.0, %v3806
  %v3808 = vpop.f32.mrf.mxu0
  %v3809 = vadd.f32 0.0, %v3808
  %3810 = vmatmul.bf16.gmra.mxu0 %v3665
  %v3811 = vpop.f32.mrf.mxu0
  %v3812 = vadd.f32 0.0, %v3811
  %v3813 = vpop.f32.mrf.mxu0
  %v3814 = vadd.f32 0.0, %v3813
  %3815 = vmatmul.bf16.gmra.mxu0 %v3668
  %v3816 = vpop.f32.mrf.mxu0
  %v3817 = vadd.f32 0.0, %v3816
  %v3818 = vpop.f32.mrf.mxu0
  %v3819 = vadd.f32 0.0, %v3818
  %3820 = vmatmul.bf16.gmra.mxu0 %v3671
  %v3821 = vpop.f32.mrf.mxu0
  %v3822 = vadd.f32 0.0, %v3821
  %v3823 = vpop.f32.mrf.mxu0
  %v3824 = vadd.f32 0.0, %v3823
  %3825 = vmatmul.bf16.gmra.mxu0 %v3674
  %v3826 = vpop.f32.mrf.mxu0
  %v3827 = vadd.f32 0.0, %v3826
  %v3828 = vpop.f32.mrf.mxu0
  %v3829 = vadd.f32 0.0, %v3828
  %3830 = vmatmul.bf16.gmra.mxu0 %v3677
  %v3831 = vpop.f32.mrf.mxu0
  %v3832 = vadd.f32 0.0, %v3831
  %v3833 = vpop.f32.mrf.mxu0
  %v3834 = vadd.f32 0.0, %v3833
  %3835 = vmatmul.bf16.gmra.mxu0 %v3680
  %v3836 = vpop.f32.mrf.mxu0
  %v3837 = vadd.f32 0.0, %v3836
  %v3838 = vpop.f32.mrf.mxu0
  %v3839 = vadd.f32 0.0, %v3838
  %3840 = vmatmul.bf16.gmra.mxu0 %v3683
  %v3841 = vpop.f32.mrf.mxu0
  %v3842 = vadd.f32 0.0, %v3841
  %v3843 = vpop.f32.mrf.mxu0
  %v3844 = vadd.f32 0.0, %v3843
  %3845 = vmatmul.bf16.gmra.mxu0 %v3686
  %v3846 = vpop.f32.mrf.mxu0
  %v3847 = vadd.f32 0.0, %v3846
  %v3848 = vpop.f32.mrf.mxu0
  %v3849 = vadd.f32 0.0, %v3848
  %3850 = vmatmul.bf16.gmra.mxu0 %v3689
  %v3851 = vpop.f32.mrf.mxu0
  %v3852 = vadd.f32 0.0, %v3851
  %v3853 = vpop.f32.mrf.mxu0
  %v3854 = vadd.f32 0.0, %v3853
  %3855 = vmatmul.bf16.gmra.mxu0 %v3692
  %v3856 = vpop.f32.mrf.mxu0
  %v3857 = vadd.f32 0.0, %v3856
  %v3858 = vpop.f32.mrf.mxu0
  %v3859 = vadd.f32 0.0, %v3858
  %3860 = vmatmul.bf16.gmra.mxu0 %v3695
  %v3861 = vpop.f32.mrf.mxu0
  %v3862 = vadd.f32 0.0, %v3861
  %v3863 = vpop.f32.mrf.mxu0
  %v3864 = vadd.f32 0.0, %v3863
  %3865 = vdwg.mxu0
  %v3866 = vadd.f32 %v3093, %v3707
  %v3867 = vadd.f32 %v3094, %v3709
  %v3868 = vadd.f32 %v3095, %v3712
  %v3869 = vadd.f32 %v3096, %v3714
  %v3870 = vadd.f32 %v3097, %v3717
  %v3871 = vadd.f32 %v3098, %v3719
  %v3872 = vadd.f32 %v3099, %v3722
  %v3873 = vadd.f32 %v3100, %v3724
  %v3874 = vadd.f32 %v3101, %v3727
  %v3875 = vadd.f32 %v3102, %v3729
  %v3876 = vadd.f32 %v3103, %v3732
  %v3877 = vadd.f32 %v3104, %v3734
  %v3878 = vadd.f32 %v3105, %v3737
  %v3879 = vadd.f32 %v3106, %v3739
  %v3880 = vadd.f32 %v3107, %v3742
  %v3881 = vadd.f32 %v3108, %v3744
  %v3882 = vadd.f32 %v3109, %v3747
  %v3883 = vadd.f32 %v3110, %v3749
  %v3884 = vadd.f32 %v3111, %v3752
  %v3885 = vadd.f32 %v3112, %v3754
  %v3886 = vadd.f32 %v3113, %v3757
  %v3887 = vadd.f32 %v3114, %v3759
  %v3888 = vadd.f32 %v3115, %v3762
  %v3889 = vadd.f32 %v3116, %v3764
  %v3890 = vadd.f32 %v3117, %v3767
  %v3891 = vadd.f32 %v3118, %v3769
  %v3892 = vadd.f32 %v3119, %v3772
  %v3893 = vadd.f32 %v3120, %v3774
  %v3894 = vadd.f32 %v3121, %v3777
  %v3895 = vadd.f32 %v3122, %v3779
  %v3896 = vadd.f32 %v3123, %v3782
  %v3897 = vadd.f32 %v3124, %v3784
  %v3898 = vadd.f32 %v3125, %v3787
  %v3899 = vadd.f32 %v3126, %v3789
  %v3900 = vadd.f32 %v3127, %v3792
  %v3901 = vadd.f32 %v3128, %v3794
  %v3902 = vadd.f32 %v3129, %v3797
  %v3903 = vadd.f32 %v3130, %v3799
  %v3904 = vadd.f32 %v3131, %v3802
  %v3905 = vadd.f32 %v3132, %v3804
  %v3906 = vadd.f32 %v3133, %v3807
  %v3907 = vadd.f32 %v3134, %v3809
  %v3908 = vadd.f32 %v3135, %v3812
  %v3909 = vadd.f32 %v3136, %v3814
  %v3910 = vadd.f32 %v3137, %v3817
  %v3911 = vadd.f32 %v3138, %v3819
  %v3912 = vadd.f32 %v3139, %v3822
  %v3913 = vadd.f32 %v3140, %v3824
  %v3914 = vadd.f32 %v3141, %v3827
  %v3915 = vadd.f32 %v3142, %v3829
  %v3916 = vadd.f32 %v3143, %v3832
  %v3917 = vadd.f32 %v3144, %v3834
  %v3918 = vadd.f32 %v3145, %v3837
  %v3919 = vadd.f32 %v3146, %v3839
  %v3920 = vadd.f32 %v3147, %v3842
  %v3921 = vadd.f32 %v3148, %v3844
  %v3922 = vadd.f32 %v3149, %v3847
  %v3923 = vadd.f32 %v3150, %v3849
  %v3924 = vadd.f32 %v3151, %v3852
  %v3925 = vadd.f32 %v3152, %v3854
  %v3926 = vadd.f32 %v3153, %v3857
  %v3927 = vadd.f32 %v3154, %v3859
  %v3928 = vadd.f32 %v3155, %v3862
  %v3929 = vadd.f32 %v3156, %v3864
  %v3930 = vshrl.u32 %v1702, 16
  %v3932 = vrot.slane %v3930, 3
  %v3933 = vshll.u32 %v1702, 16
  %v3935 = vrot.slane %v3933, 4
  %v3936 = vor.u32 %v3932, %v3935
  %v3937 = vshrl.u32 %v1752, 16
  %v3939 = vrot.slane %v3937, 3
  %v3940 = vshll.u32 %v1752, 16
  %v3942 = vrot.slane %v3940, 4
  %v3943 = vor.u32 %v3939, %v3942
  %v3944 = vsel %vm3157, %v3936, %v3943
  %v3945 = vshrl.u32 %v1734, 16
  %v3947 = vrot.slane %v3945, 3
  %v3948 = vshll.u32 %v1734, 16
  %v3950 = vrot.slane %v3948, 4
  %v3951 = vor.u32 %v3947, %v3950
  %v3952 = vshrl.u32 %v1768, 16
  %v3954 = vrot.slane %v3952, 3
  %v3955 = vshll.u32 %v1768, 16
  %v3957 = vrot.slane %v3955, 4
  %v3958 = vor.u32 %v3954, %v3957
  %v3959 = vsel %vm3157, %v3951, %v3958
  %s3960 = scalar_lea.vmem %s5, 96
  %v3961 = vld [vmem:[%s3960] sm:$0xf]
  %v3962 = vld [vmem:[%s3960 + $0x4] sm:$0xf]
  %v3963 = vld [vmem:[%s3960 + $0x8] sm:$0xf]
  %v3964 = vld [vmem:[%s3960 + $0xc] sm:$0xf]
  %v3969 = vunpack.c.l.b16 %v3961
  %v3970 = vunpack.c.l.b16 %v3962
  %v3971 = vunpack.c.l.b16 %v3963
  %v3972 = vunpack.c.l.b16 %v3964
  %v3973 = vpack.c.b16 %v3970, %v3969
  %v3974 = vpack.c.b16 %v3972, %v3971
  %v3978 = vsel %vm1947, %v3944, 0
  %v3981 = vsel %vm1947, %v3959, 0
  %3983 = vmatpush.bf16.msra.mxu0 0
  %3984 = vmatpush.bf16.msra.mxu0 0
  %3985 = vmatpush.bf16.msra.mxu0 0
  %3986 = vmatpush.bf16.msra.mxu0 0
  %3987 = vmatpush.bf16.msra.mxu0 0
  %3988 = vmatpush.bf16.msra.mxu0 0
  %3989 = vmatpush.bf16.msra.mxu0 %v3974
  %3990 = vmatpush.bf16.msra.mxu0 %v3973
  %3991 = vmatmul.bf16.gmra.mxu0 %v3611
  %v3992 = vpop.f32.mrf.mxu0
  %v3993 = vadd.f32 0.0, %v3992
  %v3994 = vpop.f32.mrf.mxu0
  %v3995 = vadd.f32 0.0, %v3994
  %3996 = vmatmul.bf16.gmra.mxu0 %v3614
  %v3997 = vpop.f32.mrf.mxu0
  %v3998 = vadd.f32 0.0, %v3997
  %v3999 = vpop.f32.mrf.mxu0
  %v4000 = vadd.f32 0.0, %v3999
  %4001 = vmatmul.bf16.gmra.mxu0 %v3617
  %v4002 = vpop.f32.mrf.mxu0
  %v4003 = vadd.f32 0.0, %v4002
  %v4004 = vpop.f32.mrf.mxu0
  %v4005 = vadd.f32 0.0, %v4004
  %4006 = vmatmul.bf16.gmra.mxu0 %v3620
  %v4007 = vpop.f32.mrf.mxu0
  %v4008 = vadd.f32 0.0, %v4007
  %v4009 = vpop.f32.mrf.mxu0
  %v4010 = vadd.f32 0.0, %v4009
  %4011 = vmatmul.bf16.gmra.mxu0 %v3623
  %v4012 = vpop.f32.mrf.mxu0
  %v4013 = vadd.f32 0.0, %v4012
  %v4014 = vpop.f32.mrf.mxu0
  %v4015 = vadd.f32 0.0, %v4014
  %4016 = vmatmul.bf16.gmra.mxu0 %v3626
  %v4017 = vpop.f32.mrf.mxu0
  %v4018 = vadd.f32 0.0, %v4017
  %v4019 = vpop.f32.mrf.mxu0
  %v4020 = vadd.f32 0.0, %v4019
  %4021 = vmatmul.bf16.gmra.mxu0 %v3629
  %v4022 = vpop.f32.mrf.mxu0
  %v4023 = vadd.f32 0.0, %v4022
  %v4024 = vpop.f32.mrf.mxu0
  %v4025 = vadd.f32 0.0, %v4024
  %4026 = vmatmul.bf16.gmra.mxu0 %v3632
  %v4027 = vpop.f32.mrf.mxu0
  %v4028 = vadd.f32 0.0, %v4027
  %v4029 = vpop.f32.mrf.mxu0
  %v4030 = vadd.f32 0.0, %v4029
  %4031 = vmatmul.bf16.gmra.mxu0 %v3635
  %v4032 = vpop.f32.mrf.mxu0
  %v4033 = vadd.f32 0.0, %v4032
  %v4034 = vpop.f32.mrf.mxu0
  %v4035 = vadd.f32 0.0, %v4034
  %4036 = vmatmul.bf16.gmra.mxu0 %v3638
  %v4037 = vpop.f32.mrf.mxu0
  %v4038 = vadd.f32 0.0, %v4037
  %v4039 = vpop.f32.mrf.mxu0
  %v4040 = vadd.f32 0.0, %v4039
  %4041 = vmatmul.bf16.gmra.mxu0 %v3641
  %v4042 = vpop.f32.mrf.mxu0
  %v4043 = vadd.f32 0.0, %v4042
  %v4044 = vpop.f32.mrf.mxu0
  %v4045 = vadd.f32 0.0, %v4044
  %4046 = vmatmul.bf16.gmra.mxu0 %v3644
  %v4047 = vpop.f32.mrf.mxu0
  %v4048 = vadd.f32 0.0, %v4047
  %v4049 = vpop.f32.mrf.mxu0
  %v4050 = vadd.f32 0.0, %v4049
  %4051 = vmatmul.bf16.gmra.mxu0 %v3647
  %v4052 = vpop.f32.mrf.mxu0
  %v4053 = vadd.f32 0.0, %v4052
  %v4054 = vpop.f32.mrf.mxu0
  %v4055 = vadd.f32 0.0, %v4054
  %4056 = vmatmul.bf16.gmra.mxu0 %v3650
  %v4057 = vpop.f32.mrf.mxu0
  %v4058 = vadd.f32 0.0, %v4057
  %v4059 = vpop.f32.mrf.mxu0
  %v4060 = vadd.f32 0.0, %v4059
  %4061 = vmatmul.bf16.gmra.mxu0 %v3653
  %v4062 = vpop.f32.mrf.mxu0
  %v4063 = vadd.f32 0.0, %v4062
  %v4064 = vpop.f32.mrf.mxu0
  %v4065 = vadd.f32 0.0, %v4064
  %4066 = vmatmul.bf16.gmra.mxu0 %v3978
  %v4067 = vpop.f32.mrf.mxu0
  %v4068 = vadd.f32 0.0, %v4067
  %v4069 = vpop.f32.mrf.mxu0
  %v4070 = vadd.f32 0.0, %v4069
  %4071 = vmatmul.bf16.gmra.mxu0 %v3611
  %v4072 = vpop.f32.mrf.mxu0
  %v4073 = vadd.f32 0.0, %v4072
  %v4074 = vpop.f32.mrf.mxu0
  %v4075 = vadd.f32 0.0, %v4074
  %4076 = vmatmul.bf16.gmra.mxu0 %v3656
  %v4077 = vpop.f32.mrf.mxu0
  %v4078 = vadd.f32 0.0, %v4077
  %v4079 = vpop.f32.mrf.mxu0
  %v4080 = vadd.f32 0.0, %v4079
  %4081 = vmatmul.bf16.gmra.mxu0 %v3659
  %v4082 = vpop.f32.mrf.mxu0
  %v4083 = vadd.f32 0.0, %v4082
  %v4084 = vpop.f32.mrf.mxu0
  %v4085 = vadd.f32 0.0, %v4084
  %4086 = vmatmul.bf16.gmra.mxu0 %v3662
  %v4087 = vpop.f32.mrf.mxu0
  %v4088 = vadd.f32 0.0, %v4087
  %v4089 = vpop.f32.mrf.mxu0
  %v4090 = vadd.f32 0.0, %v4089
  %4091 = vmatmul.bf16.gmra.mxu0 %v3665
  %v4092 = vpop.f32.mrf.mxu0
  %v4093 = vadd.f32 0.0, %v4092
  %v4094 = vpop.f32.mrf.mxu0
  %v4095 = vadd.f32 0.0, %v4094
  %4096 = vmatmul.bf16.gmra.mxu0 %v3668
  %v4097 = vpop.f32.mrf.mxu0
  %v4098 = vadd.f32 0.0, %v4097
  %v4099 = vpop.f32.mrf.mxu0
  %v4100 = vadd.f32 0.0, %v4099
  %4101 = vmatmul.bf16.gmra.mxu0 %v3671
  %v4102 = vpop.f32.mrf.mxu0
  %v4103 = vadd.f32 0.0, %v4102
  %v4104 = vpop.f32.mrf.mxu0
  %v4105 = vadd.f32 0.0, %v4104
  %4106 = vmatmul.bf16.gmra.mxu0 %v3674
  %v4107 = vpop.f32.mrf.mxu0
  %v4108 = vadd.f32 0.0, %v4107
  %v4109 = vpop.f32.mrf.mxu0
  %v4110 = vadd.f32 0.0, %v4109
  %4111 = vmatmul.bf16.gmra.mxu0 %v3677
  %v4112 = vpop.f32.mrf.mxu0
  %v4113 = vadd.f32 0.0, %v4112
  %v4114 = vpop.f32.mrf.mxu0
  %v4115 = vadd.f32 0.0, %v4114
  %4116 = vmatmul.bf16.gmra.mxu0 %v3680
  %v4117 = vpop.f32.mrf.mxu0
  %v4118 = vadd.f32 0.0, %v4117
  %v4119 = vpop.f32.mrf.mxu0
  %v4120 = vadd.f32 0.0, %v4119
  %4121 = vmatmul.bf16.gmra.mxu0 %v3683
  %v4122 = vpop.f32.mrf.mxu0
  %v4123 = vadd.f32 0.0, %v4122
  %v4124 = vpop.f32.mrf.mxu0
  %v4125 = vadd.f32 0.0, %v4124
  %4126 = vmatmul.bf16.gmra.mxu0 %v3686
  %v4127 = vpop.f32.mrf.mxu0
  %v4128 = vadd.f32 0.0, %v4127
  %v4129 = vpop.f32.mrf.mxu0
  %v4130 = vadd.f32 0.0, %v4129
  %4131 = vmatmul.bf16.gmra.mxu0 %v3689
  %v4132 = vpop.f32.mrf.mxu0
  %v4133 = vadd.f32 0.0, %v4132
  %v4134 = vpop.f32.mrf.mxu0
  %v4135 = vadd.f32 0.0, %v4134
  %4136 = vmatmul.bf16.gmra.mxu0 %v3692
  %v4137 = vpop.f32.mrf.mxu0
  %v4138 = vadd.f32 0.0, %v4137
  %v4139 = vpop.f32.mrf.mxu0
  %v4140 = vadd.f32 0.0, %v4139
  %4141 = vmatmul.bf16.gmra.mxu0 %v3695
  %v4142 = vpop.f32.mrf.mxu0
  %v4143 = vadd.f32 0.0, %v4142
  %v4144 = vpop.f32.mrf.mxu0
  %v4145 = vadd.f32 0.0, %v4144
  %4146 = vmatmul.bf16.gmra.mxu0 %v3981
  %v4147 = vpop.f32.mrf.mxu0
  %v4148 = vadd.f32 0.0, %v4147
  %v4149 = vpop.f32.mrf.mxu0
  %v4150 = vadd.f32 0.0, %v4149
  %4151 = vdwg.mxu0
  %v4152 = vadd.f32 %v3866, %v3993
  %v4153 = vadd.f32 %v3867, %v3995
  %v4154 = vadd.f32 %v3868, %v3998
  %v4155 = vadd.f32 %v3869, %v4000
  %v4156 = vadd.f32 %v3870, %v4003
  %v4157 = vadd.f32 %v3871, %v4005
  %v4158 = vadd.f32 %v3872, %v4008
  %v4159 = vadd.f32 %v3873, %v4010
  %v4160 = vadd.f32 %v3874, %v4013
  %v4161 = vadd.f32 %v3875, %v4015
  %v4162 = vadd.f32 %v3876, %v4018
  %v4163 = vadd.f32 %v3877, %v4020
  %v4164 = vadd.f32 %v3878, %v4023
  %v4165 = vadd.f32 %v3879, %v4025
  %v4166 = vadd.f32 %v3880, %v4028
  %v4167 = vadd.f32 %v3881, %v4030
  %v4168 = vadd.f32 %v3882, %v4033
  %v4169 = vadd.f32 %v3883, %v4035
  %v4170 = vadd.f32 %v3884, %v4038
  %v4171 = vadd.f32 %v3885, %v4040
  %v4172 = vadd.f32 %v3886, %v4043
  %v4173 = vadd.f32 %v3887, %v4045
  %v4174 = vadd.f32 %v3888, %v4048
  %v4175 = vadd.f32 %v3889, %v4050
  %v4176 = vadd.f32 %v3890, %v4053
  %v4177 = vadd.f32 %v3891, %v4055
  %v4178 = vadd.f32 %v3892, %v4058
  %v4179 = vadd.f32 %v3893, %v4060
  %v4180 = vadd.f32 %v3894, %v4063
  %v4181 = vadd.f32 %v3895, %v4065
  %v4182 = vadd.f32 %v3896, %v4068
  %v4183 = vadd.f32 %v3897, %v4070
  %v4184 = vadd.f32 %v3898, %v4073
  %v4185 = vadd.f32 %v3899, %v4075
  %v4186 = vadd.f32 %v3900, %v4078
  %v4187 = vadd.f32 %v3901, %v4080
  %v4188 = vadd.f32 %v3902, %v4083
  %v4189 = vadd.f32 %v3903, %v4085
  %v4190 = vadd.f32 %v3904, %v4088
  %v4191 = vadd.f32 %v3905, %v4090
  %v4192 = vadd.f32 %v3906, %v4093
  %v4193 = vadd.f32 %v3907, %v4095
  %v4194 = vadd.f32 %v3908, %v4098
  %v4195 = vadd.f32 %v3909, %v4100
  %v4196 = vadd.f32 %v3910, %v4103
  %v4197 = vadd.f32 %v3911, %v4105
  %v4198 = vadd.f32 %v3912, %v4108
  %v4199 = vadd.f32 %v3913, %v4110
  %v4200 = vadd.f32 %v3914, %v4113
  %v4201 = vadd.f32 %v3915, %v4115
  %v4202 = vadd.f32 %v3916, %v4118
  %v4203 = vadd.f32 %v3917, %v4120
  %v4204 = vadd.f32 %v3918, %v4123
  %v4205 = vadd.f32 %v3919, %v4125
  %v4206 = vadd.f32 %v3920, %v4128
  %v4207 = vadd.f32 %v3921, %v4130
  %v4208 = vadd.f32 %v3922, %v4133
  %v4209 = vadd.f32 %v3923, %v4135
  %v4210 = vadd.f32 %v3924, %v4138
  %v4211 = vadd.f32 %v3925, %v4140
  %v4212 = vadd.f32 %v3926, %v4143
  %v4213 = vadd.f32 %v3927, %v4145
  %v4214 = vadd.f32 %v3928, %v4148
  %v4215 = vadd.f32 %v3929, %v4150
  %v4216 = vshrl.u32 %v1704, 16
  %v4218 = vrot.slane %v4216, 3
  %v4219 = vshll.u32 %v1704, 16
  %v4221 = vrot.slane %v4219, 4
  %v4222 = vor.u32 %v4218, %v4221
  %v4223 = vshrl.u32 %v1753, 16
  %v4225 = vrot.slane %v4223, 3
  %v4226 = vshll.u32 %v1753, 16
  %v4228 = vrot.slane %v4226, 4
  %v4229 = vor.u32 %v4225, %v4228
  %v4230 = vsel %vm3157, %v4222, %v4229
  %v4231 = vshrl.u32 %v1736, 16
  %v4233 = vrot.slane %v4231, 3
  %v4234 = vshll.u32 %v1736, 16
  %v4236 = vrot.slane %v4234, 4
  %v4237 = vor.u32 %v4233, %v4236
  %v4238 = vshrl.u32 %v1769, 16
  %v4240 = vrot.slane %v4238, 3
  %v4241 = vshll.u32 %v1769, 16
  %v4243 = vrot.slane %v4241, 4
  %v4244 = vor.u32 %v4240, %v4243
  %v4245 = vsel %vm3157, %v4237, %v4244
  %s4246 = scalar_lea.vmem %s5, 176
  %v4247 = vld [vmem:[%s4246] sm:$0xf]
  %v4248 = vld [vmem:[%s4246 + $0x4] sm:$0xf]
  %v4249 = vld [vmem:[%s4246 + $0x8] sm:$0xf]
  %v4250 = vld [vmem:[%s4246 + $0xc] sm:$0xf]
  %v4255 = vunpack.c.l.b16 %v4247
  %v4256 = vunpack.c.l.b16 %v4248
  %v4257 = vunpack.c.l.b16 %v4249
  %v4258 = vunpack.c.l.b16 %v4250
  %v4259 = vpack.c.b16 %v4256, %v4255
  %v4260 = vpack.c.b16 %v4258, %v4257
  %v4264 = vsel %vm1947, %v4230, 0
  %v4267 = vsel %vm1947, %v4245, 0
  %4269 = vmatpush.bf16.msra.mxu0 0
  %4270 = vmatpush.bf16.msra.mxu0 0
  %4271 = vmatpush.bf16.msra.mxu0 0
  %4272 = vmatpush.bf16.msra.mxu0 0
  %4273 = vmatpush.bf16.msra.mxu0 0
  %4274 = vmatpush.bf16.msra.mxu0 0
  %4275 = vmatpush.bf16.msra.mxu0 %v4260
  %4276 = vmatpush.bf16.msra.mxu0 %v4259
  %4277 = vmatmul.bf16.gmra.mxu0 %v3614
  %v4278 = vpop.f32.mrf.mxu0
  %v4279 = vadd.f32 0.0, %v4278
  %v4280 = vpop.f32.mrf.mxu0
  %v4281 = vadd.f32 0.0, %v4280
  %4282 = vmatmul.bf16.gmra.mxu0 %v3617
  %v4283 = vpop.f32.mrf.mxu0
  %v4284 = vadd.f32 0.0, %v4283
  %v4285 = vpop.f32.mrf.mxu0
  %v4286 = vadd.f32 0.0, %v4285
  %4287 = vmatmul.bf16.gmra.mxu0 %v3620
  %v4288 = vpop.f32.mrf.mxu0
  %v4289 = vadd.f32 0.0, %v4288
  %v4290 = vpop.f32.mrf.mxu0
  %v4291 = vadd.f32 0.0, %v4290
  %4292 = vmatmul.bf16.gmra.mxu0 %v3623
  %v4293 = vpop.f32.mrf.mxu0
  %v4294 = vadd.f32 0.0, %v4293
  %v4295 = vpop.f32.mrf.mxu0
  %v4296 = vadd.f32 0.0, %v4295
  %4297 = vmatmul.bf16.gmra.mxu0 %v3626
  %v4298 = vpop.f32.mrf.mxu0
  %v4299 = vadd.f32 0.0, %v4298
  %v4300 = vpop.f32.mrf.mxu0
  %v4301 = vadd.f32 0.0, %v4300
  %4302 = vmatmul.bf16.gmra.mxu0 %v3629
  %v4303 = vpop.f32.mrf.mxu0
  %v4304 = vadd.f32 0.0, %v4303
  %v4305 = vpop.f32.mrf.mxu0
  %v4306 = vadd.f32 0.0, %v4305
  %4307 = vmatmul.bf16.gmra.mxu0 %v3632
  %v4308 = vpop.f32.mrf.mxu0
  %v4309 = vadd.f32 0.0, %v4308
  %v4310 = vpop.f32.mrf.mxu0
  %v4311 = vadd.f32 0.0, %v4310
  %4312 = vmatmul.bf16.gmra.mxu0 %v3635
  %v4313 = vpop.f32.mrf.mxu0
  %v4314 = vadd.f32 0.0, %v4313
  %v4315 = vpop.f32.mrf.mxu0
  %v4316 = vadd.f32 0.0, %v4315
  %4317 = vmatmul.bf16.gmra.mxu0 %v3638
  %v4318 = vpop.f32.mrf.mxu0
  %v4319 = vadd.f32 0.0, %v4318
  %v4320 = vpop.f32.mrf.mxu0
  %v4321 = vadd.f32 0.0, %v4320
  %4322 = vmatmul.bf16.gmra.mxu0 %v3641
  %v4323 = vpop.f32.mrf.mxu0
  %v4324 = vadd.f32 0.0, %v4323
  %v4325 = vpop.f32.mrf.mxu0
  %v4326 = vadd.f32 0.0, %v4325
  %4327 = vmatmul.bf16.gmra.mxu0 %v3644
  %v4328 = vpop.f32.mrf.mxu0
  %v4329 = vadd.f32 0.0, %v4328
  %v4330 = vpop.f32.mrf.mxu0
  %v4331 = vadd.f32 0.0, %v4330
  %4332 = vmatmul.bf16.gmra.mxu0 %v3647
  %v4333 = vpop.f32.mrf.mxu0
  %v4334 = vadd.f32 0.0, %v4333
  %v4335 = vpop.f32.mrf.mxu0
  %v4336 = vadd.f32 0.0, %v4335
  %4337 = vmatmul.bf16.gmra.mxu0 %v3650
  %v4338 = vpop.f32.mrf.mxu0
  %v4339 = vadd.f32 0.0, %v4338
  %v4340 = vpop.f32.mrf.mxu0
  %v4341 = vadd.f32 0.0, %v4340
  %4342 = vmatmul.bf16.gmra.mxu0 %v3653
  %v4343 = vpop.f32.mrf.mxu0
  %v4344 = vadd.f32 0.0, %v4343
  %v4345 = vpop.f32.mrf.mxu0
  %v4346 = vadd.f32 0.0, %v4345
  %4347 = vmatmul.bf16.gmra.mxu0 %v3978
  %v4348 = vpop.f32.mrf.mxu0
  %v4349 = vadd.f32 0.0, %v4348
  %v4350 = vpop.f32.mrf.mxu0
  %v4351 = vadd.f32 0.0, %v4350
  %4352 = vmatmul.bf16.gmra.mxu0 %v4264
  %v4353 = vpop.f32.mrf.mxu0
  %v4354 = vadd.f32 0.0, %v4353
  %v4355 = vpop.f32.mrf.mxu0
  %v4356 = vadd.f32 0.0, %v4355
  %4357 = vmatmul.bf16.gmra.mxu0 %v3656
  %v4358 = vpop.f32.mrf.mxu0
  %v4359 = vadd.f32 0.0, %v4358
  %v4360 = vpop.f32.mrf.mxu0
  %v4361 = vadd.f32 0.0, %v4360
  %4362 = vmatmul.bf16.gmra.mxu0 %v3659
  %v4363 = vpop.f32.mrf.mxu0
  %v4364 = vadd.f32 0.0, %v4363
  %v4365 = vpop.f32.mrf.mxu0
  %v4366 = vadd.f32 0.0, %v4365
  %4367 = vmatmul.bf16.gmra.mxu0 %v3662
  %v4368 = vpop.f32.mrf.mxu0
  %v4369 = vadd.f32 0.0, %v4368
  %v4370 = vpop.f32.mrf.mxu0
  %v4371 = vadd.f32 0.0, %v4370
  %4372 = vmatmul.bf16.gmra.mxu0 %v3665
  %v4373 = vpop.f32.mrf.mxu0
  %v4374 = vadd.f32 0.0, %v4373
  %v4375 = vpop.f32.mrf.mxu0
  %v4376 = vadd.f32 0.0, %v4375
  %4377 = vmatmul.bf16.gmra.mxu0 %v3668
  %v4378 = vpop.f32.mrf.mxu0
  %v4379 = vadd.f32 0.0, %v4378
  %v4380 = vpop.f32.mrf.mxu0
  %v4381 = vadd.f32 0.0, %v4380
  %4382 = vmatmul.bf16.gmra.mxu0 %v3671
  %v4383 = vpop.f32.mrf.mxu0
  %v4384 = vadd.f32 0.0, %v4383
  %v4385 = vpop.f32.mrf.mxu0
  %v4386 = vadd.f32 0.0, %v4385
  %4387 = vmatmul.bf16.gmra.mxu0 %v3674
  %v4388 = vpop.f32.mrf.mxu0
  %v4389 = vadd.f32 0.0, %v4388
  %v4390 = vpop.f32.mrf.mxu0
  %v4391 = vadd.f32 0.0, %v4390
  %4392 = vmatmul.bf16.gmra.mxu0 %v3677
  %v4393 = vpop.f32.mrf.mxu0
  %v4394 = vadd.f32 0.0, %v4393
  %v4395 = vpop.f32.mrf.mxu0
  %v4396 = vadd.f32 0.0, %v4395
  %4397 = vmatmul.bf16.gmra.mxu0 %v3680
  %v4398 = vpop.f32.mrf.mxu0
  %v4399 = vadd.f32 0.0, %v4398
  %v4400 = vpop.f32.mrf.mxu0
  %v4401 = vadd.f32 0.0, %v4400
  %4402 = vmatmul.bf16.gmra.mxu0 %v3683
  %v4403 = vpop.f32.mrf.mxu0
  %v4404 = vadd.f32 0.0, %v4403
  %v4405 = vpop.f32.mrf.mxu0
  %v4406 = vadd.f32 0.0, %v4405
  %4407 = vmatmul.bf16.gmra.mxu0 %v3686
  %v4408 = vpop.f32.mrf.mxu0
  %v4409 = vadd.f32 0.0, %v4408
  %v4410 = vpop.f32.mrf.mxu0
  %v4411 = vadd.f32 0.0, %v4410
  %4412 = vmatmul.bf16.gmra.mxu0 %v3689
  %v4413 = vpop.f32.mrf.mxu0
  %v4414 = vadd.f32 0.0, %v4413
  %v4415 = vpop.f32.mrf.mxu0
  %v4416 = vadd.f32 0.0, %v4415
  %4417 = vmatmul.bf16.gmra.mxu0 %v3692
  %v4418 = vpop.f32.mrf.mxu0
  %v4419 = vadd.f32 0.0, %v4418
  %v4420 = vpop.f32.mrf.mxu0
  %v4421 = vadd.f32 0.0, %v4420
  %4422 = vmatmul.bf16.gmra.mxu0 %v3695
  %v4423 = vpop.f32.mrf.mxu0
  %v4424 = vadd.f32 0.0, %v4423
  %v4425 = vpop.f32.mrf.mxu0
  %v4426 = vadd.f32 0.0, %v4425
  %4427 = vmatmul.bf16.gmra.mxu0 %v3981
  %v4428 = vpop.f32.mrf.mxu0
  %v4429 = vadd.f32 0.0, %v4428
  %v4430 = vpop.f32.mrf.mxu0
  %v4431 = vadd.f32 0.0, %v4430
  %4432 = vmatmul.bf16.gmra.mxu0 %v4267
  %v4433 = vpop.f32.mrf.mxu0
  %v4434 = vadd.f32 0.0, %v4433
  %v4435 = vpop.f32.mrf.mxu0
  %v4436 = vadd.f32 0.0, %v4435
  %4437 = vdwg.mxu0
  %v4438 = vadd.f32 %v4152, %v4279
  %v4439 = vadd.f32 %v4153, %v4281
  %v4440 = vadd.f32 %v4154, %v4284
  %v4441 = vadd.f32 %v4155, %v4286
  %v4442 = vadd.f32 %v4156, %v4289
  %v4443 = vadd.f32 %v4157, %v4291
  %v4444 = vadd.f32 %v4158, %v4294
  %v4445 = vadd.f32 %v4159, %v4296
  %v4446 = vadd.f32 %v4160, %v4299
  %v4447 = vadd.f32 %v4161, %v4301
  %v4448 = vadd.f32 %v4162, %v4304
  %v4449 = vadd.f32 %v4163, %v4306
  %v4450 = vadd.f32 %v4164, %v4309
  %v4451 = vadd.f32 %v4165, %v4311
  %v4452 = vadd.f32 %v4166, %v4314
  %v4453 = vadd.f32 %v4167, %v4316
  %v4454 = vadd.f32 %v4168, %v4319
  %v4455 = vadd.f32 %v4169, %v4321
  %v4456 = vadd.f32 %v4170, %v4324
  %v4457 = vadd.f32 %v4171, %v4326
  %v4458 = vadd.f32 %v4172, %v4329
  %v4459 = vadd.f32 %v4173, %v4331
  %v4460 = vadd.f32 %v4174, %v4334
  %v4461 = vadd.f32 %v4175, %v4336
  %v4462 = vadd.f32 %v4176, %v4339
  %v4463 = vadd.f32 %v4177, %v4341
  %v4464 = vadd.f32 %v4178, %v4344
  %v4465 = vadd.f32 %v4179, %v4346
  %v4466 = vadd.f32 %v4180, %v4349
  %v4467 = vadd.f32 %v4181, %v4351
  %v4468 = vadd.f32 %v4182, %v4354
  %v4469 = vadd.f32 %v4183, %v4356
  %v4470 = vadd.f32 %v4184, %v4359
  %v4471 = vadd.f32 %v4185, %v4361
  %v4472 = vadd.f32 %v4186, %v4364
  %v4473 = vadd.f32 %v4187, %v4366
  %v4474 = vadd.f32 %v4188, %v4369
  %v4475 = vadd.f32 %v4189, %v4371
  %v4476 = vadd.f32 %v4190, %v4374
  %v4477 = vadd.f32 %v4191, %v4376
  %v4478 = vadd.f32 %v4192, %v4379
  %v4479 = vadd.f32 %v4193, %v4381
  %v4480 = vadd.f32 %v4194, %v4384
  %v4481 = vadd.f32 %v4195, %v4386
  %v4482 = vadd.f32 %v4196, %v4389
  %v4483 = vadd.f32 %v4197, %v4391
  %v4484 = vadd.f32 %v4198, %v4394
  %v4485 = vadd.f32 %v4199, %v4396
  %v4486 = vadd.f32 %v4200, %v4399
  %v4487 = vadd.f32 %v4201, %v4401
  %v4488 = vadd.f32 %v4202, %v4404
  %v4489 = vadd.f32 %v4203, %v4406
  %v4490 = vadd.f32 %v4204, %v4409
  %v4491 = vadd.f32 %v4205, %v4411
  %v4492 = vadd.f32 %v4206, %v4414
  %v4493 = vadd.f32 %v4207, %v4416
  %v4494 = vadd.f32 %v4208, %v4419
  %v4495 = vadd.f32 %v4209, %v4421
  %v4496 = vadd.f32 %v4210, %v4424
  %v4497 = vadd.f32 %v4211, %v4426
  %v4498 = vadd.f32 %v4212, %v4429
  %v4499 = vadd.f32 %v4213, %v4431
  %v4500 = vadd.f32 %v4214, %v4434
  %v4501 = vadd.f32 %v4215, %v4436
  %s4502 = scalar_lea.vmem %s5, 256
  %v4503 = vld [vmem:[%s4502] sm:$0xf]
  %v4504 = vld [vmem:[%s4502 + $0x4] sm:$0xf]
  %v4505 = vld [vmem:[%s4502 + $0x8] sm:$0xf]
  %v4506 = vld [vmem:[%s4502 + $0xc] sm:$0xf]
  %v4511 = vunpack.c.l.b16 %v4503
  %v4512 = vunpack.c.l.b16 %v4504
  %v4513 = vunpack.c.l.b16 %v4505
  %v4514 = vunpack.c.l.b16 %v4506
  %v4515 = vpack.c.b16 %v4512, %v4511
  %v4516 = vpack.c.b16 %v4514, %v4513
  %4519 = vmatpush.bf16.msra.mxu0 0
  %4520 = vmatpush.bf16.msra.mxu0 0
  %4521 = vmatpush.bf16.msra.mxu0 0
  %4522 = vmatpush.bf16.msra.mxu0 0
  %4523 = vmatpush.bf16.msra.mxu0 0
  %4524 = vmatpush.bf16.msra.mxu0 0
  %4525 = vmatpush.bf16.msra.mxu0 %v4516
  %4526 = vmatpush.bf16.msra.mxu0 %v4515
  %4527 = vmatmul.bf16.gmra.mxu0 %v3617
  %v4528 = vpop.f32.mrf.mxu0
  %v4529 = vadd.f32 0.0, %v4528
  %v4530 = vpop.f32.mrf.mxu0
  %v4531 = vadd.f32 0.0, %v4530
  %4532 = vmatmul.bf16.gmra.mxu0 %v3620
  %v4533 = vpop.f32.mrf.mxu0
  %v4534 = vadd.f32 0.0, %v4533
  %v4535 = vpop.f32.mrf.mxu0
  %v4536 = vadd.f32 0.0, %v4535
  %4537 = vmatmul.bf16.gmra.mxu0 %v3623
  %v4538 = vpop.f32.mrf.mxu0
  %v4539 = vadd.f32 0.0, %v4538
  %v4540 = vpop.f32.mrf.mxu0
  %v4541 = vadd.f32 0.0, %v4540
  %4542 = vmatmul.bf16.gmra.mxu0 %v3626
  %v4543 = vpop.f32.mrf.mxu0
  %v4544 = vadd.f32 0.0, %v4543
  %v4545 = vpop.f32.mrf.mxu0
  %v4546 = vadd.f32 0.0, %v4545
  %4547 = vmatmul.bf16.gmra.mxu0 %v3629
  %v4548 = vpop.f32.mrf.mxu0
  %v4549 = vadd.f32 0.0, %v4548
  %v4550 = vpop.f32.mrf.mxu0
  %v4551 = vadd.f32 0.0, %v4550
  %4552 = vmatmul.bf16.gmra.mxu0 %v3632
  %v4553 = vpop.f32.mrf.mxu0
  %v4554 = vadd.f32 0.0, %v4553
  %v4555 = vpop.f32.mrf.mxu0
  %v4556 = vadd.f32 0.0, %v4555
  %4557 = vmatmul.bf16.gmra.mxu0 %v3635
  %v4558 = vpop.f32.mrf.mxu0
  %v4559 = vadd.f32 0.0, %v4558
  %v4560 = vpop.f32.mrf.mxu0
  %v4561 = vadd.f32 0.0, %v4560
  %4562 = vmatmul.bf16.gmra.mxu0 %v3638
  %v4563 = vpop.f32.mrf.mxu0
  %v4564 = vadd.f32 0.0, %v4563
  %v4565 = vpop.f32.mrf.mxu0
  %v4566 = vadd.f32 0.0, %v4565
  %4567 = vmatmul.bf16.gmra.mxu0 %v3641
  %v4568 = vpop.f32.mrf.mxu0
  %v4569 = vadd.f32 0.0, %v4568
  %v4570 = vpop.f32.mrf.mxu0
  %v4571 = vadd.f32 0.0, %v4570
  %4572 = vmatmul.bf16.gmra.mxu0 %v3644
  %v4573 = vpop.f32.mrf.mxu0
  %v4574 = vadd.f32 0.0, %v4573
  %v4575 = vpop.f32.mrf.mxu0
  %v4576 = vadd.f32 0.0, %v4575
  %4577 = vmatmul.bf16.gmra.mxu0 %v3647
  %v4578 = vpop.f32.mrf.mxu0
  %v4579 = vadd.f32 0.0, %v4578
  %v4580 = vpop.f32.mrf.mxu0
  %v4581 = vadd.f32 0.0, %v4580
  %4582 = vmatmul.bf16.gmra.mxu0 %v3650
  %v4583 = vpop.f32.mrf.mxu0
  %v4584 = vadd.f32 0.0, %v4583
  %v4585 = vpop.f32.mrf.mxu0
  %v4586 = vadd.f32 0.0, %v4585
  %4587 = vmatmul.bf16.gmra.mxu0 %v3653
  %v4588 = vpop.f32.mrf.mxu0
  %v4589 = vadd.f32 0.0, %v4588
  %v4590 = vpop.f32.mrf.mxu0
  %v4591 = vadd.f32 0.0, %v4590
  %4592 = vmatmul.bf16.gmra.mxu0 %v3978
  %v4593 = vpop.f32.mrf.mxu0
  %v4594 = vadd.f32 0.0, %v4593
  %v4595 = vpop.f32.mrf.mxu0
  %v4596 = vadd.f32 0.0, %v4595
  %4597 = vmatmul.bf16.gmra.mxu0 %v4264
  %v4598 = vpop.f32.mrf.mxu0
  %v4599 = vadd.f32 0.0, %v4598
  %v4600 = vpop.f32.mrf.mxu0
  %v4601 = vadd.f32 0.0, %v4600
  %4602 = vmatmul.bf16.gmra.mxu0 %v3611
  %v4603 = vpop.f32.mrf.mxu0
  %v4604 = vadd.f32 0.0, %v4603
  %v4605 = vpop.f32.mrf.mxu0
  %v4606 = vadd.f32 0.0, %v4605
  %4607 = vmatmul.bf16.gmra.mxu0 %v3659
  %v4608 = vpop.f32.mrf.mxu0
  %v4609 = vadd.f32 0.0, %v4608
  %v4610 = vpop.f32.mrf.mxu0
  %v4611 = vadd.f32 0.0, %v4610
  %4612 = vmatmul.bf16.gmra.mxu0 %v3662
  %v4613 = vpop.f32.mrf.mxu0
  %v4614 = vadd.f32 0.0, %v4613
  %v4615 = vpop.f32.mrf.mxu0
  %v4616 = vadd.f32 0.0, %v4615
  %4617 = vmatmul.bf16.gmra.mxu0 %v3665
  %v4618 = vpop.f32.mrf.mxu0
  %v4619 = vadd.f32 0.0, %v4618
  %v4620 = vpop.f32.mrf.mxu0
  %v4621 = vadd.f32 0.0, %v4620
  %4622 = vmatmul.bf16.gmra.mxu0 %v3668
  %v4623 = vpop.f32.mrf.mxu0
  %v4624 = vadd.f32 0.0, %v4623
  %v4625 = vpop.f32.mrf.mxu0
  %v4626 = vadd.f32 0.0, %v4625
  %4627 = vmatmul.bf16.gmra.mxu0 %v3671
  %v4628 = vpop.f32.mrf.mxu0
  %v4629 = vadd.f32 0.0, %v4628
  %v4630 = vpop.f32.mrf.mxu0
  %v4631 = vadd.f32 0.0, %v4630
  %4632 = vmatmul.bf16.gmra.mxu0 %v3674
  %v4633 = vpop.f32.mrf.mxu0
  %v4634 = vadd.f32 0.0, %v4633
  %v4635 = vpop.f32.mrf.mxu0
  %v4636 = vadd.f32 0.0, %v4635
  %4637 = vmatmul.bf16.gmra.mxu0 %v3677
  %v4638 = vpop.f32.mrf.mxu0
  %v4639 = vadd.f32 0.0, %v4638
  %v4640 = vpop.f32.mrf.mxu0
  %v4641 = vadd.f32 0.0, %v4640
  %4642 = vmatmul.bf16.gmra.mxu0 %v3680
  %v4643 = vpop.f32.mrf.mxu0
  %v4644 = vadd.f32 0.0, %v4643
  %v4645 = vpop.f32.mrf.mxu0
  %v4646 = vadd.f32 0.0, %v4645
  %4647 = vmatmul.bf16.gmra.mxu0 %v3683
  %v4648 = vpop.f32.mrf.mxu0
  %v4649 = vadd.f32 0.0, %v4648
  %v4650 = vpop.f32.mrf.mxu0
  %v4651 = vadd.f32 0.0, %v4650
  %4652 = vmatmul.bf16.gmra.mxu0 %v3686
  %v4653 = vpop.f32.mrf.mxu0
  %v4654 = vadd.f32 0.0, %v4653
  %v4655 = vpop.f32.mrf.mxu0
  %v4656 = vadd.f32 0.0, %v4655
  %4657 = vmatmul.bf16.gmra.mxu0 %v3689
  %v4658 = vpop.f32.mrf.mxu0
  %v4659 = vadd.f32 0.0, %v4658
  %v4660 = vpop.f32.mrf.mxu0
  %v4661 = vadd.f32 0.0, %v4660
  %4662 = vmatmul.bf16.gmra.mxu0 %v3692
  %v4663 = vpop.f32.mrf.mxu0
  %v4664 = vadd.f32 0.0, %v4663
  %v4665 = vpop.f32.mrf.mxu0
  %v4666 = vadd.f32 0.0, %v4665
  %4667 = vmatmul.bf16.gmra.mxu0 %v3695
  %v4668 = vpop.f32.mrf.mxu0
  %v4669 = vadd.f32 0.0, %v4668
  %v4670 = vpop.f32.mrf.mxu0
  %v4671 = vadd.f32 0.0, %v4670
  %4672 = vmatmul.bf16.gmra.mxu0 %v3981
  %v4673 = vpop.f32.mrf.mxu0
  %v4674 = vadd.f32 0.0, %v4673
  %v4675 = vpop.f32.mrf.mxu0
  %v4676 = vadd.f32 0.0, %v4675
  %4677 = vmatmul.bf16.gmra.mxu0 %v4267
  %v4678 = vpop.f32.mrf.mxu0
  %v4679 = vadd.f32 0.0, %v4678
  %v4680 = vpop.f32.mrf.mxu0
  %v4681 = vadd.f32 0.0, %v4680
  %4682 = vmatmul.bf16.gmra.mxu0 %v3611
  %v4683 = vpop.f32.mrf.mxu0
  %v4684 = vadd.f32 0.0, %v4683
  %v4685 = vpop.f32.mrf.mxu0
  %v4686 = vadd.f32 0.0, %v4685
  %4687 = vdwg.mxu0
  %v4688 = vadd.f32 %v4438, %v4529
  %v4689 = vadd.f32 %v4439, %v4531
  %v4690 = vadd.f32 %v4440, %v4534
  %v4691 = vadd.f32 %v4441, %v4536
  %v4692 = vadd.f32 %v4442, %v4539
  %v4693 = vadd.f32 %v4443, %v4541
  %v4694 = vadd.f32 %v4444, %v4544
  %v4695 = vadd.f32 %v4445, %v4546
  %v4696 = vadd.f32 %v4446, %v4549
  %v4697 = vadd.f32 %v4447, %v4551
  %v4698 = vadd.f32 %v4448, %v4554
  %v4699 = vadd.f32 %v4449, %v4556
  %v4700 = vadd.f32 %v4450, %v4559
  %v4701 = vadd.f32 %v4451, %v4561
  %v4702 = vadd.f32 %v4452, %v4564
  %v4703 = vadd.f32 %v4453, %v4566
  %v4704 = vadd.f32 %v4454, %v4569
  %v4705 = vadd.f32 %v4455, %v4571
  %v4706 = vadd.f32 %v4456, %v4574
  %v4707 = vadd.f32 %v4457, %v4576
  %v4708 = vadd.f32 %v4458, %v4579
  %v4709 = vadd.f32 %v4459, %v4581
  %v4710 = vadd.f32 %v4460, %v4584
  %v4711 = vadd.f32 %v4461, %v4586
  %v4712 = vadd.f32 %v4462, %v4589
  %v4713 = vadd.f32 %v4463, %v4591
  %v4714 = vadd.f32 %v4464, %v4594
  %v4715 = vadd.f32 %v4465, %v4596
  %v4716 = vadd.f32 %v4466, %v4599
  %v4717 = vadd.f32 %v4467, %v4601
  %v4718 = vadd.f32 %v4468, %v4604
  %v4719 = vadd.f32 %v4469, %v4606
  %v4720 = vadd.f32 %v4470, %v4609
  %v4721 = vadd.f32 %v4471, %v4611
  %v4722 = vadd.f32 %v4472, %v4614
  %v4723 = vadd.f32 %v4473, %v4616
  %v4724 = vadd.f32 %v4474, %v4619
  %v4725 = vadd.f32 %v4475, %v4621
  %v4726 = vadd.f32 %v4476, %v4624
  %v4727 = vadd.f32 %v4477, %v4626
  %v4728 = vadd.f32 %v4478, %v4629
  %v4729 = vadd.f32 %v4479, %v4631
  %v4730 = vadd.f32 %v4480, %v4634
  %v4731 = vadd.f32 %v4481, %v4636
  %v4732 = vadd.f32 %v4482, %v4639
  %v4733 = vadd.f32 %v4483, %v4641
  %v4734 = vadd.f32 %v4484, %v4644
  %v4735 = vadd.f32 %v4485, %v4646
  %v4736 = vadd.f32 %v4486, %v4649
  %v4737 = vadd.f32 %v4487, %v4651
  %v4738 = vadd.f32 %v4488, %v4654
  %v4739 = vadd.f32 %v4489, %v4656
  %v4740 = vadd.f32 %v4490, %v4659
  %v4741 = vadd.f32 %v4491, %v4661
  %v4742 = vadd.f32 %v4492, %v4664
  %v4743 = vadd.f32 %v4493, %v4666
  %v4744 = vadd.f32 %v4494, %v4669
  %v4745 = vadd.f32 %v4495, %v4671
  %v4746 = vadd.f32 %v4496, %v4674
  %v4747 = vadd.f32 %v4497, %v4676
  %v4748 = vadd.f32 %v4498, %v4679
  %v4749 = vadd.f32 %v4499, %v4681
  %v4750 = vadd.f32 %v4500, %v4684
  %v4751 = vadd.f32 %v4501, %v4686
  %s4752 = scalar_lea.vmem %s5, 336
  %v4753 = vld [vmem:[%s4752] sm:$0xf]
  %v4754 = vld [vmem:[%s4752 + $0x4] sm:$0xf]
  %v4755 = vld [vmem:[%s4752 + $0x8] sm:$0xf]
  %v4756 = vld [vmem:[%s4752 + $0xc] sm:$0xf]
  %v4761 = vunpack.c.l.b16 %v4753
  %v4762 = vunpack.c.l.b16 %v4754
  %v4763 = vunpack.c.l.b16 %v4755
  %v4764 = vunpack.c.l.b16 %v4756
  %v4765 = vpack.c.b16 %v4762, %v4761
  %v4766 = vpack.c.b16 %v4764, %v4763
  %4769 = vmatpush.bf16.msra.mxu0 0
  %4770 = vmatpush.bf16.msra.mxu0 0
  %4771 = vmatpush.bf16.msra.mxu0 0
  %4772 = vmatpush.bf16.msra.mxu0 0
  %4773 = vmatpush.bf16.msra.mxu0 0
  %4774 = vmatpush.bf16.msra.mxu0 0
  %4775 = vmatpush.bf16.msra.mxu0 %v4766
  %4776 = vmatpush.bf16.msra.mxu0 %v4765
  %4777 = vmatmul.bf16.gmra.mxu0 %v3620
  %v4778 = vpop.f32.mrf.mxu0
  %v4779 = vadd.f32 0.0, %v4778
  %v4780 = vpop.f32.mrf.mxu0
  %v4781 = vadd.f32 0.0, %v4780
  %4782 = vmatmul.bf16.gmra.mxu0 %v3623
  %v4783 = vpop.f32.mrf.mxu0
  %v4784 = vadd.f32 0.0, %v4783
  %v4785 = vpop.f32.mrf.mxu0
  %v4786 = vadd.f32 0.0, %v4785
  %4787 = vmatmul.bf16.gmra.mxu0 %v3626
  %v4788 = vpop.f32.mrf.mxu0
  %v4789 = vadd.f32 0.0, %v4788
  %v4790 = vpop.f32.mrf.mxu0
  %v4791 = vadd.f32 0.0, %v4790
  %4792 = vmatmul.bf16.gmra.mxu0 %v3629
  %v4793 = vpop.f32.mrf.mxu0
  %v4794 = vadd.f32 0.0, %v4793
  %v4795 = vpop.f32.mrf.mxu0
  %v4796 = vadd.f32 0.0, %v4795
  %4797 = vmatmul.bf16.gmra.mxu0 %v3632
  %v4798 = vpop.f32.mrf.mxu0
  %v4799 = vadd.f32 0.0, %v4798
  %v4800 = vpop.f32.mrf.mxu0
  %v4801 = vadd.f32 0.0, %v4800
  %4802 = vmatmul.bf16.gmra.mxu0 %v3635
  %v4803 = vpop.f32.mrf.mxu0
  %v4804 = vadd.f32 0.0, %v4803
  %v4805 = vpop.f32.mrf.mxu0
  %v4806 = vadd.f32 0.0, %v4805
  %4807 = vmatmul.bf16.gmra.mxu0 %v3638
  %v4808 = vpop.f32.mrf.mxu0
  %v4809 = vadd.f32 0.0, %v4808
  %v4810 = vpop.f32.mrf.mxu0
  %v4811 = vadd.f32 0.0, %v4810
  %4812 = vmatmul.bf16.gmra.mxu0 %v3641
  %v4813 = vpop.f32.mrf.mxu0
  %v4814 = vadd.f32 0.0, %v4813
  %v4815 = vpop.f32.mrf.mxu0
  %v4816 = vadd.f32 0.0, %v4815
  %4817 = vmatmul.bf16.gmra.mxu0 %v3644
  %v4818 = vpop.f32.mrf.mxu0
  %v4819 = vadd.f32 0.0, %v4818
  %v4820 = vpop.f32.mrf.mxu0
  %v4821 = vadd.f32 0.0, %v4820
  %4822 = vmatmul.bf16.gmra.mxu0 %v3647
  %v4823 = vpop.f32.mrf.mxu0
  %v4824 = vadd.f32 0.0, %v4823
  %v4825 = vpop.f32.mrf.mxu0
  %v4826 = vadd.f32 0.0, %v4825
  %4827 = vmatmul.bf16.gmra.mxu0 %v3650
  %v4828 = vpop.f32.mrf.mxu0
  %v4829 = vadd.f32 0.0, %v4828
  %v4830 = vpop.f32.mrf.mxu0
  %v4831 = vadd.f32 0.0, %v4830
  %4832 = vmatmul.bf16.gmra.mxu0 %v3653
  %v4833 = vpop.f32.mrf.mxu0
  %v4834 = vadd.f32 0.0, %v4833
  %v4835 = vpop.f32.mrf.mxu0
  %v4836 = vadd.f32 0.0, %v4835
  %4837 = vmatmul.bf16.gmra.mxu0 %v3978
  %v4838 = vpop.f32.mrf.mxu0
  %v4839 = vadd.f32 0.0, %v4838
  %v4840 = vpop.f32.mrf.mxu0
  %v4841 = vadd.f32 0.0, %v4840
  %4842 = vmatmul.bf16.gmra.mxu0 %v4264
  %v4843 = vpop.f32.mrf.mxu0
  %v4844 = vadd.f32 0.0, %v4843
  %v4845 = vpop.f32.mrf.mxu0
  %v4846 = vadd.f32 0.0, %v4845
  %4847 = vmatmul.bf16.gmra.mxu0 %v3611
  %v4848 = vpop.f32.mrf.mxu0
  %v4849 = vadd.f32 0.0, %v4848
  %v4850 = vpop.f32.mrf.mxu0
  %v4851 = vadd.f32 0.0, %v4850
  %4852 = vmatmul.bf16.gmra.mxu0 %v3611
  %v4853 = vpop.f32.mrf.mxu0
  %v4854 = vadd.f32 0.0, %v4853
  %v4855 = vpop.f32.mrf.mxu0
  %v4856 = vadd.f32 0.0, %v4855
  %4857 = vmatmul.bf16.gmra.mxu0 %v3662
  %v4858 = vpop.f32.mrf.mxu0
  %v4859 = vadd.f32 0.0, %v4858
  %v4860 = vpop.f32.mrf.mxu0
  %v4861 = vadd.f32 0.0, %v4860
  %4862 = vmatmul.bf16.gmra.mxu0 %v3665
  %v4863 = vpop.f32.mrf.mxu0
  %v4864 = vadd.f32 0.0, %v4863
  %v4865 = vpop.f32.mrf.mxu0
  %v4866 = vadd.f32 0.0, %v4865
  %4867 = vmatmul.bf16.gmra.mxu0 %v3668
  %v4868 = vpop.f32.mrf.mxu0
  %v4869 = vadd.f32 0.0, %v4868
  %v4870 = vpop.f32.mrf.mxu0
  %v4871 = vadd.f32 0.0, %v4870
  %4872 = vmatmul.bf16.gmra.mxu0 %v3671
  %v4873 = vpop.f32.mrf.mxu0
  %v4874 = vadd.f32 0.0, %v4873
  %v4875 = vpop.f32.mrf.mxu0
  %v4876 = vadd.f32 0.0, %v4875
  %4877 = vmatmul.bf16.gmra.mxu0 %v3674
  %v4878 = vpop.f32.mrf.mxu0
  %v4879 = vadd.f32 0.0, %v4878
  %v4880 = vpop.f32.mrf.mxu0
  %v4881 = vadd.f32 0.0, %v4880
  %4882 = vmatmul.bf16.gmra.mxu0 %v3677
  %v4883 = vpop.f32.mrf.mxu0
  %v4884 = vadd.f32 0.0, %v4883
  %v4885 = vpop.f32.mrf.mxu0
  %v4886 = vadd.f32 0.0, %v4885
  %4887 = vmatmul.bf16.gmra.mxu0 %v3680
  %v4888 = vpop.f32.mrf.mxu0
  %v4889 = vadd.f32 0.0, %v4888
  %v4890 = vpop.f32.mrf.mxu0
  %v4891 = vadd.f32 0.0, %v4890
  %4892 = vmatmul.bf16.gmra.mxu0 %v3683
  %v4893 = vpop.f32.mrf.mxu0
  %v4894 = vadd.f32 0.0, %v4893
  %v4895 = vpop.f32.mrf.mxu0
  %v4896 = vadd.f32 0.0, %v4895
  %4897 = vmatmul.bf16.gmra.mxu0 %v3686
  %v4898 = vpop.f32.mrf.mxu0
  %v4899 = vadd.f32 0.0, %v4898
  %v4900 = vpop.f32.mrf.mxu0
  %v4901 = vadd.f32 0.0, %v4900
  %4902 = vmatmul.bf16.gmra.mxu0 %v3689
  %v4903 = vpop.f32.mrf.mxu0
  %v4904 = vadd.f32 0.0, %v4903
  %v4905 = vpop.f32.mrf.mxu0
  %v4906 = vadd.f32 0.0, %v4905
  %4907 = vmatmul.bf16.gmra.mxu0 %v3692
  %v4908 = vpop.f32.mrf.mxu0
  %v4909 = vadd.f32 0.0, %v4908
  %v4910 = vpop.f32.mrf.mxu0
  %v4911 = vadd.f32 0.0, %v4910
  %4912 = vmatmul.bf16.gmra.mxu0 %v3695
  %v4913 = vpop.f32.mrf.mxu0
  %v4914 = vadd.f32 0.0, %v4913
  %v4915 = vpop.f32.mrf.mxu0
  %v4916 = vadd.f32 0.0, %v4915
  %4917 = vmatmul.bf16.gmra.mxu0 %v3981
  %v4918 = vpop.f32.mrf.mxu0
  %v4919 = vadd.f32 0.0, %v4918
  %v4920 = vpop.f32.mrf.mxu0
  %v4921 = vadd.f32 0.0, %v4920
  %4922 = vmatmul.bf16.gmra.mxu0 %v4267
  %v4923 = vpop.f32.mrf.mxu0
  %v4924 = vadd.f32 0.0, %v4923
  %v4925 = vpop.f32.mrf.mxu0
  %v4926 = vadd.f32 0.0, %v4925
  %4927 = vmatmul.bf16.gmra.mxu0 %v3611
  %v4928 = vpop.f32.mrf.mxu0
  %v4929 = vadd.f32 0.0, %v4928
  %v4930 = vpop.f32.mrf.mxu0
  %v4931 = vadd.f32 0.0, %v4930
  %4932 = vmatmul.bf16.gmra.mxu0 %v3611
  %v4933 = vpop.f32.mrf.mxu0
  %v4934 = vadd.f32 0.0, %v4933
  %v4935 = vpop.f32.mrf.mxu0
  %v4936 = vadd.f32 0.0, %v4935
  %4937 = vdwg.mxu0
  %v4938 = vadd.f32 %v4688, %v4779
  %v4939 = vadd.f32 %v4689, %v4781
  %v4940 = vadd.f32 %v4690, %v4784
  %v4941 = vadd.f32 %v4691, %v4786
  %v4942 = vadd.f32 %v4692, %v4789
  %v4943 = vadd.f32 %v4693, %v4791
  %v4944 = vadd.f32 %v4694, %v4794
  %v4945 = vadd.f32 %v4695, %v4796
  %v4946 = vadd.f32 %v4696, %v4799
  %v4947 = vadd.f32 %v4697, %v4801
  %v4948 = vadd.f32 %v4698, %v4804
  %v4949 = vadd.f32 %v4699, %v4806
  %v4950 = vadd.f32 %v4700, %v4809
  %v4951 = vadd.f32 %v4701, %v4811
  %v4952 = vadd.f32 %v4702, %v4814
  %v4953 = vadd.f32 %v4703, %v4816
  %v4954 = vadd.f32 %v4704, %v4819
  %v4955 = vadd.f32 %v4705, %v4821
  %v4956 = vadd.f32 %v4706, %v4824
  %v4957 = vadd.f32 %v4707, %v4826
  %v4958 = vadd.f32 %v4708, %v4829
  %v4959 = vadd.f32 %v4709, %v4831
  %v4960 = vadd.f32 %v4710, %v4834
  %v4961 = vadd.f32 %v4711, %v4836
  %v4962 = vadd.f32 %v4712, %v4839
  %v4963 = vadd.f32 %v4713, %v4841
  %v4964 = vadd.f32 %v4714, %v4844
  %v4965 = vadd.f32 %v4715, %v4846
  %v4966 = vadd.f32 %v4716, %v4849
  %v4967 = vadd.f32 %v4717, %v4851
  %v4968 = vadd.f32 %v4718, %v4854
  %v4969 = vadd.f32 %v4719, %v4856
  %v4970 = vadd.f32 %v4720, %v4859
  %v4971 = vadd.f32 %v4721, %v4861
  %v4972 = vadd.f32 %v4722, %v4864
  %v4973 = vadd.f32 %v4723, %v4866
  %v4974 = vadd.f32 %v4724, %v4869
  %v4975 = vadd.f32 %v4725, %v4871
  %v4976 = vadd.f32 %v4726, %v4874
  %v4977 = vadd.f32 %v4727, %v4876
  %v4978 = vadd.f32 %v4728, %v4879
  %v4979 = vadd.f32 %v4729, %v4881
  %v4980 = vadd.f32 %v4730, %v4884
  %v4981 = vadd.f32 %v4731, %v4886
  %v4982 = vadd.f32 %v4732, %v4889
  %v4983 = vadd.f32 %v4733, %v4891
  %v4984 = vadd.f32 %v4734, %v4894
  %v4985 = vadd.f32 %v4735, %v4896
  %v4986 = vadd.f32 %v4736, %v4899
  %v4987 = vadd.f32 %v4737, %v4901
  %v4988 = vadd.f32 %v4738, %v4904
  %v4989 = vadd.f32 %v4739, %v4906
  %v4990 = vadd.f32 %v4740, %v4909
  %v4991 = vadd.f32 %v4741, %v4911
  %v4992 = vadd.f32 %v4742, %v4914
  %v4993 = vadd.f32 %v4743, %v4916
  %v4994 = vadd.f32 %v4744, %v4919
  %v4995 = vadd.f32 %v4745, %v4921
  %v4996 = vadd.f32 %v4746, %v4924
  %v4997 = vadd.f32 %v4747, %v4926
  %v4998 = vadd.f32 %v4748, %v4929
  %v4999 = vadd.f32 %v4749, %v4931
  %v5000 = vadd.f32 %v4750, %v4934
  %v5001 = vadd.f32 %v4751, %v4936
  %vm5002 = vcmask 1043456
  %v5003 = vrot.slane %v1672, 4
  %v5004 = vrot.slane %v1737, 4
  %v5005 = vsel %vm5002, %v5003, %v5004
  %v5006 = vrot.slane %v1674, 4
  %v5007 = vrot.slane %v1738, 4
  %v5008 = vsel %vm5002, %v5006, %v5007
  %v5009 = vrot.slane %v1676, 4
  %v5010 = vrot.slane %v1739, 4
  %v5011 = vsel %vm5002, %v5009, %v5010
  %v5012 = vrot.slane %v1678, 4
  %v5013 = vrot.slane %v1740, 4
  %v5014 = vsel %vm5002, %v5012, %v5013
  %v5015 = vrot.slane %v1680, 4
  %v5016 = vrot.slane %v1741, 4
  %v5017 = vsel %vm5002, %v5015, %v5016
  %v5018 = vrot.slane %v1682, 4
  %v5019 = vrot.slane %v1742, 4
  %v5020 = vsel %vm5002, %v5018, %v5019
  %v5021 = vrot.slane %v1684, 4
  %v5022 = vrot.slane %v1743, 4
  %v5023 = vsel %vm5002, %v5021, %v5022
  %v5024 = vrot.slane %v1686, 4
  %v5025 = vrot.slane %v1744, 4
  %v5026 = vsel %vm5002, %v5024, %v5025
  %v5027 = vrot.slane %v1688, 4
  %v5028 = vrot.slane %v1745, 4
  %v5029 = vsel %vm5002, %v5027, %v5028
  %v5030 = vrot.slane %v1690, 4
  %v5031 = vrot.slane %v1746, 4
  %v5032 = vsel %vm5002, %v5030, %v5031
  %v5033 = vrot.slane %v1692, 4
  %v5034 = vrot.slane %v1747, 4
  %v5035 = vsel %vm5002, %v5033, %v5034
  %v5036 = vrot.slane %v1694, 4
  %v5037 = vrot.slane %v1748, 4
  %v5038 = vsel %vm5002, %v5036, %v5037
  %v5039 = vrot.slane %v1696, 4
  %v5040 = vrot.slane %v1749, 4
  %v5041 = vsel %vm5002, %v5039, %v5040
  %v5042 = vrot.slane %v1698, 4
  %v5043 = vrot.slane %v1750, 4
  %v5044 = vsel %vm5002, %v5042, %v5043
  %v5045 = vrot.slane %v1700, 4
  %v5046 = vrot.slane %v1751, 4
  %v5047 = vsel %vm5002, %v5045, %v5046
  %v5048 = vrot.slane %v1706, 4
  %v5049 = vrot.slane %v1754, 4
  %v5050 = vsel %vm5002, %v5048, %v5049
  %v5051 = vrot.slane %v1708, 4
  %v5052 = vrot.slane %v1755, 4
  %v5053 = vsel %vm5002, %v5051, %v5052
  %v5054 = vrot.slane %v1710, 4
  %v5055 = vrot.slane %v1756, 4
  %v5056 = vsel %vm5002, %v5054, %v5055
  %v5057 = vrot.slane %v1712, 4
  %v5058 = vrot.slane %v1757, 4
  %v5059 = vsel %vm5002, %v5057, %v5058
  %v5060 = vrot.slane %v1714, 4
  %v5061 = vrot.slane %v1758, 4
  %v5062 = vsel %vm5002, %v5060, %v5061
  %v5063 = vrot.slane %v1716, 4
  %v5064 = vrot.slane %v1759, 4
  %v5065 = vsel %vm5002, %v5063, %v5064
  %v5066 = vrot.slane %v1718, 4
  %v5067 = vrot.slane %v1760, 4
  %v5068 = vsel %vm5002, %v5066, %v5067
  %v5069 = vrot.slane %v1720, 4
  %v5070 = vrot.slane %v1761, 4
  %v5071 = vsel %vm5002, %v5069, %v5070
  %v5072 = vrot.slane %v1722, 4
  %v5073 = vrot.slane %v1762, 4
  %v5074 = vsel %vm5002, %v5072, %v5073
  %v5075 = vrot.slane %v1724, 4
  %v5076 = vrot.slane %v1763, 4
  %v5077 = vsel %vm5002, %v5075, %v5076
  %v5078 = vrot.slane %v1726, 4
  %v5079 = vrot.slane %v1764, 4
  %v5080 = vsel %vm5002, %v5078, %v5079
  %v5081 = vrot.slane %v1728, 4
  %v5082 = vrot.slane %v1765, 4
  %v5083 = vsel %vm5002, %v5081, %v5082
  %v5084 = vrot.slane %v1730, 4
  %v5085 = vrot.slane %v1766, 4
  %v5086 = vsel %vm5002, %v5084, %v5085
  %v5087 = vrot.slane %v1732, 4
  %v5088 = vrot.slane %v1767, 4
  %v5089 = vsel %vm5002, %v5087, %v5088
  %s5090 = scalar_lea.vmem %s5, 32
  %v5091 = vld [vmem:[%s5090] sm:$0xf]
  %v5092 = vld [vmem:[%s5090 + $0x4] sm:$0xf]
  %v5093 = vld [vmem:[%s5090 + $0x8] sm:$0xf]
  %v5094 = vld [vmem:[%s5090 + $0xc] sm:$0xf]
  %v5099 = vunpack.c.l.b16 %v5091
  %v5100 = vunpack.c.l.b16 %v5092
  %v5101 = vunpack.c.l.b16 %v5093
  %v5102 = vunpack.c.l.b16 %v5094
  %v5103 = vpack.c.b16 %v5100, %v5099
  %v5104 = vpack.c.b16 %v5102, %v5101
  %v5108 = vsel %vm1947, %v5005, 0
  %v5111 = vsel %vm1947, %v5008, 0
  %v5114 = vsel %vm1947, %v5011, 0
  %v5117 = vsel %vm1947, %v5014, 0
  %v5120 = vsel %vm1947, %v5017, 0
  %v5123 = vsel %vm1947, %v5020, 0
  %v5126 = vsel %vm1947, %v5023, 0
  %v5129 = vsel %vm1947, %v5026, 0
  %v5132 = vsel %vm1947, %v5029, 0
  %v5135 = vsel %vm1947, %v5032, 0
  %v5138 = vsel %vm1947, %v5035, 0
  %v5141 = vsel %vm1947, %v5038, 0
  %v5144 = vsel %vm1947, %v5041, 0
  %v5147 = vsel %vm1947, %v5044, 0
  %v5150 = vsel %vm1947, %v5047, 0
  %v5153 = vsel %vm1947, %v5050, 0
  %v5156 = vsel %vm1947, %v5053, 0
  %v5159 = vsel %vm1947, %v5056, 0
  %v5162 = vsel %vm1947, %v5059, 0
  %v5165 = vsel %vm1947, %v5062, 0
  %v5168 = vsel %vm1947, %v5065, 0
  %v5171 = vsel %vm1947, %v5068, 0
  %v5174 = vsel %vm1947, %v5071, 0
  %v5177 = vsel %vm1947, %v5074, 0
  %v5180 = vsel %vm1947, %v5077, 0
  %v5183 = vsel %vm1947, %v5080, 0
  %v5186 = vsel %vm1947, %v5083, 0
  %v5189 = vsel %vm1947, %v5086, 0
  %v5192 = vsel %vm1947, %v5089, 0
  %5194 = vmatpush.bf16.msra.mxu0 0
  %5195 = vmatpush.bf16.msra.mxu0 0
  %5196 = vmatpush.bf16.msra.mxu0 0
  %5197 = vmatpush.bf16.msra.mxu0 0
  %5198 = vmatpush.bf16.msra.mxu0 0
  %5199 = vmatpush.bf16.msra.mxu0 0
  %5200 = vmatpush.bf16.msra.mxu0 %v5104
  %5201 = vmatpush.bf16.msra.mxu0 %v5103
  %5202 = vmatmul.bf16.gmra.mxu0 %v5108
  %v5203 = vpop.f32.mrf.mxu0
  %v5204 = vadd.f32 0.0, %v5203
  %v5205 = vpop.f32.mrf.mxu0
  %v5206 = vadd.f32 0.0, %v5205
  %5207 = vmatmul.bf16.gmra.mxu0 %v5108
  %v5208 = vpop.f32.mrf.mxu0
  %v5209 = vadd.f32 0.0, %v5208
  %v5210 = vpop.f32.mrf.mxu0
  %v5211 = vadd.f32 0.0, %v5210
  %5212 = vmatmul.bf16.gmra.mxu0 %v5111
  %v5213 = vpop.f32.mrf.mxu0
  %v5214 = vadd.f32 0.0, %v5213
  %v5215 = vpop.f32.mrf.mxu0
  %v5216 = vadd.f32 0.0, %v5215
  %5217 = vmatmul.bf16.gmra.mxu0 %v5114
  %v5218 = vpop.f32.mrf.mxu0
  %v5219 = vadd.f32 0.0, %v5218
  %v5220 = vpop.f32.mrf.mxu0
  %v5221 = vadd.f32 0.0, %v5220
  %5222 = vmatmul.bf16.gmra.mxu0 %v5117
  %v5223 = vpop.f32.mrf.mxu0
  %v5224 = vadd.f32 0.0, %v5223
  %v5225 = vpop.f32.mrf.mxu0
  %v5226 = vadd.f32 0.0, %v5225
  %5227 = vmatmul.bf16.gmra.mxu0 %v5120
  %v5228 = vpop.f32.mrf.mxu0
  %v5229 = vadd.f32 0.0, %v5228
  %v5230 = vpop.f32.mrf.mxu0
  %v5231 = vadd.f32 0.0, %v5230
  %5232 = vmatmul.bf16.gmra.mxu0 %v5123
  %v5233 = vpop.f32.mrf.mxu0
  %v5234 = vadd.f32 0.0, %v5233
  %v5235 = vpop.f32.mrf.mxu0
  %v5236 = vadd.f32 0.0, %v5235
  %5237 = vmatmul.bf16.gmra.mxu0 %v5126
  %v5238 = vpop.f32.mrf.mxu0
  %v5239 = vadd.f32 0.0, %v5238
  %v5240 = vpop.f32.mrf.mxu0
  %v5241 = vadd.f32 0.0, %v5240
  %5242 = vmatmul.bf16.gmra.mxu0 %v5129
  %v5243 = vpop.f32.mrf.mxu0
  %v5244 = vadd.f32 0.0, %v5243
  %v5245 = vpop.f32.mrf.mxu0
  %v5246 = vadd.f32 0.0, %v5245
  %5247 = vmatmul.bf16.gmra.mxu0 %v5132
  %v5248 = vpop.f32.mrf.mxu0
  %v5249 = vadd.f32 0.0, %v5248
  %v5250 = vpop.f32.mrf.mxu0
  %v5251 = vadd.f32 0.0, %v5250
  %5252 = vmatmul.bf16.gmra.mxu0 %v5135
  %v5253 = vpop.f32.mrf.mxu0
  %v5254 = vadd.f32 0.0, %v5253
  %v5255 = vpop.f32.mrf.mxu0
  %v5256 = vadd.f32 0.0, %v5255
  %5257 = vmatmul.bf16.gmra.mxu0 %v5138
  %v5258 = vpop.f32.mrf.mxu0
  %v5259 = vadd.f32 0.0, %v5258
  %v5260 = vpop.f32.mrf.mxu0
  %v5261 = vadd.f32 0.0, %v5260
  %5262 = vmatmul.bf16.gmra.mxu0 %v5141
  %v5263 = vpop.f32.mrf.mxu0
  %v5264 = vadd.f32 0.0, %v5263
  %v5265 = vpop.f32.mrf.mxu0
  %v5266 = vadd.f32 0.0, %v5265
  %5267 = vmatmul.bf16.gmra.mxu0 %v5144
  %v5268 = vpop.f32.mrf.mxu0
  %v5269 = vadd.f32 0.0, %v5268
  %v5270 = vpop.f32.mrf.mxu0
  %v5271 = vadd.f32 0.0, %v5270
  %5272 = vmatmul.bf16.gmra.mxu0 %v5147
  %v5273 = vpop.f32.mrf.mxu0
  %v5274 = vadd.f32 0.0, %v5273
  %v5275 = vpop.f32.mrf.mxu0
  %v5276 = vadd.f32 0.0, %v5275
  %5277 = vmatmul.bf16.gmra.mxu0 %v5150
  %v5278 = vpop.f32.mrf.mxu0
  %v5279 = vadd.f32 0.0, %v5278
  %v5280 = vpop.f32.mrf.mxu0
  %v5281 = vadd.f32 0.0, %v5280
  %5282 = vmatmul.bf16.gmra.mxu0 %v5108
  %v5283 = vpop.f32.mrf.mxu0
  %v5284 = vadd.f32 0.0, %v5283
  %v5285 = vpop.f32.mrf.mxu0
  %v5286 = vadd.f32 0.0, %v5285
  %5287 = vmatmul.bf16.gmra.mxu0 %v5108
  %v5288 = vpop.f32.mrf.mxu0
  %v5289 = vadd.f32 0.0, %v5288
  %v5290 = vpop.f32.mrf.mxu0
  %v5291 = vadd.f32 0.0, %v5290
  %5292 = vmatmul.bf16.gmra.mxu0 %v5153
  %v5293 = vpop.f32.mrf.mxu0
  %v5294 = vadd.f32 0.0, %v5293
  %v5295 = vpop.f32.mrf.mxu0
  %v5296 = vadd.f32 0.0, %v5295
  %5297 = vmatmul.bf16.gmra.mxu0 %v5156
  %v5298 = vpop.f32.mrf.mxu0
  %v5299 = vadd.f32 0.0, %v5298
  %v5300 = vpop.f32.mrf.mxu0
  %v5301 = vadd.f32 0.0, %v5300
  %5302 = vmatmul.bf16.gmra.mxu0 %v5159
  %v5303 = vpop.f32.mrf.mxu0
  %v5304 = vadd.f32 0.0, %v5303
  %v5305 = vpop.f32.mrf.mxu0
  %v5306 = vadd.f32 0.0, %v5305
  %5307 = vmatmul.bf16.gmra.mxu0 %v5162
  %v5308 = vpop.f32.mrf.mxu0
  %v5309 = vadd.f32 0.0, %v5308
  %v5310 = vpop.f32.mrf.mxu0
  %v5311 = vadd.f32 0.0, %v5310
  %5312 = vmatmul.bf16.gmra.mxu0 %v5165
  %v5313 = vpop.f32.mrf.mxu0
  %v5314 = vadd.f32 0.0, %v5313
  %v5315 = vpop.f32.mrf.mxu0
  %v5316 = vadd.f32 0.0, %v5315
  %5317 = vmatmul.bf16.gmra.mxu0 %v5168
  %v5318 = vpop.f32.mrf.mxu0
  %v5319 = vadd.f32 0.0, %v5318
  %v5320 = vpop.f32.mrf.mxu0
  %v5321 = vadd.f32 0.0, %v5320
  %5322 = vmatmul.bf16.gmra.mxu0 %v5171
  %v5323 = vpop.f32.mrf.mxu0
  %v5324 = vadd.f32 0.0, %v5323
  %v5325 = vpop.f32.mrf.mxu0
  %v5326 = vadd.f32 0.0, %v5325
  %5327 = vmatmul.bf16.gmra.mxu0 %v5174
  %v5328 = vpop.f32.mrf.mxu0
  %v5329 = vadd.f32 0.0, %v5328
  %v5330 = vpop.f32.mrf.mxu0
  %v5331 = vadd.f32 0.0, %v5330
  %5332 = vmatmul.bf16.gmra.mxu0 %v5177
  %v5333 = vpop.f32.mrf.mxu0
  %v5334 = vadd.f32 0.0, %v5333
  %v5335 = vpop.f32.mrf.mxu0
  %v5336 = vadd.f32 0.0, %v5335
  %5337 = vmatmul.bf16.gmra.mxu0 %v5180
  %v5338 = vpop.f32.mrf.mxu0
  %v5339 = vadd.f32 0.0, %v5338
  %v5340 = vpop.f32.mrf.mxu0
  %v5341 = vadd.f32 0.0, %v5340
  %5342 = vmatmul.bf16.gmra.mxu0 %v5183
  %v5343 = vpop.f32.mrf.mxu0
  %v5344 = vadd.f32 0.0, %v5343
  %v5345 = vpop.f32.mrf.mxu0
  %v5346 = vadd.f32 0.0, %v5345
  %5347 = vmatmul.bf16.gmra.mxu0 %v5186
  %v5348 = vpop.f32.mrf.mxu0
  %v5349 = vadd.f32 0.0, %v5348
  %v5350 = vpop.f32.mrf.mxu0
  %v5351 = vadd.f32 0.0, %v5350
  %5352 = vmatmul.bf16.gmra.mxu0 %v5189
  %v5353 = vpop.f32.mrf.mxu0
  %v5354 = vadd.f32 0.0, %v5353
  %v5355 = vpop.f32.mrf.mxu0
  %v5356 = vadd.f32 0.0, %v5355
  %5357 = vmatmul.bf16.gmra.mxu0 %v5192
  %v5358 = vpop.f32.mrf.mxu0
  %v5359 = vadd.f32 0.0, %v5358
  %v5360 = vpop.f32.mrf.mxu0
  %v5361 = vadd.f32 0.0, %v5360
  %5362 = vdwg.mxu0
  %v5363 = vadd.f32 %v4938, %v5204
  %v5364 = vadd.f32 %v4939, %v5206
  %v5365 = vadd.f32 %v4940, %v5209
  %v5366 = vadd.f32 %v4941, %v5211
  %v5367 = vadd.f32 %v4942, %v5214
  %v5368 = vadd.f32 %v4943, %v5216
  %v5369 = vadd.f32 %v4944, %v5219
  %v5370 = vadd.f32 %v4945, %v5221
  %v5371 = vadd.f32 %v4946, %v5224
  %v5372 = vadd.f32 %v4947, %v5226
  %v5373 = vadd.f32 %v4948, %v5229
  %v5374 = vadd.f32 %v4949, %v5231
  %v5375 = vadd.f32 %v4950, %v5234
  %v5376 = vadd.f32 %v4951, %v5236
  %v5377 = vadd.f32 %v4952, %v5239
  %v5378 = vadd.f32 %v4953, %v5241
  %v5379 = vadd.f32 %v4954, %v5244
  %v5380 = vadd.f32 %v4955, %v5246
  %v5381 = vadd.f32 %v4956, %v5249
  %v5382 = vadd.f32 %v4957, %v5251
  %v5383 = vadd.f32 %v4958, %v5254
  %v5384 = vadd.f32 %v4959, %v5256
  %v5385 = vadd.f32 %v4960, %v5259
  %v5386 = vadd.f32 %v4961, %v5261
  %v5387 = vadd.f32 %v4962, %v5264
  %v5388 = vadd.f32 %v4963, %v5266
  %v5389 = vadd.f32 %v4964, %v5269
  %v5390 = vadd.f32 %v4965, %v5271
  %v5391 = vadd.f32 %v4966, %v5274
  %v5392 = vadd.f32 %v4967, %v5276
  %v5393 = vadd.f32 %v4968, %v5279
  %v5394 = vadd.f32 %v4969, %v5281
  %v5395 = vadd.f32 %v4970, %v5284
  %v5396 = vadd.f32 %v4971, %v5286
  %v5397 = vadd.f32 %v4972, %v5289
  %v5398 = vadd.f32 %v4973, %v5291
  %v5399 = vadd.f32 %v4974, %v5294
  %v5400 = vadd.f32 %v4975, %v5296
  %v5401 = vadd.f32 %v4976, %v5299
  %v5402 = vadd.f32 %v4977, %v5301
  %v5403 = vadd.f32 %v4978, %v5304
  %v5404 = vadd.f32 %v4979, %v5306
  %v5405 = vadd.f32 %v4980, %v5309
  %v5406 = vadd.f32 %v4981, %v5311
  %v5407 = vadd.f32 %v4982, %v5314
  %v5408 = vadd.f32 %v4983, %v5316
  %v5409 = vadd.f32 %v4984, %v5319
  %v5410 = vadd.f32 %v4985, %v5321
  %v5411 = vadd.f32 %v4986, %v5324
  %v5412 = vadd.f32 %v4987, %v5326
  %v5413 = vadd.f32 %v4988, %v5329
  %v5414 = vadd.f32 %v4989, %v5331
  %v5415 = vadd.f32 %v4990, %v5334
  %v5416 = vadd.f32 %v4991, %v5336
  %v5417 = vadd.f32 %v4992, %v5339
  %v5418 = vadd.f32 %v4993, %v5341
  %v5419 = vadd.f32 %v4994, %v5344
  %v5420 = vadd.f32 %v4995, %v5346
  %v5421 = vadd.f32 %v4996, %v5349
  %v5422 = vadd.f32 %v4997, %v5351
  %v5423 = vadd.f32 %v4998, %v5354
  %v5424 = vadd.f32 %v4999, %v5356
  %v5425 = vadd.f32 %v5000, %v5359
  %v5426 = vadd.f32 %v5001, %v5361
  %v5427 = vrot.slane %v1702, 4
  %v5428 = vrot.slane %v1752, 4
  %v5429 = vsel %vm5002, %v5427, %v5428
  %v5430 = vrot.slane %v1734, 4
  %v5431 = vrot.slane %v1768, 4
  %v5432 = vsel %vm5002, %v5430, %v5431
  %s5433 = scalar_lea.vmem %s5, 112
  %v5434 = vld [vmem:[%s5433] sm:$0xf]
  %v5435 = vld [vmem:[%s5433 + $0x4] sm:$0xf]
  %v5436 = vld [vmem:[%s5433 + $0x8] sm:$0xf]
  %v5437 = vld [vmem:[%s5433 + $0xc] sm:$0xf]
  %v5442 = vunpack.c.l.b16 %v5434
  %v5443 = vunpack.c.l.b16 %v5435
  %v5444 = vunpack.c.l.b16 %v5436
  %v5445 = vunpack.c.l.b16 %v5437
  %v5446 = vpack.c.b16 %v5443, %v5442
  %v5447 = vpack.c.b16 %v5445, %v5444
  %v5451 = vsel %vm1947, %v5429, 0
  %v5454 = vsel %vm1947, %v5432, 0
  %5456 = vmatpush.bf16.msra.mxu0 0
  %5457 = vmatpush.bf16.msra.mxu0 0
  %5458 = vmatpush.bf16.msra.mxu0 0
  %5459 = vmatpush.bf16.msra.mxu0 0
  %5460 = vmatpush.bf16.msra.mxu0 0
  %5461 = vmatpush.bf16.msra.mxu0 0
  %5462 = vmatpush.bf16.msra.mxu0 %v5447
  %5463 = vmatpush.bf16.msra.mxu0 %v5446
  %5464 = vmatmul.bf16.gmra.mxu0 %v5108
  %v5465 = vpop.f32.mrf.mxu0
  %v5466 = vadd.f32 0.0, %v5465
  %v5467 = vpop.f32.mrf.mxu0
  %v5468 = vadd.f32 0.0, %v5467
  %5469 = vmatmul.bf16.gmra.mxu0 %v5111
  %v5470 = vpop.f32.mrf.mxu0
  %v5471 = vadd.f32 0.0, %v5470
  %v5472 = vpop.f32.mrf.mxu0
  %v5473 = vadd.f32 0.0, %v5472
  %5474 = vmatmul.bf16.gmra.mxu0 %v5114
  %v5475 = vpop.f32.mrf.mxu0
  %v5476 = vadd.f32 0.0, %v5475
  %v5477 = vpop.f32.mrf.mxu0
  %v5478 = vadd.f32 0.0, %v5477
  %5479 = vmatmul.bf16.gmra.mxu0 %v5117
  %v5480 = vpop.f32.mrf.mxu0
  %v5481 = vadd.f32 0.0, %v5480
  %v5482 = vpop.f32.mrf.mxu0
  %v5483 = vadd.f32 0.0, %v5482
  %5484 = vmatmul.bf16.gmra.mxu0 %v5120
  %v5485 = vpop.f32.mrf.mxu0
  %v5486 = vadd.f32 0.0, %v5485
  %v5487 = vpop.f32.mrf.mxu0
  %v5488 = vadd.f32 0.0, %v5487
  %5489 = vmatmul.bf16.gmra.mxu0 %v5123
  %v5490 = vpop.f32.mrf.mxu0
  %v5491 = vadd.f32 0.0, %v5490
  %v5492 = vpop.f32.mrf.mxu0
  %v5493 = vadd.f32 0.0, %v5492
  %5494 = vmatmul.bf16.gmra.mxu0 %v5126
  %v5495 = vpop.f32.mrf.mxu0
  %v5496 = vadd.f32 0.0, %v5495
  %v5497 = vpop.f32.mrf.mxu0
  %v5498 = vadd.f32 0.0, %v5497
  %5499 = vmatmul.bf16.gmra.mxu0 %v5129
  %v5500 = vpop.f32.mrf.mxu0
  %v5501 = vadd.f32 0.0, %v5500
  %v5502 = vpop.f32.mrf.mxu0
  %v5503 = vadd.f32 0.0, %v5502
  %5504 = vmatmul.bf16.gmra.mxu0 %v5132
  %v5505 = vpop.f32.mrf.mxu0
  %v5506 = vadd.f32 0.0, %v5505
  %v5507 = vpop.f32.mrf.mxu0
  %v5508 = vadd.f32 0.0, %v5507
  %5509 = vmatmul.bf16.gmra.mxu0 %v5135
  %v5510 = vpop.f32.mrf.mxu0
  %v5511 = vadd.f32 0.0, %v5510
  %v5512 = vpop.f32.mrf.mxu0
  %v5513 = vadd.f32 0.0, %v5512
  %5514 = vmatmul.bf16.gmra.mxu0 %v5138
  %v5515 = vpop.f32.mrf.mxu0
  %v5516 = vadd.f32 0.0, %v5515
  %v5517 = vpop.f32.mrf.mxu0
  %v5518 = vadd.f32 0.0, %v5517
  %5519 = vmatmul.bf16.gmra.mxu0 %v5141
  %v5520 = vpop.f32.mrf.mxu0
  %v5521 = vadd.f32 0.0, %v5520
  %v5522 = vpop.f32.mrf.mxu0
  %v5523 = vadd.f32 0.0, %v5522
  %5524 = vmatmul.bf16.gmra.mxu0 %v5144
  %v5525 = vpop.f32.mrf.mxu0
  %v5526 = vadd.f32 0.0, %v5525
  %v5527 = vpop.f32.mrf.mxu0
  %v5528 = vadd.f32 0.0, %v5527
  %5529 = vmatmul.bf16.gmra.mxu0 %v5147
  %v5530 = vpop.f32.mrf.mxu0
  %v5531 = vadd.f32 0.0, %v5530
  %v5532 = vpop.f32.mrf.mxu0
  %v5533 = vadd.f32 0.0, %v5532
  %5534 = vmatmul.bf16.gmra.mxu0 %v5150
  %v5535 = vpop.f32.mrf.mxu0
  %v5536 = vadd.f32 0.0, %v5535
  %v5537 = vpop.f32.mrf.mxu0
  %v5538 = vadd.f32 0.0, %v5537
  %5539 = vmatmul.bf16.gmra.mxu0 %v5451
  %v5540 = vpop.f32.mrf.mxu0
  %v5541 = vadd.f32 0.0, %v5540
  %v5542 = vpop.f32.mrf.mxu0
  %v5543 = vadd.f32 0.0, %v5542
  %5544 = vmatmul.bf16.gmra.mxu0 %v5108
  %v5545 = vpop.f32.mrf.mxu0
  %v5546 = vadd.f32 0.0, %v5545
  %v5547 = vpop.f32.mrf.mxu0
  %v5548 = vadd.f32 0.0, %v5547
  %5549 = vmatmul.bf16.gmra.mxu0 %v5153
  %v5550 = vpop.f32.mrf.mxu0
  %v5551 = vadd.f32 0.0, %v5550
  %v5552 = vpop.f32.mrf.mxu0
  %v5553 = vadd.f32 0.0, %v5552
  %5554 = vmatmul.bf16.gmra.mxu0 %v5156
  %v5555 = vpop.f32.mrf.mxu0
  %v5556 = vadd.f32 0.0, %v5555
  %v5557 = vpop.f32.mrf.mxu0
  %v5558 = vadd.f32 0.0, %v5557
  %5559 = vmatmul.bf16.gmra.mxu0 %v5159
  %v5560 = vpop.f32.mrf.mxu0
  %v5561 = vadd.f32 0.0, %v5560
  %v5562 = vpop.f32.mrf.mxu0
  %v5563 = vadd.f32 0.0, %v5562
  %5564 = vmatmul.bf16.gmra.mxu0 %v5162
  %v5565 = vpop.f32.mrf.mxu0
  %v5566 = vadd.f32 0.0, %v5565
  %v5567 = vpop.f32.mrf.mxu0
  %v5568 = vadd.f32 0.0, %v5567
  %5569 = vmatmul.bf16.gmra.mxu0 %v5165
  %v5570 = vpop.f32.mrf.mxu0
  %v5571 = vadd.f32 0.0, %v5570
  %v5572 = vpop.f32.mrf.mxu0
  %v5573 = vadd.f32 0.0, %v5572
  %5574 = vmatmul.bf16.gmra.mxu0 %v5168
  %v5575 = vpop.f32.mrf.mxu0
  %v5576 = vadd.f32 0.0, %v5575
  %v5577 = vpop.f32.mrf.mxu0
  %v5578 = vadd.f32 0.0, %v5577
  %5579 = vmatmul.bf16.gmra.mxu0 %v5171
  %v5580 = vpop.f32.mrf.mxu0
  %v5581 = vadd.f32 0.0, %v5580
  %v5582 = vpop.f32.mrf.mxu0
  %v5583 = vadd.f32 0.0, %v5582
  %5584 = vmatmul.bf16.gmra.mxu0 %v5174
  %v5585 = vpop.f32.mrf.mxu0
  %v5586 = vadd.f32 0.0, %v5585
  %v5587 = vpop.f32.mrf.mxu0
  %v5588 = vadd.f32 0.0, %v5587
  %5589 = vmatmul.bf16.gmra.mxu0 %v5177
  %v5590 = vpop.f32.mrf.mxu0
  %v5591 = vadd.f32 0.0, %v5590
  %v5592 = vpop.f32.mrf.mxu0
  %v5593 = vadd.f32 0.0, %v5592
  %5594 = vmatmul.bf16.gmra.mxu0 %v5180
  %v5595 = vpop.f32.mrf.mxu0
  %v5596 = vadd.f32 0.0, %v5595
  %v5597 = vpop.f32.mrf.mxu0
  %v5598 = vadd.f32 0.0, %v5597
  %5599 = vmatmul.bf16.gmra.mxu0 %v5183
  %v5600 = vpop.f32.mrf.mxu0
  %v5601 = vadd.f32 0.0, %v5600
  %v5602 = vpop.f32.mrf.mxu0
  %v5603 = vadd.f32 0.0, %v5602
  %5604 = vmatmul.bf16.gmra.mxu0 %v5186
  %v5605 = vpop.f32.mrf.mxu0
  %v5606 = vadd.f32 0.0, %v5605
  %v5607 = vpop.f32.mrf.mxu0
  %v5608 = vadd.f32 0.0, %v5607
  %5609 = vmatmul.bf16.gmra.mxu0 %v5189
  %v5610 = vpop.f32.mrf.mxu0
  %v5611 = vadd.f32 0.0, %v5610
  %v5612 = vpop.f32.mrf.mxu0
  %v5613 = vadd.f32 0.0, %v5612
  %5614 = vmatmul.bf16.gmra.mxu0 %v5192
  %v5615 = vpop.f32.mrf.mxu0
  %v5616 = vadd.f32 0.0, %v5615
  %v5617 = vpop.f32.mrf.mxu0
  %v5618 = vadd.f32 0.0, %v5617
  %5619 = vmatmul.bf16.gmra.mxu0 %v5454
  %v5620 = vpop.f32.mrf.mxu0
  %v5621 = vadd.f32 0.0, %v5620
  %v5622 = vpop.f32.mrf.mxu0
  %v5623 = vadd.f32 0.0, %v5622
  %5624 = vdwg.mxu0
  %v5625 = vadd.f32 %v5363, %v5466
  %v5626 = vadd.f32 %v5364, %v5468
  %v5627 = vadd.f32 %v5365, %v5471
  %v5628 = vadd.f32 %v5366, %v5473
  %v5629 = vadd.f32 %v5367, %v5476
  %v5630 = vadd.f32 %v5368, %v5478
  %v5631 = vadd.f32 %v5369, %v5481
  %v5632 = vadd.f32 %v5370, %v5483
  %v5633 = vadd.f32 %v5371, %v5486
  %v5634 = vadd.f32 %v5372, %v5488
  %v5635 = vadd.f32 %v5373, %v5491
  %v5636 = vadd.f32 %v5374, %v5493
  %v5637 = vadd.f32 %v5375, %v5496
  %v5638 = vadd.f32 %v5376, %v5498
  %v5639 = vadd.f32 %v5377, %v5501
  %v5640 = vadd.f32 %v5378, %v5503
  %v5641 = vadd.f32 %v5379, %v5506
  %v5642 = vadd.f32 %v5380, %v5508
  %v5643 = vadd.f32 %v5381, %v5511
  %v5644 = vadd.f32 %v5382, %v5513
  %v5645 = vadd.f32 %v5383, %v5516
  %v5646 = vadd.f32 %v5384, %v5518
  %v5647 = vadd.f32 %v5385, %v5521
  %v5648 = vadd.f32 %v5386, %v5523
  %v5649 = vadd.f32 %v5387, %v5526
  %v5650 = vadd.f32 %v5388, %v5528
  %v5651 = vadd.f32 %v5389, %v5531
  %v5652 = vadd.f32 %v5390, %v5533
  %v5653 = vadd.f32 %v5391, %v5536
  %v5654 = vadd.f32 %v5392, %v5538
  %v5655 = vadd.f32 %v5393, %v5541
  %v5656 = vadd.f32 %v5394, %v5543
  %v5657 = vadd.f32 %v5395, %v5546
  %v5658 = vadd.f32 %v5396, %v5548
  %v5659 = vadd.f32 %v5397, %v5551
  %v5660 = vadd.f32 %v5398, %v5553
  %v5661 = vadd.f32 %v5399, %v5556
  %v5662 = vadd.f32 %v5400, %v5558
  %v5663 = vadd.f32 %v5401, %v5561
  %v5664 = vadd.f32 %v5402, %v5563
  %v5665 = vadd.f32 %v5403, %v5566
  %v5666 = vadd.f32 %v5404, %v5568
  %v5667 = vadd.f32 %v5405, %v5571
  %v5668 = vadd.f32 %v5406, %v5573
  %v5669 = vadd.f32 %v5407, %v5576
  %v5670 = vadd.f32 %v5408, %v5578
  %v5671 = vadd.f32 %v5409, %v5581
  %v5672 = vadd.f32 %v5410, %v5583
  %v5673 = vadd.f32 %v5411, %v5586
  %v5674 = vadd.f32 %v5412, %v5588
  %v5675 = vadd.f32 %v5413, %v5591
  %v5676 = vadd.f32 %v5414, %v5593
  %v5677 = vadd.f32 %v5415, %v5596
  %v5678 = vadd.f32 %v5416, %v5598
  %v5679 = vadd.f32 %v5417, %v5601
  %v5680 = vadd.f32 %v5418, %v5603
  %v5681 = vadd.f32 %v5419, %v5606
  %v5682 = vadd.f32 %v5420, %v5608
  %v5683 = vadd.f32 %v5421, %v5611
  %v5684 = vadd.f32 %v5422, %v5613
  %v5685 = vadd.f32 %v5423, %v5616
  %v5686 = vadd.f32 %v5424, %v5618
  %v5687 = vadd.f32 %v5425, %v5621
  %v5688 = vadd.f32 %v5426, %v5623
  %v5689 = vrot.slane %v1704, 4
  %v5690 = vrot.slane %v1753, 4
  %v5691 = vsel %vm5002, %v5689, %v5690
  %v5692 = vrot.slane %v1736, 4
  %v5693 = vrot.slane %v1769, 4
  %v5694 = vsel %vm5002, %v5692, %v5693
  %s5695 = scalar_lea.vmem %s5, 192
  %v5696 = vld [vmem:[%s5695] sm:$0xf]
  %v5697 = vld [vmem:[%s5695 + $0x4] sm:$0xf]
  %v5698 = vld [vmem:[%s5695 + $0x8] sm:$0xf]
  %v5699 = vld [vmem:[%s5695 + $0xc] sm:$0xf]
  %v5704 = vunpack.c.l.b16 %v5696
  %v5705 = vunpack.c.l.b16 %v5697
  %v5706 = vunpack.c.l.b16 %v5698
  %v5707 = vunpack.c.l.b16 %v5699
  %v5708 = vpack.c.b16 %v5705, %v5704
  %v5709 = vpack.c.b16 %v5707, %v5706
  %v5713 = vsel %vm1947, %v5691, 0
  %v5716 = vsel %vm1947, %v5694, 0
  %5718 = vmatpush.bf16.msra.mxu0 0
  %5719 = vmatpush.bf16.msra.mxu0 0
  %5720 = vmatpush.bf16.msra.mxu0 0
  %5721 = vmatpush.bf16.msra.mxu0 0
  %5722 = vmatpush.bf16.msra.mxu0 0
  %5723 = vmatpush.bf16.msra.mxu0 0
  %5724 = vmatpush.bf16.msra.mxu0 %v5709
  %5725 = vmatpush.bf16.msra.mxu0 %v5708
  %5726 = vmatmul.bf16.gmra.mxu0 %v5111
  %v5727 = vpop.f32.mrf.mxu0
  %v5728 = vadd.f32 0.0, %v5727
  %v5729 = vpop.f32.mrf.mxu0
  %v5730 = vadd.f32 0.0, %v5729
  %5731 = vmatmul.bf16.gmra.mxu0 %v5114
  %v5732 = vpop.f32.mrf.mxu0
  %v5733 = vadd.f32 0.0, %v5732
  %v5734 = vpop.f32.mrf.mxu0
  %v5735 = vadd.f32 0.0, %v5734
  %5736 = vmatmul.bf16.gmra.mxu0 %v5117
  %v5737 = vpop.f32.mrf.mxu0
  %v5738 = vadd.f32 0.0, %v5737
  %v5739 = vpop.f32.mrf.mxu0
  %v5740 = vadd.f32 0.0, %v5739
  %5741 = vmatmul.bf16.gmra.mxu0 %v5120
  %v5742 = vpop.f32.mrf.mxu0
  %v5743 = vadd.f32 0.0, %v5742
  %v5744 = vpop.f32.mrf.mxu0
  %v5745 = vadd.f32 0.0, %v5744
  %5746 = vmatmul.bf16.gmra.mxu0 %v5123
  %v5747 = vpop.f32.mrf.mxu0
  %v5748 = vadd.f32 0.0, %v5747
  %v5749 = vpop.f32.mrf.mxu0
  %v5750 = vadd.f32 0.0, %v5749
  %5751 = vmatmul.bf16.gmra.mxu0 %v5126
  %v5752 = vpop.f32.mrf.mxu0
  %v5753 = vadd.f32 0.0, %v5752
  %v5754 = vpop.f32.mrf.mxu0
  %v5755 = vadd.f32 0.0, %v5754
  %5756 = vmatmul.bf16.gmra.mxu0 %v5129
  %v5757 = vpop.f32.mrf.mxu0
  %v5758 = vadd.f32 0.0, %v5757
  %v5759 = vpop.f32.mrf.mxu0
  %v5760 = vadd.f32 0.0, %v5759
  %5761 = vmatmul.bf16.gmra.mxu0 %v5132
  %v5762 = vpop.f32.mrf.mxu0
  %v5763 = vadd.f32 0.0, %v5762
  %v5764 = vpop.f32.mrf.mxu0
  %v5765 = vadd.f32 0.0, %v5764
  %5766 = vmatmul.bf16.gmra.mxu0 %v5135
  %v5767 = vpop.f32.mrf.mxu0
  %v5768 = vadd.f32 0.0, %v5767
  %v5769 = vpop.f32.mrf.mxu0
  %v5770 = vadd.f32 0.0, %v5769
  %5771 = vmatmul.bf16.gmra.mxu0 %v5138
  %v5772 = vpop.f32.mrf.mxu0
  %v5773 = vadd.f32 0.0, %v5772
  %v5774 = vpop.f32.mrf.mxu0
  %v5775 = vadd.f32 0.0, %v5774
  %5776 = vmatmul.bf16.gmra.mxu0 %v5141
  %v5777 = vpop.f32.mrf.mxu0
  %v5778 = vadd.f32 0.0, %v5777
  %v5779 = vpop.f32.mrf.mxu0
  %v5780 = vadd.f32 0.0, %v5779
  %5781 = vmatmul.bf16.gmra.mxu0 %v5144
  %v5782 = vpop.f32.mrf.mxu0
  %v5783 = vadd.f32 0.0, %v5782
  %v5784 = vpop.f32.mrf.mxu0
  %v5785 = vadd.f32 0.0, %v5784
  %5786 = vmatmul.bf16.gmra.mxu0 %v5147
  %v5787 = vpop.f32.mrf.mxu0
  %v5788 = vadd.f32 0.0, %v5787
  %v5789 = vpop.f32.mrf.mxu0
  %v5790 = vadd.f32 0.0, %v5789
  %5791 = vmatmul.bf16.gmra.mxu0 %v5150
  %v5792 = vpop.f32.mrf.mxu0
  %v5793 = vadd.f32 0.0, %v5792
  %v5794 = vpop.f32.mrf.mxu0
  %v5795 = vadd.f32 0.0, %v5794
  %5796 = vmatmul.bf16.gmra.mxu0 %v5451
  %v5797 = vpop.f32.mrf.mxu0
  %v5798 = vadd.f32 0.0, %v5797
  %v5799 = vpop.f32.mrf.mxu0
  %v5800 = vadd.f32 0.0, %v5799
  %5801 = vmatmul.bf16.gmra.mxu0 %v5713
  %v5802 = vpop.f32.mrf.mxu0
  %v5803 = vadd.f32 0.0, %v5802
  %v5804 = vpop.f32.mrf.mxu0
  %v5805 = vadd.f32 0.0, %v5804
  %5806 = vmatmul.bf16.gmra.mxu0 %v5153
  %v5807 = vpop.f32.mrf.mxu0
  %v5808 = vadd.f32 0.0, %v5807
  %v5809 = vpop.f32.mrf.mxu0
  %v5810 = vadd.f32 0.0, %v5809
  %5811 = vmatmul.bf16.gmra.mxu0 %v5156
  %v5812 = vpop.f32.mrf.mxu0
  %v5813 = vadd.f32 0.0, %v5812
  %v5814 = vpop.f32.mrf.mxu0
  %v5815 = vadd.f32 0.0, %v5814
  %5816 = vmatmul.bf16.gmra.mxu0 %v5159
  %v5817 = vpop.f32.mrf.mxu0
  %v5818 = vadd.f32 0.0, %v5817
  %v5819 = vpop.f32.mrf.mxu0
  %v5820 = vadd.f32 0.0, %v5819
  %5821 = vmatmul.bf16.gmra.mxu0 %v5162
  %v5822 = vpop.f32.mrf.mxu0
  %v5823 = vadd.f32 0.0, %v5822
  %v5824 = vpop.f32.mrf.mxu0
  %v5825 = vadd.f32 0.0, %v5824
  %5826 = vmatmul.bf16.gmra.mxu0 %v5165
  %v5827 = vpop.f32.mrf.mxu0
  %v5828 = vadd.f32 0.0, %v5827
  %v5829 = vpop.f32.mrf.mxu0
  %v5830 = vadd.f32 0.0, %v5829
  %5831 = vmatmul.bf16.gmra.mxu0 %v5168
  %v5832 = vpop.f32.mrf.mxu0
  %v5833 = vadd.f32 0.0, %v5832
  %v5834 = vpop.f32.mrf.mxu0
  %v5835 = vadd.f32 0.0, %v5834
  %5836 = vmatmul.bf16.gmra.mxu0 %v5171
  %v5837 = vpop.f32.mrf.mxu0
  %v5838 = vadd.f32 0.0, %v5837
  %v5839 = vpop.f32.mrf.mxu0
  %v5840 = vadd.f32 0.0, %v5839
  %5841 = vmatmul.bf16.gmra.mxu0 %v5174
  %v5842 = vpop.f32.mrf.mxu0
  %v5843 = vadd.f32 0.0, %v5842
  %v5844 = vpop.f32.mrf.mxu0
  %v5845 = vadd.f32 0.0, %v5844
  %5846 = vmatmul.bf16.gmra.mxu0 %v5177
  %v5847 = vpop.f32.mrf.mxu0
  %v5848 = vadd.f32 0.0, %v5847
  %v5849 = vpop.f32.mrf.mxu0
  %v5850 = vadd.f32 0.0, %v5849
  %5851 = vmatmul.bf16.gmra.mxu0 %v5180
  %v5852 = vpop.f32.mrf.mxu0
  %v5853 = vadd.f32 0.0, %v5852
  %v5854 = vpop.f32.mrf.mxu0
  %v5855 = vadd.f32 0.0, %v5854
  %5856 = vmatmul.bf16.gmra.mxu0 %v5183
  %v5857 = vpop.f32.mrf.mxu0
  %v5858 = vadd.f32 0.0, %v5857
  %v5859 = vpop.f32.mrf.mxu0
  %v5860 = vadd.f32 0.0, %v5859
  %5861 = vmatmul.bf16.gmra.mxu0 %v5186
  %v5862 = vpop.f32.mrf.mxu0
  %v5863 = vadd.f32 0.0, %v5862
  %v5864 = vpop.f32.mrf.mxu0
  %v5865 = vadd.f32 0.0, %v5864
  %5866 = vmatmul.bf16.gmra.mxu0 %v5189
  %v5867 = vpop.f32.mrf.mxu0
  %v5868 = vadd.f32 0.0, %v5867
  %v5869 = vpop.f32.mrf.mxu0
  %v5870 = vadd.f32 0.0, %v5869
  %5871 = vmatmul.bf16.gmra.mxu0 %v5192
  %v5872 = vpop.f32.mrf.mxu0
  %v5873 = vadd.f32 0.0, %v5872
  %v5874 = vpop.f32.mrf.mxu0
  %v5875 = vadd.f32 0.0, %v5874
  %5876 = vmatmul.bf16.gmra.mxu0 %v5454
  %v5877 = vpop.f32.mrf.mxu0
  %v5878 = vadd.f32 0.0, %v5877
  %v5879 = vpop.f32.mrf.mxu0
  %v5880 = vadd.f32 0.0, %v5879
  %5881 = vmatmul.bf16.gmra.mxu0 %v5716
  %v5882 = vpop.f32.mrf.mxu0
  %v5883 = vadd.f32 0.0, %v5882
  %v5884 = vpop.f32.mrf.mxu0
  %v5885 = vadd.f32 0.0, %v5884
  %5886 = vdwg.mxu0
  %v5887 = vadd.f32 %v5625, %v5728
  %v5888 = vadd.f32 %v5626, %v5730
  %v5889 = vadd.f32 %v5627, %v5733
  %v5890 = vadd.f32 %v5628, %v5735
  %v5891 = vadd.f32 %v5629, %v5738
  %v5892 = vadd.f32 %v5630, %v5740
  %v5893 = vadd.f32 %v5631, %v5743
  %v5894 = vadd.f32 %v5632, %v5745
  %v5895 = vadd.f32 %v5633, %v5748
  %v5896 = vadd.f32 %v5634, %v5750
  %v5897 = vadd.f32 %v5635, %v5753
  %v5898 = vadd.f32 %v5636, %v5755
  %v5899 = vadd.f32 %v5637, %v5758
  %v5900 = vadd.f32 %v5638, %v5760
  %v5901 = vadd.f32 %v5639, %v5763
  %v5902 = vadd.f32 %v5640, %v5765
  %v5903 = vadd.f32 %v5641, %v5768
  %v5904 = vadd.f32 %v5642, %v5770
  %v5905 = vadd.f32 %v5643, %v5773
  %v5906 = vadd.f32 %v5644, %v5775
  %v5907 = vadd.f32 %v5645, %v5778
  %v5908 = vadd.f32 %v5646, %v5780
  %v5909 = vadd.f32 %v5647, %v5783
  %v5910 = vadd.f32 %v5648, %v5785
  %v5911 = vadd.f32 %v5649, %v5788
  %v5912 = vadd.f32 %v5650, %v5790
  %v5913 = vadd.f32 %v5651, %v5793
  %v5914 = vadd.f32 %v5652, %v5795
  %v5915 = vadd.f32 %v5653, %v5798
  %v5916 = vadd.f32 %v5654, %v5800
  %v5917 = vadd.f32 %v5655, %v5803
  %v5918 = vadd.f32 %v5656, %v5805
  %v5919 = vadd.f32 %v5657, %v5808
  %v5920 = vadd.f32 %v5658, %v5810
  %v5921 = vadd.f32 %v5659, %v5813
  %v5922 = vadd.f32 %v5660, %v5815
  %v5923 = vadd.f32 %v5661, %v5818
  %v5924 = vadd.f32 %v5662, %v5820
  %v5925 = vadd.f32 %v5663, %v5823
  %v5926 = vadd.f32 %v5664, %v5825
  %v5927 = vadd.f32 %v5665, %v5828
  %v5928 = vadd.f32 %v5666, %v5830
  %v5929 = vadd.f32 %v5667, %v5833
  %v5930 = vadd.f32 %v5668, %v5835
  %v5931 = vadd.f32 %v5669, %v5838
  %v5932 = vadd.f32 %v5670, %v5840
  %v5933 = vadd.f32 %v5671, %v5843
  %v5934 = vadd.f32 %v5672, %v5845
  %v5935 = vadd.f32 %v5673, %v5848
  %v5936 = vadd.f32 %v5674, %v5850
  %v5937 = vadd.f32 %v5675, %v5853
  %v5938 = vadd.f32 %v5676, %v5855
  %v5939 = vadd.f32 %v5677, %v5858
  %v5940 = vadd.f32 %v5678, %v5860
  %v5941 = vadd.f32 %v5679, %v5863
  %v5942 = vadd.f32 %v5680, %v5865
  %v5943 = vadd.f32 %v5681, %v5868
  %v5944 = vadd.f32 %v5682, %v5870
  %v5945 = vadd.f32 %v5683, %v5873
  %v5946 = vadd.f32 %v5684, %v5875
  %v5947 = vadd.f32 %v5685, %v5878
  %v5948 = vadd.f32 %v5686, %v5880
  %v5949 = vadd.f32 %v5687, %v5883
  %v5950 = vadd.f32 %v5688, %v5885
  %s5951 = scalar_lea.vmem %s5, 272
  %v5952 = vld [vmem:[%s5951] sm:$0xf]
  %v5953 = vld [vmem:[%s5951 + $0x4] sm:$0xf]
  %v5954 = vld [vmem:[%s5951 + $0x8] sm:$0xf]
  %v5955 = vld [vmem:[%s5951 + $0xc] sm:$0xf]
  %v5960 = vunpack.c.l.b16 %v5952
  %v5961 = vunpack.c.l.b16 %v5953
  %v5962 = vunpack.c.l.b16 %v5954
  %v5963 = vunpack.c.l.b16 %v5955
  %v5964 = vpack.c.b16 %v5961, %v5960
  %v5965 = vpack.c.b16 %v5963, %v5962
  %5968 = vmatpush.bf16.msra.mxu0 0
  %5969 = vmatpush.bf16.msra.mxu0 0
  %5970 = vmatpush.bf16.msra.mxu0 0
  %5971 = vmatpush.bf16.msra.mxu0 0
  %5972 = vmatpush.bf16.msra.mxu0 0
  %5973 = vmatpush.bf16.msra.mxu0 0
  %5974 = vmatpush.bf16.msra.mxu0 %v5965
  %5975 = vmatpush.bf16.msra.mxu0 %v5964
  %5976 = vmatmul.bf16.gmra.mxu0 %v5114
  %v5977 = vpop.f32.mrf.mxu0
  %v5978 = vadd.f32 0.0, %v5977
  %v5979 = vpop.f32.mrf.mxu0
  %v5980 = vadd.f32 0.0, %v5979
  %5981 = vmatmul.bf16.gmra.mxu0 %v5117
  %v5982 = vpop.f32.mrf.mxu0
  %v5983 = vadd.f32 0.0, %v5982
  %v5984 = vpop.f32.mrf.mxu0
  %v5985 = vadd.f32 0.0, %v5984
  %5986 = vmatmul.bf16.gmra.mxu0 %v5120
  %v5987 = vpop.f32.mrf.mxu0
  %v5988 = vadd.f32 0.0, %v5987
  %v5989 = vpop.f32.mrf.mxu0
  %v5990 = vadd.f32 0.0, %v5989
  %5991 = vmatmul.bf16.gmra.mxu0 %v5123
  %v5992 = vpop.f32.mrf.mxu0
  %v5993 = vadd.f32 0.0, %v5992
  %v5994 = vpop.f32.mrf.mxu0
  %v5995 = vadd.f32 0.0, %v5994
  %5996 = vmatmul.bf16.gmra.mxu0 %v5126
  %v5997 = vpop.f32.mrf.mxu0
  %v5998 = vadd.f32 0.0, %v5997
  %v5999 = vpop.f32.mrf.mxu0
  %v6000 = vadd.f32 0.0, %v5999
  %6001 = vmatmul.bf16.gmra.mxu0 %v5129
  %v6002 = vpop.f32.mrf.mxu0
  %v6003 = vadd.f32 0.0, %v6002
  %v6004 = vpop.f32.mrf.mxu0
  %v6005 = vadd.f32 0.0, %v6004
  %6006 = vmatmul.bf16.gmra.mxu0 %v5132
  %v6007 = vpop.f32.mrf.mxu0
  %v6008 = vadd.f32 0.0, %v6007
  %v6009 = vpop.f32.mrf.mxu0
  %v6010 = vadd.f32 0.0, %v6009
  %6011 = vmatmul.bf16.gmra.mxu0 %v5135
  %v6012 = vpop.f32.mrf.mxu0
  %v6013 = vadd.f32 0.0, %v6012
  %v6014 = vpop.f32.mrf.mxu0
  %v6015 = vadd.f32 0.0, %v6014
  %6016 = vmatmul.bf16.gmra.mxu0 %v5138
  %v6017 = vpop.f32.mrf.mxu0
  %v6018 = vadd.f32 0.0, %v6017
  %v6019 = vpop.f32.mrf.mxu0
  %v6020 = vadd.f32 0.0, %v6019
  %6021 = vmatmul.bf16.gmra.mxu0 %v5141
  %v6022 = vpop.f32.mrf.mxu0
  %v6023 = vadd.f32 0.0, %v6022
  %v6024 = vpop.f32.mrf.mxu0
  %v6025 = vadd.f32 0.0, %v6024
  %6026 = vmatmul.bf16.gmra.mxu0 %v5144
  %v6027 = vpop.f32.mrf.mxu0
  %v6028 = vadd.f32 0.0, %v6027
  %v6029 = vpop.f32.mrf.mxu0
  %v6030 = vadd.f32 0.0, %v6029
  %6031 = vmatmul.bf16.gmra.mxu0 %v5147
  %v6032 = vpop.f32.mrf.mxu0
  %v6033 = vadd.f32 0.0, %v6032
  %v6034 = vpop.f32.mrf.mxu0
  %v6035 = vadd.f32 0.0, %v6034
  %6036 = vmatmul.bf16.gmra.mxu0 %v5150
  %v6037 = vpop.f32.mrf.mxu0
  %v6038 = vadd.f32 0.0, %v6037
  %v6039 = vpop.f32.mrf.mxu0
  %v6040 = vadd.f32 0.0, %v6039
  %6041 = vmatmul.bf16.gmra.mxu0 %v5451
  %v6042 = vpop.f32.mrf.mxu0
  %v6043 = vadd.f32 0.0, %v6042
  %v6044 = vpop.f32.mrf.mxu0
  %v6045 = vadd.f32 0.0, %v6044
  %6046 = vmatmul.bf16.gmra.mxu0 %v5713
  %v6047 = vpop.f32.mrf.mxu0
  %v6048 = vadd.f32 0.0, %v6047
  %v6049 = vpop.f32.mrf.mxu0
  %v6050 = vadd.f32 0.0, %v6049
  %6051 = vmatmul.bf16.gmra.mxu0 %v5108
  %v6052 = vpop.f32.mrf.mxu0
  %v6053 = vadd.f32 0.0, %v6052
  %v6054 = vpop.f32.mrf.mxu0
  %v6055 = vadd.f32 0.0, %v6054
  %6056 = vmatmul.bf16.gmra.mxu0 %v5156
  %v6057 = vpop.f32.mrf.mxu0
  %v6058 = vadd.f32 0.0, %v6057
  %v6059 = vpop.f32.mrf.mxu0
  %v6060 = vadd.f32 0.0, %v6059
  %6061 = vmatmul.bf16.gmra.mxu0 %v5159
  %v6062 = vpop.f32.mrf.mxu0
  %v6063 = vadd.f32 0.0, %v6062
  %v6064 = vpop.f32.mrf.mxu0
  %v6065 = vadd.f32 0.0, %v6064
  %6066 = vmatmul.bf16.gmra.mxu0 %v5162
  %v6067 = vpop.f32.mrf.mxu0
  %v6068 = vadd.f32 0.0, %v6067
  %v6069 = vpop.f32.mrf.mxu0
  %v6070 = vadd.f32 0.0, %v6069
  %6071 = vmatmul.bf16.gmra.mxu0 %v5165
  %v6072 = vpop.f32.mrf.mxu0
  %v6073 = vadd.f32 0.0, %v6072
  %v6074 = vpop.f32.mrf.mxu0
  %v6075 = vadd.f32 0.0, %v6074
  %6076 = vmatmul.bf16.gmra.mxu0 %v5168
  %v6077 = vpop.f32.mrf.mxu0
  %v6078 = vadd.f32 0.0, %v6077
  %v6079 = vpop.f32.mrf.mxu0
  %v6080 = vadd.f32 0.0, %v6079
  %6081 = vmatmul.bf16.gmra.mxu0 %v5171
  %v6082 = vpop.f32.mrf.mxu0
  %v6083 = vadd.f32 0.0, %v6082
  %v6084 = vpop.f32.mrf.mxu0
  %v6085 = vadd.f32 0.0, %v6084
  %6086 = vmatmul.bf16.gmra.mxu0 %v5174
  %v6087 = vpop.f32.mrf.mxu0
  %v6088 = vadd.f32 0.0, %v6087
  %v6089 = vpop.f32.mrf.mxu0
  %v6090 = vadd.f32 0.0, %v6089
  %6091 = vmatmul.bf16.gmra.mxu0 %v5177
  %v6092 = vpop.f32.mrf.mxu0
  %v6093 = vadd.f32 0.0, %v6092
  %v6094 = vpop.f32.mrf.mxu0
  %v6095 = vadd.f32 0.0, %v6094
  %6096 = vmatmul.bf16.gmra.mxu0 %v5180
  %v6097 = vpop.f32.mrf.mxu0
  %v6098 = vadd.f32 0.0, %v6097
  %v6099 = vpop.f32.mrf.mxu0
  %v6100 = vadd.f32 0.0, %v6099
  %6101 = vmatmul.bf16.gmra.mxu0 %v5183
  %v6102 = vpop.f32.mrf.mxu0
  %v6103 = vadd.f32 0.0, %v6102
  %v6104 = vpop.f32.mrf.mxu0
  %v6105 = vadd.f32 0.0, %v6104
  %6106 = vmatmul.bf16.gmra.mxu0 %v5186
  %v6107 = vpop.f32.mrf.mxu0
  %v6108 = vadd.f32 0.0, %v6107
  %v6109 = vpop.f32.mrf.mxu0
  %v6110 = vadd.f32 0.0, %v6109
  %6111 = vmatmul.bf16.gmra.mxu0 %v5189
  %v6112 = vpop.f32.mrf.mxu0
  %v6113 = vadd.f32 0.0, %v6112
  %v6114 = vpop.f32.mrf.mxu0
  %v6115 = vadd.f32 0.0, %v6114
  %6116 = vmatmul.bf16.gmra.mxu0 %v5192
  %v6117 = vpop.f32.mrf.mxu0
  %v6118 = vadd.f32 0.0, %v6117
  %v6119 = vpop.f32.mrf.mxu0
  %v6120 = vadd.f32 0.0, %v6119
  %6121 = vmatmul.bf16.gmra.mxu0 %v5454
  %v6122 = vpop.f32.mrf.mxu0
  %v6123 = vadd.f32 0.0, %v6122
  %v6124 = vpop.f32.mrf.mxu0
  %v6125 = vadd.f32 0.0, %v6124
  %6126 = vmatmul.bf16.gmra.mxu0 %v5716
  %v6127 = vpop.f32.mrf.mxu0
  %v6128 = vadd.f32 0.0, %v6127
  %v6129 = vpop.f32.mrf.mxu0
  %v6130 = vadd.f32 0.0, %v6129
  %6131 = vmatmul.bf16.gmra.mxu0 %v5108
  %v6132 = vpop.f32.mrf.mxu0
  %v6133 = vadd.f32 0.0, %v6132
  %v6134 = vpop.f32.mrf.mxu0
  %v6135 = vadd.f32 0.0, %v6134
  %6136 = vdwg.mxu0
  %v6137 = vadd.f32 %v5887, %v5978
  %v6138 = vadd.f32 %v5888, %v5980
  %v6139 = vadd.f32 %v5889, %v5983
  %v6140 = vadd.f32 %v5890, %v5985
  %v6141 = vadd.f32 %v5891, %v5988
  %v6142 = vadd.f32 %v5892, %v5990
  %v6143 = vadd.f32 %v5893, %v5993
  %v6144 = vadd.f32 %v5894, %v5995
  %v6145 = vadd.f32 %v5895, %v5998
  %v6146 = vadd.f32 %v5896, %v6000
  %v6147 = vadd.f32 %v5897, %v6003
  %v6148 = vadd.f32 %v5898, %v6005
  %v6149 = vadd.f32 %v5899, %v6008
  %v6150 = vadd.f32 %v5900, %v6010
  %v6151 = vadd.f32 %v5901, %v6013
  %v6152 = vadd.f32 %v5902, %v6015
  %v6153 = vadd.f32 %v5903, %v6018
  %v6154 = vadd.f32 %v5904, %v6020
  %v6155 = vadd.f32 %v5905, %v6023
  %v6156 = vadd.f32 %v5906, %v6025
  %v6157 = vadd.f32 %v5907, %v6028
  %v6158 = vadd.f32 %v5908, %v6030
  %v6159 = vadd.f32 %v5909, %v6033
  %v6160 = vadd.f32 %v5910, %v6035
  %v6161 = vadd.f32 %v5911, %v6038
  %v6162 = vadd.f32 %v5912, %v6040
  %v6163 = vadd.f32 %v5913, %v6043
  %v6164 = vadd.f32 %v5914, %v6045
  %v6165 = vadd.f32 %v5915, %v6048
  %v6166 = vadd.f32 %v5916, %v6050
  %v6167 = vadd.f32 %v5917, %v6053
  %v6168 = vadd.f32 %v5918, %v6055
  %v6169 = vadd.f32 %v5919, %v6058
  %v6170 = vadd.f32 %v5920, %v6060
  %v6171 = vadd.f32 %v5921, %v6063
  %v6172 = vadd.f32 %v5922, %v6065
  %v6173 = vadd.f32 %v5923, %v6068
  %v6174 = vadd.f32 %v5924, %v6070
  %v6175 = vadd.f32 %v5925, %v6073
  %v6176 = vadd.f32 %v5926, %v6075
  %v6177 = vadd.f32 %v5927, %v6078
  %v6178 = vadd.f32 %v5928, %v6080
  %v6179 = vadd.f32 %v5929, %v6083
  %v6180 = vadd.f32 %v5930, %v6085
  %v6181 = vadd.f32 %v5931, %v6088
  %v6182 = vadd.f32 %v5932, %v6090
  %v6183 = vadd.f32 %v5933, %v6093
  %v6184 = vadd.f32 %v5934, %v6095
  %v6185 = vadd.f32 %v5935, %v6098
  %v6186 = vadd.f32 %v5936, %v6100
  %v6187 = vadd.f32 %v5937, %v6103
  %v6188 = vadd.f32 %v5938, %v6105
  %v6189 = vadd.f32 %v5939, %v6108
  %v6190 = vadd.f32 %v5940, %v6110
  %v6191 = vadd.f32 %v5941, %v6113
  %v6192 = vadd.f32 %v5942, %v6115
  %v6193 = vadd.f32 %v5943, %v6118
  %v6194 = vadd.f32 %v5944, %v6120
  %v6195 = vadd.f32 %v5945, %v6123
  %v6196 = vadd.f32 %v5946, %v6125
  %v6197 = vadd.f32 %v5947, %v6128
  %v6198 = vadd.f32 %v5948, %v6130
  %v6199 = vadd.f32 %v5949, %v6133
  %v6200 = vadd.f32 %v5950, %v6135
  %s6201 = scalar_lea.vmem %s5, 352
  %v6202 = vld [vmem:[%s6201] sm:$0xf]
  %v6203 = vld [vmem:[%s6201 + $0x4] sm:$0xf]
  %v6204 = vld [vmem:[%s6201 + $0x8] sm:$0xf]
  %v6205 = vld [vmem:[%s6201 + $0xc] sm:$0xf]
  %v6210 = vunpack.c.l.b16 %v6202
  %v6211 = vunpack.c.l.b16 %v6203
  %v6212 = vunpack.c.l.b16 %v6204
  %v6213 = vunpack.c.l.b16 %v6205
  %v6214 = vpack.c.b16 %v6211, %v6210
  %v6215 = vpack.c.b16 %v6213, %v6212
  %6218 = vmatpush.bf16.msra.mxu0 0
  %6219 = vmatpush.bf16.msra.mxu0 0
  %6220 = vmatpush.bf16.msra.mxu0 0
  %6221 = vmatpush.bf16.msra.mxu0 0
  %6222 = vmatpush.bf16.msra.mxu0 0
  %6223 = vmatpush.bf16.msra.mxu0 0
  %6224 = vmatpush.bf16.msra.mxu0 %v6215
  %6225 = vmatpush.bf16.msra.mxu0 %v6214
  %6226 = vmatmul.bf16.gmra.mxu0 %v5117
  %v6227 = vpop.f32.mrf.mxu0
  %v6228 = vadd.f32 0.0, %v6227
  %v6229 = vpop.f32.mrf.mxu0
  %v6230 = vadd.f32 0.0, %v6229
  %6231 = vmatmul.bf16.gmra.mxu0 %v5120
  %v6232 = vpop.f32.mrf.mxu0
  %v6233 = vadd.f32 0.0, %v6232
  %v6234 = vpop.f32.mrf.mxu0
  %v6235 = vadd.f32 0.0, %v6234
  %6236 = vmatmul.bf16.gmra.mxu0 %v5123
  %v6237 = vpop.f32.mrf.mxu0
  %v6238 = vadd.f32 0.0, %v6237
  %v6239 = vpop.f32.mrf.mxu0
  %v6240 = vadd.f32 0.0, %v6239
  %6241 = vmatmul.bf16.gmra.mxu0 %v5126
  %v6242 = vpop.f32.mrf.mxu0
  %v6243 = vadd.f32 0.0, %v6242
  %v6244 = vpop.f32.mrf.mxu0
  %v6245 = vadd.f32 0.0, %v6244
  %6246 = vmatmul.bf16.gmra.mxu0 %v5129
  %v6247 = vpop.f32.mrf.mxu0
  %v6248 = vadd.f32 0.0, %v6247
  %v6249 = vpop.f32.mrf.mxu0
  %v6250 = vadd.f32 0.0, %v6249
  %6251 = vmatmul.bf16.gmra.mxu0 %v5132
  %v6252 = vpop.f32.mrf.mxu0
  %v6253 = vadd.f32 0.0, %v6252
  %v6254 = vpop.f32.mrf.mxu0
  %v6255 = vadd.f32 0.0, %v6254
  %6256 = vmatmul.bf16.gmra.mxu0 %v5135
  %v6257 = vpop.f32.mrf.mxu0
  %v6258 = vadd.f32 0.0, %v6257
  %v6259 = vpop.f32.mrf.mxu0
  %v6260 = vadd.f32 0.0, %v6259
  %6261 = vmatmul.bf16.gmra.mxu0 %v5138
  %v6262 = vpop.f32.mrf.mxu0
  %v6263 = vadd.f32 0.0, %v6262
  %v6264 = vpop.f32.mrf.mxu0
  %v6265 = vadd.f32 0.0, %v6264
  %6266 = vmatmul.bf16.gmra.mxu0 %v5141
  %v6267 = vpop.f32.mrf.mxu0
  %v6268 = vadd.f32 0.0, %v6267
  %v6269 = vpop.f32.mrf.mxu0
  %v6270 = vadd.f32 0.0, %v6269
  %6271 = vmatmul.bf16.gmra.mxu0 %v5144
  %v6272 = vpop.f32.mrf.mxu0
  %v6273 = vadd.f32 0.0, %v6272
  %v6274 = vpop.f32.mrf.mxu0
  %v6275 = vadd.f32 0.0, %v6274
  %6276 = vmatmul.bf16.gmra.mxu0 %v5147
  %v6277 = vpop.f32.mrf.mxu0
  %v6278 = vadd.f32 0.0, %v6277
  %v6279 = vpop.f32.mrf.mxu0
  %v6280 = vadd.f32 0.0, %v6279
  %6281 = vmatmul.bf16.gmra.mxu0 %v5150
  %v6282 = vpop.f32.mrf.mxu0
  %v6283 = vadd.f32 0.0, %v6282
  %v6284 = vpop.f32.mrf.mxu0
  %v6285 = vadd.f32 0.0, %v6284
  %6286 = vmatmul.bf16.gmra.mxu0 %v5451
  %v6287 = vpop.f32.mrf.mxu0
  %v6288 = vadd.f32 0.0, %v6287
  %v6289 = vpop.f32.mrf.mxu0
  %v6290 = vadd.f32 0.0, %v6289
  %6291 = vmatmul.bf16.gmra.mxu0 %v5713
  %v6292 = vpop.f32.mrf.mxu0
  %v6293 = vadd.f32 0.0, %v6292
  %v6294 = vpop.f32.mrf.mxu0
  %v6295 = vadd.f32 0.0, %v6294
  %6296 = vmatmul.bf16.gmra.mxu0 %v5108
  %v6297 = vpop.f32.mrf.mxu0
  %v6298 = vadd.f32 0.0, %v6297
  %v6299 = vpop.f32.mrf.mxu0
  %v6300 = vadd.f32 0.0, %v6299
  %6301 = vmatmul.bf16.gmra.mxu0 %v5108
  %v6302 = vpop.f32.mrf.mxu0
  %v6303 = vadd.f32 0.0, %v6302
  %v6304 = vpop.f32.mrf.mxu0
  %v6305 = vadd.f32 0.0, %v6304
  %6306 = vmatmul.bf16.gmra.mxu0 %v5159
  %v6307 = vpop.f32.mrf.mxu0
  %v6308 = vadd.f32 0.0, %v6307
  %v6309 = vpop.f32.mrf.mxu0
  %v6310 = vadd.f32 0.0, %v6309
  %6311 = vmatmul.bf16.gmra.mxu0 %v5162
  %v6312 = vpop.f32.mrf.mxu0
  %v6313 = vadd.f32 0.0, %v6312
  %v6314 = vpop.f32.mrf.mxu0
  %v6315 = vadd.f32 0.0, %v6314
  %6316 = vmatmul.bf16.gmra.mxu0 %v5165
  %v6317 = vpop.f32.mrf.mxu0
  %v6318 = vadd.f32 0.0, %v6317
  %v6319 = vpop.f32.mrf.mxu0
  %v6320 = vadd.f32 0.0, %v6319
  %6321 = vmatmul.bf16.gmra.mxu0 %v5168
  %v6322 = vpop.f32.mrf.mxu0
  %v6323 = vadd.f32 0.0, %v6322
  %v6324 = vpop.f32.mrf.mxu0
  %v6325 = vadd.f32 0.0, %v6324
  %6326 = vmatmul.bf16.gmra.mxu0 %v5171
  %v6327 = vpop.f32.mrf.mxu0
  %v6328 = vadd.f32 0.0, %v6327
  %v6329 = vpop.f32.mrf.mxu0
  %v6330 = vadd.f32 0.0, %v6329
  %6331 = vmatmul.bf16.gmra.mxu0 %v5174
  %v6332 = vpop.f32.mrf.mxu0
  %v6333 = vadd.f32 0.0, %v6332
  %v6334 = vpop.f32.mrf.mxu0
  %v6335 = vadd.f32 0.0, %v6334
  %6336 = vmatmul.bf16.gmra.mxu0 %v5177
  %v6337 = vpop.f32.mrf.mxu0
  %v6338 = vadd.f32 0.0, %v6337
  %v6339 = vpop.f32.mrf.mxu0
  %v6340 = vadd.f32 0.0, %v6339
  %6341 = vmatmul.bf16.gmra.mxu0 %v5180
  %v6342 = vpop.f32.mrf.mxu0
  %v6343 = vadd.f32 0.0, %v6342
  %v6344 = vpop.f32.mrf.mxu0
  %v6345 = vadd.f32 0.0, %v6344
  %6346 = vmatmul.bf16.gmra.mxu0 %v5183
  %v6347 = vpop.f32.mrf.mxu0
  %v6348 = vadd.f32 0.0, %v6347
  %v6349 = vpop.f32.mrf.mxu0
  %v6350 = vadd.f32 0.0, %v6349
  %6351 = vmatmul.bf16.gmra.mxu0 %v5186
  %v6352 = vpop.f32.mrf.mxu0
  %v6353 = vadd.f32 0.0, %v6352
  %v6354 = vpop.f32.mrf.mxu0
  %v6355 = vadd.f32 0.0, %v6354
  %6356 = vmatmul.bf16.gmra.mxu0 %v5189
  %v6357 = vpop.f32.mrf.mxu0
  %v6358 = vadd.f32 0.0, %v6357
  %v6359 = vpop.f32.mrf.mxu0
  %v6360 = vadd.f32 0.0, %v6359
  %6361 = vmatmul.bf16.gmra.mxu0 %v5192
  %v6362 = vpop.f32.mrf.mxu0
  %v6363 = vadd.f32 0.0, %v6362
  %v6364 = vpop.f32.mrf.mxu0
  %v6365 = vadd.f32 0.0, %v6364
  %6366 = vmatmul.bf16.gmra.mxu0 %v5454
  %v6367 = vpop.f32.mrf.mxu0
  %v6368 = vadd.f32 0.0, %v6367
  %v6369 = vpop.f32.mrf.mxu0
  %v6370 = vadd.f32 0.0, %v6369
  %6371 = vmatmul.bf16.gmra.mxu0 %v5716
  %v6372 = vpop.f32.mrf.mxu0
  %v6373 = vadd.f32 0.0, %v6372
  %v6374 = vpop.f32.mrf.mxu0
  %v6375 = vadd.f32 0.0, %v6374
  %6376 = vmatmul.bf16.gmra.mxu0 %v5108
  %v6377 = vpop.f32.mrf.mxu0
  %v6378 = vadd.f32 0.0, %v6377
  %v6379 = vpop.f32.mrf.mxu0
  %v6380 = vadd.f32 0.0, %v6379
  %6381 = vmatmul.bf16.gmra.mxu0 %v5108
  %v6382 = vpop.f32.mrf.mxu0
  %v6383 = vadd.f32 0.0, %v6382
  %v6384 = vpop.f32.mrf.mxu0
  %v6385 = vadd.f32 0.0, %v6384
  %6386 = vdwg.mxu0
  %v6387 = vadd.f32 %v6137, %v6228
  %v6388 = vadd.f32 %v6138, %v6230
  %v6389 = vadd.f32 %v6139, %v6233
  %v6390 = vadd.f32 %v6140, %v6235
  %v6391 = vadd.f32 %v6141, %v6238
  %v6392 = vadd.f32 %v6142, %v6240
  %v6393 = vadd.f32 %v6143, %v6243
  %v6394 = vadd.f32 %v6144, %v6245
  %v6395 = vadd.f32 %v6145, %v6248
  %v6396 = vadd.f32 %v6146, %v6250
  %v6397 = vadd.f32 %v6147, %v6253
  %v6398 = vadd.f32 %v6148, %v6255
  %v6399 = vadd.f32 %v6149, %v6258
  %v6400 = vadd.f32 %v6150, %v6260
  %v6401 = vadd.f32 %v6151, %v6263
  %v6402 = vadd.f32 %v6152, %v6265
  %v6403 = vadd.f32 %v6153, %v6268
  %v6404 = vadd.f32 %v6154, %v6270
  %v6405 = vadd.f32 %v6155, %v6273
  %v6406 = vadd.f32 %v6156, %v6275
  %v6407 = vadd.f32 %v6157, %v6278
  %v6408 = vadd.f32 %v6158, %v6280
  %v6409 = vadd.f32 %v6159, %v6283
  %v6410 = vadd.f32 %v6160, %v6285
  %v6411 = vadd.f32 %v6161, %v6288
  %v6412 = vadd.f32 %v6162, %v6290
  %v6413 = vadd.f32 %v6163, %v6293
  %v6414 = vadd.f32 %v6164, %v6295
  %v6415 = vadd.f32 %v6165, %v6298
  %v6416 = vadd.f32 %v6166, %v6300
  %v6417 = vadd.f32 %v6167, %v6303
  %v6418 = vadd.f32 %v6168, %v6305
  %v6419 = vadd.f32 %v6169, %v6308
  %v6420 = vadd.f32 %v6170, %v6310
  %v6421 = vadd.f32 %v6171, %v6313
  %v6422 = vadd.f32 %v6172, %v6315
  %v6423 = vadd.f32 %v6173, %v6318
  %v6424 = vadd.f32 %v6174, %v6320
  %v6425 = vadd.f32 %v6175, %v6323
  %v6426 = vadd.f32 %v6176, %v6325
  %v6427 = vadd.f32 %v6177, %v6328
  %v6428 = vadd.f32 %v6178, %v6330
  %v6429 = vadd.f32 %v6179, %v6333
  %v6430 = vadd.f32 %v6180, %v6335
  %v6431 = vadd.f32 %v6181, %v6338
  %v6432 = vadd.f32 %v6182, %v6340
  %v6433 = vadd.f32 %v6183, %v6343
  %v6434 = vadd.f32 %v6184, %v6345
  %v6435 = vadd.f32 %v6185, %v6348
  %v6436 = vadd.f32 %v6186, %v6350
  %v6437 = vadd.f32 %v6187, %v6353
  %v6438 = vadd.f32 %v6188, %v6355
  %v6439 = vadd.f32 %v6189, %v6358
  %v6440 = vadd.f32 %v6190, %v6360
  %v6441 = vadd.f32 %v6191, %v6363
  %v6442 = vadd.f32 %v6192, %v6365
  %v6443 = vadd.f32 %v6193, %v6368
  %v6444 = vadd.f32 %v6194, %v6370
  %v6445 = vadd.f32 %v6195, %v6373
  %v6446 = vadd.f32 %v6196, %v6375
  %v6447 = vadd.f32 %v6197, %v6378
  %v6448 = vadd.f32 %v6198, %v6380
  %v6449 = vadd.f32 %v6199, %v6383
  %v6450 = vadd.f32 %v6200, %v6385
  %vm6451 = vsmask.f32 3328
  %v6452 = vrot.slane %v3158, 4
  %v6453 = vrot.slane %v3161, 5
  %v6454 = vor.u32 %v6452, %v6453
  %v6455 = vrot.slane %v3165, 4
  %v6456 = vrot.slane %v3168, 5
  %v6457 = vor.u32 %v6455, %v6456
  %v6458 = vsel %vm6451, %v6454, %v6457
  %v6459 = vrot.slane %v3173, 4
  %v6460 = vrot.slane %v3176, 5
  %v6461 = vor.u32 %v6459, %v6460
  %v6462 = vrot.slane %v3180, 4
  %v6463 = vrot.slane %v3183, 5
  %v6464 = vor.u32 %v6462, %v6463
  %v6465 = vsel %vm6451, %v6461, %v6464
  %v6466 = vrot.slane %v3188, 4
  %v6467 = vrot.slane %v3191, 5
  %v6468 = vor.u32 %v6466, %v6467
  %v6469 = vrot.slane %v3195, 4
  %v6470 = vrot.slane %v3198, 5
  %v6471 = vor.u32 %v6469, %v6470
  %v6472 = vsel %vm6451, %v6468, %v6471
  %v6473 = vrot.slane %v3203, 4
  %v6474 = vrot.slane %v3206, 5
  %v6475 = vor.u32 %v6473, %v6474
  %v6476 = vrot.slane %v3210, 4
  %v6477 = vrot.slane %v3213, 5
  %v6478 = vor.u32 %v6476, %v6477
  %v6479 = vsel %vm6451, %v6475, %v6478
  %v6480 = vrot.slane %v3218, 4
  %v6481 = vrot.slane %v3221, 5
  %v6482 = vor.u32 %v6480, %v6481
  %v6483 = vrot.slane %v3225, 4
  %v6484 = vrot.slane %v3228, 5
  %v6485 = vor.u32 %v6483, %v6484
  %v6486 = vsel %vm6451, %v6482, %v6485
  %v6487 = vrot.slane %v3233, 4
  %v6488 = vrot.slane %v3236, 5
  %v6489 = vor.u32 %v6487, %v6488
  %v6490 = vrot.slane %v3240, 4
  %v6491 = vrot.slane %v3243, 5
  %v6492 = vor.u32 %v6490, %v6491
  %v6493 = vsel %vm6451, %v6489, %v6492
  %v6494 = vrot.slane %v3248, 4
  %v6495 = vrot.slane %v3251, 5
  %v6496 = vor.u32 %v6494, %v6495
  %v6497 = vrot.slane %v3255, 4
  %v6498 = vrot.slane %v3258, 5
  %v6499 = vor.u32 %v6497, %v6498
  %v6500 = vsel %vm6451, %v6496, %v6499
  %v6501 = vrot.slane %v3263, 4
  %v6502 = vrot.slane %v3266, 5
  %v6503 = vor.u32 %v6501, %v6502
  %v6504 = vrot.slane %v3270, 4
  %v6505 = vrot.slane %v3273, 5
  %v6506 = vor.u32 %v6504, %v6505
  %v6507 = vsel %vm6451, %v6503, %v6506
  %v6508 = vrot.slane %v3278, 4
  %v6509 = vrot.slane %v3281, 5
  %v6510 = vor.u32 %v6508, %v6509
  %v6511 = vrot.slane %v3285, 4
  %v6512 = vrot.slane %v3288, 5
  %v6513 = vor.u32 %v6511, %v6512
  %v6514 = vsel %vm6451, %v6510, %v6513
  %v6515 = vrot.slane %v3293, 4
  %v6516 = vrot.slane %v3296, 5
  %v6517 = vor.u32 %v6515, %v6516
  %v6518 = vrot.slane %v3300, 4
  %v6519 = vrot.slane %v3303, 5
  %v6520 = vor.u32 %v6518, %v6519
  %v6521 = vsel %vm6451, %v6517, %v6520
  %v6522 = vrot.slane %v3308, 4
  %v6523 = vrot.slane %v3311, 5
  %v6524 = vor.u32 %v6522, %v6523
  %v6525 = vrot.slane %v3315, 4
  %v6526 = vrot.slane %v3318, 5
  %v6527 = vor.u32 %v6525, %v6526
  %v6528 = vsel %vm6451, %v6524, %v6527
  %v6529 = vrot.slane %v3323, 4
  %v6530 = vrot.slane %v3326, 5
  %v6531 = vor.u32 %v6529, %v6530
  %v6532 = vrot.slane %v3330, 4
  %v6533 = vrot.slane %v3333, 5
  %v6534 = vor.u32 %v6532, %v6533
  %v6535 = vsel %vm6451, %v6531, %v6534
  %v6536 = vrot.slane %v3338, 4
  %v6537 = vrot.slane %v3341, 5
  %v6538 = vor.u32 %v6536, %v6537
  %v6539 = vrot.slane %v3345, 4
  %v6540 = vrot.slane %v3348, 5
  %v6541 = vor.u32 %v6539, %v6540
  %v6542 = vsel %vm6451, %v6538, %v6541
  %v6543 = vrot.slane %v3353, 4
  %v6544 = vrot.slane %v3356, 5
  %v6545 = vor.u32 %v6543, %v6544
  %v6546 = vrot.slane %v3360, 4
  %v6547 = vrot.slane %v3363, 5
  %v6548 = vor.u32 %v6546, %v6547
  %v6549 = vsel %vm6451, %v6545, %v6548
  %v6550 = vrot.slane %v3368, 4
  %v6551 = vrot.slane %v3371, 5
  %v6552 = vor.u32 %v6550, %v6551
  %v6553 = vrot.slane %v3375, 4
  %v6554 = vrot.slane %v3378, 5
  %v6555 = vor.u32 %v6553, %v6554
  %v6556 = vsel %vm6451, %v6552, %v6555
  %v6557 = vrot.slane %v3383, 4
  %v6558 = vrot.slane %v3386, 5
  %v6559 = vor.u32 %v6557, %v6558
  %v6560 = vrot.slane %v3390, 4
  %v6561 = vrot.slane %v3393, 5
  %v6562 = vor.u32 %v6560, %v6561
  %v6563 = vsel %vm6451, %v6559, %v6562
  %v6564 = vrot.slane %v3398, 4
  %v6565 = vrot.slane %v3401, 5
  %v6566 = vor.u32 %v6564, %v6565
  %v6567 = vrot.slane %v3405, 4
  %v6568 = vrot.slane %v3408, 5
  %v6569 = vor.u32 %v6567, %v6568
  %v6570 = vsel %vm6451, %v6566, %v6569
  %v6571 = vrot.slane %v3413, 4
  %v6572 = vrot.slane %v3416, 5
  %v6573 = vor.u32 %v6571, %v6572
  %v6574 = vrot.slane %v3420, 4
  %v6575 = vrot.slane %v3423, 5
  %v6576 = vor.u32 %v6574, %v6575
  %v6577 = vsel %vm6451, %v6573, %v6576
  %v6578 = vrot.slane %v3428, 4
  %v6579 = vrot.slane %v3431, 5
  %v6580 = vor.u32 %v6578, %v6579
  %v6581 = vrot.slane %v3435, 4
  %v6582 = vrot.slane %v3438, 5
  %v6583 = vor.u32 %v6581, %v6582
  %v6584 = vsel %vm6451, %v6580, %v6583
  %v6585 = vrot.slane %v3443, 4
  %v6586 = vrot.slane %v3446, 5
  %v6587 = vor.u32 %v6585, %v6586
  %v6588 = vrot.slane %v3450, 4
  %v6589 = vrot.slane %v3453, 5
  %v6590 = vor.u32 %v6588, %v6589
  %v6591 = vsel %vm6451, %v6587, %v6590
  %v6592 = vrot.slane %v3458, 4
  %v6593 = vrot.slane %v3461, 5
  %v6594 = vor.u32 %v6592, %v6593
  %v6595 = vrot.slane %v3465, 4
  %v6596 = vrot.slane %v3468, 5
  %v6597 = vor.u32 %v6595, %v6596
  %v6598 = vsel %vm6451, %v6594, %v6597
  %v6599 = vrot.slane %v3473, 4
  %v6600 = vrot.slane %v3476, 5
  %v6601 = vor.u32 %v6599, %v6600
  %v6602 = vrot.slane %v3480, 4
  %v6603 = vrot.slane %v3483, 5
  %v6604 = vor.u32 %v6602, %v6603
  %v6605 = vsel %vm6451, %v6601, %v6604
  %v6606 = vrot.slane %v3488, 4
  %v6607 = vrot.slane %v3491, 5
  %v6608 = vor.u32 %v6606, %v6607
  %v6609 = vrot.slane %v3495, 4
  %v6610 = vrot.slane %v3498, 5
  %v6611 = vor.u32 %v6609, %v6610
  %v6612 = vsel %vm6451, %v6608, %v6611
  %v6613 = vrot.slane %v3503, 4
  %v6614 = vrot.slane %v3506, 5
  %v6615 = vor.u32 %v6613, %v6614
  %v6616 = vrot.slane %v3510, 4
  %v6617 = vrot.slane %v3513, 5
  %v6618 = vor.u32 %v6616, %v6617
  %v6619 = vsel %vm6451, %v6615, %v6618
  %v6620 = vrot.slane %v3518, 4
  %v6621 = vrot.slane %v3521, 5
  %v6622 = vor.u32 %v6620, %v6621
  %v6623 = vrot.slane %v3525, 4
  %v6624 = vrot.slane %v3528, 5
  %v6625 = vor.u32 %v6623, %v6624
  %v6626 = vsel %vm6451, %v6622, %v6625
  %v6627 = vrot.slane %v3533, 4
  %v6628 = vrot.slane %v3536, 5
  %v6629 = vor.u32 %v6627, %v6628
  %v6630 = vrot.slane %v3540, 4
  %v6631 = vrot.slane %v3543, 5
  %v6632 = vor.u32 %v6630, %v6631
  %v6633 = vsel %vm6451, %v6629, %v6632
  %v6634 = vrot.slane %v3548, 4
  %v6635 = vrot.slane %v3551, 5
  %v6636 = vor.u32 %v6634, %v6635
  %v6637 = vrot.slane %v3555, 4
  %v6638 = vrot.slane %v3558, 5
  %v6639 = vor.u32 %v6637, %v6638
  %v6640 = vsel %vm6451, %v6636, %v6639
  %v6641 = vrot.slane %v3563, 4
  %v6642 = vrot.slane %v3566, 5
  %v6643 = vor.u32 %v6641, %v6642
  %v6644 = vrot.slane %v3570, 4
  %v6645 = vrot.slane %v3573, 5
  %v6646 = vor.u32 %v6644, %v6645
  %v6647 = vsel %vm6451, %v6643, %v6646
  %v6648 = vrot.slane %v3578, 4
  %v6649 = vrot.slane %v3581, 5
  %v6650 = vor.u32 %v6648, %v6649
  %v6651 = vrot.slane %v3585, 4
  %v6652 = vrot.slane %v3588, 5
  %v6653 = vor.u32 %v6651, %v6652
  %v6654 = vsel %vm6451, %v6650, %v6653
  %s6655 = scalar_lea.vmem %s5, 48
  %v6656 = vld [vmem:[%s6655] sm:$0xf]
  %v6657 = vld [vmem:[%s6655 + $0x4] sm:$0xf]
  %v6658 = vld [vmem:[%s6655 + $0x8] sm:$0xf]
  %v6659 = vld [vmem:[%s6655 + $0xc] sm:$0xf]
  %v6664 = vunpack.c.l.b16 %v6656
  %v6665 = vunpack.c.l.b16 %v6657
  %v6666 = vunpack.c.l.b16 %v6658
  %v6667 = vunpack.c.l.b16 %v6659
  %v6668 = vpack.c.b16 %v6665, %v6664
  %v6669 = vpack.c.b16 %v6667, %v6666
  %v6673 = vsel %vm1947, %v6458, 0
  %v6676 = vsel %vm1947, %v6465, 0
  %v6679 = vsel %vm1947, %v6472, 0
  %v6682 = vsel %vm1947, %v6479, 0
  %v6685 = vsel %vm1947, %v6486, 0
  %v6688 = vsel %vm1947, %v6493, 0
  %v6691 = vsel %vm1947, %v6500, 0
  %v6694 = vsel %vm1947, %v6507, 0
  %v6697 = vsel %vm1947, %v6514, 0
  %v6700 = vsel %vm1947, %v6521, 0
  %v6703 = vsel %vm1947, %v6528, 0
  %v6706 = vsel %vm1947, %v6535, 0
  %v6709 = vsel %vm1947, %v6542, 0
  %v6712 = vsel %vm1947, %v6549, 0
  %v6715 = vsel %vm1947, %v6556, 0
  %v6718 = vsel %vm1947, %v6563, 0
  %v6721 = vsel %vm1947, %v6570, 0
  %v6724 = vsel %vm1947, %v6577, 0
  %v6727 = vsel %vm1947, %v6584, 0
  %v6730 = vsel %vm1947, %v6591, 0
  %v6733 = vsel %vm1947, %v6598, 0
  %v6736 = vsel %vm1947, %v6605, 0
  %v6739 = vsel %vm1947, %v6612, 0
  %v6742 = vsel %vm1947, %v6619, 0
  %v6745 = vsel %vm1947, %v6626, 0
  %v6748 = vsel %vm1947, %v6633, 0
  %v6751 = vsel %vm1947, %v6640, 0
  %v6754 = vsel %vm1947, %v6647, 0
  %v6757 = vsel %vm1947, %v6654, 0
  %6759 = vmatpush.bf16.msra.mxu0 0
  %6760 = vmatpush.bf16.msra.mxu0 0
  %6761 = vmatpush.bf16.msra.mxu0 0
  %6762 = vmatpush.bf16.msra.mxu0 0
  %6763 = vmatpush.bf16.msra.mxu0 0
  %6764 = vmatpush.bf16.msra.mxu0 0
  %6765 = vmatpush.bf16.msra.mxu0 %v6669
  %6766 = vmatpush.bf16.msra.mxu0 %v6668
  %6767 = vmatmul.bf16.gmra.mxu0 %v6673
  %v6768 = vpop.f32.mrf.mxu0
  %v6769 = vadd.f32 0.0, %v6768
  %v6770 = vpop.f32.mrf.mxu0
  %v6771 = vadd.f32 0.0, %v6770
  %6772 = vmatmul.bf16.gmra.mxu0 %v6673
  %v6773 = vpop.f32.mrf.mxu0
  %v6774 = vadd.f32 0.0, %v6773
  %v6775 = vpop.f32.mrf.mxu0
  %v6776 = vadd.f32 0.0, %v6775
  %6777 = vmatmul.bf16.gmra.mxu0 %v6676
  %v6778 = vpop.f32.mrf.mxu0
  %v6779 = vadd.f32 0.0, %v6778
  %v6780 = vpop.f32.mrf.mxu0
  %v6781 = vadd.f32 0.0, %v6780
  %6782 = vmatmul.bf16.gmra.mxu0 %v6679
  %v6783 = vpop.f32.mrf.mxu0
  %v6784 = vadd.f32 0.0, %v6783
  %v6785 = vpop.f32.mrf.mxu0
  %v6786 = vadd.f32 0.0, %v6785
  %6787 = vmatmul.bf16.gmra.mxu0 %v6682
  %v6788 = vpop.f32.mrf.mxu0
  %v6789 = vadd.f32 0.0, %v6788
  %v6790 = vpop.f32.mrf.mxu0
  %v6791 = vadd.f32 0.0, %v6790
  %6792 = vmatmul.bf16.gmra.mxu0 %v6685
  %v6793 = vpop.f32.mrf.mxu0
  %v6794 = vadd.f32 0.0, %v6793
  %v6795 = vpop.f32.mrf.mxu0
  %v6796 = vadd.f32 0.0, %v6795
  %6797 = vmatmul.bf16.gmra.mxu0 %v6688
  %v6798 = vpop.f32.mrf.mxu0
  %v6799 = vadd.f32 0.0, %v6798
  %v6800 = vpop.f32.mrf.mxu0
  %v6801 = vadd.f32 0.0, %v6800
  %6802 = vmatmul.bf16.gmra.mxu0 %v6691
  %v6803 = vpop.f32.mrf.mxu0
  %v6804 = vadd.f32 0.0, %v6803
  %v6805 = vpop.f32.mrf.mxu0
  %v6806 = vadd.f32 0.0, %v6805
  %6807 = vmatmul.bf16.gmra.mxu0 %v6694
  %v6808 = vpop.f32.mrf.mxu0
  %v6809 = vadd.f32 0.0, %v6808
  %v6810 = vpop.f32.mrf.mxu0
  %v6811 = vadd.f32 0.0, %v6810
  %6812 = vmatmul.bf16.gmra.mxu0 %v6697
  %v6813 = vpop.f32.mrf.mxu0
  %v6814 = vadd.f32 0.0, %v6813
  %v6815 = vpop.f32.mrf.mxu0
  %v6816 = vadd.f32 0.0, %v6815
  %6817 = vmatmul.bf16.gmra.mxu0 %v6700
  %v6818 = vpop.f32.mrf.mxu0
  %v6819 = vadd.f32 0.0, %v6818
  %v6820 = vpop.f32.mrf.mxu0
  %v6821 = vadd.f32 0.0, %v6820
  %6822 = vmatmul.bf16.gmra.mxu0 %v6703
  %v6823 = vpop.f32.mrf.mxu0
  %v6824 = vadd.f32 0.0, %v6823
  %v6825 = vpop.f32.mrf.mxu0
  %v6826 = vadd.f32 0.0, %v6825
  %6827 = vmatmul.bf16.gmra.mxu0 %v6706
  %v6828 = vpop.f32.mrf.mxu0
  %v6829 = vadd.f32 0.0, %v6828
  %v6830 = vpop.f32.mrf.mxu0
  %v6831 = vadd.f32 0.0, %v6830
  %6832 = vmatmul.bf16.gmra.mxu0 %v6709
  %v6833 = vpop.f32.mrf.mxu0
  %v6834 = vadd.f32 0.0, %v6833
  %v6835 = vpop.f32.mrf.mxu0
  %v6836 = vadd.f32 0.0, %v6835
  %6837 = vmatmul.bf16.gmra.mxu0 %v6712
  %v6838 = vpop.f32.mrf.mxu0
  %v6839 = vadd.f32 0.0, %v6838
  %v6840 = vpop.f32.mrf.mxu0
  %v6841 = vadd.f32 0.0, %v6840
  %6842 = vmatmul.bf16.gmra.mxu0 %v6715
  %v6843 = vpop.f32.mrf.mxu0
  %v6844 = vadd.f32 0.0, %v6843
  %v6845 = vpop.f32.mrf.mxu0
  %v6846 = vadd.f32 0.0, %v6845
  %6847 = vmatmul.bf16.gmra.mxu0 %v6673
  %v6848 = vpop.f32.mrf.mxu0
  %v6849 = vadd.f32 0.0, %v6848
  %v6850 = vpop.f32.mrf.mxu0
  %v6851 = vadd.f32 0.0, %v6850
  %6852 = vmatmul.bf16.gmra.mxu0 %v6673
  %v6853 = vpop.f32.mrf.mxu0
  %v6854 = vadd.f32 0.0, %v6853
  %v6855 = vpop.f32.mrf.mxu0
  %v6856 = vadd.f32 0.0, %v6855
  %6857 = vmatmul.bf16.gmra.mxu0 %v6718
  %v6858 = vpop.f32.mrf.mxu0
  %v6859 = vadd.f32 0.0, %v6858
  %v6860 = vpop.f32.mrf.mxu0
  %v6861 = vadd.f32 0.0, %v6860
  %6862 = vmatmul.bf16.gmra.mxu0 %v6721
  %v6863 = vpop.f32.mrf.mxu0
  %v6864 = vadd.f32 0.0, %v6863
  %v6865 = vpop.f32.mrf.mxu0
  %v6866 = vadd.f32 0.0, %v6865
  %6867 = vmatmul.bf16.gmra.mxu0 %v6724
  %v6868 = vpop.f32.mrf.mxu0
  %v6869 = vadd.f32 0.0, %v6868
  %v6870 = vpop.f32.mrf.mxu0
  %v6871 = vadd.f32 0.0, %v6870
  %6872 = vmatmul.bf16.gmra.mxu0 %v6727
  %v6873 = vpop.f32.mrf.mxu0
  %v6874 = vadd.f32 0.0, %v6873
  %v6875 = vpop.f32.mrf.mxu0
  %v6876 = vadd.f32 0.0, %v6875
  %6877 = vmatmul.bf16.gmra.mxu0 %v6730
  %v6878 = vpop.f32.mrf.mxu0
  %v6879 = vadd.f32 0.0, %v6878
  %v6880 = vpop.f32.mrf.mxu0
  %v6881 = vadd.f32 0.0, %v6880
  %6882 = vmatmul.bf16.gmra.mxu0 %v6733
  %v6883 = vpop.f32.mrf.mxu0
  %v6884 = vadd.f32 0.0, %v6883
  %v6885 = vpop.f32.mrf.mxu0
  %v6886 = vadd.f32 0.0, %v6885
  %6887 = vmatmul.bf16.gmra.mxu0 %v6736
  %v6888 = vpop.f32.mrf.mxu0
  %v6889 = vadd.f32 0.0, %v6888
  %v6890 = vpop.f32.mrf.mxu0
  %v6891 = vadd.f32 0.0, %v6890
  %6892 = vmatmul.bf16.gmra.mxu0 %v6739
  %v6893 = vpop.f32.mrf.mxu0
  %v6894 = vadd.f32 0.0, %v6893
  %v6895 = vpop.f32.mrf.mxu0
  %v6896 = vadd.f32 0.0, %v6895
  %6897 = vmatmul.bf16.gmra.mxu0 %v6742
  %v6898 = vpop.f32.mrf.mxu0
  %v6899 = vadd.f32 0.0, %v6898
  %v6900 = vpop.f32.mrf.mxu0
  %v6901 = vadd.f32 0.0, %v6900
  %6902 = vmatmul.bf16.gmra.mxu0 %v6745
  %v6903 = vpop.f32.mrf.mxu0
  %v6904 = vadd.f32 0.0, %v6903
  %v6905 = vpop.f32.mrf.mxu0
  %v6906 = vadd.f32 0.0, %v6905
  %6907 = vmatmul.bf16.gmra.mxu0 %v6748
  %v6908 = vpop.f32.mrf.mxu0
  %v6909 = vadd.f32 0.0, %v6908
  %v6910 = vpop.f32.mrf.mxu0
  %v6911 = vadd.f32 0.0, %v6910
  %6912 = vmatmul.bf16.gmra.mxu0 %v6751
  %v6913 = vpop.f32.mrf.mxu0
  %v6914 = vadd.f32 0.0, %v6913
  %v6915 = vpop.f32.mrf.mxu0
  %v6916 = vadd.f32 0.0, %v6915
  %6917 = vmatmul.bf16.gmra.mxu0 %v6754
  %v6918 = vpop.f32.mrf.mxu0
  %v6919 = vadd.f32 0.0, %v6918
  %v6920 = vpop.f32.mrf.mxu0
  %v6921 = vadd.f32 0.0, %v6920
  %6922 = vmatmul.bf16.gmra.mxu0 %v6757
  %v6923 = vpop.f32.mrf.mxu0
  %v6924 = vadd.f32 0.0, %v6923
  %v6925 = vpop.f32.mrf.mxu0
  %v6926 = vadd.f32 0.0, %v6925
  %6927 = vdwg.mxu0
  %v6928 = vadd.f32 %v6387, %v6769
  %v6929 = vadd.f32 %v6388, %v6771
  %v6930 = vadd.f32 %v6389, %v6774
  %v6931 = vadd.f32 %v6390, %v6776
  %v6932 = vadd.f32 %v6391, %v6779
  %v6933 = vadd.f32 %v6392, %v6781
  %v6934 = vadd.f32 %v6393, %v6784
  %v6935 = vadd.f32 %v6394, %v6786
  %v6936 = vadd.f32 %v6395, %v6789
  %v6937 = vadd.f32 %v6396, %v6791
  %v6938 = vadd.f32 %v6397, %v6794
  %v6939 = vadd.f32 %v6398, %v6796
  %v6940 = vadd.f32 %v6399, %v6799
  %v6941 = vadd.f32 %v6400, %v6801
  %v6942 = vadd.f32 %v6401, %v6804
  %v6943 = vadd.f32 %v6402, %v6806
  %v6944 = vadd.f32 %v6403, %v6809
  %v6945 = vadd.f32 %v6404, %v6811
  %v6946 = vadd.f32 %v6405, %v6814
  %v6947 = vadd.f32 %v6406, %v6816
  %v6948 = vadd.f32 %v6407, %v6819
  %v6949 = vadd.f32 %v6408, %v6821
  %v6950 = vadd.f32 %v6409, %v6824
  %v6951 = vadd.f32 %v6410, %v6826
  %v6952 = vadd.f32 %v6411, %v6829
  %v6953 = vadd.f32 %v6412, %v6831
  %v6954 = vadd.f32 %v6413, %v6834
  %v6955 = vadd.f32 %v6414, %v6836
  %v6956 = vadd.f32 %v6415, %v6839
  %v6957 = vadd.f32 %v6416, %v6841
  %v6958 = vadd.f32 %v6417, %v6844
  %v6959 = vadd.f32 %v6418, %v6846
  %v6960 = vadd.f32 %v6419, %v6849
  %v6961 = vadd.f32 %v6420, %v6851
  %v6962 = vadd.f32 %v6421, %v6854
  %v6963 = vadd.f32 %v6422, %v6856
  %v6964 = vadd.f32 %v6423, %v6859
  %v6965 = vadd.f32 %v6424, %v6861
  %v6966 = vadd.f32 %v6425, %v6864
  %v6967 = vadd.f32 %v6426, %v6866
  %v6968 = vadd.f32 %v6427, %v6869
  %v6969 = vadd.f32 %v6428, %v6871
  %v6970 = vadd.f32 %v6429, %v6874
  %v6971 = vadd.f32 %v6430, %v6876
  %v6972 = vadd.f32 %v6431, %v6879
  %v6973 = vadd.f32 %v6432, %v6881
  %v6974 = vadd.f32 %v6433, %v6884
  %v6975 = vadd.f32 %v6434, %v6886
  %v6976 = vadd.f32 %v6435, %v6889
  %v6977 = vadd.f32 %v6436, %v6891
  %v6978 = vadd.f32 %v6437, %v6894
  %v6979 = vadd.f32 %v6438, %v6896
  %v6980 = vadd.f32 %v6439, %v6899
  %v6981 = vadd.f32 %v6440, %v6901
  %v6982 = vadd.f32 %v6441, %v6904
  %v6983 = vadd.f32 %v6442, %v6906
  %v6984 = vadd.f32 %v6443, %v6909
  %v6985 = vadd.f32 %v6444, %v6911
  %v6986 = vadd.f32 %v6445, %v6914
  %v6987 = vadd.f32 %v6446, %v6916
  %v6988 = vadd.f32 %v6447, %v6919
  %v6989 = vadd.f32 %v6448, %v6921
  %v6990 = vadd.f32 %v6449, %v6924
  %v6991 = vadd.f32 %v6450, %v6926
  %v6992 = vrot.slane %v3930, 4
  %v6993 = vrot.slane %v3933, 5
  %v6994 = vor.u32 %v6992, %v6993
  %v6995 = vrot.slane %v3937, 4
  %v6996 = vrot.slane %v3940, 5
  %v6997 = vor.u32 %v6995, %v6996
  %v6998 = vsel %vm6451, %v6994, %v6997
  %v6999 = vrot.slane %v3945, 4
  %v7000 = vrot.slane %v3948, 5
  %v7001 = vor.u32 %v6999, %v7000
  %v7002 = vrot.slane %v3952, 4
  %v7003 = vrot.slane %v3955, 5
  %v7004 = vor.u32 %v7002, %v7003
  %v7005 = vsel %vm6451, %v7001, %v7004
  %s7006 = scalar_lea.vmem %s5, 128
  %v7007 = vld [vmem:[%s7006] sm:$0xf]
  %v7008 = vld [vmem:[%s7006 + $0x4] sm:$0xf]
  %v7009 = vld [vmem:[%s7006 + $0x8] sm:$0xf]
  %v7010 = vld [vmem:[%s7006 + $0xc] sm:$0xf]
  %v7015 = vunpack.c.l.b16 %v7007
  %v7016 = vunpack.c.l.b16 %v7008
  %v7017 = vunpack.c.l.b16 %v7009
  %v7018 = vunpack.c.l.b16 %v7010
  %v7019 = vpack.c.b16 %v7016, %v7015
  %v7020 = vpack.c.b16 %v7018, %v7017
  %v7024 = vsel %vm1947, %v6998, 0
  %v7027 = vsel %vm1947, %v7005, 0
  %7029 = vmatpush.bf16.msra.mxu0 0
  %7030 = vmatpush.bf16.msra.mxu0 0
  %7031 = vmatpush.bf16.msra.mxu0 0
  %7032 = vmatpush.bf16.msra.mxu0 0
  %7033 = vmatpush.bf16.msra.mxu0 0
  %7034 = vmatpush.bf16.msra.mxu0 0
  %7035 = vmatpush.bf16.msra.mxu0 %v7020
  %7036 = vmatpush.bf16.msra.mxu0 %v7019
  %7037 = vmatmul.bf16.gmra.mxu0 %v6673
  %v7038 = vpop.f32.mrf.mxu0
  %v7039 = vadd.f32 0.0, %v7038
  %v7040 = vpop.f32.mrf.mxu0
  %v7041 = vadd.f32 0.0, %v7040
  %7042 = vmatmul.bf16.gmra.mxu0 %v6676
  %v7043 = vpop.f32.mrf.mxu0
  %v7044 = vadd.f32 0.0, %v7043
  %v7045 = vpop.f32.mrf.mxu0
  %v7046 = vadd.f32 0.0, %v7045
  %7047 = vmatmul.bf16.gmra.mxu0 %v6679
  %v7048 = vpop.f32.mrf.mxu0
  %v7049 = vadd.f32 0.0, %v7048
  %v7050 = vpop.f32.mrf.mxu0
  %v7051 = vadd.f32 0.0, %v7050
  %7052 = vmatmul.bf16.gmra.mxu0 %v6682
  %v7053 = vpop.f32.mrf.mxu0
  %v7054 = vadd.f32 0.0, %v7053
  %v7055 = vpop.f32.mrf.mxu0
  %v7056 = vadd.f32 0.0, %v7055
  %7057 = vmatmul.bf16.gmra.mxu0 %v6685
  %v7058 = vpop.f32.mrf.mxu0
  %v7059 = vadd.f32 0.0, %v7058
  %v7060 = vpop.f32.mrf.mxu0
  %v7061 = vadd.f32 0.0, %v7060
  %7062 = vmatmul.bf16.gmra.mxu0 %v6688
  %v7063 = vpop.f32.mrf.mxu0
  %v7064 = vadd.f32 0.0, %v7063
  %v7065 = vpop.f32.mrf.mxu0
  %v7066 = vadd.f32 0.0, %v7065
  %7067 = vmatmul.bf16.gmra.mxu0 %v6691
  %v7068 = vpop.f32.mrf.mxu0
  %v7069 = vadd.f32 0.0, %v7068
  %v7070 = vpop.f32.mrf.mxu0
  %v7071 = vadd.f32 0.0, %v7070
  %7072 = vmatmul.bf16.gmra.mxu0 %v6694
  %v7073 = vpop.f32.mrf.mxu0
  %v7074 = vadd.f32 0.0, %v7073
  %v7075 = vpop.f32.mrf.mxu0
  %v7076 = vadd.f32 0.0, %v7075
  %7077 = vmatmul.bf16.gmra.mxu0 %v6697
  %v7078 = vpop.f32.mrf.mxu0
  %v7079 = vadd.f32 0.0, %v7078
  %v7080 = vpop.f32.mrf.mxu0
  %v7081 = vadd.f32 0.0, %v7080
  %7082 = vmatmul.bf16.gmra.mxu0 %v6700
  %v7083 = vpop.f32.mrf.mxu0
  %v7084 = vadd.f32 0.0, %v7083
  %v7085 = vpop.f32.mrf.mxu0
  %v7086 = vadd.f32 0.0, %v7085
  %7087 = vmatmul.bf16.gmra.mxu0 %v6703
  %v7088 = vpop.f32.mrf.mxu0
  %v7089 = vadd.f32 0.0, %v7088
  %v7090 = vpop.f32.mrf.mxu0
  %v7091 = vadd.f32 0.0, %v7090
  %7092 = vmatmul.bf16.gmra.mxu0 %v6706
  %v7093 = vpop.f32.mrf.mxu0
  %v7094 = vadd.f32 0.0, %v7093
  %v7095 = vpop.f32.mrf.mxu0
  %v7096 = vadd.f32 0.0, %v7095
  %7097 = vmatmul.bf16.gmra.mxu0 %v6709
  %v7098 = vpop.f32.mrf.mxu0
  %v7099 = vadd.f32 0.0, %v7098
  %v7100 = vpop.f32.mrf.mxu0
  %v7101 = vadd.f32 0.0, %v7100
  %7102 = vmatmul.bf16.gmra.mxu0 %v6712
  %v7103 = vpop.f32.mrf.mxu0
  %v7104 = vadd.f32 0.0, %v7103
  %v7105 = vpop.f32.mrf.mxu0
  %v7106 = vadd.f32 0.0, %v7105
  %7107 = vmatmul.bf16.gmra.mxu0 %v6715
  %v7108 = vpop.f32.mrf.mxu0
  %v7109 = vadd.f32 0.0, %v7108
  %v7110 = vpop.f32.mrf.mxu0
  %v7111 = vadd.f32 0.0, %v7110
  %7112 = vmatmul.bf16.gmra.mxu0 %v7024
  %v7113 = vpop.f32.mrf.mxu0
  %v7114 = vadd.f32 0.0, %v7113
  %v7115 = vpop.f32.mrf.mxu0
  %v7116 = vadd.f32 0.0, %v7115
  %7117 = vmatmul.bf16.gmra.mxu0 %v6673
  %v7118 = vpop.f32.mrf.mxu0
  %v7119 = vadd.f32 0.0, %v7118
  %v7120 = vpop.f32.mrf.mxu0
  %v7121 = vadd.f32 0.0, %v7120
  %7122 = vmatmul.bf16.gmra.mxu0 %v6718
  %v7123 = vpop.f32.mrf.mxu0
  %v7124 = vadd.f32 0.0, %v7123
  %v7125 = vpop.f32.mrf.mxu0
  %v7126 = vadd.f32 0.0, %v7125
  %7127 = vmatmul.bf16.gmra.mxu0 %v6721
  %v7128 = vpop.f32.mrf.mxu0
  %v7129 = vadd.f32 0.0, %v7128
  %v7130 = vpop.f32.mrf.mxu0
  %v7131 = vadd.f32 0.0, %v7130
  %7132 = vmatmul.bf16.gmra.mxu0 %v6724
  %v7133 = vpop.f32.mrf.mxu0
  %v7134 = vadd.f32 0.0, %v7133
  %v7135 = vpop.f32.mrf.mxu0
  %v7136 = vadd.f32 0.0, %v7135
  %7137 = vmatmul.bf16.gmra.mxu0 %v6727
  %v7138 = vpop.f32.mrf.mxu0
  %v7139 = vadd.f32 0.0, %v7138
  %v7140 = vpop.f32.mrf.mxu0
  %v7141 = vadd.f32 0.0, %v7140
  %7142 = vmatmul.bf16.gmra.mxu0 %v6730
  %v7143 = vpop.f32.mrf.mxu0
  %v7144 = vadd.f32 0.0, %v7143
  %v7145 = vpop.f32.mrf.mxu0
  %v7146 = vadd.f32 0.0, %v7145
  %7147 = vmatmul.bf16.gmra.mxu0 %v6733
  %v7148 = vpop.f32.mrf.mxu0
  %v7149 = vadd.f32 0.0, %v7148
  %v7150 = vpop.f32.mrf.mxu0
  %v7151 = vadd.f32 0.0, %v7150
  %7152 = vmatmul.bf16.gmra.mxu0 %v6736
  %v7153 = vpop.f32.mrf.mxu0
  %v7154 = vadd.f32 0.0, %v7153
  %v7155 = vpop.f32.mrf.mxu0
  %v7156 = vadd.f32 0.0, %v7155
  %7157 = vmatmul.bf16.gmra.mxu0 %v6739
  %v7158 = vpop.f32.mrf.mxu0
  %v7159 = vadd.f32 0.0, %v7158
  %v7160 = vpop.f32.mrf.mxu0
  %v7161 = vadd.f32 0.0, %v7160
  %7162 = vmatmul.bf16.gmra.mxu0 %v6742
  %v7163 = vpop.f32.mrf.mxu0
  %v7164 = vadd.f32 0.0, %v7163
  %v7165 = vpop.f32.mrf.mxu0
  %v7166 = vadd.f32 0.0, %v7165
  %7167 = vmatmul.bf16.gmra.mxu0 %v6745
  %v7168 = vpop.f32.mrf.mxu0
  %v7169 = vadd.f32 0.0, %v7168
  %v7170 = vpop.f32.mrf.mxu0
  %v7171 = vadd.f32 0.0, %v7170
  %7172 = vmatmul.bf16.gmra.mxu0 %v6748
  %v7173 = vpop.f32.mrf.mxu0
  %v7174 = vadd.f32 0.0, %v7173
  %v7175 = vpop.f32.mrf.mxu0
  %v7176 = vadd.f32 0.0, %v7175
  %7177 = vmatmul.bf16.gmra.mxu0 %v6751
  %v7178 = vpop.f32.mrf.mxu0
  %v7179 = vadd.f32 0.0, %v7178
  %v7180 = vpop.f32.mrf.mxu0
  %v7181 = vadd.f32 0.0, %v7180
  %7182 = vmatmul.bf16.gmra.mxu0 %v6754
  %v7183 = vpop.f32.mrf.mxu0
  %v7184 = vadd.f32 0.0, %v7183
  %v7185 = vpop.f32.mrf.mxu0
  %v7186 = vadd.f32 0.0, %v7185
  %7187 = vmatmul.bf16.gmra.mxu0 %v6757
  %v7188 = vpop.f32.mrf.mxu0
  %v7189 = vadd.f32 0.0, %v7188
  %v7190 = vpop.f32.mrf.mxu0
  %v7191 = vadd.f32 0.0, %v7190
  %7192 = vmatmul.bf16.gmra.mxu0 %v7027
  %v7193 = vpop.f32.mrf.mxu0
  %v7194 = vadd.f32 0.0, %v7193
  %v7195 = vpop.f32.mrf.mxu0
  %v7196 = vadd.f32 0.0, %v7195
  %7197 = vdwg.mxu0
  %v7198 = vadd.f32 %v6928, %v7039
  %v7199 = vadd.f32 %v6929, %v7041
  %v7200 = vadd.f32 %v6930, %v7044
  %v7201 = vadd.f32 %v6931, %v7046
  %v7202 = vadd.f32 %v6932, %v7049
  %v7203 = vadd.f32 %v6933, %v7051
  %v7204 = vadd.f32 %v6934, %v7054
  %v7205 = vadd.f32 %v6935, %v7056
  %v7206 = vadd.f32 %v6936, %v7059
  %v7207 = vadd.f32 %v6937, %v7061
  %v7208 = vadd.f32 %v6938, %v7064
  %v7209 = vadd.f32 %v6939, %v7066
  %v7210 = vadd.f32 %v6940, %v7069
  %v7211 = vadd.f32 %v6941, %v7071
  %v7212 = vadd.f32 %v6942, %v7074
  %v7213 = vadd.f32 %v6943, %v7076
  %v7214 = vadd.f32 %v6944, %v7079
  %v7215 = vadd.f32 %v6945, %v7081
  %v7216 = vadd.f32 %v6946, %v7084
  %v7217 = vadd.f32 %v6947, %v7086
  %v7218 = vadd.f32 %v6948, %v7089
  %v7219 = vadd.f32 %v6949, %v7091
  %v7220 = vadd.f32 %v6950, %v7094
  %v7221 = vadd.f32 %v6951, %v7096
  %v7222 = vadd.f32 %v6952, %v7099
  %v7223 = vadd.f32 %v6953, %v7101
  %v7224 = vadd.f32 %v6954, %v7104
  %v7225 = vadd.f32 %v6955, %v7106
  %v7226 = vadd.f32 %v6956, %v7109
  %v7227 = vadd.f32 %v6957, %v7111
  %v7228 = vadd.f32 %v6958, %v7114
  %v7229 = vadd.f32 %v6959, %v7116
  %v7230 = vadd.f32 %v6960, %v7119
  %v7231 = vadd.f32 %v6961, %v7121
  %v7232 = vadd.f32 %v6962, %v7124
  %v7233 = vadd.f32 %v6963, %v7126
  %v7234 = vadd.f32 %v6964, %v7129
  %v7235 = vadd.f32 %v6965, %v7131
  %v7236 = vadd.f32 %v6966, %v7134
  %v7237 = vadd.f32 %v6967, %v7136
  %v7238 = vadd.f32 %v6968, %v7139
  %v7239 = vadd.f32 %v6969, %v7141
  %v7240 = vadd.f32 %v6970, %v7144
  %v7241 = vadd.f32 %v6971, %v7146
  %v7242 = vadd.f32 %v6972, %v7149
  %v7243 = vadd.f32 %v6973, %v7151
  %v7244 = vadd.f32 %v6974, %v7154
  %v7245 = vadd.f32 %v6975, %v7156
  %v7246 = vadd.f32 %v6976, %v7159
  %v7247 = vadd.f32 %v6977, %v7161
  %v7248 = vadd.f32 %v6978, %v7164
  %v7249 = vadd.f32 %v6979, %v7166
  %v7250 = vadd.f32 %v6980, %v7169
  %v7251 = vadd.f32 %v6981, %v7171
  %v7252 = vadd.f32 %v6982, %v7174
  %v7253 = vadd.f32 %v6983, %v7176
  %v7254 = vadd.f32 %v6984, %v7179
  %v7255 = vadd.f32 %v6985, %v7181
  %v7256 = vadd.f32 %v6986, %v7184
  %v7257 = vadd.f32 %v6987, %v7186
  %v7258 = vadd.f32 %v6988, %v7189
  %v7259 = vadd.f32 %v6989, %v7191
  %v7260 = vadd.f32 %v6990, %v7194
  %v7261 = vadd.f32 %v6991, %v7196
  %v7262 = vrot.slane %v4216, 4
  %v7263 = vrot.slane %v4219, 5
  %v7264 = vor.u32 %v7262, %v7263
  %v7265 = vrot.slane %v4223, 4
  %v7266 = vrot.slane %v4226, 5
  %v7267 = vor.u32 %v7265, %v7266
  %v7268 = vsel %vm6451, %v7264, %v7267
  %v7269 = vrot.slane %v4231, 4
  %v7270 = vrot.slane %v4234, 5
  %v7271 = vor.u32 %v7269, %v7270
  %v7272 = vrot.slane %v4238, 4
  %v7273 = vrot.slane %v4241, 5
  %v7274 = vor.u32 %v7272, %v7273
  %v7275 = vsel %vm6451, %v7271, %v7274
  %s7276 = scalar_lea.vmem %s5, 208
  %v7277 = vld [vmem:[%s7276] sm:$0xf]
  %v7278 = vld [vmem:[%s7276 + $0x4] sm:$0xf]
  %v7279 = vld [vmem:[%s7276 + $0x8] sm:$0xf]
  %v7280 = vld [vmem:[%s7276 + $0xc] sm:$0xf]
  %v7285 = vunpack.c.l.b16 %v7277
  %v7286 = vunpack.c.l.b16 %v7278
  %v7287 = vunpack.c.l.b16 %v7279
  %v7288 = vunpack.c.l.b16 %v7280
  %v7289 = vpack.c.b16 %v7286, %v7285
  %v7290 = vpack.c.b16 %v7288, %v7287
  %v7294 = vsel %vm1947, %v7268, 0
  %v7297 = vsel %vm1947, %v7275, 0
  %7299 = vmatpush.bf16.msra.mxu0 0
  %7300 = vmatpush.bf16.msra.mxu0 0
  %7301 = vmatpush.bf16.msra.mxu0 0
  %7302 = vmatpush.bf16.msra.mxu0 0
  %7303 = vmatpush.bf16.msra.mxu0 0
  %7304 = vmatpush.bf16.msra.mxu0 0
  %7305 = vmatpush.bf16.msra.mxu0 %v7290
  %7306 = vmatpush.bf16.msra.mxu0 %v7289
  %7307 = vmatmul.bf16.gmra.mxu0 %v6676
  %v7308 = vpop.f32.mrf.mxu0
  %v7309 = vadd.f32 0.0, %v7308
  %v7310 = vpop.f32.mrf.mxu0
  %v7311 = vadd.f32 0.0, %v7310
  %7312 = vmatmul.bf16.gmra.mxu0 %v6679
  %v7313 = vpop.f32.mrf.mxu0
  %v7314 = vadd.f32 0.0, %v7313
  %v7315 = vpop.f32.mrf.mxu0
  %v7316 = vadd.f32 0.0, %v7315
  %7317 = vmatmul.bf16.gmra.mxu0 %v6682
  %v7318 = vpop.f32.mrf.mxu0
  %v7319 = vadd.f32 0.0, %v7318
  %v7320 = vpop.f32.mrf.mxu0
  %v7321 = vadd.f32 0.0, %v7320
  %7322 = vmatmul.bf16.gmra.mxu0 %v6685
  %v7323 = vpop.f32.mrf.mxu0
  %v7324 = vadd.f32 0.0, %v7323
  %v7325 = vpop.f32.mrf.mxu0
  %v7326 = vadd.f32 0.0, %v7325
  %7327 = vmatmul.bf16.gmra.mxu0 %v6688
  %v7328 = vpop.f32.mrf.mxu0
  %v7329 = vadd.f32 0.0, %v7328
  %v7330 = vpop.f32.mrf.mxu0
  %v7331 = vadd.f32 0.0, %v7330
  %7332 = vmatmul.bf16.gmra.mxu0 %v6691
  %v7333 = vpop.f32.mrf.mxu0
  %v7334 = vadd.f32 0.0, %v7333
  %v7335 = vpop.f32.mrf.mxu0
  %v7336 = vadd.f32 0.0, %v7335
  %7337 = vmatmul.bf16.gmra.mxu0 %v6694
  %v7338 = vpop.f32.mrf.mxu0
  %v7339 = vadd.f32 0.0, %v7338
  %v7340 = vpop.f32.mrf.mxu0
  %v7341 = vadd.f32 0.0, %v7340
  %7342 = vmatmul.bf16.gmra.mxu0 %v6697
  %v7343 = vpop.f32.mrf.mxu0
  %v7344 = vadd.f32 0.0, %v7343
  %v7345 = vpop.f32.mrf.mxu0
  %v7346 = vadd.f32 0.0, %v7345
  %7347 = vmatmul.bf16.gmra.mxu0 %v6700
  %v7348 = vpop.f32.mrf.mxu0
  %v7349 = vadd.f32 0.0, %v7348
  %v7350 = vpop.f32.mrf.mxu0
  %v7351 = vadd.f32 0.0, %v7350
  %7352 = vmatmul.bf16.gmra.mxu0 %v6703
  %v7353 = vpop.f32.mrf.mxu0
  %v7354 = vadd.f32 0.0, %v7353
  %v7355 = vpop.f32.mrf.mxu0
  %v7356 = vadd.f32 0.0, %v7355
  %7357 = vmatmul.bf16.gmra.mxu0 %v6706
  %v7358 = vpop.f32.mrf.mxu0
  %v7359 = vadd.f32 0.0, %v7358
  %v7360 = vpop.f32.mrf.mxu0
  %v7361 = vadd.f32 0.0, %v7360
  %7362 = vmatmul.bf16.gmra.mxu0 %v6709
  %v7363 = vpop.f32.mrf.mxu0
  %v7364 = vadd.f32 0.0, %v7363
  %v7365 = vpop.f32.mrf.mxu0
  %v7366 = vadd.f32 0.0, %v7365
  %7367 = vmatmul.bf16.gmra.mxu0 %v6712
  %v7368 = vpop.f32.mrf.mxu0
  %v7369 = vadd.f32 0.0, %v7368
  %v7370 = vpop.f32.mrf.mxu0
  %v7371 = vadd.f32 0.0, %v7370
  %7372 = vmatmul.bf16.gmra.mxu0 %v6715
  %v7373 = vpop.f32.mrf.mxu0
  %v7374 = vadd.f32 0.0, %v7373
  %v7375 = vpop.f32.mrf.mxu0
  %v7376 = vadd.f32 0.0, %v7375
  %7377 = vmatmul.bf16.gmra.mxu0 %v7024
  %v7378 = vpop.f32.mrf.mxu0
  %v7379 = vadd.f32 0.0, %v7378
  %v7380 = vpop.f32.mrf.mxu0
  %v7381 = vadd.f32 0.0, %v7380
  %7382 = vmatmul.bf16.gmra.mxu0 %v7294
  %v7383 = vpop.f32.mrf.mxu0
  %v7384 = vadd.f32 0.0, %v7383
  %v7385 = vpop.f32.mrf.mxu0
  %v7386 = vadd.f32 0.0, %v7385
  %7387 = vmatmul.bf16.gmra.mxu0 %v6718
  %v7388 = vpop.f32.mrf.mxu0
  %v7389 = vadd.f32 0.0, %v7388
  %v7390 = vpop.f32.mrf.mxu0
  %v7391 = vadd.f32 0.0, %v7390
  %7392 = vmatmul.bf16.gmra.mxu0 %v6721
  %v7393 = vpop.f32.mrf.mxu0
  %v7394 = vadd.f32 0.0, %v7393
  %v7395 = vpop.f32.mrf.mxu0
  %v7396 = vadd.f32 0.0, %v7395
  %7397 = vmatmul.bf16.gmra.mxu0 %v6724
  %v7398 = vpop.f32.mrf.mxu0
  %v7399 = vadd.f32 0.0, %v7398
  %v7400 = vpop.f32.mrf.mxu0
  %v7401 = vadd.f32 0.0, %v7400
  %7402 = vmatmul.bf16.gmra.mxu0 %v6727
  %v7403 = vpop.f32.mrf.mxu0
  %v7404 = vadd.f32 0.0, %v7403
  %v7405 = vpop.f32.mrf.mxu0
  %v7406 = vadd.f32 0.0, %v7405
  %7407 = vmatmul.bf16.gmra.mxu0 %v6730
  %v7408 = vpop.f32.mrf.mxu0
  %v7409 = vadd.f32 0.0, %v7408
  %v7410 = vpop.f32.mrf.mxu0
  %v7411 = vadd.f32 0.0, %v7410
  %7412 = vmatmul.bf16.gmra.mxu0 %v6733
  %v7413 = vpop.f32.mrf.mxu0
  %v7414 = vadd.f32 0.0, %v7413
  %v7415 = vpop.f32.mrf.mxu0
  %v7416 = vadd.f32 0.0, %v7415
  %7417 = vmatmul.bf16.gmra.mxu0 %v6736
  %v7418 = vpop.f32.mrf.mxu0
  %v7419 = vadd.f32 0.0, %v7418
  %v7420 = vpop.f32.mrf.mxu0
  %v7421 = vadd.f32 0.0, %v7420
  %7422 = vmatmul.bf16.gmra.mxu0 %v6739
  %v7423 = vpop.f32.mrf.mxu0
  %v7424 = vadd.f32 0.0, %v7423
  %v7425 = vpop.f32.mrf.mxu0
  %v7426 = vadd.f32 0.0, %v7425
  %7427 = vmatmul.bf16.gmra.mxu0 %v6742
  %v7428 = vpop.f32.mrf.mxu0
  %v7429 = vadd.f32 0.0, %v7428
  %v7430 = vpop.f32.mrf.mxu0
  %v7431 = vadd.f32 0.0, %v7430
  %7432 = vmatmul.bf16.gmra.mxu0 %v6745
  %v7433 = vpop.f32.mrf.mxu0
  %v7434 = vadd.f32 0.0, %v7433
  %v7435 = vpop.f32.mrf.mxu0
  %v7436 = vadd.f32 0.0, %v7435
  %7437 = vmatmul.bf16.gmra.mxu0 %v6748
  %v7438 = vpop.f32.mrf.mxu0
  %v7439 = vadd.f32 0.0, %v7438
  %v7440 = vpop.f32.mrf.mxu0
  %v7441 = vadd.f32 0.0, %v7440
  %7442 = vmatmul.bf16.gmra.mxu0 %v6751
  %v7443 = vpop.f32.mrf.mxu0
  %v7444 = vadd.f32 0.0, %v7443
  %v7445 = vpop.f32.mrf.mxu0
  %v7446 = vadd.f32 0.0, %v7445
  %7447 = vmatmul.bf16.gmra.mxu0 %v6754
  %v7448 = vpop.f32.mrf.mxu0
  %v7449 = vadd.f32 0.0, %v7448
  %v7450 = vpop.f32.mrf.mxu0
  %v7451 = vadd.f32 0.0, %v7450
  %7452 = vmatmul.bf16.gmra.mxu0 %v6757
  %v7453 = vpop.f32.mrf.mxu0
  %v7454 = vadd.f32 0.0, %v7453
  %v7455 = vpop.f32.mrf.mxu0
  %v7456 = vadd.f32 0.0, %v7455
  %7457 = vmatmul.bf16.gmra.mxu0 %v7027
  %v7458 = vpop.f32.mrf.mxu0
  %v7459 = vadd.f32 0.0, %v7458
  %v7460 = vpop.f32.mrf.mxu0
  %v7461 = vadd.f32 0.0, %v7460
  %7462 = vmatmul.bf16.gmra.mxu0 %v7297
  %v7463 = vpop.f32.mrf.mxu0
  %v7464 = vadd.f32 0.0, %v7463
  %v7465 = vpop.f32.mrf.mxu0
  %v7466 = vadd.f32 0.0, %v7465
  %7467 = vdwg.mxu0
  %v7468 = vadd.f32 %v7198, %v7309
  %v7469 = vadd.f32 %v7199, %v7311
  %v7470 = vadd.f32 %v7200, %v7314
  %v7471 = vadd.f32 %v7201, %v7316
  %v7472 = vadd.f32 %v7202, %v7319
  %v7473 = vadd.f32 %v7203, %v7321
  %v7474 = vadd.f32 %v7204, %v7324
  %v7475 = vadd.f32 %v7205, %v7326
  %v7476 = vadd.f32 %v7206, %v7329
  %v7477 = vadd.f32 %v7207, %v7331
  %v7478 = vadd.f32 %v7208, %v7334
  %v7479 = vadd.f32 %v7209, %v7336
  %v7480 = vadd.f32 %v7210, %v7339
  %v7481 = vadd.f32 %v7211, %v7341
  %v7482 = vadd.f32 %v7212, %v7344
  %v7483 = vadd.f32 %v7213, %v7346
  %v7484 = vadd.f32 %v7214, %v7349
  %v7485 = vadd.f32 %v7215, %v7351
  %v7486 = vadd.f32 %v7216, %v7354
  %v7487 = vadd.f32 %v7217, %v7356
  %v7488 = vadd.f32 %v7218, %v7359
  %v7489 = vadd.f32 %v7219, %v7361
  %v7490 = vadd.f32 %v7220, %v7364
  %v7491 = vadd.f32 %v7221, %v7366
  %v7492 = vadd.f32 %v7222, %v7369
  %v7493 = vadd.f32 %v7223, %v7371
  %v7494 = vadd.f32 %v7224, %v7374
  %v7495 = vadd.f32 %v7225, %v7376
  %v7496 = vadd.f32 %v7226, %v7379
  %v7497 = vadd.f32 %v7227, %v7381
  %v7498 = vadd.f32 %v7228, %v7384
  %v7499 = vadd.f32 %v7229, %v7386
  %v7500 = vadd.f32 %v7230, %v7389
  %v7501 = vadd.f32 %v7231, %v7391
  %v7502 = vadd.f32 %v7232, %v7394
  %v7503 = vadd.f32 %v7233, %v7396
  %v7504 = vadd.f32 %v7234, %v7399
  %v7505 = vadd.f32 %v7235, %v7401
  %v7506 = vadd.f32 %v7236, %v7404
  %v7507 = vadd.f32 %v7237, %v7406
  %v7508 = vadd.f32 %v7238, %v7409
  %v7509 = vadd.f32 %v7239, %v7411
  %v7510 = vadd.f32 %v7240, %v7414
  %v7511 = vadd.f32 %v7241, %v7416
  %v7512 = vadd.f32 %v7242, %v7419
  %v7513 = vadd.f32 %v7243, %v7421
  %v7514 = vadd.f32 %v7244, %v7424
  %v7515 = vadd.f32 %v7245, %v7426
  %v7516 = vadd.f32 %v7246, %v7429
  %v7517 = vadd.f32 %v7247, %v7431
  %v7518 = vadd.f32 %v7248, %v7434
  %v7519 = vadd.f32 %v7249, %v7436
  %v7520 = vadd.f32 %v7250, %v7439
  %v7521 = vadd.f32 %v7251, %v7441
  %v7522 = vadd.f32 %v7252, %v7444
  %v7523 = vadd.f32 %v7253, %v7446
  %v7524 = vadd.f32 %v7254, %v7449
  %v7525 = vadd.f32 %v7255, %v7451
  %v7526 = vadd.f32 %v7256, %v7454
  %v7527 = vadd.f32 %v7257, %v7456
  %v7528 = vadd.f32 %v7258, %v7459
  %v7529 = vadd.f32 %v7259, %v7461
  %v7530 = vadd.f32 %v7260, %v7464
  %v7531 = vadd.f32 %v7261, %v7466
  %s7532 = scalar_lea.vmem %s5, 288
  %v7533 = vld [vmem:[%s7532] sm:$0xf]
  %v7534 = vld [vmem:[%s7532 + $0x4] sm:$0xf]
  %v7535 = vld [vmem:[%s7532 + $0x8] sm:$0xf]
  %v7536 = vld [vmem:[%s7532 + $0xc] sm:$0xf]
  %v7541 = vunpack.c.l.b16 %v7533
  %v7542 = vunpack.c.l.b16 %v7534
  %v7543 = vunpack.c.l.b16 %v7535
  %v7544 = vunpack.c.l.b16 %v7536
  %v7545 = vpack.c.b16 %v7542, %v7541
  %v7546 = vpack.c.b16 %v7544, %v7543
  %7549 = vmatpush.bf16.msra.mxu0 0
  %7550 = vmatpush.bf16.msra.mxu0 0
  %7551 = vmatpush.bf16.msra.mxu0 0
  %7552 = vmatpush.bf16.msra.mxu0 0
  %7553 = vmatpush.bf16.msra.mxu0 0
  %7554 = vmatpush.bf16.msra.mxu0 0
  %7555 = vmatpush.bf16.msra.mxu0 %v7546
  %7556 = vmatpush.bf16.msra.mxu0 %v7545
  %7557 = vmatmul.bf16.gmra.mxu0 %v6679
  %v7558 = vpop.f32.mrf.mxu0
  %v7559 = vadd.f32 0.0, %v7558
  %v7560 = vpop.f32.mrf.mxu0
  %v7561 = vadd.f32 0.0, %v7560
  %7562 = vmatmul.bf16.gmra.mxu0 %v6682
  %v7563 = vpop.f32.mrf.mxu0
  %v7564 = vadd.f32 0.0, %v7563
  %v7565 = vpop.f32.mrf.mxu0
  %v7566 = vadd.f32 0.0, %v7565
  %7567 = vmatmul.bf16.gmra.mxu0 %v6685
  %v7568 = vpop.f32.mrf.mxu0
  %v7569 = vadd.f32 0.0, %v7568
  %v7570 = vpop.f32.mrf.mxu0
  %v7571 = vadd.f32 0.0, %v7570
  %7572 = vmatmul.bf16.gmra.mxu0 %v6688
  %v7573 = vpop.f32.mrf.mxu0
  %v7574 = vadd.f32 0.0, %v7573
  %v7575 = vpop.f32.mrf.mxu0
  %v7576 = vadd.f32 0.0, %v7575
  %7577 = vmatmul.bf16.gmra.mxu0 %v6691
  %v7578 = vpop.f32.mrf.mxu0
  %v7579 = vadd.f32 0.0, %v7578
  %v7580 = vpop.f32.mrf.mxu0
  %v7581 = vadd.f32 0.0, %v7580
  %7582 = vmatmul.bf16.gmra.mxu0 %v6694
  %v7583 = vpop.f32.mrf.mxu0
  %v7584 = vadd.f32 0.0, %v7583
  %v7585 = vpop.f32.mrf.mxu0
  %v7586 = vadd.f32 0.0, %v7585
  %7587 = vmatmul.bf16.gmra.mxu0 %v6697
  %v7588 = vpop.f32.mrf.mxu0
  %v7589 = vadd.f32 0.0, %v7588
  %v7590 = vpop.f32.mrf.mxu0
  %v7591 = vadd.f32 0.0, %v7590
  %7592 = vmatmul.bf16.gmra.mxu0 %v6700
  %v7593 = vpop.f32.mrf.mxu0
  %v7594 = vadd.f32 0.0, %v7593
  %v7595 = vpop.f32.mrf.mxu0
  %v7596 = vadd.f32 0.0, %v7595
  %7597 = vmatmul.bf16.gmra.mxu0 %v6703
  %v7598 = vpop.f32.mrf.mxu0
  %v7599 = vadd.f32 0.0, %v7598
  %v7600 = vpop.f32.mrf.mxu0
  %v7601 = vadd.f32 0.0, %v7600
  %7602 = vmatmul.bf16.gmra.mxu0 %v6706
  %v7603 = vpop.f32.mrf.mxu0
  %v7604 = vadd.f32 0.0, %v7603
  %v7605 = vpop.f32.mrf.mxu0
  %v7606 = vadd.f32 0.0, %v7605
  %7607 = vmatmul.bf16.gmra.mxu0 %v6709
  %v7608 = vpop.f32.mrf.mxu0
  %v7609 = vadd.f32 0.0, %v7608
  %v7610 = vpop.f32.mrf.mxu0
  %v7611 = vadd.f32 0.0, %v7610
  %7612 = vmatmul.bf16.gmra.mxu0 %v6712
  %v7613 = vpop.f32.mrf.mxu0
  %v7614 = vadd.f32 0.0, %v7613
  %v7615 = vpop.f32.mrf.mxu0
  %v7616 = vadd.f32 0.0, %v7615
  %7617 = vmatmul.bf16.gmra.mxu0 %v6715
  %v7618 = vpop.f32.mrf.mxu0
  %v7619 = vadd.f32 0.0, %v7618
  %v7620 = vpop.f32.mrf.mxu0
  %v7621 = vadd.f32 0.0, %v7620
  %7622 = vmatmul.bf16.gmra.mxu0 %v7024
  %v7623 = vpop.f32.mrf.mxu0
  %v7624 = vadd.f32 0.0, %v7623
  %v7625 = vpop.f32.mrf.mxu0
  %v7626 = vadd.f32 0.0, %v7625
  %7627 = vmatmul.bf16.gmra.mxu0 %v7294
  %v7628 = vpop.f32.mrf.mxu0
  %v7629 = vadd.f32 0.0, %v7628
  %v7630 = vpop.f32.mrf.mxu0
  %v7631 = vadd.f32 0.0, %v7630
  %7632 = vmatmul.bf16.gmra.mxu0 %v6673
  %v7633 = vpop.f32.mrf.mxu0
  %v7634 = vadd.f32 0.0, %v7633
  %v7635 = vpop.f32.mrf.mxu0
  %v7636 = vadd.f32 0.0, %v7635
  %7637 = vmatmul.bf16.gmra.mxu0 %v6721
  %v7638 = vpop.f32.mrf.mxu0
  %v7639 = vadd.f32 0.0, %v7638
  %v7640 = vpop.f32.mrf.mxu0
  %v7641 = vadd.f32 0.0, %v7640
  %7642 = vmatmul.bf16.gmra.mxu0 %v6724
  %v7643 = vpop.f32.mrf.mxu0
  %v7644 = vadd.f32 0.0, %v7643
  %v7645 = vpop.f32.mrf.mxu0
  %v7646 = vadd.f32 0.0, %v7645
  %7647 = vmatmul.bf16.gmra.mxu0 %v6727
  %v7648 = vpop.f32.mrf.mxu0
  %v7649 = vadd.f32 0.0, %v7648
  %v7650 = vpop.f32.mrf.mxu0
  %v7651 = vadd.f32 0.0, %v7650
  %7652 = vmatmul.bf16.gmra.mxu0 %v6730
  %v7653 = vpop.f32.mrf.mxu0
  %v7654 = vadd.f32 0.0, %v7653
  %v7655 = vpop.f32.mrf.mxu0
  %v7656 = vadd.f32 0.0, %v7655
  %7657 = vmatmul.bf16.gmra.mxu0 %v6733
  %v7658 = vpop.f32.mrf.mxu0
  %v7659 = vadd.f32 0.0, %v7658
  %v7660 = vpop.f32.mrf.mxu0
  %v7661 = vadd.f32 0.0, %v7660
  %7662 = vmatmul.bf16.gmra.mxu0 %v6736
  %v7663 = vpop.f32.mrf.mxu0
  %v7664 = vadd.f32 0.0, %v7663
  %v7665 = vpop.f32.mrf.mxu0
  %v7666 = vadd.f32 0.0, %v7665
  %7667 = vmatmul.bf16.gmra.mxu0 %v6739
  %v7668 = vpop.f32.mrf.mxu0
  %v7669 = vadd.f32 0.0, %v7668
  %v7670 = vpop.f32.mrf.mxu0
  %v7671 = vadd.f32 0.0, %v7670
  %7672 = vmatmul.bf16.gmra.mxu0 %v6742
  %v7673 = vpop.f32.mrf.mxu0
  %v7674 = vadd.f32 0.0, %v7673
  %v7675 = vpop.f32.mrf.mxu0
  %v7676 = vadd.f32 0.0, %v7675
  %7677 = vmatmul.bf16.gmra.mxu0 %v6745
  %v7678 = vpop.f32.mrf.mxu0
  %v7679 = vadd.f32 0.0, %v7678
  %v7680 = vpop.f32.mrf.mxu0
  %v7681 = vadd.f32 0.0, %v7680
  %7682 = vmatmul.bf16.gmra.mxu0 %v6748
  %v7683 = vpop.f32.mrf.mxu0
  %v7684 = vadd.f32 0.0, %v7683
  %v7685 = vpop.f32.mrf.mxu0
  %v7686 = vadd.f32 0.0, %v7685
  %7687 = vmatmul.bf16.gmra.mxu0 %v6751
  %v7688 = vpop.f32.mrf.mxu0
  %v7689 = vadd.f32 0.0, %v7688
  %v7690 = vpop.f32.mrf.mxu0
  %v7691 = vadd.f32 0.0, %v7690
  %7692 = vmatmul.bf16.gmra.mxu0 %v6754
  %v7693 = vpop.f32.mrf.mxu0
  %v7694 = vadd.f32 0.0, %v7693
  %v7695 = vpop.f32.mrf.mxu0
  %v7696 = vadd.f32 0.0, %v7695
  %7697 = vmatmul.bf16.gmra.mxu0 %v6757
  %v7698 = vpop.f32.mrf.mxu0
  %v7699 = vadd.f32 0.0, %v7698
  %v7700 = vpop.f32.mrf.mxu0
  %v7701 = vadd.f32 0.0, %v7700
  %7702 = vmatmul.bf16.gmra.mxu0 %v7027
  %v7703 = vpop.f32.mrf.mxu0
  %v7704 = vadd.f32 0.0, %v7703
  %v7705 = vpop.f32.mrf.mxu0
  %v7706 = vadd.f32 0.0, %v7705
  %7707 = vmatmul.bf16.gmra.mxu0 %v7297
  %v7708 = vpop.f32.mrf.mxu0
  %v7709 = vadd.f32 0.0, %v7708
  %v7710 = vpop.f32.mrf.mxu0
  %v7711 = vadd.f32 0.0, %v7710
  %7712 = vmatmul.bf16.gmra.mxu0 %v6673
  %v7713 = vpop.f32.mrf.mxu0
  %v7714 = vadd.f32 0.0, %v7713
  %v7715 = vpop.f32.mrf.mxu0
  %v7716 = vadd.f32 0.0, %v7715
  %7717 = vdwg.mxu0
  %v7718 = vadd.f32 %v7468, %v7559
  %v7719 = vadd.f32 %v7469, %v7561
  %v7720 = vadd.f32 %v7470, %v7564
  %v7721 = vadd.f32 %v7471, %v7566
  %v7722 = vadd.f32 %v7472, %v7569
  %v7723 = vadd.f32 %v7473, %v7571
  %v7724 = vadd.f32 %v7474, %v7574
  %v7725 = vadd.f32 %v7475, %v7576
  %v7726 = vadd.f32 %v7476, %v7579
  %v7727 = vadd.f32 %v7477, %v7581
  %v7728 = vadd.f32 %v7478, %v7584
  %v7729 = vadd.f32 %v7479, %v7586
  %v7730 = vadd.f32 %v7480, %v7589
  %v7731 = vadd.f32 %v7481, %v7591
  %v7732 = vadd.f32 %v7482, %v7594
  %v7733 = vadd.f32 %v7483, %v7596
  %v7734 = vadd.f32 %v7484, %v7599
  %v7735 = vadd.f32 %v7485, %v7601
  %v7736 = vadd.f32 %v7486, %v7604
  %v7737 = vadd.f32 %v7487, %v7606
  %v7738 = vadd.f32 %v7488, %v7609
  %v7739 = vadd.f32 %v7489, %v7611
  %v7740 = vadd.f32 %v7490, %v7614
  %v7741 = vadd.f32 %v7491, %v7616
  %v7742 = vadd.f32 %v7492, %v7619
  %v7743 = vadd.f32 %v7493, %v7621
  %v7744 = vadd.f32 %v7494, %v7624
  %v7745 = vadd.f32 %v7495, %v7626
  %v7746 = vadd.f32 %v7496, %v7629
  %v7747 = vadd.f32 %v7497, %v7631
  %v7748 = vadd.f32 %v7498, %v7634
  %v7749 = vadd.f32 %v7499, %v7636
  %v7750 = vadd.f32 %v7500, %v7639
  %v7751 = vadd.f32 %v7501, %v7641
  %v7752 = vadd.f32 %v7502, %v7644
  %v7753 = vadd.f32 %v7503, %v7646
  %v7754 = vadd.f32 %v7504, %v7649
  %v7755 = vadd.f32 %v7505, %v7651
  %v7756 = vadd.f32 %v7506, %v7654
  %v7757 = vadd.f32 %v7507, %v7656
  %v7758 = vadd.f32 %v7508, %v7659
  %v7759 = vadd.f32 %v7509, %v7661
  %v7760 = vadd.f32 %v7510, %v7664
  %v7761 = vadd.f32 %v7511, %v7666
  %v7762 = vadd.f32 %v7512, %v7669
  %v7763 = vadd.f32 %v7513, %v7671
  %v7764 = vadd.f32 %v7514, %v7674
  %v7765 = vadd.f32 %v7515, %v7676
  %v7766 = vadd.f32 %v7516, %v7679
  %v7767 = vadd.f32 %v7517, %v7681
  %v7768 = vadd.f32 %v7518, %v7684
  %v7769 = vadd.f32 %v7519, %v7686
  %v7770 = vadd.f32 %v7520, %v7689
  %v7771 = vadd.f32 %v7521, %v7691
  %v7772 = vadd.f32 %v7522, %v7694
  %v7773 = vadd.f32 %v7523, %v7696
  %v7774 = vadd.f32 %v7524, %v7699
  %v7775 = vadd.f32 %v7525, %v7701
  %v7776 = vadd.f32 %v7526, %v7704
  %v7777 = vadd.f32 %v7527, %v7706
  %v7778 = vadd.f32 %v7528, %v7709
  %v7779 = vadd.f32 %v7529, %v7711
  %v7780 = vadd.f32 %v7530, %v7714
  %v7781 = vadd.f32 %v7531, %v7716
  %s7782 = scalar_lea.vmem %s5, 368
  %v7783 = vld [vmem:[%s7782] sm:$0xf]
  %v7784 = vld [vmem:[%s7782 + $0x4] sm:$0xf]
  %v7785 = vld [vmem:[%s7782 + $0x8] sm:$0xf]
  %v7786 = vld [vmem:[%s7782 + $0xc] sm:$0xf]
  %v7791 = vunpack.c.l.b16 %v7783
  %v7792 = vunpack.c.l.b16 %v7784
  %v7793 = vunpack.c.l.b16 %v7785
  %v7794 = vunpack.c.l.b16 %v7786
  %v7795 = vpack.c.b16 %v7792, %v7791
  %v7796 = vpack.c.b16 %v7794, %v7793
  %7799 = vmatpush.bf16.msra.mxu0 0
  %7800 = vmatpush.bf16.msra.mxu0 0
  %7801 = vmatpush.bf16.msra.mxu0 0
  %7802 = vmatpush.bf16.msra.mxu0 0
  %7803 = vmatpush.bf16.msra.mxu0 0
  %7804 = vmatpush.bf16.msra.mxu0 0
  %7805 = vmatpush.bf16.msra.mxu0 %v7796
  %7806 = vmatpush.bf16.msra.mxu0 %v7795
  %7807 = vmatmul.bf16.gmra.mxu0 %v6682
  %v7808 = vpop.f32.mrf.mxu0
  %v7809 = vadd.f32 0.0, %v7808
  %v7810 = vpop.f32.mrf.mxu0
  %v7811 = vadd.f32 0.0, %v7810
  %7812 = vmatmul.bf16.gmra.mxu0 %v6685
  %v7813 = vpop.f32.mrf.mxu0
  %v7814 = vadd.f32 0.0, %v7813
  %v7815 = vpop.f32.mrf.mxu0
  %v7816 = vadd.f32 0.0, %v7815
  %7817 = vmatmul.bf16.gmra.mxu0 %v6688
  %v7818 = vpop.f32.mrf.mxu0
  %v7819 = vadd.f32 0.0, %v7818
  %v7820 = vpop.f32.mrf.mxu0
  %v7821 = vadd.f32 0.0, %v7820
  %7822 = vmatmul.bf16.gmra.mxu0 %v6691
  %v7823 = vpop.f32.mrf.mxu0
  %v7824 = vadd.f32 0.0, %v7823
  %v7825 = vpop.f32.mrf.mxu0
  %v7826 = vadd.f32 0.0, %v7825
  %7827 = vmatmul.bf16.gmra.mxu0 %v6694
  %v7828 = vpop.f32.mrf.mxu0
  %v7829 = vadd.f32 0.0, %v7828
  %v7830 = vpop.f32.mrf.mxu0
  %v7831 = vadd.f32 0.0, %v7830
  %7832 = vmatmul.bf16.gmra.mxu0 %v6697
  %v7833 = vpop.f32.mrf.mxu0
  %v7834 = vadd.f32 0.0, %v7833
  %v7835 = vpop.f32.mrf.mxu0
  %v7836 = vadd.f32 0.0, %v7835
  %7837 = vmatmul.bf16.gmra.mxu0 %v6700
  %v7838 = vpop.f32.mrf.mxu0
  %v7839 = vadd.f32 0.0, %v7838
  %v7840 = vpop.f32.mrf.mxu0
  %v7841 = vadd.f32 0.0, %v7840
  %7842 = vmatmul.bf16.gmra.mxu0 %v6703
  %v7843 = vpop.f32.mrf.mxu0
  %v7844 = vadd.f32 0.0, %v7843
  %v7845 = vpop.f32.mrf.mxu0
  %v7846 = vadd.f32 0.0, %v7845
  %7847 = vmatmul.bf16.gmra.mxu0 %v6706
  %v7848 = vpop.f32.mrf.mxu0
  %v7849 = vadd.f32 0.0, %v7848
  %v7850 = vpop.f32.mrf.mxu0
  %v7851 = vadd.f32 0.0, %v7850
  %7852 = vmatmul.bf16.gmra.mxu0 %v6709
  %v7853 = vpop.f32.mrf.mxu0
  %v7854 = vadd.f32 0.0, %v7853
  %v7855 = vpop.f32.mrf.mxu0
  %v7856 = vadd.f32 0.0, %v7855
  %7857 = vmatmul.bf16.gmra.mxu0 %v6712
  %v7858 = vpop.f32.mrf.mxu0
  %v7859 = vadd.f32 0.0, %v7858
  %v7860 = vpop.f32.mrf.mxu0
  %v7861 = vadd.f32 0.0, %v7860
  %7862 = vmatmul.bf16.gmra.mxu0 %v6715
  %v7863 = vpop.f32.mrf.mxu0
  %v7864 = vadd.f32 0.0, %v7863
  %v7865 = vpop.f32.mrf.mxu0
  %v7866 = vadd.f32 0.0, %v7865
  %7867 = vmatmul.bf16.gmra.mxu0 %v7024
  %v7868 = vpop.f32.mrf.mxu0
  %v7869 = vadd.f32 0.0, %v7868
  %v7870 = vpop.f32.mrf.mxu0
  %v7871 = vadd.f32 0.0, %v7870
  %7872 = vmatmul.bf16.gmra.mxu0 %v7294
  %v7873 = vpop.f32.mrf.mxu0
  %v7874 = vadd.f32 0.0, %v7873
  %v7875 = vpop.f32.mrf.mxu0
  %v7876 = vadd.f32 0.0, %v7875
  %7877 = vmatmul.bf16.gmra.mxu0 %v6673
  %v7878 = vpop.f32.mrf.mxu0
  %v7879 = vadd.f32 0.0, %v7878
  %v7880 = vpop.f32.mrf.mxu0
  %v7881 = vadd.f32 0.0, %v7880
  %7882 = vmatmul.bf16.gmra.mxu0 %v6673
  %v7883 = vpop.f32.mrf.mxu0
  %v7884 = vadd.f32 0.0, %v7883
  %v7885 = vpop.f32.mrf.mxu0
  %v7886 = vadd.f32 0.0, %v7885
  %7887 = vmatmul.bf16.gmra.mxu0 %v6724
  %v7888 = vpop.f32.mrf.mxu0
  %v7889 = vadd.f32 0.0, %v7888
  %v7890 = vpop.f32.mrf.mxu0
  %v7891 = vadd.f32 0.0, %v7890
  %7892 = vmatmul.bf16.gmra.mxu0 %v6727
  %v7893 = vpop.f32.mrf.mxu0
  %v7894 = vadd.f32 0.0, %v7893
  %v7895 = vpop.f32.mrf.mxu0
  %v7896 = vadd.f32 0.0, %v7895
  %7897 = vmatmul.bf16.gmra.mxu0 %v6730
  %v7898 = vpop.f32.mrf.mxu0
  %v7899 = vadd.f32 0.0, %v7898
  %v7900 = vpop.f32.mrf.mxu0
  %v7901 = vadd.f32 0.0, %v7900
  %7902 = vmatmul.bf16.gmra.mxu0 %v6733
  %v7903 = vpop.f32.mrf.mxu0
  %v7904 = vadd.f32 0.0, %v7903
  %v7905 = vpop.f32.mrf.mxu0
  %v7906 = vadd.f32 0.0, %v7905
  %7907 = vmatmul.bf16.gmra.mxu0 %v6736
  %v7908 = vpop.f32.mrf.mxu0
  %v7909 = vadd.f32 0.0, %v7908
  %v7910 = vpop.f32.mrf.mxu0
  %v7911 = vadd.f32 0.0, %v7910
  %7912 = vmatmul.bf16.gmra.mxu0 %v6739
  %v7913 = vpop.f32.mrf.mxu0
  %v7914 = vadd.f32 0.0, %v7913
  %v7915 = vpop.f32.mrf.mxu0
  %v7916 = vadd.f32 0.0, %v7915
  %7917 = vmatmul.bf16.gmra.mxu0 %v6742
  %v7918 = vpop.f32.mrf.mxu0
  %v7919 = vadd.f32 0.0, %v7918
  %v7920 = vpop.f32.mrf.mxu0
  %v7921 = vadd.f32 0.0, %v7920
  %7922 = vmatmul.bf16.gmra.mxu0 %v6745
  %v7923 = vpop.f32.mrf.mxu0
  %v7924 = vadd.f32 0.0, %v7923
  %v7925 = vpop.f32.mrf.mxu0
  %v7926 = vadd.f32 0.0, %v7925
  %7927 = vmatmul.bf16.gmra.mxu0 %v6748
  %v7928 = vpop.f32.mrf.mxu0
  %v7929 = vadd.f32 0.0, %v7928
  %v7930 = vpop.f32.mrf.mxu0
  %v7931 = vadd.f32 0.0, %v7930
  %7932 = vmatmul.bf16.gmra.mxu0 %v6751
  %v7933 = vpop.f32.mrf.mxu0
  %v7934 = vadd.f32 0.0, %v7933
  %v7935 = vpop.f32.mrf.mxu0
  %v7936 = vadd.f32 0.0, %v7935
  %7937 = vmatmul.bf16.gmra.mxu0 %v6754
  %v7938 = vpop.f32.mrf.mxu0
  %v7939 = vadd.f32 0.0, %v7938
  %v7940 = vpop.f32.mrf.mxu0
  %v7941 = vadd.f32 0.0, %v7940
  %7942 = vmatmul.bf16.gmra.mxu0 %v6757
  %v7943 = vpop.f32.mrf.mxu0
  %v7944 = vadd.f32 0.0, %v7943
  %v7945 = vpop.f32.mrf.mxu0
  %v7946 = vadd.f32 0.0, %v7945
  %7947 = vmatmul.bf16.gmra.mxu0 %v7027
  %v7948 = vpop.f32.mrf.mxu0
  %v7949 = vadd.f32 0.0, %v7948
  %v7950 = vpop.f32.mrf.mxu0
  %v7951 = vadd.f32 0.0, %v7950
  %7952 = vmatmul.bf16.gmra.mxu0 %v7297
  %v7953 = vpop.f32.mrf.mxu0
  %v7954 = vadd.f32 0.0, %v7953
  %v7955 = vpop.f32.mrf.mxu0
  %v7956 = vadd.f32 0.0, %v7955
  %7957 = vmatmul.bf16.gmra.mxu0 %v6673
  %v7958 = vpop.f32.mrf.mxu0
  %v7959 = vadd.f32 0.0, %v7958
  %v7960 = vpop.f32.mrf.mxu0
  %v7961 = vadd.f32 0.0, %v7960
  %7962 = vmatmul.bf16.gmra.mxu0 %v6673
  %v7963 = vpop.f32.mrf.mxu0
  %v7964 = vadd.f32 0.0, %v7963
  %v7965 = vpop.f32.mrf.mxu0
  %v7966 = vadd.f32 0.0, %v7965
  %7967 = vdwg.mxu0
  %v7968 = vadd.f32 %v7718, %v7809
  %v7969 = vadd.f32 %v7719, %v7811
  %v7970 = vadd.f32 %v7720, %v7814
  %v7971 = vadd.f32 %v7721, %v7816
  %v7972 = vadd.f32 %v7722, %v7819
  %v7973 = vadd.f32 %v7723, %v7821
  %v7974 = vadd.f32 %v7724, %v7824
  %v7975 = vadd.f32 %v7725, %v7826
  %v7976 = vadd.f32 %v7726, %v7829
  %v7977 = vadd.f32 %v7727, %v7831
  %v7978 = vadd.f32 %v7728, %v7834
  %v7979 = vadd.f32 %v7729, %v7836
  %v7980 = vadd.f32 %v7730, %v7839
  %v7981 = vadd.f32 %v7731, %v7841
  %v7982 = vadd.f32 %v7732, %v7844
  %v7983 = vadd.f32 %v7733, %v7846
  %v7984 = vadd.f32 %v7734, %v7849
  %v7985 = vadd.f32 %v7735, %v7851
  %v7986 = vadd.f32 %v7736, %v7854
  %v7987 = vadd.f32 %v7737, %v7856
  %v7988 = vadd.f32 %v7738, %v7859
  %v7989 = vadd.f32 %v7739, %v7861
  %v7990 = vadd.f32 %v7740, %v7864
  %v7991 = vadd.f32 %v7741, %v7866
  %v7992 = vadd.f32 %v7742, %v7869
  %v7993 = vadd.f32 %v7743, %v7871
  %v7994 = vadd.f32 %v7744, %v7874
  %v7995 = vadd.f32 %v7745, %v7876
  %v7996 = vadd.f32 %v7746, %v7879
  %v7997 = vadd.f32 %v7747, %v7881
  %v7998 = vadd.f32 %v7748, %v7884
  %v7999 = vadd.f32 %v7749, %v7886
  %v8000 = vadd.f32 %v7750, %v7889
  %v8001 = vadd.f32 %v7751, %v7891
  %v8002 = vadd.f32 %v7752, %v7894
  %v8003 = vadd.f32 %v7753, %v7896
  %v8004 = vadd.f32 %v7754, %v7899
  %v8005 = vadd.f32 %v7755, %v7901
  %v8006 = vadd.f32 %v7756, %v7904
  %v8007 = vadd.f32 %v7757, %v7906
  %v8008 = vadd.f32 %v7758, %v7909
  %v8009 = vadd.f32 %v7759, %v7911
  %v8010 = vadd.f32 %v7760, %v7914
  %v8011 = vadd.f32 %v7761, %v7916
  %v8012 = vadd.f32 %v7762, %v7919
  %v8013 = vadd.f32 %v7763, %v7921
  %v8014 = vadd.f32 %v7764, %v7924
  %v8015 = vadd.f32 %v7765, %v7926
  %v8016 = vadd.f32 %v7766, %v7929
  %v8017 = vadd.f32 %v7767, %v7931
  %v8018 = vadd.f32 %v7768, %v7934
  %v8019 = vadd.f32 %v7769, %v7936
  %v8020 = vadd.f32 %v7770, %v7939
  %v8021 = vadd.f32 %v7771, %v7941
  %v8022 = vadd.f32 %v7772, %v7944
  %v8023 = vadd.f32 %v7773, %v7946
  %v8024 = vadd.f32 %v7774, %v7949
  %v8025 = vadd.f32 %v7775, %v7951
  %v8026 = vadd.f32 %v7776, %v7954
  %v8027 = vadd.f32 %v7777, %v7956
  %v8028 = vadd.f32 %v7778, %v7959
  %v8029 = vadd.f32 %v7779, %v7961
  %v8030 = vadd.f32 %v7780, %v7964
  %v8031 = vadd.f32 %v7781, %v7966
  %vm8032 = vcmask 1042432
  %v8033 = vrot.slane %v1672, 5
  %v8034 = vrot.slane %v1737, 5
  %v8035 = vsel %vm8032, %v8033, %v8034
  %v8036 = vrot.slane %v1674, 5
  %v8037 = vrot.slane %v1738, 5
  %v8038 = vsel %vm8032, %v8036, %v8037
  %v8039 = vrot.slane %v1676, 5
  %v8040 = vrot.slane %v1739, 5
  %v8041 = vsel %vm8032, %v8039, %v8040
  %v8042 = vrot.slane %v1678, 5
  %v8043 = vrot.slane %v1740, 5
  %v8044 = vsel %vm8032, %v8042, %v8043
  %v8045 = vrot.slane %v1680, 5
  %v8046 = vrot.slane %v1741, 5
  %v8047 = vsel %vm8032, %v8045, %v8046
  %v8048 = vrot.slane %v1682, 5
  %v8049 = vrot.slane %v1742, 5
  %v8050 = vsel %vm8032, %v8048, %v8049
  %v8051 = vrot.slane %v1684, 5
  %v8052 = vrot.slane %v1743, 5
  %v8053 = vsel %vm8032, %v8051, %v8052
  %v8054 = vrot.slane %v1686, 5
  %v8055 = vrot.slane %v1744, 5
  %v8056 = vsel %vm8032, %v8054, %v8055
  %v8057 = vrot.slane %v1688, 5
  %v8058 = vrot.slane %v1745, 5
  %v8059 = vsel %vm8032, %v8057, %v8058
  %v8060 = vrot.slane %v1690, 5
  %v8061 = vrot.slane %v1746, 5
  %v8062 = vsel %vm8032, %v8060, %v8061
  %v8063 = vrot.slane %v1692, 5
  %v8064 = vrot.slane %v1747, 5
  %v8065 = vsel %vm8032, %v8063, %v8064
  %v8066 = vrot.slane %v1694, 5
  %v8067 = vrot.slane %v1748, 5
  %v8068 = vsel %vm8032, %v8066, %v8067
  %v8069 = vrot.slane %v1696, 5
  %v8070 = vrot.slane %v1749, 5
  %v8071 = vsel %vm8032, %v8069, %v8070
  %v8072 = vrot.slane %v1698, 5
  %v8073 = vrot.slane %v1750, 5
  %v8074 = vsel %vm8032, %v8072, %v8073
  %v8075 = vrot.slane %v1700, 5
  %v8076 = vrot.slane %v1751, 5
  %v8077 = vsel %vm8032, %v8075, %v8076
  %v8078 = vrot.slane %v1706, 5
  %v8079 = vrot.slane %v1754, 5
  %v8080 = vsel %vm8032, %v8078, %v8079
  %v8081 = vrot.slane %v1708, 5
  %v8082 = vrot.slane %v1755, 5
  %v8083 = vsel %vm8032, %v8081, %v8082
  %v8084 = vrot.slane %v1710, 5
  %v8085 = vrot.slane %v1756, 5
  %v8086 = vsel %vm8032, %v8084, %v8085
  %v8087 = vrot.slane %v1712, 5
  %v8088 = vrot.slane %v1757, 5
  %v8089 = vsel %vm8032, %v8087, %v8088
  %v8090 = vrot.slane %v1714, 5
  %v8091 = vrot.slane %v1758, 5
  %v8092 = vsel %vm8032, %v8090, %v8091
  %v8093 = vrot.slane %v1716, 5
  %v8094 = vrot.slane %v1759, 5
  %v8095 = vsel %vm8032, %v8093, %v8094
  %v8096 = vrot.slane %v1718, 5
  %v8097 = vrot.slane %v1760, 5
  %v8098 = vsel %vm8032, %v8096, %v8097
  %v8099 = vrot.slane %v1720, 5
  %v8100 = vrot.slane %v1761, 5
  %v8101 = vsel %vm8032, %v8099, %v8100
  %v8102 = vrot.slane %v1722, 5
  %v8103 = vrot.slane %v1762, 5
  %v8104 = vsel %vm8032, %v8102, %v8103
  %v8105 = vrot.slane %v1724, 5
  %v8106 = vrot.slane %v1763, 5
  %v8107 = vsel %vm8032, %v8105, %v8106
  %v8108 = vrot.slane %v1726, 5
  %v8109 = vrot.slane %v1764, 5
  %v8110 = vsel %vm8032, %v8108, %v8109
  %v8111 = vrot.slane %v1728, 5
  %v8112 = vrot.slane %v1765, 5
  %v8113 = vsel %vm8032, %v8111, %v8112
  %v8114 = vrot.slane %v1730, 5
  %v8115 = vrot.slane %v1766, 5
  %v8116 = vsel %vm8032, %v8114, %v8115
  %v8117 = vrot.slane %v1732, 5
  %v8118 = vrot.slane %v1767, 5
  %v8119 = vsel %vm8032, %v8117, %v8118
  %s8120 = scalar_lea.vmem %s5, 64
  %v8121 = vld [vmem:[%s8120] sm:$0xf]
  %v8122 = vld [vmem:[%s8120 + $0x4] sm:$0xf]
  %v8123 = vld [vmem:[%s8120 + $0x8] sm:$0xf]
  %v8124 = vld [vmem:[%s8120 + $0xc] sm:$0xf]
  %v8129 = vunpack.c.l.b16 %v8121
  %v8130 = vunpack.c.l.b16 %v8122
  %v8131 = vunpack.c.l.b16 %v8123
  %v8132 = vunpack.c.l.b16 %v8124
  %v8133 = vpack.c.b16 %v8130, %v8129
  %v8134 = vpack.c.b16 %v8132, %v8131
  %v8138 = vsel %vm1947, %v8035, 0
  %v8141 = vsel %vm1947, %v8038, 0
  %v8144 = vsel %vm1947, %v8041, 0
  %v8147 = vsel %vm1947, %v8044, 0
  %v8150 = vsel %vm1947, %v8047, 0
  %v8153 = vsel %vm1947, %v8050, 0
  %v8156 = vsel %vm1947, %v8053, 0
  %v8159 = vsel %vm1947, %v8056, 0
  %v8162 = vsel %vm1947, %v8059, 0
  %v8165 = vsel %vm1947, %v8062, 0
  %v8168 = vsel %vm1947, %v8065, 0
  %v8171 = vsel %vm1947, %v8068, 0
  %v8174 = vsel %vm1947, %v8071, 0
  %v8177 = vsel %vm1947, %v8074, 0
  %v8180 = vsel %vm1947, %v8077, 0
  %v8183 = vsel %vm1947, %v8080, 0
  %v8186 = vsel %vm1947, %v8083, 0
  %v8189 = vsel %vm1947, %v8086, 0
  %v8192 = vsel %vm1947, %v8089, 0
  %v8195 = vsel %vm1947, %v8092, 0
  %v8198 = vsel %vm1947, %v8095, 0
  %v8201 = vsel %vm1947, %v8098, 0
  %v8204 = vsel %vm1947, %v8101, 0
  %v8207 = vsel %vm1947, %v8104, 0
  %v8210 = vsel %vm1947, %v8107, 0
  %v8213 = vsel %vm1947, %v8110, 0
  %v8216 = vsel %vm1947, %v8113, 0
  %v8219 = vsel %vm1947, %v8116, 0
  %v8222 = vsel %vm1947, %v8119, 0
  %8224 = vmatpush.bf16.msra.mxu0 0
  %8225 = vmatpush.bf16.msra.mxu0 0
  %8226 = vmatpush.bf16.msra.mxu0 0
  %8227 = vmatpush.bf16.msra.mxu0 0
  %8228 = vmatpush.bf16.msra.mxu0 0
  %8229 = vmatpush.bf16.msra.mxu0 0
  %8230 = vmatpush.bf16.msra.mxu0 %v8134
  %8231 = vmatpush.bf16.msra.mxu0 %v8133
  %8232 = vmatmul.bf16.gmra.mxu0 %v8138
  %v8233 = vpop.f32.mrf.mxu0
  %v8234 = vadd.f32 0.0, %v8233
  %v8235 = vpop.f32.mrf.mxu0
  %v8236 = vadd.f32 0.0, %v8235
  %8237 = vmatmul.bf16.gmra.mxu0 %v8138
  %v8238 = vpop.f32.mrf.mxu0
  %v8239 = vadd.f32 0.0, %v8238
  %v8240 = vpop.f32.mrf.mxu0
  %v8241 = vadd.f32 0.0, %v8240
  %8242 = vmatmul.bf16.gmra.mxu0 %v8141
  %v8243 = vpop.f32.mrf.mxu0
  %v8244 = vadd.f32 0.0, %v8243
  %v8245 = vpop.f32.mrf.mxu0
  %v8246 = vadd.f32 0.0, %v8245
  %8247 = vmatmul.bf16.gmra.mxu0 %v8144
  %v8248 = vpop.f32.mrf.mxu0
  %v8249 = vadd.f32 0.0, %v8248
  %v8250 = vpop.f32.mrf.mxu0
  %v8251 = vadd.f32 0.0, %v8250
  %8252 = vmatmul.bf16.gmra.mxu0 %v8147
  %v8253 = vpop.f32.mrf.mxu0
  %v8254 = vadd.f32 0.0, %v8253
  %v8255 = vpop.f32.mrf.mxu0
  %v8256 = vadd.f32 0.0, %v8255
  %8257 = vmatmul.bf16.gmra.mxu0 %v8150
  %v8258 = vpop.f32.mrf.mxu0
  %v8259 = vadd.f32 0.0, %v8258
  %v8260 = vpop.f32.mrf.mxu0
  %v8261 = vadd.f32 0.0, %v8260
  %8262 = vmatmul.bf16.gmra.mxu0 %v8153
  %v8263 = vpop.f32.mrf.mxu0
  %v8264 = vadd.f32 0.0, %v8263
  %v8265 = vpop.f32.mrf.mxu0
  %v8266 = vadd.f32 0.0, %v8265
  %8267 = vmatmul.bf16.gmra.mxu0 %v8156
  %v8268 = vpop.f32.mrf.mxu0
  %v8269 = vadd.f32 0.0, %v8268
  %v8270 = vpop.f32.mrf.mxu0
  %v8271 = vadd.f32 0.0, %v8270
  %8272 = vmatmul.bf16.gmra.mxu0 %v8159
  %v8273 = vpop.f32.mrf.mxu0
  %v8274 = vadd.f32 0.0, %v8273
  %v8275 = vpop.f32.mrf.mxu0
  %v8276 = vadd.f32 0.0, %v8275
  %8277 = vmatmul.bf16.gmra.mxu0 %v8162
  %v8278 = vpop.f32.mrf.mxu0
  %v8279 = vadd.f32 0.0, %v8278
  %v8280 = vpop.f32.mrf.mxu0
  %v8281 = vadd.f32 0.0, %v8280
  %8282 = vmatmul.bf16.gmra.mxu0 %v8165
  %v8283 = vpop.f32.mrf.mxu0
  %v8284 = vadd.f32 0.0, %v8283
  %v8285 = vpop.f32.mrf.mxu0
  %v8286 = vadd.f32 0.0, %v8285
  %8287 = vmatmul.bf16.gmra.mxu0 %v8168
  %v8288 = vpop.f32.mrf.mxu0
  %v8289 = vadd.f32 0.0, %v8288
  %v8290 = vpop.f32.mrf.mxu0
  %v8291 = vadd.f32 0.0, %v8290
  %8292 = vmatmul.bf16.gmra.mxu0 %v8171
  %v8293 = vpop.f32.mrf.mxu0
  %v8294 = vadd.f32 0.0, %v8293
  %v8295 = vpop.f32.mrf.mxu0
  %v8296 = vadd.f32 0.0, %v8295
  %8297 = vmatmul.bf16.gmra.mxu0 %v8174
  %v8298 = vpop.f32.mrf.mxu0
  %v8299 = vadd.f32 0.0, %v8298
  %v8300 = vpop.f32.mrf.mxu0
  %v8301 = vadd.f32 0.0, %v8300
  %8302 = vmatmul.bf16.gmra.mxu0 %v8177
  %v8303 = vpop.f32.mrf.mxu0
  %v8304 = vadd.f32 0.0, %v8303
  %v8305 = vpop.f32.mrf.mxu0
  %v8306 = vadd.f32 0.0, %v8305
  %8307 = vmatmul.bf16.gmra.mxu0 %v8180
  %v8308 = vpop.f32.mrf.mxu0
  %v8309 = vadd.f32 0.0, %v8308
  %v8310 = vpop.f32.mrf.mxu0
  %v8311 = vadd.f32 0.0, %v8310
  %8312 = vmatmul.bf16.gmra.mxu0 %v8138
  %v8313 = vpop.f32.mrf.mxu0
  %v8314 = vadd.f32 0.0, %v8313
  %v8315 = vpop.f32.mrf.mxu0
  %v8316 = vadd.f32 0.0, %v8315
  %8317 = vmatmul.bf16.gmra.mxu0 %v8138
  %v8318 = vpop.f32.mrf.mxu0
  %v8319 = vadd.f32 0.0, %v8318
  %v8320 = vpop.f32.mrf.mxu0
  %v8321 = vadd.f32 0.0, %v8320
  %8322 = vmatmul.bf16.gmra.mxu0 %v8183
  %v8323 = vpop.f32.mrf.mxu0
  %v8324 = vadd.f32 0.0, %v8323
  %v8325 = vpop.f32.mrf.mxu0
  %v8326 = vadd.f32 0.0, %v8325
  %8327 = vmatmul.bf16.gmra.mxu0 %v8186
  %v8328 = vpop.f32.mrf.mxu0
  %v8329 = vadd.f32 0.0, %v8328
  %v8330 = vpop.f32.mrf.mxu0
  %v8331 = vadd.f32 0.0, %v8330
  %8332 = vmatmul.bf16.gmra.mxu0 %v8189
  %v8333 = vpop.f32.mrf.mxu0
  %v8334 = vadd.f32 0.0, %v8333
  %v8335 = vpop.f32.mrf.mxu0
  %v8336 = vadd.f32 0.0, %v8335
  %8337 = vmatmul.bf16.gmra.mxu0 %v8192
  %v8338 = vpop.f32.mrf.mxu0
  %v8339 = vadd.f32 0.0, %v8338
  %v8340 = vpop.f32.mrf.mxu0
  %v8341 = vadd.f32 0.0, %v8340
  %8342 = vmatmul.bf16.gmra.mxu0 %v8195
  %v8343 = vpop.f32.mrf.mxu0
  %v8344 = vadd.f32 0.0, %v8343
  %v8345 = vpop.f32.mrf.mxu0
  %v8346 = vadd.f32 0.0, %v8345
  %8347 = vmatmul.bf16.gmra.mxu0 %v8198
  %v8348 = vpop.f32.mrf.mxu0
  %v8349 = vadd.f32 0.0, %v8348
  %v8350 = vpop.f32.mrf.mxu0
  %v8351 = vadd.f32 0.0, %v8350
  %8352 = vmatmul.bf16.gmra.mxu0 %v8201
  %v8353 = vpop.f32.mrf.mxu0
  %v8354 = vadd.f32 0.0, %v8353
  %v8355 = vpop.f32.mrf.mxu0
  %v8356 = vadd.f32 0.0, %v8355
  %8357 = vmatmul.bf16.gmra.mxu0 %v8204
  %v8358 = vpop.f32.mrf.mxu0
  %v8359 = vadd.f32 0.0, %v8358
  %v8360 = vpop.f32.mrf.mxu0
  %v8361 = vadd.f32 0.0, %v8360
  %8362 = vmatmul.bf16.gmra.mxu0 %v8207
  %v8363 = vpop.f32.mrf.mxu0
  %v8364 = vadd.f32 0.0, %v8363
  %v8365 = vpop.f32.mrf.mxu0
  %v8366 = vadd.f32 0.0, %v8365
  %8367 = vmatmul.bf16.gmra.mxu0 %v8210
  %v8368 = vpop.f32.mrf.mxu0
  %v8369 = vadd.f32 0.0, %v8368
  %v8370 = vpop.f32.mrf.mxu0
  %v8371 = vadd.f32 0.0, %v8370
  %8372 = vmatmul.bf16.gmra.mxu0 %v8213
  %v8373 = vpop.f32.mrf.mxu0
  %v8374 = vadd.f32 0.0, %v8373
  %v8375 = vpop.f32.mrf.mxu0
  %v8376 = vadd.f32 0.0, %v8375
  %8377 = vmatmul.bf16.gmra.mxu0 %v8216
  %v8378 = vpop.f32.mrf.mxu0
  %v8379 = vadd.f32 0.0, %v8378
  %v8380 = vpop.f32.mrf.mxu0
  %v8381 = vadd.f32 0.0, %v8380
  %8382 = vmatmul.bf16.gmra.mxu0 %v8219
  %v8383 = vpop.f32.mrf.mxu0
  %v8384 = vadd.f32 0.0, %v8383
  %v8385 = vpop.f32.mrf.mxu0
  %v8386 = vadd.f32 0.0, %v8385
  %8387 = vmatmul.bf16.gmra.mxu0 %v8222
  %v8388 = vpop.f32.mrf.mxu0
  %v8389 = vadd.f32 0.0, %v8388
  %v8390 = vpop.f32.mrf.mxu0
  %v8391 = vadd.f32 0.0, %v8390
  %8392 = vdwg.mxu0
  %v8393 = vadd.f32 %v7968, %v8234
  %v8394 = vadd.f32 %v7969, %v8236
  %v8395 = vadd.f32 %v7970, %v8239
  %v8396 = vadd.f32 %v7971, %v8241
  %v8397 = vadd.f32 %v7972, %v8244
  %v8398 = vadd.f32 %v7973, %v8246
  %v8399 = vadd.f32 %v7974, %v8249
  %v8400 = vadd.f32 %v7975, %v8251
  %v8401 = vadd.f32 %v7976, %v8254
  %v8402 = vadd.f32 %v7977, %v8256
  %v8403 = vadd.f32 %v7978, %v8259
  %v8404 = vadd.f32 %v7979, %v8261
  %v8405 = vadd.f32 %v7980, %v8264
  %v8406 = vadd.f32 %v7981, %v8266
  %v8407 = vadd.f32 %v7982, %v8269
  %v8408 = vadd.f32 %v7983, %v8271
  %v8409 = vadd.f32 %v7984, %v8274
  %v8410 = vadd.f32 %v7985, %v8276
  %v8411 = vadd.f32 %v7986, %v8279
  %v8412 = vadd.f32 %v7987, %v8281
  %v8413 = vadd.f32 %v7988, %v8284
  %v8414 = vadd.f32 %v7989, %v8286
  %v8415 = vadd.f32 %v7990, %v8289
  %v8416 = vadd.f32 %v7991, %v8291
  %v8417 = vadd.f32 %v7992, %v8294
  %v8418 = vadd.f32 %v7993, %v8296
  %v8419 = vadd.f32 %v7994, %v8299
  %v8420 = vadd.f32 %v7995, %v8301
  %v8421 = vadd.f32 %v7996, %v8304
  %v8422 = vadd.f32 %v7997, %v8306
  %v8423 = vadd.f32 %v7998, %v8309
  %v8424 = vadd.f32 %v7999, %v8311
  %v8425 = vadd.f32 %v8000, %v8314
  %v8426 = vadd.f32 %v8001, %v8316
  %v8427 = vadd.f32 %v8002, %v8319
  %v8428 = vadd.f32 %v8003, %v8321
  %v8429 = vadd.f32 %v8004, %v8324
  %v8430 = vadd.f32 %v8005, %v8326
  %v8431 = vadd.f32 %v8006, %v8329
  %v8432 = vadd.f32 %v8007, %v8331
  %v8433 = vadd.f32 %v8008, %v8334
  %v8434 = vadd.f32 %v8009, %v8336
  %v8435 = vadd.f32 %v8010, %v8339
  %v8436 = vadd.f32 %v8011, %v8341
  %v8437 = vadd.f32 %v8012, %v8344
  %v8438 = vadd.f32 %v8013, %v8346
  %v8439 = vadd.f32 %v8014, %v8349
  %v8440 = vadd.f32 %v8015, %v8351
  %v8441 = vadd.f32 %v8016, %v8354
  %v8442 = vadd.f32 %v8017, %v8356
  %v8443 = vadd.f32 %v8018, %v8359
  %v8444 = vadd.f32 %v8019, %v8361
  %v8445 = vadd.f32 %v8020, %v8364
  %v8446 = vadd.f32 %v8021, %v8366
  %v8447 = vadd.f32 %v8022, %v8369
  %v8448 = vadd.f32 %v8023, %v8371
  %v8449 = vadd.f32 %v8024, %v8374
  %v8450 = vadd.f32 %v8025, %v8376
  %v8451 = vadd.f32 %v8026, %v8379
  %v8452 = vadd.f32 %v8027, %v8381
  %v8453 = vadd.f32 %v8028, %v8384
  %v8454 = vadd.f32 %v8029, %v8386
  %v8455 = vadd.f32 %v8030, %v8389
  %v8456 = vadd.f32 %v8031, %v8391
  %v8457 = vrot.slane %v1702, 5
  %v8458 = vrot.slane %v1752, 5
  %v8459 = vsel %vm8032, %v8457, %v8458
  %v8460 = vrot.slane %v1734, 5
  %v8461 = vrot.slane %v1768, 5
  %v8462 = vsel %vm8032, %v8460, %v8461
  %s8463 = scalar_lea.vmem %s5, 144
  %v8464 = vld [vmem:[%s8463] sm:$0xf]
  %v8465 = vld [vmem:[%s8463 + $0x4] sm:$0xf]
  %v8466 = vld [vmem:[%s8463 + $0x8] sm:$0xf]
  %v8467 = vld [vmem:[%s8463 + $0xc] sm:$0xf]
  %v8472 = vunpack.c.l.b16 %v8464
  %v8473 = vunpack.c.l.b16 %v8465
  %v8474 = vunpack.c.l.b16 %v8466
  %v8475 = vunpack.c.l.b16 %v8467
  %v8476 = vpack.c.b16 %v8473, %v8472
  %v8477 = vpack.c.b16 %v8475, %v8474
  %v8481 = vsel %vm1947, %v8459, 0
  %v8484 = vsel %vm1947, %v8462, 0
  %8486 = vmatpush.bf16.msra.mxu0 0
  %8487 = vmatpush.bf16.msra.mxu0 0
  %8488 = vmatpush.bf16.msra.mxu0 0
  %8489 = vmatpush.bf16.msra.mxu0 0
  %8490 = vmatpush.bf16.msra.mxu0 0
  %8491 = vmatpush.bf16.msra.mxu0 0
  %8492 = vmatpush.bf16.msra.mxu0 %v8477
  %8493 = vmatpush.bf16.msra.mxu0 %v8476
  %8494 = vmatmul.bf16.gmra.mxu0 %v8138
  %v8495 = vpop.f32.mrf.mxu0
  %v8496 = vadd.f32 0.0, %v8495
  %v8497 = vpop.f32.mrf.mxu0
  %v8498 = vadd.f32 0.0, %v8497
  %8499 = vmatmul.bf16.gmra.mxu0 %v8141
  %v8500 = vpop.f32.mrf.mxu0
  %v8501 = vadd.f32 0.0, %v8500
  %v8502 = vpop.f32.mrf.mxu0
  %v8503 = vadd.f32 0.0, %v8502
  %8504 = vmatmul.bf16.gmra.mxu0 %v8144
  %v8505 = vpop.f32.mrf.mxu0
  %v8506 = vadd.f32 0.0, %v8505
  %v8507 = vpop.f32.mrf.mxu0
  %v8508 = vadd.f32 0.0, %v8507
  %8509 = vmatmul.bf16.gmra.mxu0 %v8147
  %v8510 = vpop.f32.mrf.mxu0
  %v8511 = vadd.f32 0.0, %v8510
  %v8512 = vpop.f32.mrf.mxu0
  %v8513 = vadd.f32 0.0, %v8512
  %8514 = vmatmul.bf16.gmra.mxu0 %v8150
  %v8515 = vpop.f32.mrf.mxu0
  %v8516 = vadd.f32 0.0, %v8515
  %v8517 = vpop.f32.mrf.mxu0
  %v8518 = vadd.f32 0.0, %v8517
  %8519 = vmatmul.bf16.gmra.mxu0 %v8153
  %v8520 = vpop.f32.mrf.mxu0
  %v8521 = vadd.f32 0.0, %v8520
  %v8522 = vpop.f32.mrf.mxu0
  %v8523 = vadd.f32 0.0, %v8522
  %8524 = vmatmul.bf16.gmra.mxu0 %v8156
  %v8525 = vpop.f32.mrf.mxu0
  %v8526 = vadd.f32 0.0, %v8525
  %v8527 = vpop.f32.mrf.mxu0
  %v8528 = vadd.f32 0.0, %v8527
  %8529 = vmatmul.bf16.gmra.mxu0 %v8159
  %v8530 = vpop.f32.mrf.mxu0
  %v8531 = vadd.f32 0.0, %v8530
  %v8532 = vpop.f32.mrf.mxu0
  %v8533 = vadd.f32 0.0, %v8532
  %8534 = vmatmul.bf16.gmra.mxu0 %v8162
  %v8535 = vpop.f32.mrf.mxu0
  %v8536 = vadd.f32 0.0, %v8535
  %v8537 = vpop.f32.mrf.mxu0
  %v8538 = vadd.f32 0.0, %v8537
  %8539 = vmatmul.bf16.gmra.mxu0 %v8165
  %v8540 = vpop.f32.mrf.mxu0
  %v8541 = vadd.f32 0.0, %v8540
  %v8542 = vpop.f32.mrf.mxu0
  %v8543 = vadd.f32 0.0, %v8542
  %8544 = vmatmul.bf16.gmra.mxu0 %v8168
  %v8545 = vpop.f32.mrf.mxu0
  %v8546 = vadd.f32 0.0, %v8545
  %v8547 = vpop.f32.mrf.mxu0
  %v8548 = vadd.f32 0.0, %v8547
  %8549 = vmatmul.bf16.gmra.mxu0 %v8171
  %v8550 = vpop.f32.mrf.mxu0
  %v8551 = vadd.f32 0.0, %v8550
  %v8552 = vpop.f32.mrf.mxu0
  %v8553 = vadd.f32 0.0, %v8552
  %8554 = vmatmul.bf16.gmra.mxu0 %v8174
  %v8555 = vpop.f32.mrf.mxu0
  %v8556 = vadd.f32 0.0, %v8555
  %v8557 = vpop.f32.mrf.mxu0
  %v8558 = vadd.f32 0.0, %v8557
  %8559 = vmatmul.bf16.gmra.mxu0 %v8177
  %v8560 = vpop.f32.mrf.mxu0
  %v8561 = vadd.f32 0.0, %v8560
  %v8562 = vpop.f32.mrf.mxu0
  %v8563 = vadd.f32 0.0, %v8562
  %8564 = vmatmul.bf16.gmra.mxu0 %v8180
  %v8565 = vpop.f32.mrf.mxu0
  %v8566 = vadd.f32 0.0, %v8565
  %v8567 = vpop.f32.mrf.mxu0
  %v8568 = vadd.f32 0.0, %v8567
  %8569 = vmatmul.bf16.gmra.mxu0 %v8481
  %v8570 = vpop.f32.mrf.mxu0
  %v8571 = vadd.f32 0.0, %v8570
  %v8572 = vpop.f32.mrf.mxu0
  %v8573 = vadd.f32 0.0, %v8572
  %8574 = vmatmul.bf16.gmra.mxu0 %v8138
  %v8575 = vpop.f32.mrf.mxu0
  %v8576 = vadd.f32 0.0, %v8575
  %v8577 = vpop.f32.mrf.mxu0
  %v8578 = vadd.f32 0.0, %v8577
  %8579 = vmatmul.bf16.gmra.mxu0 %v8183
  %v8580 = vpop.f32.mrf.mxu0
  %v8581 = vadd.f32 0.0, %v8580
  %v8582 = vpop.f32.mrf.mxu0
  %v8583 = vadd.f32 0.0, %v8582
  %8584 = vmatmul.bf16.gmra.mxu0 %v8186
  %v8585 = vpop.f32.mrf.mxu0
  %v8586 = vadd.f32 0.0, %v8585
  %v8587 = vpop.f32.mrf.mxu0
  %v8588 = vadd.f32 0.0, %v8587
  %8589 = vmatmul.bf16.gmra.mxu0 %v8189
  %v8590 = vpop.f32.mrf.mxu0
  %v8591 = vadd.f32 0.0, %v8590
  %v8592 = vpop.f32.mrf.mxu0
  %v8593 = vadd.f32 0.0, %v8592
  %8594 = vmatmul.bf16.gmra.mxu0 %v8192
  %v8595 = vpop.f32.mrf.mxu0
  %v8596 = vadd.f32 0.0, %v8595
  %v8597 = vpop.f32.mrf.mxu0
  %v8598 = vadd.f32 0.0, %v8597
  %8599 = vmatmul.bf16.gmra.mxu0 %v8195
  %v8600 = vpop.f32.mrf.mxu0
  %v8601 = vadd.f32 0.0, %v8600
  %v8602 = vpop.f32.mrf.mxu0
  %v8603 = vadd.f32 0.0, %v8602
  %8604 = vmatmul.bf16.gmra.mxu0 %v8198
  %v8605 = vpop.f32.mrf.mxu0
  %v8606 = vadd.f32 0.0, %v8605
  %v8607 = vpop.f32.mrf.mxu0
  %v8608 = vadd.f32 0.0, %v8607
  %8609 = vmatmul.bf16.gmra.mxu0 %v8201
  %v8610 = vpop.f32.mrf.mxu0
  %v8611 = vadd.f32 0.0, %v8610
  %v8612 = vpop.f32.mrf.mxu0
  %v8613 = vadd.f32 0.0, %v8612
  %8614 = vmatmul.bf16.gmra.mxu0 %v8204
  %v8615 = vpop.f32.mrf.mxu0
  %v8616 = vadd.f32 0.0, %v8615
  %v8617 = vpop.f32.mrf.mxu0
  %v8618 = vadd.f32 0.0, %v8617
  %8619 = vmatmul.bf16.gmra.mxu0 %v8207
  %v8620 = vpop.f32.mrf.mxu0
  %v8621 = vadd.f32 0.0, %v8620
  %v8622 = vpop.f32.mrf.mxu0
  %v8623 = vadd.f32 0.0, %v8622
  %8624 = vmatmul.bf16.gmra.mxu0 %v8210
  %v8625 = vpop.f32.mrf.mxu0
  %v8626 = vadd.f32 0.0, %v8625
  %v8627 = vpop.f32.mrf.mxu0
  %v8628 = vadd.f32 0.0, %v8627
  %8629 = vmatmul.bf16.gmra.mxu0 %v8213
  %v8630 = vpop.f32.mrf.mxu0
  %v8631 = vadd.f32 0.0, %v8630
  %v8632 = vpop.f32.mrf.mxu0
  %v8633 = vadd.f32 0.0, %v8632
  %8634 = vmatmul.bf16.gmra.mxu0 %v8216
  %v8635 = vpop.f32.mrf.mxu0
  %v8636 = vadd.f32 0.0, %v8635
  %v8637 = vpop.f32.mrf.mxu0
  %v8638 = vadd.f32 0.0, %v8637
  %8639 = vmatmul.bf16.gmra.mxu0 %v8219
  %v8640 = vpop.f32.mrf.mxu0
  %v8641 = vadd.f32 0.0, %v8640
  %v8642 = vpop.f32.mrf.mxu0
  %v8643 = vadd.f32 0.0, %v8642
  %8644 = vmatmul.bf16.gmra.mxu0 %v8222
  %v8645 = vpop.f32.mrf.mxu0
  %v8646 = vadd.f32 0.0, %v8645
  %v8647 = vpop.f32.mrf.mxu0
  %v8648 = vadd.f32 0.0, %v8647
  %8649 = vmatmul.bf16.gmra.mxu0 %v8484
  %v8650 = vpop.f32.mrf.mxu0
  %v8651 = vadd.f32 0.0, %v8650
  %v8652 = vpop.f32.mrf.mxu0
  %v8653 = vadd.f32 0.0, %v8652
  %8654 = vdwg.mxu0
  %v8655 = vadd.f32 %v8393, %v8496
  %v8656 = vadd.f32 %v8394, %v8498
  %v8657 = vadd.f32 %v8395, %v8501
  %v8658 = vadd.f32 %v8396, %v8503
  %v8659 = vadd.f32 %v8397, %v8506
  %v8660 = vadd.f32 %v8398, %v8508
  %v8661 = vadd.f32 %v8399, %v8511
  %v8662 = vadd.f32 %v8400, %v8513
  %v8663 = vadd.f32 %v8401, %v8516
  %v8664 = vadd.f32 %v8402, %v8518
  %v8665 = vadd.f32 %v8403, %v8521
  %v8666 = vadd.f32 %v8404, %v8523
  %v8667 = vadd.f32 %v8405, %v8526
  %v8668 = vadd.f32 %v8406, %v8528
  %v8669 = vadd.f32 %v8407, %v8531
  %v8670 = vadd.f32 %v8408, %v8533
  %v8671 = vadd.f32 %v8409, %v8536
  %v8672 = vadd.f32 %v8410, %v8538
  %v8673 = vadd.f32 %v8411, %v8541
  %v8674 = vadd.f32 %v8412, %v8543
  %v8675 = vadd.f32 %v8413, %v8546
  %v8676 = vadd.f32 %v8414, %v8548
  %v8677 = vadd.f32 %v8415, %v8551
  %v8678 = vadd.f32 %v8416, %v8553
  %v8679 = vadd.f32 %v8417, %v8556
  %v8680 = vadd.f32 %v8418, %v8558
  %v8681 = vadd.f32 %v8419, %v8561
  %v8682 = vadd.f32 %v8420, %v8563
  %v8683 = vadd.f32 %v8421, %v8566
  %v8684 = vadd.f32 %v8422, %v8568
  %v8685 = vadd.f32 %v8423, %v8571
  %v8686 = vadd.f32 %v8424, %v8573
  %v8687 = vadd.f32 %v8425, %v8576
  %v8688 = vadd.f32 %v8426, %v8578
  %v8689 = vadd.f32 %v8427, %v8581
  %v8690 = vadd.f32 %v8428, %v8583
  %v8691 = vadd.f32 %v8429, %v8586
  %v8692 = vadd.f32 %v8430, %v8588
  %v8693 = vadd.f32 %v8431, %v8591
  %v8694 = vadd.f32 %v8432, %v8593
  %v8695 = vadd.f32 %v8433, %v8596
  %v8696 = vadd.f32 %v8434, %v8598
  %v8697 = vadd.f32 %v8435, %v8601
  %v8698 = vadd.f32 %v8436, %v8603
  %v8699 = vadd.f32 %v8437, %v8606
  %v8700 = vadd.f32 %v8438, %v8608
  %v8701 = vadd.f32 %v8439, %v8611
  %v8702 = vadd.f32 %v8440, %v8613
  %v8703 = vadd.f32 %v8441, %v8616
  %v8704 = vadd.f32 %v8442, %v8618
  %v8705 = vadd.f32 %v8443, %v8621
  %v8706 = vadd.f32 %v8444, %v8623
  %v8707 = vadd.f32 %v8445, %v8626
  %v8708 = vadd.f32 %v8446, %v8628
  %v8709 = vadd.f32 %v8447, %v8631
  %v8710 = vadd.f32 %v8448, %v8633
  %v8711 = vadd.f32 %v8449, %v8636
  %v8712 = vadd.f32 %v8450, %v8638
  %v8713 = vadd.f32 %v8451, %v8641
  %v8714 = vadd.f32 %v8452, %v8643
  %v8715 = vadd.f32 %v8453, %v8646
  %v8716 = vadd.f32 %v8454, %v8648
  %v8717 = vadd.f32 %v8455, %v8651
  %v8718 = vadd.f32 %v8456, %v8653
  %v8719 = vrot.slane %v1704, 5
  %v8720 = vrot.slane %v1753, 5
  %v8721 = vsel %vm8032, %v8719, %v8720
  %v8722 = vrot.slane %v1736, 5
  %v8723 = vrot.slane %v1769, 5
  %v8724 = vsel %vm8032, %v8722, %v8723
  %s8725 = scalar_lea.vmem %s5, 224
  %v8726 = vld [vmem:[%s8725] sm:$0xf]
  %v8727 = vld [vmem:[%s8725 + $0x4] sm:$0xf]
  %v8728 = vld [vmem:[%s8725 + $0x8] sm:$0xf]
  %v8729 = vld [vmem:[%s8725 + $0xc] sm:$0xf]
  %v8734 = vunpack.c.l.b16 %v8726
  %v8735 = vunpack.c.l.b16 %v8727
  %v8736 = vunpack.c.l.b16 %v8728
  %v8737 = vunpack.c.l.b16 %v8729
  %v8738 = vpack.c.b16 %v8735, %v8734
  %v8739 = vpack.c.b16 %v8737, %v8736
  %v8743 = vsel %vm1947, %v8721, 0
  %v8746 = vsel %vm1947, %v8724, 0
  %8748 = vmatpush.bf16.msra.mxu0 0
  %8749 = vmatpush.bf16.msra.mxu0 0
  %8750 = vmatpush.bf16.msra.mxu0 0
  %8751 = vmatpush.bf16.msra.mxu0 0
  %8752 = vmatpush.bf16.msra.mxu0 0
  %8753 = vmatpush.bf16.msra.mxu0 0
  %8754 = vmatpush.bf16.msra.mxu0 %v8739
  %8755 = vmatpush.bf16.msra.mxu0 %v8738
  %8756 = vmatmul.bf16.gmra.mxu0 %v8141
  %v8757 = vpop.f32.mrf.mxu0
  %v8758 = vadd.f32 0.0, %v8757
  %v8759 = vpop.f32.mrf.mxu0
  %v8760 = vadd.f32 0.0, %v8759
  %8761 = vmatmul.bf16.gmra.mxu0 %v8144
  %v8762 = vpop.f32.mrf.mxu0
  %v8763 = vadd.f32 0.0, %v8762
  %v8764 = vpop.f32.mrf.mxu0
  %v8765 = vadd.f32 0.0, %v8764
  %8766 = vmatmul.bf16.gmra.mxu0 %v8147
  %v8767 = vpop.f32.mrf.mxu0
  %v8768 = vadd.f32 0.0, %v8767
  %v8769 = vpop.f32.mrf.mxu0
  %v8770 = vadd.f32 0.0, %v8769
  %8771 = vmatmul.bf16.gmra.mxu0 %v8150
  %v8772 = vpop.f32.mrf.mxu0
  %v8773 = vadd.f32 0.0, %v8772
  %v8774 = vpop.f32.mrf.mxu0
  %v8775 = vadd.f32 0.0, %v8774
  %8776 = vmatmul.bf16.gmra.mxu0 %v8153
  %v8777 = vpop.f32.mrf.mxu0
  %v8778 = vadd.f32 0.0, %v8777
  %v8779 = vpop.f32.mrf.mxu0
  %v8780 = vadd.f32 0.0, %v8779
  %8781 = vmatmul.bf16.gmra.mxu0 %v8156
  %v8782 = vpop.f32.mrf.mxu0
  %v8783 = vadd.f32 0.0, %v8782
  %v8784 = vpop.f32.mrf.mxu0
  %v8785 = vadd.f32 0.0, %v8784
  %8786 = vmatmul.bf16.gmra.mxu0 %v8159
  %v8787 = vpop.f32.mrf.mxu0
  %v8788 = vadd.f32 0.0, %v8787
  %v8789 = vpop.f32.mrf.mxu0
  %v8790 = vadd.f32 0.0, %v8789
  %8791 = vmatmul.bf16.gmra.mxu0 %v8162
  %v8792 = vpop.f32.mrf.mxu0
  %v8793 = vadd.f32 0.0, %v8792
  %v8794 = vpop.f32.mrf.mxu0
  %v8795 = vadd.f32 0.0, %v8794
  %8796 = vmatmul.bf16.gmra.mxu0 %v8165
  %v8797 = vpop.f32.mrf.mxu0
  %v8798 = vadd.f32 0.0, %v8797
  %v8799 = vpop.f32.mrf.mxu0
  %v8800 = vadd.f32 0.0, %v8799
  %8801 = vmatmul.bf16.gmra.mxu0 %v8168
  %v8802 = vpop.f32.mrf.mxu0
  %v8803 = vadd.f32 0.0, %v8802
  %v8804 = vpop.f32.mrf.mxu0
  %v8805 = vadd.f32 0.0, %v8804
  %8806 = vmatmul.bf16.gmra.mxu0 %v8171
  %v8807 = vpop.f32.mrf.mxu0
  %v8808 = vadd.f32 0.0, %v8807
  %v8809 = vpop.f32.mrf.mxu0
  %v8810 = vadd.f32 0.0, %v8809
  %8811 = vmatmul.bf16.gmra.mxu0 %v8174
  %v8812 = vpop.f32.mrf.mxu0
  %v8813 = vadd.f32 0.0, %v8812
  %v8814 = vpop.f32.mrf.mxu0
  %v8815 = vadd.f32 0.0, %v8814
  %8816 = vmatmul.bf16.gmra.mxu0 %v8177
  %v8817 = vpop.f32.mrf.mxu0
  %v8818 = vadd.f32 0.0, %v8817
  %v8819 = vpop.f32.mrf.mxu0
  %v8820 = vadd.f32 0.0, %v8819
  %8821 = vmatmul.bf16.gmra.mxu0 %v8180
  %v8822 = vpop.f32.mrf.mxu0
  %v8823 = vadd.f32 0.0, %v8822
  %v8824 = vpop.f32.mrf.mxu0
  %v8825 = vadd.f32 0.0, %v8824
  %8826 = vmatmul.bf16.gmra.mxu0 %v8481
  %v8827 = vpop.f32.mrf.mxu0
  %v8828 = vadd.f32 0.0, %v8827
  %v8829 = vpop.f32.mrf.mxu0
  %v8830 = vadd.f32 0.0, %v8829
  %8831 = vmatmul.bf16.gmra.mxu0 %v8743
  %v8832 = vpop.f32.mrf.mxu0
  %v8833 = vadd.f32 0.0, %v8832
  %v8834 = vpop.f32.mrf.mxu0
  %v8835 = vadd.f32 0.0, %v8834
  %8836 = vmatmul.bf16.gmra.mxu0 %v8183
  %v8837 = vpop.f32.mrf.mxu0
  %v8838 = vadd.f32 0.0, %v8837
  %v8839 = vpop.f32.mrf.mxu0
  %v8840 = vadd.f32 0.0, %v8839
  %8841 = vmatmul.bf16.gmra.mxu0 %v8186
  %v8842 = vpop.f32.mrf.mxu0
  %v8843 = vadd.f32 0.0, %v8842
  %v8844 = vpop.f32.mrf.mxu0
  %v8845 = vadd.f32 0.0, %v8844
  %8846 = vmatmul.bf16.gmra.mxu0 %v8189
  %v8847 = vpop.f32.mrf.mxu0
  %v8848 = vadd.f32 0.0, %v8847
  %v8849 = vpop.f32.mrf.mxu0
  %v8850 = vadd.f32 0.0, %v8849
  %8851 = vmatmul.bf16.gmra.mxu0 %v8192
  %v8852 = vpop.f32.mrf.mxu0
  %v8853 = vadd.f32 0.0, %v8852
  %v8854 = vpop.f32.mrf.mxu0
  %v8855 = vadd.f32 0.0, %v8854
  %8856 = vmatmul.bf16.gmra.mxu0 %v8195
  %v8857 = vpop.f32.mrf.mxu0
  %v8858 = vadd.f32 0.0, %v8857
  %v8859 = vpop.f32.mrf.mxu0
  %v8860 = vadd.f32 0.0, %v8859
  %8861 = vmatmul.bf16.gmra.mxu0 %v8198
  %v8862 = vpop.f32.mrf.mxu0
  %v8863 = vadd.f32 0.0, %v8862
  %v8864 = vpop.f32.mrf.mxu0
  %v8865 = vadd.f32 0.0, %v8864
  %8866 = vmatmul.bf16.gmra.mxu0 %v8201
  %v8867 = vpop.f32.mrf.mxu0
  %v8868 = vadd.f32 0.0, %v8867
  %v8869 = vpop.f32.mrf.mxu0
  %v8870 = vadd.f32 0.0, %v8869
  %8871 = vmatmul.bf16.gmra.mxu0 %v8204
  %v8872 = vpop.f32.mrf.mxu0
  %v8873 = vadd.f32 0.0, %v8872
  %v8874 = vpop.f32.mrf.mxu0
  %v8875 = vadd.f32 0.0, %v8874
  %8876 = vmatmul.bf16.gmra.mxu0 %v8207
  %v8877 = vpop.f32.mrf.mxu0
  %v8878 = vadd.f32 0.0, %v8877
  %v8879 = vpop.f32.mrf.mxu0
  %v8880 = vadd.f32 0.0, %v8879
  %8881 = vmatmul.bf16.gmra.mxu0 %v8210
  %v8882 = vpop.f32.mrf.mxu0
  %v8883 = vadd.f32 0.0, %v8882
  %v8884 = vpop.f32.mrf.mxu0
  %v8885 = vadd.f32 0.0, %v8884
  %8886 = vmatmul.bf16.gmra.mxu0 %v8213
  %v8887 = vpop.f32.mrf.mxu0
  %v8888 = vadd.f32 0.0, %v8887
  %v8889 = vpop.f32.mrf.mxu0
  %v8890 = vadd.f32 0.0, %v8889
  %8891 = vmatmul.bf16.gmra.mxu0 %v8216
  %v8892 = vpop.f32.mrf.mxu0
  %v8893 = vadd.f32 0.0, %v8892
  %v8894 = vpop.f32.mrf.mxu0
  %v8895 = vadd.f32 0.0, %v8894
  %8896 = vmatmul.bf16.gmra.mxu0 %v8219
  %v8897 = vpop.f32.mrf.mxu0
  %v8898 = vadd.f32 0.0, %v8897
  %v8899 = vpop.f32.mrf.mxu0
  %v8900 = vadd.f32 0.0, %v8899
  %8901 = vmatmul.bf16.gmra.mxu0 %v8222
  %v8902 = vpop.f32.mrf.mxu0
  %v8903 = vadd.f32 0.0, %v8902
  %v8904 = vpop.f32.mrf.mxu0
  %v8905 = vadd.f32 0.0, %v8904
  %8906 = vmatmul.bf16.gmra.mxu0 %v8484
  %v8907 = vpop.f32.mrf.mxu0
  %v8908 = vadd.f32 0.0, %v8907
  %v8909 = vpop.f32.mrf.mxu0
  %v8910 = vadd.f32 0.0, %v8909
  %8911 = vmatmul.bf16.gmra.mxu0 %v8746
  %v8912 = vpop.f32.mrf.mxu0
  %v8913 = vadd.f32 0.0, %v8912
  %v8914 = vpop.f32.mrf.mxu0
  %v8915 = vadd.f32 0.0, %v8914
  %8916 = vdwg.mxu0
  %v8917 = vadd.f32 %v8655, %v8758
  %v8918 = vadd.f32 %v8656, %v8760
  %v8919 = vadd.f32 %v8657, %v8763
  %v8920 = vadd.f32 %v8658, %v8765
  %v8921 = vadd.f32 %v8659, %v8768
  %v8922 = vadd.f32 %v8660, %v8770
  %v8923 = vadd.f32 %v8661, %v8773
  %v8924 = vadd.f32 %v8662, %v8775
  %v8925 = vadd.f32 %v8663, %v8778
  %v8926 = vadd.f32 %v8664, %v8780
  %v8927 = vadd.f32 %v8665, %v8783
  %v8928 = vadd.f32 %v8666, %v8785
  %v8929 = vadd.f32 %v8667, %v8788
  %v8930 = vadd.f32 %v8668, %v8790
  %v8931 = vadd.f32 %v8669, %v8793
  %v8932 = vadd.f32 %v8670, %v8795
  %v8933 = vadd.f32 %v8671, %v8798
  %v8934 = vadd.f32 %v8672, %v8800
  %v8935 = vadd.f32 %v8673, %v8803
  %v8936 = vadd.f32 %v8674, %v8805
  %v8937 = vadd.f32 %v8675, %v8808
  %v8938 = vadd.f32 %v8676, %v8810
  %v8939 = vadd.f32 %v8677, %v8813
  %v8940 = vadd.f32 %v8678, %v8815
  %v8941 = vadd.f32 %v8679, %v8818
  %v8942 = vadd.f32 %v8680, %v8820
  %v8943 = vadd.f32 %v8681, %v8823
  %v8944 = vadd.f32 %v8682, %v8825
  %v8945 = vadd.f32 %v8683, %v8828
  %v8946 = vadd.f32 %v8684, %v8830
  %v8947 = vadd.f32 %v8685, %v8833
  %v8948 = vadd.f32 %v8686, %v8835
  %v8949 = vadd.f32 %v8687, %v8838
  %v8950 = vadd.f32 %v8688, %v8840
  %v8951 = vadd.f32 %v8689, %v8843
  %v8952 = vadd.f32 %v8690, %v8845
  %v8953 = vadd.f32 %v8691, %v8848
  %v8954 = vadd.f32 %v8692, %v8850
  %v8955 = vadd.f32 %v8693, %v8853
  %v8956 = vadd.f32 %v8694, %v8855
  %v8957 = vadd.f32 %v8695, %v8858
  %v8958 = vadd.f32 %v8696, %v8860
  %v8959 = vadd.f32 %v8697, %v8863
  %v8960 = vadd.f32 %v8698, %v8865
  %v8961 = vadd.f32 %v8699, %v8868
  %v8962 = vadd.f32 %v8700, %v8870
  %v8963 = vadd.f32 %v8701, %v8873
  %v8964 = vadd.f32 %v8702, %v8875
  %v8965 = vadd.f32 %v8703, %v8878
  %v8966 = vadd.f32 %v8704, %v8880
  %v8967 = vadd.f32 %v8705, %v8883
  %v8968 = vadd.f32 %v8706, %v8885
  %v8969 = vadd.f32 %v8707, %v8888
  %v8970 = vadd.f32 %v8708, %v8890
  %v8971 = vadd.f32 %v8709, %v8893
  %v8972 = vadd.f32 %v8710, %v8895
  %v8973 = vadd.f32 %v8711, %v8898
  %v8974 = vadd.f32 %v8712, %v8900
  %v8975 = vadd.f32 %v8713, %v8903
  %v8976 = vadd.f32 %v8714, %v8905
  %v8977 = vadd.f32 %v8715, %v8908
  %v8978 = vadd.f32 %v8716, %v8910
  %v8979 = vadd.f32 %v8717, %v8913
  %v8980 = vadd.f32 %v8718, %v8915
  %s8981 = scalar_lea.vmem %s5, 304
  %v8982 = vld [vmem:[%s8981] sm:$0xf]
  %v8983 = vld [vmem:[%s8981 + $0x4] sm:$0xf]
  %v8984 = vld [vmem:[%s8981 + $0x8] sm:$0xf]
  %v8985 = vld [vmem:[%s8981 + $0xc] sm:$0xf]
  %v8990 = vunpack.c.l.b16 %v8982
  %v8991 = vunpack.c.l.b16 %v8983
  %v8992 = vunpack.c.l.b16 %v8984
  %v8993 = vunpack.c.l.b16 %v8985
  %v8994 = vpack.c.b16 %v8991, %v8990
  %v8995 = vpack.c.b16 %v8993, %v8992
  %8998 = vmatpush.bf16.msra.mxu0 0
  %8999 = vmatpush.bf16.msra.mxu0 0
  %9000 = vmatpush.bf16.msra.mxu0 0
  %9001 = vmatpush.bf16.msra.mxu0 0
  %9002 = vmatpush.bf16.msra.mxu0 0
  %9003 = vmatpush.bf16.msra.mxu0 0
  %9004 = vmatpush.bf16.msra.mxu0 %v8995
  %9005 = vmatpush.bf16.msra.mxu0 %v8994
  %9006 = vmatmul.bf16.gmra.mxu0 %v8144
  %v9007 = vpop.f32.mrf.mxu0
  %v9008 = vadd.f32 0.0, %v9007
  %v9009 = vpop.f32.mrf.mxu0
  %v9010 = vadd.f32 0.0, %v9009
  %9011 = vmatmul.bf16.gmra.mxu0 %v8147
  %v9012 = vpop.f32.mrf.mxu0
  %v9013 = vadd.f32 0.0, %v9012
  %v9014 = vpop.f32.mrf.mxu0
  %v9015 = vadd.f32 0.0, %v9014
  %9016 = vmatmul.bf16.gmra.mxu0 %v8150
  %v9017 = vpop.f32.mrf.mxu0
  %v9018 = vadd.f32 0.0, %v9017
  %v9019 = vpop.f32.mrf.mxu0
  %v9020 = vadd.f32 0.0, %v9019
  %9021 = vmatmul.bf16.gmra.mxu0 %v8153
  %v9022 = vpop.f32.mrf.mxu0
  %v9023 = vadd.f32 0.0, %v9022
  %v9024 = vpop.f32.mrf.mxu0
  %v9025 = vadd.f32 0.0, %v9024
  %9026 = vmatmul.bf16.gmra.mxu0 %v8156
  %v9027 = vpop.f32.mrf.mxu0
  %v9028 = vadd.f32 0.0, %v9027
  %v9029 = vpop.f32.mrf.mxu0
  %v9030 = vadd.f32 0.0, %v9029
  %9031 = vmatmul.bf16.gmra.mxu0 %v8159
  %v9032 = vpop.f32.mrf.mxu0
  %v9033 = vadd.f32 0.0, %v9032
  %v9034 = vpop.f32.mrf.mxu0
  %v9035 = vadd.f32 0.0, %v9034
  %9036 = vmatmul.bf16.gmra.mxu0 %v8162
  %v9037 = vpop.f32.mrf.mxu0
  %v9038 = vadd.f32 0.0, %v9037
  %v9039 = vpop.f32.mrf.mxu0
  %v9040 = vadd.f32 0.0, %v9039
  %9041 = vmatmul.bf16.gmra.mxu0 %v8165
  %v9042 = vpop.f32.mrf.mxu0
  %v9043 = vadd.f32 0.0, %v9042
  %v9044 = vpop.f32.mrf.mxu0
  %v9045 = vadd.f32 0.0, %v9044
  %9046 = vmatmul.bf16.gmra.mxu0 %v8168
  %v9047 = vpop.f32.mrf.mxu0
  %v9048 = vadd.f32 0.0, %v9047
  %v9049 = vpop.f32.mrf.mxu0
  %v9050 = vadd.f32 0.0, %v9049
  %9051 = vmatmul.bf16.gmra.mxu0 %v8171
  %v9052 = vpop.f32.mrf.mxu0
  %v9053 = vadd.f32 0.0, %v9052
  %v9054 = vpop.f32.mrf.mxu0
  %v9055 = vadd.f32 0.0, %v9054
  %9056 = vmatmul.bf16.gmra.mxu0 %v8174
  %v9057 = vpop.f32.mrf.mxu0
  %v9058 = vadd.f32 0.0, %v9057
  %v9059 = vpop.f32.mrf.mxu0
  %v9060 = vadd.f32 0.0, %v9059
  %9061 = vmatmul.bf16.gmra.mxu0 %v8177
  %v9062 = vpop.f32.mrf.mxu0
  %v9063 = vadd.f32 0.0, %v9062
  %v9064 = vpop.f32.mrf.mxu0
  %v9065 = vadd.f32 0.0, %v9064
  %9066 = vmatmul.bf16.gmra.mxu0 %v8180
  %v9067 = vpop.f32.mrf.mxu0
  %v9068 = vadd.f32 0.0, %v9067
  %v9069 = vpop.f32.mrf.mxu0
  %v9070 = vadd.f32 0.0, %v9069
  %9071 = vmatmul.bf16.gmra.mxu0 %v8481
  %v9072 = vpop.f32.mrf.mxu0
  %v9073 = vadd.f32 0.0, %v9072
  %v9074 = vpop.f32.mrf.mxu0
  %v9075 = vadd.f32 0.0, %v9074
  %9076 = vmatmul.bf16.gmra.mxu0 %v8743
  %v9077 = vpop.f32.mrf.mxu0
  %v9078 = vadd.f32 0.0, %v9077
  %v9079 = vpop.f32.mrf.mxu0
  %v9080 = vadd.f32 0.0, %v9079
  %9081 = vmatmul.bf16.gmra.mxu0 %v8138
  %v9082 = vpop.f32.mrf.mxu0
  %v9083 = vadd.f32 0.0, %v9082
  %v9084 = vpop.f32.mrf.mxu0
  %v9085 = vadd.f32 0.0, %v9084
  %9086 = vmatmul.bf16.gmra.mxu0 %v8186
  %v9087 = vpop.f32.mrf.mxu0
  %v9088 = vadd.f32 0.0, %v9087
  %v9089 = vpop.f32.mrf.mxu0
  %v9090 = vadd.f32 0.0, %v9089
  %9091 = vmatmul.bf16.gmra.mxu0 %v8189
  %v9092 = vpop.f32.mrf.mxu0
  %v9093 = vadd.f32 0.0, %v9092
  %v9094 = vpop.f32.mrf.mxu0
  %v9095 = vadd.f32 0.0, %v9094
  %9096 = vmatmul.bf16.gmra.mxu0 %v8192
  %v9097 = vpop.f32.mrf.mxu0
  %v9098 = vadd.f32 0.0, %v9097
  %v9099 = vpop.f32.mrf.mxu0
  %v9100 = vadd.f32 0.0, %v9099
  %9101 = vmatmul.bf16.gmra.mxu0 %v8195
  %v9102 = vpop.f32.mrf.mxu0
  %v9103 = vadd.f32 0.0, %v9102
  %v9104 = vpop.f32.mrf.mxu0
  %v9105 = vadd.f32 0.0, %v9104
  %9106 = vmatmul.bf16.gmra.mxu0 %v8198
  %v9107 = vpop.f32.mrf.mxu0
  %v9108 = vadd.f32 0.0, %v9107
  %v9109 = vpop.f32.mrf.mxu0
  %v9110 = vadd.f32 0.0, %v9109
  %9111 = vmatmul.bf16.gmra.mxu0 %v8201
  %v9112 = vpop.f32.mrf.mxu0
  %v9113 = vadd.f32 0.0, %v9112
  %v9114 = vpop.f32.mrf.mxu0
  %v9115 = vadd.f32 0.0, %v9114
  %9116 = vmatmul.bf16.gmra.mxu0 %v8204
  %v9117 = vpop.f32.mrf.mxu0
  %v9118 = vadd.f32 0.0, %v9117
  %v9119 = vpop.f32.mrf.mxu0
  %v9120 = vadd.f32 0.0, %v9119
  %9121 = vmatmul.bf16.gmra.mxu0 %v8207
  %v9122 = vpop.f32.mrf.mxu0
  %v9123 = vadd.f32 0.0, %v9122
  %v9124 = vpop.f32.mrf.mxu0
  %v9125 = vadd.f32 0.0, %v9124
  %9126 = vmatmul.bf16.gmra.mxu0 %v8210
  %v9127 = vpop.f32.mrf.mxu0
  %v9128 = vadd.f32 0.0, %v9127
  %v9129 = vpop.f32.mrf.mxu0
  %v9130 = vadd.f32 0.0, %v9129
  %9131 = vmatmul.bf16.gmra.mxu0 %v8213
  %v9132 = vpop.f32.mrf.mxu0
  %v9133 = vadd.f32 0.0, %v9132
  %v9134 = vpop.f32.mrf.mxu0
  %v9135 = vadd.f32 0.0, %v9134
  %9136 = vmatmul.bf16.gmra.mxu0 %v8216
  %v9137 = vpop.f32.mrf.mxu0
  %v9138 = vadd.f32 0.0, %v9137
  %v9139 = vpop.f32.mrf.mxu0
  %v9140 = vadd.f32 0.0, %v9139
  %9141 = vmatmul.bf16.gmra.mxu0 %v8219
  %v9142 = vpop.f32.mrf.mxu0
  %v9143 = vadd.f32 0.0, %v9142
  %v9144 = vpop.f32.mrf.mxu0
  %v9145 = vadd.f32 0.0, %v9144
  %9146 = vmatmul.bf16.gmra.mxu0 %v8222
  %v9147 = vpop.f32.mrf.mxu0
  %v9148 = vadd.f32 0.0, %v9147
  %v9149 = vpop.f32.mrf.mxu0
  %v9150 = vadd.f32 0.0, %v9149
  %9151 = vmatmul.bf16.gmra.mxu0 %v8484
  %v9152 = vpop.f32.mrf.mxu0
  %v9153 = vadd.f32 0.0, %v9152
  %v9154 = vpop.f32.mrf.mxu0
  %v9155 = vadd.f32 0.0, %v9154
  %9156 = vmatmul.bf16.gmra.mxu0 %v8746
  %v9157 = vpop.f32.mrf.mxu0
  %v9158 = vadd.f32 0.0, %v9157
  %v9159 = vpop.f32.mrf.mxu0
  %v9160 = vadd.f32 0.0, %v9159
  %9161 = vmatmul.bf16.gmra.mxu0 %v8138
  %v9162 = vpop.f32.mrf.mxu0
  %v9163 = vadd.f32 0.0, %v9162
  %v9164 = vpop.f32.mrf.mxu0
  %v9165 = vadd.f32 0.0, %v9164
  %9166 = vdwg.mxu0
  %v9167 = vadd.f32 %v8917, %v9008
  %v9168 = vadd.f32 %v8918, %v9010
  %v9169 = vadd.f32 %v8919, %v9013
  %v9170 = vadd.f32 %v8920, %v9015
  %v9171 = vadd.f32 %v8921, %v9018
  %v9172 = vadd.f32 %v8922, %v9020
  %v9173 = vadd.f32 %v8923, %v9023
  %v9174 = vadd.f32 %v8924, %v9025
  %v9175 = vadd.f32 %v8925, %v9028
  %v9176 = vadd.f32 %v8926, %v9030
  %v9177 = vadd.f32 %v8927, %v9033
  %v9178 = vadd.f32 %v8928, %v9035
  %v9179 = vadd.f32 %v8929, %v9038
  %v9180 = vadd.f32 %v8930, %v9040
  %v9181 = vadd.f32 %v8931, %v9043
  %v9182 = vadd.f32 %v8932, %v9045
  %v9183 = vadd.f32 %v8933, %v9048
  %v9184 = vadd.f32 %v8934, %v9050
  %v9185 = vadd.f32 %v8935, %v9053
  %v9186 = vadd.f32 %v8936, %v9055
  %v9187 = vadd.f32 %v8937, %v9058
  %v9188 = vadd.f32 %v8938, %v9060
  %v9189 = vadd.f32 %v8939, %v9063
  %v9190 = vadd.f32 %v8940, %v9065
  %v9191 = vadd.f32 %v8941, %v9068
  %v9192 = vadd.f32 %v8942, %v9070
  %v9193 = vadd.f32 %v8943, %v9073
  %v9194 = vadd.f32 %v8944, %v9075
  %v9195 = vadd.f32 %v8945, %v9078
  %v9196 = vadd.f32 %v8946, %v9080
  %v9197 = vadd.f32 %v8947, %v9083
  %v9198 = vadd.f32 %v8948, %v9085
  %v9199 = vadd.f32 %v8949, %v9088
  %v9200 = vadd.f32 %v8950, %v9090
  %v9201 = vadd.f32 %v8951, %v9093
  %v9202 = vadd.f32 %v8952, %v9095
  %v9203 = vadd.f32 %v8953, %v9098
  %v9204 = vadd.f32 %v8954, %v9100
  %v9205 = vadd.f32 %v8955, %v9103
  %v9206 = vadd.f32 %v8956, %v9105
  %v9207 = vadd.f32 %v8957, %v9108
  %v9208 = vadd.f32 %v8958, %v9110
  %v9209 = vadd.f32 %v8959, %v9113
  %v9210 = vadd.f32 %v8960, %v9115
  %v9211 = vadd.f32 %v8961, %v9118
  %v9212 = vadd.f32 %v8962, %v9120
  %v9213 = vadd.f32 %v8963, %v9123
  %v9214 = vadd.f32 %v8964, %v9125
  %v9215 = vadd.f32 %v8965, %v9128
  %v9216 = vadd.f32 %v8966, %v9130
  %v9217 = vadd.f32 %v8967, %v9133
  %v9218 = vadd.f32 %v8968, %v9135
  %v9219 = vadd.f32 %v8969, %v9138
  %v9220 = vadd.f32 %v8970, %v9140
  %v9221 = vadd.f32 %v8971, %v9143
  %v9222 = vadd.f32 %v8972, %v9145
  %v9223 = vadd.f32 %v8973, %v9148
  %v9224 = vadd.f32 %v8974, %v9150
  %v9225 = vadd.f32 %v8975, %v9153
  %v9226 = vadd.f32 %v8976, %v9155
  %v9227 = vadd.f32 %v8977, %v9158
  %v9228 = vadd.f32 %v8978, %v9160
  %v9229 = vadd.f32 %v8979, %v9163
  %v9230 = vadd.f32 %v8980, %v9165
  %s9231 = scalar_lea.vmem %s5, 384
  %v9232 = vld [vmem:[%s9231] sm:$0xf]
  %v9233 = vld [vmem:[%s9231 + $0x4] sm:$0xf]
  %v9234 = vld [vmem:[%s9231 + $0x8] sm:$0xf]
  %v9235 = vld [vmem:[%s9231 + $0xc] sm:$0xf]
  %v9240 = vunpack.c.l.b16 %v9232
  %v9241 = vunpack.c.l.b16 %v9233
  %v9242 = vunpack.c.l.b16 %v9234
  %v9243 = vunpack.c.l.b16 %v9235
  %v9244 = vpack.c.b16 %v9241, %v9240
  %v9245 = vpack.c.b16 %v9243, %v9242
  %9248 = vmatpush.bf16.msra.mxu0 0
  %9249 = vmatpush.bf16.msra.mxu0 0
  %9250 = vmatpush.bf16.msra.mxu0 0
  %9251 = vmatpush.bf16.msra.mxu0 0
  %9252 = vmatpush.bf16.msra.mxu0 0
  %9253 = vmatpush.bf16.msra.mxu0 0
  %9254 = vmatpush.bf16.msra.mxu0 %v9245
  %9255 = vmatpush.bf16.msra.mxu0 %v9244
  %9256 = vmatmul.bf16.gmra.mxu0 %v8147
  %v9257 = vpop.f32.mrf.mxu0
  %v9258 = vadd.f32 0.0, %v9257
  %v9259 = vpop.f32.mrf.mxu0
  %v9260 = vadd.f32 0.0, %v9259
  %9261 = vmatmul.bf16.gmra.mxu0 %v8150
  %v9262 = vpop.f32.mrf.mxu0
  %v9263 = vadd.f32 0.0, %v9262
  %v9264 = vpop.f32.mrf.mxu0
  %v9265 = vadd.f32 0.0, %v9264
  %9266 = vmatmul.bf16.gmra.mxu0 %v8153
  %v9267 = vpop.f32.mrf.mxu0
  %v9268 = vadd.f32 0.0, %v9267
  %v9269 = vpop.f32.mrf.mxu0
  %v9270 = vadd.f32 0.0, %v9269
  %9271 = vmatmul.bf16.gmra.mxu0 %v8156
  %v9272 = vpop.f32.mrf.mxu0
  %v9273 = vadd.f32 0.0, %v9272
  %v9274 = vpop.f32.mrf.mxu0
  %v9275 = vadd.f32 0.0, %v9274
  %9276 = vmatmul.bf16.gmra.mxu0 %v8159
  %v9277 = vpop.f32.mrf.mxu0
  %v9278 = vadd.f32 0.0, %v9277
  %v9279 = vpop.f32.mrf.mxu0
  %v9280 = vadd.f32 0.0, %v9279
  %9281 = vmatmul.bf16.gmra.mxu0 %v8162
  %v9282 = vpop.f32.mrf.mxu0
  %v9283 = vadd.f32 0.0, %v9282
  %v9284 = vpop.f32.mrf.mxu0
  %v9285 = vadd.f32 0.0, %v9284
  %9286 = vmatmul.bf16.gmra.mxu0 %v8165
  %v9287 = vpop.f32.mrf.mxu0
  %v9288 = vadd.f32 0.0, %v9287
  %v9289 = vpop.f32.mrf.mxu0
  %v9290 = vadd.f32 0.0, %v9289
  %9291 = vmatmul.bf16.gmra.mxu0 %v8168
  %v9292 = vpop.f32.mrf.mxu0
  %v9293 = vadd.f32 0.0, %v9292
  %v9294 = vpop.f32.mrf.mxu0
  %v9295 = vadd.f32 0.0, %v9294
  %9296 = vmatmul.bf16.gmra.mxu0 %v8171
  %v9297 = vpop.f32.mrf.mxu0
  %v9298 = vadd.f32 0.0, %v9297
  %v9299 = vpop.f32.mrf.mxu0
  %v9300 = vadd.f32 0.0, %v9299
  %9301 = vmatmul.bf16.gmra.mxu0 %v8174
  %v9302 = vpop.f32.mrf.mxu0
  %v9303 = vadd.f32 0.0, %v9302
  %v9304 = vpop.f32.mrf.mxu0
  %v9305 = vadd.f32 0.0, %v9304
  %9306 = vmatmul.bf16.gmra.mxu0 %v8177
  %v9307 = vpop.f32.mrf.mxu0
  %v9308 = vadd.f32 0.0, %v9307
  %v9309 = vpop.f32.mrf.mxu0
  %v9310 = vadd.f32 0.0, %v9309
  %9311 = vmatmul.bf16.gmra.mxu0 %v8180
  %v9312 = vpop.f32.mrf.mxu0
  %v9313 = vadd.f32 0.0, %v9312
  %v9314 = vpop.f32.mrf.mxu0
  %v9315 = vadd.f32 0.0, %v9314
  %9316 = vmatmul.bf16.gmra.mxu0 %v8481
  %v9317 = vpop.f32.mrf.mxu0
  %v9318 = vadd.f32 0.0, %v9317
  %v9319 = vpop.f32.mrf.mxu0
  %v9320 = vadd.f32 0.0, %v9319
  %9321 = vmatmul.bf16.gmra.mxu0 %v8743
  %v9322 = vpop.f32.mrf.mxu0
  %v9323 = vadd.f32 0.0, %v9322
  %v9324 = vpop.f32.mrf.mxu0
  %v9325 = vadd.f32 0.0, %v9324
  %9326 = vmatmul.bf16.gmra.mxu0 %v8138
  %v9327 = vpop.f32.mrf.mxu0
  %v9328 = vadd.f32 0.0, %v9327
  %v9329 = vpop.f32.mrf.mxu0
  %v9330 = vadd.f32 0.0, %v9329
  %9331 = vmatmul.bf16.gmra.mxu0 %v8138
  %v9332 = vpop.f32.mrf.mxu0
  %v9333 = vadd.f32 0.0, %v9332
  %v9334 = vpop.f32.mrf.mxu0
  %v9335 = vadd.f32 0.0, %v9334
  %9336 = vmatmul.bf16.gmra.mxu0 %v8189
  %v9337 = vpop.f32.mrf.mxu0
  %v9338 = vadd.f32 0.0, %v9337
  %v9339 = vpop.f32.mrf.mxu0
  %v9340 = vadd.f32 0.0, %v9339
  %9341 = vmatmul.bf16.gmra.mxu0 %v8192
  %v9342 = vpop.f32.mrf.mxu0
  %v9343 = vadd.f32 0.0, %v9342
  %v9344 = vpop.f32.mrf.mxu0
  %v9345 = vadd.f32 0.0, %v9344
  %9346 = vmatmul.bf16.gmra.mxu0 %v8195
  %v9347 = vpop.f32.mrf.mxu0
  %v9348 = vadd.f32 0.0, %v9347
  %v9349 = vpop.f32.mrf.mxu0
  %v9350 = vadd.f32 0.0, %v9349
  %9351 = vmatmul.bf16.gmra.mxu0 %v8198
  %v9352 = vpop.f32.mrf.mxu0
  %v9353 = vadd.f32 0.0, %v9352
  %v9354 = vpop.f32.mrf.mxu0
  %v9355 = vadd.f32 0.0, %v9354
  %9356 = vmatmul.bf16.gmra.mxu0 %v8201
  %v9357 = vpop.f32.mrf.mxu0
  %v9358 = vadd.f32 0.0, %v9357
  %v9359 = vpop.f32.mrf.mxu0
  %v9360 = vadd.f32 0.0, %v9359
  %9361 = vmatmul.bf16.gmra.mxu0 %v8204
  %v9362 = vpop.f32.mrf.mxu0
  %v9363 = vadd.f32 0.0, %v9362
  %v9364 = vpop.f32.mrf.mxu0
  %v9365 = vadd.f32 0.0, %v9364
  %9366 = vmatmul.bf16.gmra.mxu0 %v8207
  %v9367 = vpop.f32.mrf.mxu0
  %v9368 = vadd.f32 0.0, %v9367
  %v9369 = vpop.f32.mrf.mxu0
  %v9370 = vadd.f32 0.0, %v9369
  %9371 = vmatmul.bf16.gmra.mxu0 %v8210
  %v9372 = vpop.f32.mrf.mxu0
  %v9373 = vadd.f32 0.0, %v9372
  %v9374 = vpop.f32.mrf.mxu0
  %v9375 = vadd.f32 0.0, %v9374
  %9376 = vmatmul.bf16.gmra.mxu0 %v8213
  %v9377 = vpop.f32.mrf.mxu0
  %v9378 = vadd.f32 0.0, %v9377
  %v9379 = vpop.f32.mrf.mxu0
  %v9380 = vadd.f32 0.0, %v9379
  %9381 = vmatmul.bf16.gmra.mxu0 %v8216
  %v9382 = vpop.f32.mrf.mxu0
  %v9383 = vadd.f32 0.0, %v9382
  %v9384 = vpop.f32.mrf.mxu0
  %v9385 = vadd.f32 0.0, %v9384
  %9386 = vmatmul.bf16.gmra.mxu0 %v8219
  %v9387 = vpop.f32.mrf.mxu0
  %v9388 = vadd.f32 0.0, %v9387
  %v9389 = vpop.f32.mrf.mxu0
  %v9390 = vadd.f32 0.0, %v9389
  %9391 = vmatmul.bf16.gmra.mxu0 %v8222
  %v9392 = vpop.f32.mrf.mxu0
  %v9393 = vadd.f32 0.0, %v9392
  %v9394 = vpop.f32.mrf.mxu0
  %v9395 = vadd.f32 0.0, %v9394
  %9396 = vmatmul.bf16.gmra.mxu0 %v8484
  %v9397 = vpop.f32.mrf.mxu0
  %v9398 = vadd.f32 0.0, %v9397
  %v9399 = vpop.f32.mrf.mxu0
  %v9400 = vadd.f32 0.0, %v9399
  %9401 = vmatmul.bf16.gmra.mxu0 %v8746
  %v9402 = vpop.f32.mrf.mxu0
  %v9403 = vadd.f32 0.0, %v9402
  %v9404 = vpop.f32.mrf.mxu0
  %v9405 = vadd.f32 0.0, %v9404
  %9406 = vmatmul.bf16.gmra.mxu0 %v8138
  %v9407 = vpop.f32.mrf.mxu0
  %v9408 = vadd.f32 0.0, %v9407
  %v9409 = vpop.f32.mrf.mxu0
  %v9410 = vadd.f32 0.0, %v9409
  %9411 = vmatmul.bf16.gmra.mxu0 %v8138
  %v9412 = vpop.f32.mrf.mxu0
  %v9413 = vadd.f32 0.0, %v9412
  %v9414 = vpop.f32.mrf.mxu0
  %v9415 = vadd.f32 0.0, %v9414
  %9416 = vdwg.mxu0
  %v9417 = vadd.f32 %v9167, %v9258
  %v9418 = vadd.f32 %v9168, %v9260
  %v9419 = vadd.f32 %v9169, %v9263
  %v9420 = vadd.f32 %v9170, %v9265
  %v9421 = vadd.f32 %v9171, %v9268
  %v9422 = vadd.f32 %v9172, %v9270
  %v9423 = vadd.f32 %v9173, %v9273
  %v9424 = vadd.f32 %v9174, %v9275
  %v9425 = vadd.f32 %v9175, %v9278
  %v9426 = vadd.f32 %v9176, %v9280
  %v9427 = vadd.f32 %v9177, %v9283
  %v9428 = vadd.f32 %v9178, %v9285
  %v9429 = vadd.f32 %v9179, %v9288
  %v9430 = vadd.f32 %v9180, %v9290
  %v9431 = vadd.f32 %v9181, %v9293
  %v9432 = vadd.f32 %v9182, %v9295
  %v9433 = vadd.f32 %v9183, %v9298
  %v9434 = vadd.f32 %v9184, %v9300
  %v9435 = vadd.f32 %v9185, %v9303
  %v9436 = vadd.f32 %v9186, %v9305
  %v9437 = vadd.f32 %v9187, %v9308
  %v9438 = vadd.f32 %v9188, %v9310
  %v9439 = vadd.f32 %v9189, %v9313
  %v9440 = vadd.f32 %v9190, %v9315
  %v9441 = vadd.f32 %v9191, %v9318
  %v9442 = vadd.f32 %v9192, %v9320
  %v9443 = vadd.f32 %v9193, %v9323
  %v9444 = vadd.f32 %v9194, %v9325
  %v9445 = vadd.f32 %v9195, %v9328
  %v9446 = vadd.f32 %v9196, %v9330
  %v9447 = vadd.f32 %v9197, %v9333
  %v9448 = vadd.f32 %v9198, %v9335
  %v9449 = vadd.f32 %v9199, %v9338
  %v9450 = vadd.f32 %v9200, %v9340
  %v9451 = vadd.f32 %v9201, %v9343
  %v9452 = vadd.f32 %v9202, %v9345
  %v9453 = vadd.f32 %v9203, %v9348
  %v9454 = vadd.f32 %v9204, %v9350
  %v9455 = vadd.f32 %v9205, %v9353
  %v9456 = vadd.f32 %v9206, %v9355
  %v9457 = vadd.f32 %v9207, %v9358
  %v9458 = vadd.f32 %v9208, %v9360
  %v9459 = vadd.f32 %v9209, %v9363
  %v9460 = vadd.f32 %v9210, %v9365
  %v9461 = vadd.f32 %v9211, %v9368
  %v9462 = vadd.f32 %v9212, %v9370
  %v9463 = vadd.f32 %v9213, %v9373
  %v9464 = vadd.f32 %v9214, %v9375
  %v9465 = vadd.f32 %v9215, %v9378
  %v9466 = vadd.f32 %v9216, %v9380
  %v9467 = vadd.f32 %v9217, %v9383
  %v9468 = vadd.f32 %v9218, %v9385
  %v9469 = vadd.f32 %v9219, %v9388
  %v9470 = vadd.f32 %v9220, %v9390
  %v9471 = vadd.f32 %v9221, %v9393
  %v9472 = vadd.f32 %v9222, %v9395
  %v9473 = vadd.f32 %v9223, %v9398
  %v9474 = vadd.f32 %v9224, %v9400
  %v9475 = vadd.f32 %v9225, %v9403
  %v9476 = vadd.f32 %v9226, %v9405
  %v9477 = vadd.f32 %v9227, %v9408
  %v9478 = vadd.f32 %v9228, %v9410
  %v9479 = vadd.f32 %v9229, %v9413
  %v9480 = vadd.f32 %v9230, %v9415
  %v9481 = vld [vmem:[%s6] sm:$0x1]
  %v9483 = vperm.slane %v9481, 0
  %v9485 = vadd.f32 %v9417, %v9483
  %v9486 = vadd.f32 %v9418, %v9483
  %v9487 = vadd.f32 %v9419, %v9483
  %v9488 = vadd.f32 %v9420, %v9483
  %v9489 = vadd.f32 %v9421, %v9483
  %v9490 = vadd.f32 %v9422, %v9483
  %v9491 = vadd.f32 %v9423, %v9483
  %v9492 = vadd.f32 %v9424, %v9483
  %v9493 = vadd.f32 %v9425, %v9483
  %v9494 = vadd.f32 %v9426, %v9483
  %v9495 = vadd.f32 %v9427, %v9483
  %v9496 = vadd.f32 %v9428, %v9483
  %v9497 = vadd.f32 %v9429, %v9483
  %v9498 = vadd.f32 %v9430, %v9483
  %v9499 = vadd.f32 %v9431, %v9483
  %v9500 = vadd.f32 %v9432, %v9483
  %v9501 = vadd.f32 %v9433, %v9483
  %v9502 = vadd.f32 %v9434, %v9483
  %v9503 = vadd.f32 %v9435, %v9483
  %v9504 = vadd.f32 %v9436, %v9483
  %v9505 = vadd.f32 %v9437, %v9483
  %v9506 = vadd.f32 %v9438, %v9483
  %v9507 = vadd.f32 %v9439, %v9483
  %v9508 = vadd.f32 %v9440, %v9483
  %v9509 = vadd.f32 %v9441, %v9483
  %v9510 = vadd.f32 %v9442, %v9483
  %v9511 = vadd.f32 %v9443, %v9483
  %v9512 = vadd.f32 %v9444, %v9483
  %v9513 = vadd.f32 %v9445, %v9483
  %v9514 = vadd.f32 %v9446, %v9483
  %v9515 = vadd.f32 %v9447, %v9483
  %v9516 = vadd.f32 %v9448, %v9483
  %v9517 = vadd.f32 %v9449, %v9483
  %v9518 = vadd.f32 %v9450, %v9483
  %v9519 = vadd.f32 %v9451, %v9483
  %v9520 = vadd.f32 %v9452, %v9483
  %v9521 = vadd.f32 %v9453, %v9483
  %v9522 = vadd.f32 %v9454, %v9483
  %v9523 = vadd.f32 %v9455, %v9483
  %v9524 = vadd.f32 %v9456, %v9483
  %v9525 = vadd.f32 %v9457, %v9483
  %v9526 = vadd.f32 %v9458, %v9483
  %v9527 = vadd.f32 %v9459, %v9483
  %v9528 = vadd.f32 %v9460, %v9483
  %v9529 = vadd.f32 %v9461, %v9483
  %v9530 = vadd.f32 %v9462, %v9483
  %v9531 = vadd.f32 %v9463, %v9483
  %v9532 = vadd.f32 %v9464, %v9483
  %v9533 = vadd.f32 %v9465, %v9483
  %v9534 = vadd.f32 %v9466, %v9483
  %v9535 = vadd.f32 %v9467, %v9483
  %v9536 = vadd.f32 %v9468, %v9483
  %v9537 = vadd.f32 %v9469, %v9483
  %v9538 = vadd.f32 %v9470, %v9483
  %v9539 = vadd.f32 %v9471, %v9483
  %v9540 = vadd.f32 %v9472, %v9483
  %v9541 = vadd.f32 %v9473, %v9483
  %v9542 = vadd.f32 %v9474, %v9483
  %v9543 = vadd.f32 %v9475, %v9483
  %v9544 = vadd.f32 %v9476, %v9483
  %v9545 = vadd.f32 %v9477, %v9483
  %v9546 = vadd.f32 %v9478, %v9483
  %v9547 = vadd.f32 %v9479, %v9483
  %v9548 = vadd.f32 %v9480, %v9483
  %9549 = vxpose.xlu0.b32.start [1/16] %v9485, 128
  %9550 = vxpose.xlu0.b32.cont [2/16] %v9486, 128
  %9551 = vxpose.xlu0.b32.cont [3/16] %v9487, 128
  %9552 = vxpose.xlu0.b32.cont [4/16] %v9488, 128
  %9553 = vxpose.xlu0.b32.cont [5/16] %v9489, 128
  %9554 = vxpose.xlu0.b32.cont [6/16] %v9490, 128
  %9555 = vxpose.xlu0.b32.cont [7/16] %v9491, 128
  %9556 = vxpose.xlu0.b32.cont [8/16] %v9492, 128
  %9557 = vxpose.xlu0.b32.cont [9/16] %v9493, 128
  %9558 = vxpose.xlu0.b32.cont [10/16] %v9494, 128
  %9559 = vxpose.xlu0.b32.cont [11/16] %v9495, 128
  %9560 = vxpose.xlu0.b32.cont [12/16] %v9496, 128
  %9561 = vxpose.xlu0.b32.cont [13/16] %v9497, 128
  %9562 = vxpose.xlu0.b32.cont [14/16] %v9498, 128
  %9563 = vxpose.xlu0.b32.cont [15/16] %v9499, 128
  %9564 = vxpose.xlu0.b32.end [16/16] %v9500, 128
  %v9565 = vpop.trf.xlu0
  %v9566 = vpop.trf.xlu0
  %v9567 = vpop.trf.xlu0
  %v9568 = vpop.trf.xlu0
  %v9569 = vpop.trf.xlu0
  %v9570 = vpop.trf.xlu0
  %v9571 = vpop.trf.xlu0
  %v9572 = vpop.trf.xlu0
  %v9573 = vpop.trf.xlu0
  %v9574 = vpop.trf.xlu0
  %v9575 = vpop.trf.xlu0
  %v9576 = vpop.trf.xlu0
  %v9577 = vpop.trf.xlu0
  %v9578 = vpop.trf.xlu0
  %v9579 = vpop.trf.xlu0
  %v9580 = vpop.trf.xlu0
  %9581 = vxpose.xlu0.b32.start [1/16] %v9501, 128
  %9582 = vxpose.xlu0.b32.cont [2/16] %v9502, 128
  %9583 = vxpose.xlu0.b32.cont [3/16] %v9503, 128
  %9584 = vxpose.xlu0.b32.cont [4/16] %v9504, 128
  %9585 = vxpose.xlu0.b32.cont [5/16] %v9505, 128
  %9586 = vxpose.xlu0.b32.cont [6/16] %v9506, 128
  %9587 = vxpose.xlu0.b32.cont [7/16] %v9507, 128
  %9588 = vxpose.xlu0.b32.cont [8/16] %v9508, 128
  %9589 = vxpose.xlu0.b32.cont [9/16] %v9509, 128
  %9590 = vxpose.xlu0.b32.cont [10/16] %v9510, 128
  %9591 = vxpose.xlu0.b32.cont [11/16] %v9511, 128
  %9592 = vxpose.xlu0.b32.cont [12/16] %v9512, 128
  %9593 = vxpose.xlu0.b32.cont [13/16] %v9513, 128
  %9594 = vxpose.xlu0.b32.cont [14/16] %v9514, 128
  %9595 = vxpose.xlu0.b32.cont [15/16] %v9515, 128
  %9596 = vxpose.xlu0.b32.end [16/16] %v9516, 128
  %v9597 = vpop.trf.xlu0
  %v9598 = vpop.trf.xlu0
  %v9599 = vpop.trf.xlu0
  %v9600 = vpop.trf.xlu0
  %v9601 = vpop.trf.xlu0
  %v9602 = vpop.trf.xlu0
  %v9603 = vpop.trf.xlu0
  %v9604 = vpop.trf.xlu0
  %v9605 = vpop.trf.xlu0
  %v9606 = vpop.trf.xlu0
  %v9607 = vpop.trf.xlu0
  %v9608 = vpop.trf.xlu0
  %v9609 = vpop.trf.xlu0
  %v9610 = vpop.trf.xlu0
  %v9611 = vpop.trf.xlu0
  %v9612 = vpop.trf.xlu0
  %9613 = vxpose.xlu0.b32.start [1/16] %v9517, 128
  %9614 = vxpose.xlu0.b32.cont [2/16] %v9518, 128
  %9615 = vxpose.xlu0.b32.cont [3/16] %v9519, 128
  %9616 = vxpose.xlu0.b32.cont [4/16] %v9520, 128
  %9617 = vxpose.xlu0.b32.cont [5/16] %v9521, 128
  %9618 = vxpose.xlu0.b32.cont [6/16] %v9522, 128
  %9619 = vxpose.xlu0.b32.cont [7/16] %v9523, 128
  %9620 = vxpose.xlu0.b32.cont [8/16] %v9524, 128
  %9621 = vxpose.xlu0.b32.cont [9/16] %v9525, 128
  %9622 = vxpose.xlu0.b32.cont [10/16] %v9526, 128
  %9623 = vxpose.xlu0.b32.cont [11/16] %v9527, 128
  %9624 = vxpose.xlu0.b32.cont [12/16] %v9528, 128
  %9625 = vxpose.xlu0.b32.cont [13/16] %v9529, 128
  %9626 = vxpose.xlu0.b32.cont [14/16] %v9530, 128
  %9627 = vxpose.xlu0.b32.cont [15/16] %v9531, 128
  %9628 = vxpose.xlu0.b32.end [16/16] %v9532, 128
  %v9629 = vpop.trf.xlu0
  %v9630 = vpop.trf.xlu0
  %v9631 = vpop.trf.xlu0
  %v9632 = vpop.trf.xlu0
  %v9633 = vpop.trf.xlu0
  %v9634 = vpop.trf.xlu0
  %v9635 = vpop.trf.xlu0
  %v9636 = vpop.trf.xlu0
  %v9637 = vpop.trf.xlu0
  %v9638 = vpop.trf.xlu0
  %v9639 = vpop.trf.xlu0
  %v9640 = vpop.trf.xlu0
  %v9641 = vpop.trf.xlu0
  %v9642 = vpop.trf.xlu0
  %v9643 = vpop.trf.xlu0
  %v9644 = vpop.trf.xlu0
  %9645 = vxpose.xlu0.b32.start [1/16] %v9533, 128
  %9646 = vxpose.xlu0.b32.cont [2/16] %v9534, 128
  %9647 = vxpose.xlu0.b32.cont [3/16] %v9535, 128
  %9648 = vxpose.xlu0.b32.cont [4/16] %v9536, 128
  %9649 = vxpose.xlu0.b32.cont [5/16] %v9537, 128
  %9650 = vxpose.xlu0.b32.cont [6/16] %v9538, 128
  %9651 = vxpose.xlu0.b32.cont [7/16] %v9539, 128
  %9652 = vxpose.xlu0.b32.cont [8/16] %v9540, 128
  %9653 = vxpose.xlu0.b32.cont [9/16] %v9541, 128
  %9654 = vxpose.xlu0.b32.cont [10/16] %v9542, 128
  %9655 = vxpose.xlu0.b32.cont [11/16] %v9543, 128
  %9656 = vxpose.xlu0.b32.cont [12/16] %v9544, 128
  %9657 = vxpose.xlu0.b32.cont [13/16] %v9545, 128
  %9658 = vxpose.xlu0.b32.cont [14/16] %v9546, 128
  %9659 = vxpose.xlu0.b32.cont [15/16] %v9547, 128
  %9660 = vxpose.xlu0.b32.end [16/16] %v9548, 128
  %v9661 = vpop.trf.xlu0
  %v9662 = vpop.trf.xlu0
  %v9663 = vpop.trf.xlu0
  %v9664 = vpop.trf.xlu0
  %v9665 = vpop.trf.xlu0
  %v9666 = vpop.trf.xlu0
  %v9667 = vpop.trf.xlu0
  %v9668 = vpop.trf.xlu0
  %v9669 = vpop.trf.xlu0
  %v9670 = vpop.trf.xlu0
  %v9671 = vpop.trf.xlu0
  %v9672 = vpop.trf.xlu0
  %v9673 = vpop.trf.xlu0
  %v9674 = vpop.trf.xlu0
  %v9675 = vpop.trf.xlu0
  %v9676 = vpop.trf.xlu0
  %v9681 = vrot.slane %v9597, 4
  %v9682 = vrot.slane %v9661, 4
  %v9683 = vsel %vm1669, %v9565, %v9681
  %v9684 = vsel %vm1669, %v9629, %v9682
  %9687 = vst [vmem:[%s7] sm:$0x77] %v9683
  %9688 = vst [vmem:[%s7 + $0x8] sm:$0x77] %v9684
  // Predicated region
  $region30: #{_srcnn_forward_impl.1} parent=0 // pred_check
    _
  $region31: #{_srcnn_forward_impl.1} parent=0 // pred_check_branch
    %9690 = sbr.rel (0) target = $region33
  $region32: #{_srcnn_forward_impl.1} parent=0 // pred_region
    _
  $region33: #{_srcnn_forward_impl.1} parent=0 // pred_fallthru
    _
  // Predicated region
  $region34: #{_srcnn_forward_impl.1} parent=0 // pred_check
    _
  $region35: #{_srcnn_forward_impl.1} parent=0 // pred_check_branch
    %9692 = sbr.rel (0) target = $region37
  $region36: #{_srcnn_forward_impl.1} parent=0 // pred_region
    _
  $region37: #{_srcnn_forward_impl.1} parent=0 // pred_fallthru
    _

</llo_original>
